<compile_context>
chip_gen: v7x
topology: tpu7x:2x2x1
jax: 0.10.0
libtpu: 0.0.40
codegen_flags: <defaults>
</compile_context>

<pallas_src>
import functools

import jax
import jax.numpy as jnp
from jax.experimental import pallas as pl
from jax.experimental.pallas import tpu as pltpu


# --------------------------------------------------------------------------
# helpers
# --------------------------------------------------------------------------
def _pick_tile(n, prefs=(512, 256, 128)):
    for t in prefs:
        if n % t == 0:
            return t
    return n  # whole-dimension block is always legal


def _compiler_params(dimension_semantics, est_bytes):
    return pltpu.CompilerParams(
        dimension_semantics=dimension_semantics,
        vmem_limit_bytes=int(max(2 * est_bytes, 32 * 1024 * 1024)),
    )


# --------------------------------------------------------------------------
# Tiled sparse-as-dense propagation:  X_{h} = A_norm @ X_{h-1}
#   grid = (row tiles [parallel], col tiles [arbitrary, reduction last])
#   A streamed in (tm, tk) bf16 blocks, X fully VMEM-resident,
#   accumulator in f32 VMEM scratch.
# --------------------------------------------------------------------------
def spmm_kernel(a_ref, x_ref, o_ref, acc_ref, *, tk):
    k = pl.program_id(1)

    @pl.when(k == 0)
    def _():
        acc_ref[...] = jnp.zeros_like(acc_ref)

    start = pl.multiple_of(k * tk, tk)
    x_blk = x_ref[pl.ds(start, tk), :]                     # [tk, C] bf16 (resident)
    acc_ref[...] += jnp.dot(a_ref[...], x_blk,
                            preferred_element_type=jnp.float32)

    @pl.when(k == pl.num_programs(1) - 1)
    def _():
        o_ref[...] = acc_ref[...].astype(o_ref.dtype)


def spmm_tiled(a_bf16, x_bf16, *, tm, tk):
    N = a_bf16.shape[0]
    C = x_bf16.shape[1]
    grid = (N // tm, N // tk)
    est = (2 * tm * tk * 2      # A blocks (double-buffered, bf16)
           + 2 * N * C * 2      # resident X (conservatively x2)
           + 2 * tm * C * 2     # output blocks (bf16)
           + tm * C * 4)        # f32 accumulator scratch
    return pl.pallas_call(
        functools.partial(spmm_kernel, tk=tk),
        out_shape=jax.ShapeDtypeStruct((N, C), jnp.bfloat16),
        grid_spec=pltpu.PrefetchScalarGridSpec(
            num_scalar_prefetch=0,
            grid=grid,
            in_specs=[
                pl.BlockSpec((tm, tk), lambda i, k: (i, k)),   # A_norm tiles
                pl.BlockSpec((N, C), lambda i, k: (0, 0)),     # X resident
            ],
            out_specs=pl.BlockSpec((tm, C), lambda i, k: (i, 0)),
            scratch_shapes=[pltpu.VMEM((tm, C), jnp.float32)]),
        compiler_params=_compiler_params(("parallel", "arbitrary"), est),
    )(a_bf16, x_bf16)


# --------------------------------------------------------------------------
# TAGConv combine:  out = relu(concat(hops) @ W_flat + b)
# fused with the running JumpingKnowledge 'max' (prev_max aliased to output).
# --------------------------------------------------------------------------
def tag_combine_kernel(*refs, num_x):
    x_refs = refs[:num_x]
    w_ref, b_ref, pmax_ref, out_ref, max_ref = refs[num_x:]
    x_cat = jnp.concatenate([r[...] for r in x_refs], axis=-1)   # [tm, (K+1)*Cin] bf16
    acc = jnp.dot(x_cat, w_ref[...], preferred_element_type=jnp.float32)
    acc = acc + b_ref[...]
    out = jnp.maximum(acc, 0.0)                                  # ReLU (dropout = id, eval)
    out_ref[...] = out.astype(out_ref.dtype)
    max_ref[...] = jnp.maximum(out, pmax_ref[...])               # JK 'max' accumulation


def tag_combine(hops, w_flat, b, prev_max, *, tm):
    N, cout = prev_max.shape
    num_x = len(hops)
    grid = (N // tm,)

    in_specs = [pl.BlockSpec((tm, h.shape[1]), lambda i: (i, 0)) for h in hops]
    in_specs += [
        pl.BlockSpec(w_flat.shape, lambda i: (0, 0)),
        pl.BlockSpec(b.shape, lambda i: (0, 0)),
        pl.BlockSpec((tm, cout), lambda i: (i, 0)),              # prev_max
    ]
    est = (sum(2 * tm * h.shape[1] * 2 for h in hops)
           + 2 * w_flat.size * 2
           + 2 * tm * cout * (4 + 2 + 4))
    out, new_max = pl.pallas_call(
        functools.partial(tag_combine_kernel, num_x=num_x),
        out_shape=(jax.ShapeDtypeStruct((N, cout), jnp.bfloat16),   # next layer input
                   jax.ShapeDtypeStruct((N, cout), jnp.float32)),   # running JK max
        grid_spec=pltpu.PrefetchScalarGridSpec(
            num_scalar_prefetch=0,
            grid=grid,
            in_specs=in_specs,
            out_specs=(pl.BlockSpec((tm, cout), lambda i: (i, 0)),
                       pl.BlockSpec((tm, cout), lambda i: (i, 0)))),
        input_output_aliases={num_x + 2: 1},                      # prev_max -> new_max
        compiler_params=_compiler_params(("parallel",), est),
    )(*hops, w_flat, b, prev_max)
    return out, new_max


# --------------------------------------------------------------------------
# Edge MLP head (transposed layout):
#   prodT = srcT * dstT                        [H,  te]
#   h     = relu(W1^T @ prodT + b1_col)        [Hm, te]
#   out   = sum_m(h * w2_col) + b2             [1,  te]   (lane-dense output)
# --------------------------------------------------------------------------
def edge_mlp_kernel(srcT_ref, dstT_ref, w1t_ref, b1_ref, w2_ref, b2_ref, out_ref):
    prod = srcT_ref[...] * dstT_ref[...]                          # embed_product^T
    h = jnp.dot(w1t_ref[...], prod,
                preferred_element_type=jnp.float32) + b1_ref[...]
    h = jnp.maximum(h, 0.0)                                       # ReLU (dropout = id, eval)
    o = jnp.sum(h * w2_ref[...], axis=0, keepdims=True) + b2_ref[...]
    out_ref[...] = o                                              # [1, te] lane-dense


def edge_mlp(src_t, dst_t, w1, b1, w2, b2, *, te=128):
    H, E = src_t.shape
    E_pad = ((E + te - 1) // te) * te
    if E_pad != E:
        pad = ((0, 0), (0, E_pad - E))
        src_t = jnp.pad(src_t, pad)
        dst_t = jnp.pad(dst_t, pad)
    Hm = w1.shape[1]
    w1t = w1.T                                                    # [Hm, H]
    b1c = b1.reshape(Hm, 1)
    w2c = w2.reshape(Hm, 1)
    b2c = b2.reshape(1, 1)
    grid = (E_pad // te,)
    est = 2 * (2 * H * te * 4 + Hm * H * 4 + te * 4) + Hm * te * 4
    out = pl.pallas_call(
        edge_mlp_kernel,
        out_shape=jax.ShapeDtypeStruct((1, E_pad), jnp.float32),
        grid_spec=pltpu.PrefetchScalarGridSpec(
            num_scalar_prefetch=0,
            grid=grid,
            in_specs=[
                pl.BlockSpec((H, te), lambda i: (0, i)),
                pl.BlockSpec((H, te), lambda i: (0, i)),
                pl.BlockSpec((Hm, H), lambda i: (0, 0)),
                pl.BlockSpec((Hm, 1), lambda i: (0, 0)),
                pl.BlockSpec((Hm, 1), lambda i: (0, 0)),
                pl.BlockSpec((1, 1), lambda i: (0, 0)),
            ],
            out_specs=pl.BlockSpec((1, te), lambda i: (0, i))),
        compiler_params=_compiler_params(("parallel",), est),
    )(src_t, dst_t, w1t, b1c, w2c, b2c)
    return out[0, :E]                                             # .squeeze(1)


# --------------------------------------------------------------------------
# Glue: adjacency normalization, parameter construction, full forward.
# --------------------------------------------------------------------------
def gcn_norm_dense(adj):
    # TAGConv uses gcn_norm with add_self_loops=False:  D^{-1/2} A D^{-1/2} (f32)
    deg = adj.sum(axis=1)
    dinv = jnp.where(deg > 0, 1.0 / jnp.sqrt(deg), 0.0)
    return adj * dinv[:, None] * dinv[None, :]


def xavier_uniform(key, shape):
    fan_in, fan_out = shape[-2], shape[-1]
    lim = jnp.sqrt(6.0 / (fan_in + fan_out))
    return jax.random.uniform(key, shape, jnp.float32, -lim, lim)


def init_params(key, *, num_nodes, embed_dim, gnn_in_dim, gnn_hidden_dim,
                gnn_out_dim, gnn_num_layers, K, mlp_in_dim, mlp_hidden_dim,
                mlp_out_dim):
    keys = jax.random.split(key, 2 + 2 * gnn_num_layers + 4)
    ki = iter(range(len(keys)))
    params = {}
    params["emb"] = xavier_uniform(keys[next(ki)], (num_nodes, embed_dim))

    conv_dims = [(gnn_in_dim, gnn_hidden_dim)]
    for _ in range(gnn_num_layers - 2):
        conv_dims.append((gnn_hidden_dim, gnn_hidden_dim))
    conv_dims.append((gnn_hidden_dim, gnn_out_dim))

    params["conv_w"], params["conv_b"] = [], []
    for cin, cout in conv_dims:
        params["conv_w"].append(xavier_uniform(keys[next(ki)], (K + 1, cin, cout)))
        params["conv_b"].append(jnp.zeros((1, cout), jnp.float32))
        next(ki)

    # MLP (mlp_num_layers = 2): Linear(mlp_in, mlp_hidden), Linear(mlp_hidden, 1)
    def linear_init(k, cin, cout):
        kw, kb = jax.random.split(k)
        bound = 1.0 / jnp.sqrt(cin)
        w = jax.random.uniform(kw, (cin, cout), jnp.float32, -bound, bound)
        b = jax.random.uniform(kb, (1, cout), jnp.float32, -bound, bound)
        return w, b

    w1, b1 = linear_init(keys[next(ki)], mlp_in_dim, mlp_hidden_dim)
    w2, b2 = linear_init(keys[next(ki)], mlp_hidden_dim, mlp_out_dim)
    params["lin_w"] = [w1, w2]
    params["lin_b"] = [b1, b2]
    return params


def dea_gnn_jk_forward(params, x_feature, edge_label_index, a_norm_bf16, *, K, te=128):
    # out = cat([emb.weight, x_feature], dim=1); cast to bf16 for the MXU.
    x_in = jnp.concatenate([params["emb"], x_feature], axis=1).astype(jnp.bfloat16)
    N = x_in.shape[0]
    H = params["conv_w"][0].shape[-1]
    assert all(w.shape[-1] == H for w in params["conv_w"]), \
        "JK 'max' requires gnn_out_dim == gnn_hidden_dim"

    tm = _pick_tile(N)
    tk = _pick_tile(N)

    # JK 'max' over post-ReLU layer outputs (>= 0), so zeros is a valid init.
    running_max = jnp.zeros((N, H), jnp.float32)

    for w, b in zip(params["conv_w"], params["conv_b"]):
        hops = [x_in]
        for _ in range(K):                                 # A_norm^k X recurrence
            hops.append(spmm_tiled(a_norm_bf16, hops[-1], tm=tm, tk=tk))
        kp1, cin, cout = w.shape
        w_flat = w.reshape(kp1 * cin, cout).astype(jnp.bfloat16)
        x_in, running_max = tag_combine(hops, w_flat, b, running_max, tm=tm)

    jk_out = running_max                                   # JumpingKnowledge(mode='max')

    # TODO(synk): fuse this data-dependent row gather into the edge-MLP kernel
    # (scalar-prefetch indices + per-row DMA gather) to avoid the HBM roundtrip.
    src_t = jnp.take(jk_out, edge_label_index[0], axis=0).T   # [H, E]
    dst_t = jnp.take(jk_out, edge_label_index[1], axis=0).T   # [H, E]

    return edge_mlp(src_t, dst_t,
                    params["lin_w"][0], params["lin_b"][0],
                    params["lin_w"][1], params["lin_b"][1], te=te)


if __name__ == "__main__":
    key = jax.random.PRNGKey(0)
    k_adj, k_edge, k_feat, k_param = jax.random.split(key, 4)

    # Lane-dense channel dims (multiples of 128); gnn_out_dim == gnn_hidden_dim
    # so JK 'max' over all layer outputs is well-defined.
    num_nodes, embed_dim, feat_dim = 1024, 64, 64
    gnn_in_dim = embed_dim + feat_dim                # 128
    gnn_hidden_dim = gnn_out_dim = 128
    gnn_num_layers, K = 3, 2
    mlp_in_dim, mlp_hidden_dim, mlp_out_dim = gnn_hidden_dim, 128, 1
    num_edges = 512

    # Random symmetric adjacency (no self-loops); gcn_norm in f32, then bf16.
    r = jax.random.uniform(k_adj, (num_nodes, num_nodes))
    upper = jnp.triu((r < 0.01).astype(jnp.float32), k=1)
    adj = upper + upper.T
    a_norm = gcn_norm_dense(adj)
    a_norm_bf16 = a_norm.astype(jnp.bfloat16)

    edge_label_index = jax.random.randint(k_edge, (2, num_edges), 0, num_nodes)
    x_feature = jax.random.normal(k_feat, (num_nodes, feat_dim), jnp.float32)

    params = init_params(
        k_param, num_nodes=num_nodes, embed_dim=embed_dim,
        gnn_in_dim=gnn_in_dim, gnn_hidden_dim=gnn_hidden_dim,
        gnn_out_dim=gnn_out_dim, gnn_num_layers=gnn_num_layers, K=K,
        mlp_in_dim=mlp_in_dim, mlp_hidden_dim=mlp_hidden_dim,
        mlp_out_dim=mlp_out_dim)

    fwd = jax.jit(functools.partial(dea_gnn_jk_forward, K=K))
    logits = fwd(params, x_feature, edge_label_index, a_norm_bf16)
    jax.block_until_ready(logits)
    assert logits.shape == (num_edges,)
    assert bool(jnp.all(jnp.isfinite(logits)))
    print("KERNEL_OK")
</pallas_src>

<mosaic_0001>
module attributes {stable_mosaic.version = 11 : i64} {
  func.func @spmm_kernel(%arg0: i32, %arg1: i32, %arg2: memref<512x512xbf16, #tpu.memory_space<vmem>>, %arg3: memref<1024x128xbf16, #tpu.memory_space<vmem>>, %arg4: memref<512x128xbf16, #tpu.memory_space<vmem>>, %arg5: memref<512x128xf32, #tpu.memory_space<vmem>>) attributes {dimension_semantics = [#tpu.dimension_semantics<parallel>, #tpu.dimension_semantics<arbitrary>], iteration_bounds = array<i64: 2, 2>, scalar_prefetch = 0 : i64, scratch_operands = 1 : i64, tpu.core_type = #tpu.core_type<tc>, window_params = [{transform_indices = @transform_0, window_bounds = array<i64: 512, 512>}, {pipeline_mode = #tpu.pipeline_mode<synchronous>, transform_indices = @transform_1, window_bounds = array<i64: 1024, 128>}, {transform_indices = @transform_2, window_bounds = array<i64: 512, 128>}]} {
    %c0_i32 = arith.constant 0 : i32
    %0 = arith.cmpi eq, %arg1, %c0_i32 : i32
    %1 = arith.extui %0 : i1 to i32
    %c0_i32_0 = arith.constant 0 : i32
    %2 = arith.cmpi ne, %1, %c0_i32_0 : i32
    scf.if %2 {
      %cst_8 = arith.constant 0.000000e+00 : f32
      %15 = vector.broadcast %cst_8 : f32 to vector<512x128xf32>
      %c0_9 = arith.constant 0 : index
      %c0_10 = arith.constant 0 : index
      %16 = vector.load %arg5[%c0_9, %c0_10] : memref<512x128xf32, #tpu.memory_space<vmem>>, vector<512x128xf32>
      tpu.vector_store %arg5[%c0_9, %c0_10], %15 {strides = array<i32>} : memref<512x128xf32, #tpu.memory_space<vmem>>, vector<512x128xf32>,
    } else {
    }
    %c512_i32 = arith.constant 512 : i32
    %3 = arith.muli %arg1, %c512_i32 : i32
    %4 = tpu.assume_multiple %3, 512 : i32
    %5 = arith.index_cast %4 : i32 to index
    %c0 = arith.constant 0 : index
    %6 = vector.load %arg3[%5, %c0] : memref<1024x128xbf16, #tpu.memory_space<vmem>>, vector<512x128xbf16>
    %c0_1 = arith.constant 0 : index
    %c0_2 = arith.constant 0 : index
    %7 = vector.load %arg5[%c0_1, %c0_2] : memref<512x128xf32, #tpu.memory_space<vmem>>, vector<512x128xf32>
    %c0_3 = arith.constant 0 : index
    %c0_4 = arith.constant 0 : index
    %8 = vector.load %arg2[%c0_3, %c0_4] : memref<512x512xbf16, #tpu.memory_space<vmem>>, vector<512x512xbf16>
    %cst = arith.constant dense<0.000000e+00> : vector<512x128xf32>
    %9 = tpu.matmul %8, %6, %cst {dimension_numbers = #tpu.dot_dimension_numbers<[1], [0], [0], [1], [0, 0, 1, 1], [], []>} : vector<512x512xbf16>, vector<512x128xbf16>, vector<512x128xf32> -> vector<512x128xf32>
    %10 = arith.addf %7, %9 : vector<512x128xf32>
    %c0_5 = arith.constant 0 : index
    %c0_6 = arith.constant 0 : index
    %11 = vector.load %arg5[%c0_5, %c0_6] : memref<512x128xf32, #tpu.memory_space<vmem>>, vector<512x128xf32>
    tpu.vector_store %arg5[%c0_5, %c0_6], %10 {strides = array<i32>} : memref<512x128xf32, #tpu.memory_space<vmem>>, vector<512x128xf32>,
    %c1_i32 = arith.constant 1 : i32
    %12 = arith.cmpi eq, %arg1, %c1_i32 : i32
    %13 = arith.extui %12 : i1 to i32
    %c0_i32_7 = arith.constant 0 : i32
    %14 = arith.cmpi ne, %13, %c0_i32_7 : i32
    scf.if %14 {
      %c0_8 = arith.constant 0 : index
      %c0_9 = arith.constant 0 : index
      %15 = vector.load %arg5[%c0_8, %c0_9] : memref<512x128xf32, #tpu.memory_space<vmem>>, vector<512x128xf32>
      %16 = arith.truncf %15 : vector<512x128xf32> to vector<512x128xbf16>
      %c0_10 = arith.constant 0 : index
      %c0_11 = arith.constant 0 : index
      %17 = vector.load %arg4[%c0_10, %c0_11] : memref<512x128xbf16, #tpu.memory_space<vmem>>, vector<512x128xbf16>
      tpu.vector_store %arg4[%c0_10, %c0_11], %16 {strides = array<i32>} : memref<512x128xbf16, #tpu.memory_space<vmem>>, vector<512x128xbf16>,
    } else {
    }
    return
  }
  func.func @transform_0(%arg0: i32, %arg1: i32) -> (i32, i32) {
    %c0_i32 = arith.constant 0 : i32
    return %arg0, %arg1 : i32, i32
  }
  func.func @transform_1(%arg0: i32, %arg1: i32) -> (i32, i32) {
    %c0_i32 = arith.constant 0 : i32
    %c0_i32_0 = arith.constant 0 : i32
    %c0_i32_1 = arith.constant 0 : i32
    return %c0_i32, %c0_i32_0 : i32, i32
  }
  func.func @transform_2(%arg0: i32, %arg1: i32) -> (i32, i32) {
    %c0_i32 = arith.constant 0 : i32
    %c0_i32_0 = arith.constant 0 : i32
    return %arg0, %c0_i32 : i32, i32
  }
}

module attributes {stable_mosaic.version = 11 : i64} {
  func.func @tag_combine_kernel(%arg0: i32, %arg1: memref<512x128xbf16, #tpu.memory_space<vmem>>, %arg2: memref<512x128xbf16, #tpu.memory_space<vmem>>, %arg3: memref<512x128xbf16, #tpu.memory_space<vmem>>, %arg4: memref<384x128xbf16, #tpu.memory_space<vmem>>, %arg5: memref<1x128xf32, #tpu.memory_space<vmem>>, %arg6: memref<512x128xf32, #tpu.memory_space<vmem>>, %arg7: memref<512x128xbf16, #tpu.memory_space<vmem>>, %arg8: memref<512x128xf32, #tpu.memory_space<vmem>>) attributes {dimension_semantics = [#tpu.dimension_semantics<parallel>], iteration_bounds = array<i64: 2>, scalar_prefetch = 0 : i64, scratch_operands = 0 : i64, tpu.core_type = #tpu.core_type<tc>, window_params = [{transform_indices = @transform_0, window_bounds = array<i64: 512, 128>}, {transform_indices = @transform_1, window_bounds = array<i64: 512, 128>}, {transform_indices = @transform_2, window_bounds = array<i64: 512, 128>}, {pipeline_mode = #tpu.pipeline_mode<synchronous>, transform_indices = @transform_3, window_bounds = array<i64: 384, 128>}, {pipeline_mode = #tpu.pipeline_mode<synchronous>, transform_indices = @transform_4, window_bounds = array<i64: 1, 128>}, {transform_indices = @transform_5, window_bounds = array<i64: 512, 128>}, {transform_indices = @transform_6, window_bounds = array<i64: 512, 128>}, {transform_indices = @transform_7, window_bounds = array<i64: 512, 128>}]} {
    %c0 = arith.constant 0 : index
    %c0_0 = arith.constant 0 : index
    %0 = vector.load %arg1[%c0, %c0_0] : memref<512x128xbf16, #tpu.memory_space<vmem>>, vector<512x128xbf16>
    %c0_1 = arith.constant 0 : index
    %c0_2 = arith.constant 0 : index
    %1 = vector.load %arg2[%c0_1, %c0_2] : memref<512x128xbf16, #tpu.memory_space<vmem>>, vector<512x128xbf16>
    %c0_3 = arith.constant 0 : index
    %c0_4 = arith.constant 0 : index
    %2 = vector.load %arg3[%c0_3, %c0_4] : memref<512x128xbf16, #tpu.memory_space<vmem>>, vector<512x128xbf16>
    %3 = tpu.concatenate %0, %1, %2 in 1 : vector<512x128xbf16>, vector<512x128xbf16>, vector<512x128xbf16> -> vector<512x384xbf16>
    %c0_5 = arith.constant 0 : index
    %c0_6 = arith.constant 0 : index
    %4 = vector.load %arg4[%c0_5, %c0_6] : memref<384x128xbf16, #tpu.memory_space<vmem>>, vector<384x128xbf16>
    %cst = arith.constant dense<0.000000e+00> : vector<512x128xf32>
    %5 = tpu.matmul %3, %4, %cst {dimension_numbers = #tpu.dot_dimension_numbers<[1], [0], [0], [1], [0, 0, 1, 1], [], []>} : vector<512x384xbf16>, vector<384x128xbf16>, vector<512x128xf32> -> vector<512x128xf32>
    %c0_7 = arith.constant 0 : index
    %c0_8 = arith.constant 0 : index
    %6 = vector.load %arg5[%c0_7, %c0_8] : memref<1x128xf32, #tpu.memory_space<vmem>>, vector<1x128xf32>
    %7 = vector.broadcast %6 : vector<1x128xf32> to vector<512x128xf32>
    %8 = arith.addf %5, %7 : vector<512x128xf32>
    %cst_9 = arith.constant 0.000000e+00 : f32
    %9 = vector.broadcast %cst_9 : f32 to vector<512x128xf32>
    %10 = arith.maximumf %8, %9 : vector<512x128xf32>
    %11 = arith.truncf %10 : vector<512x128xf32> to vector<512x128xbf16>
    %c0_10 = arith.constant 0 : index
    %c0_11 = arith.constant 0 : index
    %12 = vector.load %arg7[%c0_10, %c0_11] : memref<512x128xbf16, #tpu.memory_space<vmem>>, vector<512x128xbf16>
    tpu.vector_store %arg7[%c0_10, %c0_11], %11 {strides = array<i32>} : memref<512x128xbf16, #tpu.memory_space<vmem>>, vector<512x128xbf16>,
    %c0_12 = arith.constant 0 : index
    %c0_13 = arith.constant 0 : index
    %13 = vector.load %arg6[%c0_12, %c0_13] : memref<512x128xf32, #tpu.memory_space<vmem>>, vector<512x128xf32>
    %14 = arith.maximumf %10, %13 : vector<512x128xf32>
    %c0_14 = arith.constant 0 : index
    %c0_15 = arith.constant 0 : index
    %15 = vector.load %arg8[%c0_14, %c0_15] : memref<512x128xf32, #tpu.memory_space<vmem>>, vector<512x128xf32>
    tpu.vector_store %arg8[%c0_14, %c0_15], %14 {strides = array<i32>} : memref<512x128xf32, #tpu.memory_space<vmem>>, vector<512x128xf32>,
    return
  }
  func.func @transform_0(%arg0: i32) -> (i32, i32) {
    %c0_i32 = arith.constant 0 : i32
    %c0_i32_0 = arith.constant 0 : i32
    return %arg0, %c0_i32 : i32, i32
  }
  func.func @transform_1(%arg0: i32) -> (i32, i32) {
    %c0_i32 = arith.constant 0 : i32
    %c0_i32_0 = arith.constant 0 : i32
    return %arg0, %c0_i32 : i32, i32
  }
  func.func @transform_2(%arg0: i32) -> (i32, i32) {
    %c0_i32 = arith.constant 0 : i32
    %c0_i32_0 = arith.constant 0 : i32
    return %arg0, %c0_i32 : i32, i32
  }
  func.func @transform_3(%arg0: i32) -> (i32, i32) {
    %c0_i32 = arith.constant 0 : i32
    %c0_i32_0 = arith.constant 0 : i32
    %c0_i32_1 = arith.constant 0 : i32
    return %c0_i32, %c0_i32_0 : i32, i32
  }
  func.func @transform_4(%arg0: i32) -> (i32, i32) {
    %c0_i32 = arith.constant 0 : i32
    %c0_i32_0 = arith.constant 0 : i32
    %c0_i32_1 = arith.constant 0 : i32
    return %c0_i32, %c0_i32_0 : i32, i32
  }
  func.func @transform_5(%arg0: i32) -> (i32, i32) {
    %c0_i32 = arith.constant 0 : i32
    %c0_i32_0 = arith.constant 0 : i32
    return %arg0, %c0_i32 : i32, i32
  }
  func.func @transform_6(%arg0: i32) -> (i32, i32) {
    %c0_i32 = arith.constant 0 : i32
    %c0_i32_0 = arith.constant 0 : i32
    return %arg0, %c0_i32 : i32, i32
  }
  func.func @transform_7(%arg0: i32) -> (i32, i32) {
    %c0_i32 = arith.constant 0 : i32
    %c0_i32_0 = arith.constant 0 : i32
    return %arg0, %c0_i32 : i32, i32
  }
}

module attributes {stable_mosaic.version = 11 : i64} {
  func.func @tag_combine_kernel(%arg0: i32, %arg1: memref<512x128xbf16, #tpu.memory_space<vmem>>, %arg2: memref<512x128xbf16, #tpu.memory_space<vmem>>, %arg3: memref<512x128xbf16, #tpu.memory_space<vmem>>, %arg4: memref<384x128xbf16, #tpu.memory_space<vmem>>, %arg5: memref<1x128xf32, #tpu.memory_space<vmem>>, %arg6: memref<512x128xf32, #tpu.memory_space<vmem>>, %arg7: memref<512x128xbf16, #tpu.memory_space<vmem>>, %arg8: memref<512x128xf32, #tpu.memory_space<vmem>>) attributes {dimension_semantics = [#tpu.dimension_semantics<parallel>], iteration_bounds = array<i64: 2>, scalar_prefetch = 0 : i64, scratch_operands = 0 : i64, tpu.core_type = #tpu.core_type<tc>, window_params = [{transform_indices = @transform_0, window_bounds = array<i64: 512, 128>}, {transform_indices = @transform_1, window_bounds = array<i64: 512, 128>}, {transform_indices = @transform_2, window_bounds = array<i64: 512, 128>}, {pipeline_mode = #tpu.pipeline_mode<synchronous>, transform_indices = @transform_3, window_bounds = array<i64: 384, 128>}, {pipeline_mode = #tpu.pipeline_mode<synchronous>, transform_indices = @transform_4, window_bounds = array<i64: 1, 128>}, {transform_indices = @transform_5, window_bounds = array<i64: 512, 128>}, {transform_indices = @transform_6, window_bounds = array<i64: 512, 128>}, {transform_indices = @transform_7, window_bounds = array<i64: 512, 128>}]} {
    %c0 = arith.constant 0 : index
    %c0_0 = arith.constant 0 : index
    %0 = vector.load %arg1[%c0, %c0_0] : memref<512x128xbf16, #tpu.memory_space<vmem>>, vector<512x128xbf16>
    %c0_1 = arith.constant 0 : index
    %c0_2 = arith.constant 0 : index
    %1 = vector.load %arg2[%c0_1, %c0_2] : memref<512x128xbf16, #tpu.memory_space<vmem>>, vector<512x128xbf16>
    %c0_3 = arith.constant 0 : index
    %c0_4 = arith.constant 0 : index
    %2 = vector.load %arg3[%c0_3, %c0_4] : memref<512x128xbf16, #tpu.memory_space<vmem>>, vector<512x128xbf16>
    %3 = tpu.concatenate %0, %1, %2 in 1 : vector<512x128xbf16>, vector<512x128xbf16>, vector<512x128xbf16> -> vector<512x384xbf16>
    %c0_5 = arith.constant 0 : index
    %c0_6 = arith.constant 0 : index
    %4 = vector.load %arg4[%c0_5, %c0_6] : memref<384x128xbf16, #tpu.memory_space<vmem>>, vector<384x128xbf16>
    %cst = arith.constant dense<0.000000e+00> : vector<512x128xf32>
    %5 = tpu.matmul %3, %4, %cst {dimension_numbers = #tpu.dot_dimension_numbers<[1], [0], [0], [1], [0, 0, 1, 1], [], []>} : vector<512x384xbf16>, vector<384x128xbf16>, vector<512x128xf32> -> vector<512x128xf32>
    %c0_7 = arith.constant 0 : index
    %c0_8 = arith.constant 0 : index
    %6 = vector.load %arg5[%c0_7, %c0_8] : memref<1x128xf32, #tpu.memory_space<vmem>>, vector<1x128xf32>
    %7 = vector.broadcast %6 : vector<1x128xf32> to vector<512x128xf32>
    %8 = arith.addf %5, %7 : vector<512x128xf32>
    %cst_9 = arith.constant 0.000000e+00 : f32
    %9 = vector.broadcast %cst_9 : f32 to vector<512x128xf32>
    %10 = arith.maximumf %8, %9 : vector<512x128xf32>
    %11 = arith.truncf %10 : vector<512x128xf32> to vector<512x128xbf16>
    %c0_10 = arith.constant 0 : index
    %c0_11 = arith.constant 0 : index
    %12 = vector.load %arg7[%c0_10, %c0_11] : memref<512x128xbf16, #tpu.memory_space<vmem>>, vector<512x128xbf16>
    tpu.vector_store %arg7[%c0_10, %c0_11], %11 {strides = array<i32>} : memref<512x128xbf16, #tpu.memory_space<vmem>>, vector<512x128xbf16>,
    %c0_12 = arith.constant 0 : index
    %c0_13 = arith.constant 0 : index
    %13 = vector.load %arg6[%c0_12, %c0_13] : memref<512x128xf32, #tpu.memory_space<vmem>>, vector<512x128xf32>
    %14 = arith.maximumf %10, %13 : vector<512x128xf32>
    %c0_14 = arith.constant 0 : index
    %c0_15 = arith.constant 0 : index
    %15 = vector.load %arg8[%c0_14, %c0_15] : memref<512x128xf32, #tpu.memory_space<vmem>>, vector<512x128xf32>
    tpu.vector_store %arg8[%c0_14, %c0_15], %14 {strides = array<i32>} : memref<512x128xf32, #tpu.memory_space<vmem>>, vector<512x128xf32>,
    return
  }
  func.func @transform_0(%arg0: i32) -> (i32, i32) {
    %c0_i32 = arith.constant 0 : i32
    %c0_i32_0 = arith.constant 0 : i32
    return %arg0, %c0_i32 : i32, i32
  }
  func.func @transform_1(%arg0: i32) -> (i32, i32) {
    %c0_i32 = arith.constant 0 : i32
    %c0_i32_0 = arith.constant 0 : i32
    return %arg0, %c0_i32 : i32, i32
  }
  func.func @transform_2(%arg0: i32) -> (i32, i32) {
    %c0_i32 = arith.constant 0 : i32
    %c0_i32_0 = arith.constant 0 : i32
    return %arg0, %c0_i32 : i32, i32
  }
  func.func @transform_3(%arg0: i32) -> (i32, i32) {
    %c0_i32 = arith.constant 0 : i32
    %c0_i32_0 = arith.constant 0 : i32
    %c0_i32_1 = arith.constant 0 : i32
    return %c0_i32, %c0_i32_0 : i32, i32
  }
  func.func @transform_4(%arg0: i32) -> (i32, i32) {
    %c0_i32 = arith.constant 0 : i32
    %c0_i32_0 = arith.constant 0 : i32
    %c0_i32_1 = arith.constant 0 : i32
    return %c0_i32, %c0_i32_0 : i32, i32
  }
  func.func @transform_5(%arg0: i32) -> (i32, i32) {
    %c0_i32 = arith.constant 0 : i32
    %c0_i32_0 = arith.constant 0 : i32
    return %arg0, %c0_i32 : i32, i32
  }
  func.func @transform_6(%arg0: i32) -> (i32, i32) {
    %c0_i32 = arith.constant 0 : i32
    %c0_i32_0 = arith.constant 0 : i32
    return %arg0, %c0_i32 : i32, i32
  }
  func.func @transform_7(%arg0: i32) -> (i32, i32) {
    %c0_i32 = arith.constant 0 : i32
    %c0_i32_0 = arith.constant 0 : i32
    return %arg0, %c0_i32 : i32, i32
  }
}

module attributes {stable_mosaic.version = 11 : i64} {
  func.func @edge_mlp_kernel(%arg0: i32, %arg1: memref<128x128xf32, #tpu.memory_space<vmem>>, %arg2: memref<128x128xf32, #tpu.memory_space<vmem>>, %arg3: memref<128x128xf32, #tpu.memory_space<vmem>>, %arg4: memref<128x1xf32, #tpu.memory_space<vmem>>, %arg5: memref<128x1xf32, #tpu.memory_space<vmem>>, %arg6: memref<1x1xf32, #tpu.memory_space<vmem>>, %arg7: memref<1x128xf32, #tpu.memory_space<vmem>>) attributes {dimension_semantics = [#tpu.dimension_semantics<parallel>], iteration_bounds = array<i64: 4>, scalar_prefetch = 0 : i64, scratch_operands = 0 : i64, tpu.core_type = #tpu.core_type<tc>, window_params = [{transform_indices = @transform_0, window_bounds = array<i64: 128, 128>}, {transform_indices = @transform_1, window_bounds = array<i64: 128, 128>}, {pipeline_mode = #tpu.pipeline_mode<synchronous>, transform_indices = @transform_2, window_bounds = array<i64: 128, 128>}, {pipeline_mode = #tpu.pipeline_mode<synchronous>, transform_indices = @transform_3, window_bounds = array<i64: 128, 1>}, {pipeline_mode = #tpu.pipeline_mode<synchronous>, transform_indices = @transform_4, window_bounds = array<i64: 128, 1>}, {pipeline_mode = #tpu.pipeline_mode<synchronous>, transform_indices = @transform_5, window_bounds = array<i64: 1, 1>}, {transform_indices = @transform_6, window_bounds = array<i64: 1, 128>}]} {
    %c0 = arith.constant 0 : index
    %c0_0 = arith.constant 0 : index
    %0 = vector.load %arg1[%c0, %c0_0] : memref<128x128xf32, #tpu.memory_space<vmem>>, vector<128x128xf32>
    %c0_1 = arith.constant 0 : index
    %c0_2 = arith.constant 0 : index
    %1 = vector.load %arg2[%c0_1, %c0_2] : memref<128x128xf32, #tpu.memory_space<vmem>>, vector<128x128xf32>
    %2 = arith.mulf %0, %1 : vector<128x128xf32>
    %c0_3 = arith.constant 0 : index
    %c0_4 = arith.constant 0 : index
    %3 = vector.load %arg3[%c0_3, %c0_4] : memref<128x128xf32, #tpu.memory_space<vmem>>, vector<128x128xf32>
    %cst = arith.constant dense<0.000000e+00> : vector<128x128xf32>
    %4 = tpu.matmul %3, %2, %cst {dimension_numbers = #tpu.dot_dimension_numbers<[1], [0], [0], [1], [0, 0, 1, 1], [], []>} : vector<128x128xf32>, vector<128x128xf32>, vector<128x128xf32> -> vector<128x128xf32>
    %c0_5 = arith.constant 0 : index
    %c0_6 = arith.constant 0 : index
    %5 = vector.load %arg4[%c0_5, %c0_6] : memref<128x1xf32, #tpu.memory_space<vmem>>, vector<128x1xf32>
    %6 = vector.broadcast %5 : vector<128x1xf32> to vector<128x128xf32>
    %7 = arith.addf %4, %6 : vector<128x128xf32>
    %cst_7 = arith.constant 0.000000e+00 : f32
    %8 = vector.broadcast %cst_7 : f32 to vector<128x128xf32>
    %9 = arith.maximumf %7, %8 : vector<128x128xf32>
    %c0_8 = arith.constant 0 : index
    %c0_9 = arith.constant 0 : index
    %10 = vector.load %arg5[%c0_8, %c0_9] : memref<128x1xf32, #tpu.memory_space<vmem>>, vector<128x1xf32>
    %11 = vector.broadcast %10 : vector<128x1xf32> to vector<128x128xf32>
    %12 = arith.mulf %9, %11 : vector<128x128xf32>
    %cst_10 = arith.constant dense<0.000000e+00> : vector<128xf32>
    %13 = vector.multi_reduction <add>, %12, %cst_10 [0] : vector<128x128xf32> to vector<128xf32>
    %14 = vector.shape_cast %13 : vector<128xf32> to vector<1x128xf32>
    %c0_11 = arith.constant 0 : index
    %c0_12 = arith.constant 0 : index
    %15 = vector.load %arg6[%c0_11, %c0_12] : memref<1x1xf32, #tpu.memory_space<vmem>>, vector<1x1xf32>
    %16 = vector.broadcast %15 : vector<1x1xf32> to vector<1x128xf32>
    %17 = arith.addf %14, %16 : vector<1x128xf32>
    %c0_13 = arith.constant 0 : index
    %c0_14 = arith.constant 0 : index
    %18 = vector.load %arg7[%c0_13, %c0_14] : memref<1x128xf32, #tpu.memory_space<vmem>>, vector<1x128xf32>
    tpu.vector_store %arg7[%c0_13, %c0_14], %17 {strides = array<i32>} : memref<1x128xf32, #tpu.memory_space<vmem>>, vector<1x128xf32>,
    return
  }
  func.func @transform_0(%arg0: i32) -> (i32, i32) {
    %c0_i32 = arith.constant 0 : i32
    %c0_i32_0 = arith.constant 0 : i32
    return %c0_i32, %arg0 : i32, i32
  }
  func.func @transform_1(%arg0: i32) -> (i32, i32) {
    %c0_i32 = arith.constant 0 : i32
    %c0_i32_0 = arith.constant 0 : i32
    return %c0_i32, %arg0 : i32, i32
  }
  func.func @transform_2(%arg0: i32) -> (i32, i32) {
    %c0_i32 = arith.constant 0 : i32
    %c0_i32_0 = arith.constant 0 : i32
    %c0_i32_1 = arith.constant 0 : i32
    return %c0_i32, %c0_i32_0 : i32, i32
  }
  func.func @transform_3(%arg0: i32) -> (i32, i32) {
    %c0_i32 = arith.constant 0 : i32
    %c0_i32_0 = arith.constant 0 : i32
    %c0_i32_1 = arith.constant 0 : i32
    return %c0_i32, %c0_i32_0 : i32, i32
  }
  func.func @transform_4(%arg0: i32) -> (i32, i32) {
    %c0_i32 = arith.constant 0 : i32
    %c0_i32_0 = arith.constant 0 : i32
    %c0_i32_1 = arith.constant 0 : i32
    return %c0_i32, %c0_i32_0 : i32, i32
  }
  func.func @transform_5(%arg0: i32) -> (i32, i32) {
    %c0_i32 = arith.constant 0 : i32
    %c0_i32_0 = arith.constant 0 : i32
    %c0_i32_1 = arith.constant 0 : i32
    return %c0_i32, %c0_i32_0 : i32, i32
  }
  func.func @transform_6(%arg0: i32) -> (i32, i32) {
    %c0_i32 = arith.constant 0 : i32
    %c0_i32_0 = arith.constant 0 : i32
    return %c0_i32, %arg0 : i32, i32
  }
}

</mosaic_0001>

<llo_original>
// kernel: dea_gnn_jk_forward.12
$region0: #{dea_gnn_jk_forward.12}
  #allocation0 [shape = 'u32[]', space=smem, size = 0x4, offset = 0x4, fixed_abs, tag = 'smem constant byte address 0x4 - core index']
  #allocation1 [shape = 'u32[144,128]{1,0:T(1,128)}', space=vmem, size = 0x12000, scoped, tag = 'internal scratch']
  %s0 = inlined_call_operand.vmem [shape: bf16[1024,128], index: 0, kind: input, shape index: {}]
  %s1 = inlined_call_operand.vmem [shape: bf16[1024,128], index: 1, kind: input, shape index: {}]
  %s2 = inlined_call_operand.vmem [shape: bf16[1024,128], index: 2, kind: input, shape index: {}]
  %s3 = inlined_call_operand.vmem [shape: bf16[384,128], index: 3, kind: input, shape index: {}]
  %s4 = inlined_call_operand.vmem [shape: f32[1,128], index: 4, kind: input, shape index: {}]
  %s5 = inlined_call_operand.vmem [shape: f32[1024,128], index: 5, kind: input, shape index: {}, may-alias: {5,7}]
  %s6 = inlined_call_operand.vmem [shape: bf16[1024,128], index: 6, kind: output, shape index: {0}]
  %s7 = inlined_call_operand.vmem [shape: f32[1024,128], index: 7, kind: output, shape index: {1}, may-alias: {5,7}]
  %8 = xla_tuple %s6, %s7
  %s9 = sld [smem:[#allocation0]]
  $region65: #{dea_gnn_jk_forward.12} parent=0
    _
  %s11 = ssub.s32 1, %s9
  %s12 = scalar_select 0, %s11, %s9
  loop: start=0, step=1, limit=4
  $region2: #{dea_gnn_jk_forward.12} parent=0 // loop_pre_header
    _
  $region3: #{dea_gnn_jk_forward.12} parent=0 // loop_header
    %s14 = sphi 0, %s18
    %p15 = scmp.ge.s32.totalorder %s14, 4
    %s24 = sphi 0, %s26
    %s27 = sphi 0, %s24
    %s28 = sphi 0, %s27
    %s44 = sphi 0, %s28
    %s50 = sphi 0, %s52
    %s53 = sphi 0, %s50
    %s54 = sphi 0, %s53
    %s70 = sphi 0, %s54
    %s76 = sphi 0, %s78
    %s79 = sphi 0, %s76
    %s80 = sphi 0, %s79
    %s96 = sphi 0, %s80
    %s100 = sphi 0, %s100
    %s102 = sphi 0, %s100
    %s103 = sphi 0, %s102
    %s117 = sphi 0, %s103
    %s121 = sphi 0, %s121
    %s123 = sphi 0, %s121
    %s124 = sphi 0, %s123
    %s138 = sphi 0, %s124
    %s144 = sphi 0, %s146
    %s147 = sphi 0, %s144
    %s148 = sphi 0, %s147
    %s164 = sphi 0, %s148
    %s170 = sphi 0, %s172
    %s173 = sphi 0, %s170
    %s174 = sphi 0, %s173
    %s190 = sphi 0, %s174
    %s196 = sphi 0, %s198
    %s199 = sphi 0, %s196
    %s200 = sphi 0, %s199
    %s216 = sphi 0, %s200
  $region4: #{dea_gnn_jk_forward.12} parent=0 // loop_header_branch
    %17 = sbr.rel (%p15) target = $region8
  $region5: #{dea_gnn_jk_forward.12} parent=0 // loop_body
    %s19 = ssub.s32 %s14, 1
    %s20 = ssub.s32 %s14, 2
    %s21 = sadd.s32 %s14, 1
    %s22 = ssub.s32 %s14, %s21
    %p23 = scmp.eq.s32.totalorder %s22, 0
    %s25 = sadd.s32 %s24, 1
    %s26 = scalar_select %p23, %s24, %s25
    %p29 = pneg %p23
    %p30 = scmp.eq.s32.totalorder %s14, 1
    %p31 = por %p29, %p30
    %p32 = scmp.ne.s32.totalorder %s24, %s27
    %p33 = scmp.eq.s32.totalorder %s14, 0
    %p34 = por %p32, %p33
    %p35 = scmp.ne.s32.totalorder %s24, %s27
    %p36 = scmp.eq.s32.totalorder %s19, 1
    %p37 = por %p35, %p36
    %p38 = scmp.ne.s32.totalorder %s27, %s28
    %p39 = scmp.eq.s32.totalorder %s19, 0
    %p40 = por %p38, %p39
    %p41 = scmp.ne.s32.totalorder %s27, %s28
    %p42 = scmp.eq.s32.totalorder %s20, 1
    %p43 = por %p41, %p42
    %p45 = scmp.ne.s32.totalorder %s28, %s44
    %p46 = scmp.eq.s32.totalorder %s20, 0
    %p47 = por %p45, %p46
    %s48 = ssub.s32 %s14, %s21
    %p49 = scmp.eq.s32.totalorder %s48, 0
    %s51 = sadd.s32 %s50, 1
    %s52 = scalar_select %p49, %s50, %s51
    %p55 = pneg %p49
    %p56 = scmp.eq.s32.totalorder %s14, 1
    %p57 = por %p55, %p56
    %p58 = scmp.ne.s32.totalorder %s50, %s53
    %p59 = scmp.eq.s32.totalorder %s14, 0
    %p60 = por %p58, %p59
    %p61 = scmp.ne.s32.totalorder %s50, %s53
    %p62 = scmp.eq.s32.totalorder %s19, 1
    %p63 = por %p61, %p62
    %p64 = scmp.ne.s32.totalorder %s53, %s54
    %p65 = scmp.eq.s32.totalorder %s19, 0
    %p66 = por %p64, %p65
    %p67 = scmp.ne.s32.totalorder %s53, %s54
    %p68 = scmp.eq.s32.totalorder %s20, 1
    %p69 = por %p67, %p68
    %p71 = scmp.ne.s32.totalorder %s54, %s70
    %p72 = scmp.eq.s32.totalorder %s20, 0
    %p73 = por %p71, %p72
    %s74 = ssub.s32 %s14, %s21
    %p75 = scmp.eq.s32.totalorder %s74, 0
    %s77 = sadd.s32 %s76, 1
    %s78 = scalar_select %p75, %s76, %s77
    %p81 = pneg %p75
    %p82 = scmp.eq.s32.totalorder %s14, 1
    %p83 = por %p81, %p82
    %p84 = scmp.ne.s32.totalorder %s76, %s79
    %p85 = scmp.eq.s32.totalorder %s14, 0
    %p86 = por %p84, %p85
    %p87 = scmp.ne.s32.totalorder %s76, %s79
    %p88 = scmp.eq.s32.totalorder %s19, 1
    %p89 = por %p87, %p88
    %p90 = scmp.ne.s32.totalorder %s79, %s80
    %p91 = scmp.eq.s32.totalorder %s19, 0
    %p92 = por %p90, %p91
    %p93 = scmp.ne.s32.totalorder %s79, %s80
    %p94 = scmp.eq.s32.totalorder %s20, 1
    %p95 = por %p93, %p94
    %p97 = scmp.ne.s32.totalorder %s80, %s96
    %p98 = scmp.eq.s32.totalorder %s20, 0
    %p99 = por %p97, %p98
    %s101 = sadd.s32 %s100, 1
    %p104 = scmp.eq.s32.totalorder %s14, 1
    %p105 = scmp.ne.s32.totalorder %s100, %s102
    %p106 = scmp.eq.s32.totalorder %s14, 0
    %p107 = por %p105, %p106
    %p108 = scmp.ne.s32.totalorder %s100, %s102
    %p109 = scmp.eq.s32.totalorder %s19, 1
    %p110 = por %p108, %p109
    %p111 = scmp.ne.s32.totalorder %s102, %s103
    %p112 = scmp.eq.s32.totalorder %s19, 0
    %p113 = por %p111, %p112
    %p114 = scmp.ne.s32.totalorder %s102, %s103
    %p115 = scmp.eq.s32.totalorder %s20, 1
    %p116 = por %p114, %p115
    %p118 = scmp.ne.s32.totalorder %s103, %s117
    %p119 = scmp.eq.s32.totalorder %s20, 0
    %p120 = por %p118, %p119
    %s122 = sadd.s32 %s121, 1
    %p125 = scmp.eq.s32.totalorder %s14, 1
    %p126 = scmp.ne.s32.totalorder %s121, %s123
    %p127 = scmp.eq.s32.totalorder %s14, 0
    %p128 = por %p126, %p127
    %p129 = scmp.ne.s32.totalorder %s121, %s123
    %p130 = scmp.eq.s32.totalorder %s19, 1
    %p131 = por %p129, %p130
    %p132 = scmp.ne.s32.totalorder %s123, %s124
    %p133 = scmp.eq.s32.totalorder %s19, 0
    %p134 = por %p132, %p133
    %p135 = scmp.ne.s32.totalorder %s123, %s124
    %p136 = scmp.eq.s32.totalorder %s20, 1
    %p137 = por %p135, %p136
    %p139 = scmp.ne.s32.totalorder %s124, %s138
    %p140 = scmp.eq.s32.totalorder %s20, 0
    %p141 = por %p139, %p140
    %s142 = ssub.s32 %s14, %s21
    %p143 = scmp.eq.s32.totalorder %s142, 0
    %s145 = sadd.s32 %s144, 1
    %s146 = scalar_select %p143, %s144, %s145
    %p149 = pneg %p143
    %p150 = scmp.eq.s32.totalorder %s14, 1
    %p151 = por %p149, %p150
    %p152 = scmp.ne.s32.totalorder %s144, %s147
    %p153 = scmp.eq.s32.totalorder %s14, 0
    %p154 = por %p152, %p153
    %p155 = scmp.ne.s32.totalorder %s144, %s147
    %p156 = scmp.eq.s32.totalorder %s19, 1
    %p157 = por %p155, %p156
    %p158 = scmp.ne.s32.totalorder %s147, %s148
    %p159 = scmp.eq.s32.totalorder %s19, 0
    %p160 = por %p158, %p159
    %p161 = scmp.ne.s32.totalorder %s147, %s148
    %p162 = scmp.eq.s32.totalorder %s20, 1
    %p163 = por %p161, %p162
    %p165 = scmp.ne.s32.totalorder %s148, %s164
    %p166 = scmp.eq.s32.totalorder %s20, 0
    %p167 = por %p165, %p166
    %s168 = ssub.s32 %s14, %s21
    %p169 = scmp.eq.s32.totalorder %s168, 0
    %s171 = sadd.s32 %s170, 1
    %s172 = scalar_select %p169, %s170, %s171
    %p175 = pneg %p169
    %p176 = scmp.eq.s32.totalorder %s14, 1
    %p177 = por %p175, %p176
    %p178 = scmp.ne.s32.totalorder %s170, %s173
    %p179 = scmp.eq.s32.totalorder %s14, 0
    %p180 = por %p178, %p179
    %p181 = scmp.ne.s32.totalorder %s170, %s173
    %p182 = scmp.eq.s32.totalorder %s19, 1
    %p183 = por %p181, %p182
    %p184 = scmp.ne.s32.totalorder %s173, %s174
    %p185 = scmp.eq.s32.totalorder %s19, 0
    %p186 = por %p184, %p185
    %p187 = scmp.ne.s32.totalorder %s173, %s174
    %p188 = scmp.eq.s32.totalorder %s20, 1
    %p189 = por %p187, %p188
    %p191 = scmp.ne.s32.totalorder %s174, %s190
    %p192 = scmp.eq.s32.totalorder %s20, 0
    %p193 = por %p191, %p192
    %s194 = ssub.s32 %s14, %s21
    %p195 = scmp.eq.s32.totalorder %s194, 0
    %s197 = sadd.s32 %s196, 1
    %s198 = scalar_select %p195, %s196, %s197
    %p201 = pneg %p195
    %p202 = scmp.eq.s32.totalorder %s14, 1
    %p203 = por %p201, %p202
    %p204 = scmp.ne.s32.totalorder %s196, %s199
    %p205 = scmp.eq.s32.totalorder %s14, 0
    %p206 = por %p204, %p205
    %p207 = scmp.ne.s32.totalorder %s196, %s199
    %p208 = scmp.eq.s32.totalorder %s19, 1
    %p209 = por %p207, %p208
    %p210 = scmp.ne.s32.totalorder %s199, %s200
    %p211 = scmp.eq.s32.totalorder %s19, 0
    %p212 = por %p210, %p211
    %p213 = scmp.ne.s32.totalorder %s199, %s200
    %p214 = scmp.eq.s32.totalorder %s20, 1
    %p215 = por %p213, %p214
    %p217 = scmp.ne.s32.totalorder %s200, %s216
    %p218 = scmp.eq.s32.totalorder %s20, 0
    %p219 = por %p217, %p218
    %p220 = scmp.le.s32.totalorder 1, %s14
    %p221 = scmp.lt.s32.totalorder %s14, 3
    %p222 = pnand %p220, %p221
    %p223 = pneg %p222
    // Predicated region
    $region9: #{dea_gnn_jk_forward.12} parent=5 // pred_check
      _
    $region10: #{dea_gnn_jk_forward.12} parent=5 // pred_check_branch
      %225 = sbr.rel (%p222) target = $region12
    $region11: #{dea_gnn_jk_forward.12} parent=5 // pred_region
      %s226 = ssub.s32 %s14, 1
      // Predicated region
      $region13: #{dea_gnn_jk_forward.12} parent=11 // pred_check
        %p227 = pneg %p113
      $region14: #{dea_gnn_jk_forward.12} parent=11 // pred_check_branch
        %229 = sbr.rel (%p227) target = $region16
      $region15: #{dea_gnn_jk_forward.12} parent=11 // pred_region
        _
      $region16: #{dea_gnn_jk_forward.12} parent=11 // pred_fallthru
        _
      // Predicated region
      $region17: #{dea_gnn_jk_forward.12} parent=11 // pred_check
        %p230 = pneg %p134
      $region18: #{dea_gnn_jk_forward.12} parent=11 // pred_check_branch
        %232 = sbr.rel (%p230) target = $region20
      $region19: #{dea_gnn_jk_forward.12} parent=11 // pred_region
        _
      $region20: #{dea_gnn_jk_forward.12} parent=11 // pred_fallthru
        _
    $region12: #{dea_gnn_jk_forward.12} parent=5 // pred_fallthru
      _
    %p233 = scmp.lt.s32.totalorder %s14, 2
    // Predicated region
    $region21: #{dea_gnn_jk_forward.12} parent=5 // pred_check
      %p234 = pneg %p233
    $region22: #{dea_gnn_jk_forward.12} parent=5 // pred_check_branch
      %236 = sbr.rel (%p234) target = $region24
    $region23: #{dea_gnn_jk_forward.12} parent=5 // pred_region
      // Predicated region
      $region25: #{dea_gnn_jk_forward.12} parent=23 // pred_check
        %p237 = pneg %p34
      $region26: #{dea_gnn_jk_forward.12} parent=23 // pred_check_branch
        %239 = sbr.rel (%p237) target = $region28
      $region27: #{dea_gnn_jk_forward.12} parent=23 // pred_region
        %s240 = smul.u32 64, %s14
        %p241 = scmp.lt.s32.totalorder %s240, 127
        %s242 = scalar_select %p241, %s240, 127
        %s243 = smul.addr %s242, 4
        %s244 = scalar_lea.vmem %s0, %s243
        %s245 = smul.u32 64, %s14
      $region28: #{dea_gnn_jk_forward.12} parent=23 // pred_fallthru
        _
      // Predicated region
      $region29: #{dea_gnn_jk_forward.12} parent=23 // pred_check
        %p246 = pneg %p60
      $region30: #{dea_gnn_jk_forward.12} parent=23 // pred_check_branch
        %248 = sbr.rel (%p246) target = $region32
      $region31: #{dea_gnn_jk_forward.12} parent=23 // pred_region
        %s249 = smul.u32 64, %s14
        %p250 = scmp.lt.s32.totalorder %s249, 127
        %s251 = scalar_select %p250, %s249, 127
        %s252 = smul.addr %s251, 4
        %s253 = scalar_lea.vmem %s1, %s252
        %s254 = smul.u32 64, %s14
      $region32: #{dea_gnn_jk_forward.12} parent=23 // pred_fallthru
        _
      // Predicated region
      $region33: #{dea_gnn_jk_forward.12} parent=23 // pred_check
        %p255 = pneg %p86
      $region34: #{dea_gnn_jk_forward.12} parent=23 // pred_check_branch
        %257 = sbr.rel (%p255) target = $region36
      $region35: #{dea_gnn_jk_forward.12} parent=23 // pred_region
        %s258 = smul.u32 64, %s14
        %p259 = scmp.lt.s32.totalorder %s258, 127
        %s260 = scalar_select %p259, %s258, 127
        %s261 = smul.addr %s260, 4
        %s262 = scalar_lea.vmem %s2, %s261
        %s263 = smul.u32 64, %s14
      $region36: #{dea_gnn_jk_forward.12} parent=23 // pred_fallthru
        _
      // Predicated region
      $region37: #{dea_gnn_jk_forward.12} parent=23 // pred_check
        %p264 = pneg %p154
      $region38: #{dea_gnn_jk_forward.12} parent=23 // pred_check_branch
        %266 = sbr.rel (%p264) target = $region40
      $region39: #{dea_gnn_jk_forward.12} parent=23 // pred_region
        %s267 = smul.u32 64, %s14
        %p268 = scmp.lt.s32.totalorder %s267, 127
        %s269 = scalar_select %p268, %s267, 127
        %s270 = smul.addr %s269, 8
        %s271 = scalar_lea.vmem %s5, %s270
        %s272 = smul.u32 64, %s14
      $region40: #{dea_gnn_jk_forward.12} parent=23 // pred_fallthru
        _
    $region24: #{dea_gnn_jk_forward.12} parent=5 // pred_fallthru
      _
    %p273 = scmp.le.s32.totalorder 1, %s14
    %p274 = scmp.lt.s32.totalorder %s14, 3
    %p275 = pnand %p273, %p274
    %p276 = pneg %p275
    // Predicated region
    $region41: #{dea_gnn_jk_forward.12} parent=5 // pred_check
      _
    $region42: #{dea_gnn_jk_forward.12} parent=5 // pred_check_branch
      %278 = sbr.rel (%p275) target = $region44
    $region43: #{dea_gnn_jk_forward.12} parent=5 // pred_region
      %s279 = ssub.s32 %s14, 1
      %s280 = smul.u32 64, %s19
      %p281 = scmp.lt.s32.totalorder %s280, 127
      %s282 = scalar_select %p281, %s280, 127
      %s283 = smul.addr %s282, 4
      %s284 = scalar_lea.vmem %s0, %s283
      %p285 = pneg %p40
      %p286 = pneg %p37
      %s287 = smul.u32 64, %s19
      %p288 = scmp.lt.s32.totalorder %s287, 127
      %s289 = scalar_select %p288, %s287, 127
      %s290 = smul.addr %s289, 4
      %s291 = scalar_lea.vmem %s1, %s290
      %p292 = pneg %p66
      %p293 = pneg %p63
      %s294 = smul.u32 64, %s19
      %p295 = scmp.lt.s32.totalorder %s294, 127
      %s296 = scalar_select %p295, %s294, 127
      %s297 = smul.addr %s296, 4
      %s298 = scalar_lea.vmem %s2, %s297
      %p299 = pneg %p92
      %p300 = pneg %p89
      %p301 = pneg %p113
      %p302 = pneg %p110
      %p303 = pneg %p134
      %p304 = pneg %p131
      %s305 = smul.u32 64, %s19
      %p306 = scmp.lt.s32.totalorder %s305, 127
      %s307 = scalar_select %p306, %s305, 127
      %s308 = smul.addr %s307, 8
      %s309 = scalar_lea.vmem %s5, %s308
      %p310 = pneg %p160
      %p311 = pneg %p157
      %p312 = pneg %p186
      %p313 = pneg %p183
      %s314 = smul.u32 64, %s19
      %p315 = scmp.lt.s32.totalorder %s314, 127
      %s316 = scalar_select %p315, %s314, 127
      %s317 = smul.addr %s316, 4
      %s318 = scalar_lea.vmem %s6, %s317
      %p319 = pneg %p212
      %p320 = pneg %p209
      %s321 = smul.u32 64, %s19
      %p322 = scmp.lt.s32.totalorder %s321, 127
      %s323 = scalar_select %p322, %s321, 127
      %s324 = smul.addr %s323, 8
      %s325 = scalar_lea.vmem %s7, %s324
      %s326 = smul.u32 64, %s19
      %p327 = scmp.lt.s32.totalorder %s326, 127
      %s328 = scalar_select %p327, %s326, 127
      %s329 = smul.addr %s328, 4
      %s330 = scalar_lea.vmem %s0, %s329
      %s331 = smul.u32 64, %s19
      %s332 = smul.u32 64, %s19
      %p333 = scmp.lt.s32.totalorder %s332, 127
      %s334 = scalar_select %p333, %s332, 127
      %s335 = smul.addr %s334, 4
      %s336 = scalar_lea.vmem %s1, %s335
      %s337 = smul.u32 64, %s19
      %s338 = smul.u32 64, %s19
      %p339 = scmp.lt.s32.totalorder %s338, 127
      %s340 = scalar_select %p339, %s338, 127
      %s341 = smul.addr %s340, 4
      %s342 = scalar_lea.vmem %s2, %s341
      %s343 = smul.u32 64, %s19
      %s344 = smul.u32 64, %s19
      %p345 = scmp.lt.s32.totalorder %s344, 127
      %s346 = scalar_select %p345, %s344, 127
      %s347 = smul.addr %s346, 8
      %s348 = scalar_lea.vmem %s5, %s347
      %s349 = smul.u32 64, %s19
      %s350 = smul.u32 64, %s19
      %p351 = scmp.lt.s32.totalorder %s350, 127
      %s352 = scalar_select %p351, %s350, 127
      %s353 = smul.addr %s352, 4
      %s354 = scalar_lea.vmem %s6, %s353
      %s355 = smul.u32 64, %s19
      %s356 = smul.u32 64, %s19
      %p357 = scmp.lt.s32.totalorder %s356, 127
      %s358 = scalar_select %p357, %s356, 127
      %s359 = smul.addr %s358, 8
      %s360 = scalar_lea.vmem %s7, %s359
      %s361 = smul.u32 64, %s19
      %v363 = vld [vmem:[%s330] sm:$0xf]
      %v364 = vld [vmem:[%s330 + $0x4] sm:$0xf]
      %v365 = vld [vmem:[%s330 + $0x8] sm:$0xf]
      %v366 = vld [vmem:[%s330 + $0xc] sm:$0xf]
      %v367 = vld [vmem:[%s330 + $0x10] sm:$0xf]
      %v368 = vld [vmem:[%s330 + $0x14] sm:$0xf]
      %v369 = vld [vmem:[%s330 + $0x18] sm:$0xf]
      %v370 = vld [vmem:[%s330 + $0x1c] sm:$0xf]
      %v371 = vld [vmem:[%s330 + $0x20] sm:$0xf]
      %v372 = vld [vmem:[%s330 + $0x24] sm:$0xf]
      %v373 = vld [vmem:[%s330 + $0x28] sm:$0xf]
      %v374 = vld [vmem:[%s330 + $0x2c] sm:$0xf]
      %v375 = vld [vmem:[%s330 + $0x30] sm:$0xf]
      %v376 = vld [vmem:[%s330 + $0x34] sm:$0xf]
      %v377 = vld [vmem:[%s330 + $0x38] sm:$0xf]
      %v378 = vld [vmem:[%s330 + $0x3c] sm:$0xf]
      %v379 = vld [vmem:[%s330 + $0x40] sm:$0xf]
      %v380 = vld [vmem:[%s330 + $0x44] sm:$0xf]
      %v381 = vld [vmem:[%s330 + $0x48] sm:$0xf]
      %v382 = vld [vmem:[%s330 + $0x4c] sm:$0xf]
      %v383 = vld [vmem:[%s330 + $0x50] sm:$0xf]
      %v384 = vld [vmem:[%s330 + $0x54] sm:$0xf]
      %v385 = vld [vmem:[%s330 + $0x58] sm:$0xf]
      %v386 = vld [vmem:[%s330 + $0x5c] sm:$0xf]
      %v387 = vld [vmem:[%s330 + $0x60] sm:$0xf]
      %v388 = vld [vmem:[%s330 + $0x64] sm:$0xf]
      %v389 = vld [vmem:[%s330 + $0x68] sm:$0xf]
      %v390 = vld [vmem:[%s330 + $0x6c] sm:$0xf]
      %v391 = vld [vmem:[%s330 + $0x70] sm:$0xf]
      %v392 = vld [vmem:[%s330 + $0x74] sm:$0xf]
      %v393 = vld [vmem:[%s330 + $0x78] sm:$0xf]
      %v394 = vld [vmem:[%s330 + $0x7c] sm:$0xf]
      %v395 = vld [vmem:[%s330 + $0x80] sm:$0xf]
      %v396 = vld [vmem:[%s330 + $0x84] sm:$0xf]
      %v397 = vld [vmem:[%s330 + $0x88] sm:$0xf]
      %v398 = vld [vmem:[%s330 + $0x8c] sm:$0xf]
      %v399 = vld [vmem:[%s330 + $0x90] sm:$0xf]
      %v400 = vld [vmem:[%s330 + $0x94] sm:$0xf]
      %v401 = vld [vmem:[%s330 + $0x98] sm:$0xf]
      %v402 = vld [vmem:[%s330 + $0x9c] sm:$0xf]
      %v403 = vld [vmem:[%s330 + $0xa0] sm:$0xf]
      %v404 = vld [vmem:[%s330 + $0xa4] sm:$0xf]
      %v405 = vld [vmem:[%s330 + $0xa8] sm:$0xf]
      %v406 = vld [vmem:[%s330 + $0xac] sm:$0xf]
      %v407 = vld [vmem:[%s330 + $0xb0] sm:$0xf]
      %v408 = vld [vmem:[%s330 + $0xb4] sm:$0xf]
      %v409 = vld [vmem:[%s330 + $0xb8] sm:$0xf]
      %v410 = vld [vmem:[%s330 + $0xbc] sm:$0xf]
      %v411 = vld [vmem:[%s330 + $0xc0] sm:$0xf]
      %v412 = vld [vmem:[%s330 + $0xc4] sm:$0xf]
      %v413 = vld [vmem:[%s330 + $0xc8] sm:$0xf]
      %v414 = vld [vmem:[%s330 + $0xcc] sm:$0xf]
      %v415 = vld [vmem:[%s330 + $0xd0] sm:$0xf]
      %v416 = vld [vmem:[%s330 + $0xd4] sm:$0xf]
      %v417 = vld [vmem:[%s330 + $0xd8] sm:$0xf]
      %v418 = vld [vmem:[%s330 + $0xdc] sm:$0xf]
      %v419 = vld [vmem:[%s330 + $0xe0] sm:$0xf]
      %v420 = vld [vmem:[%s330 + $0xe4] sm:$0xf]
      %v421 = vld [vmem:[%s330 + $0xe8] sm:$0xf]
      %v422 = vld [vmem:[%s330 + $0xec] sm:$0xf]
      %v423 = vld [vmem:[%s330 + $0xf0] sm:$0xf]
      %v424 = vld [vmem:[%s330 + $0xf4] sm:$0xf]
      %v425 = vld [vmem:[%s330 + $0xf8] sm:$0xf]
      %v426 = vld [vmem:[%s330 + $0xfc] sm:$0xf]
      %v427 = vld [vmem:[%s336] sm:$0xf]
      %v428 = vld [vmem:[%s336 + $0x4] sm:$0xf]
      %v429 = vld [vmem:[%s336 + $0x8] sm:$0xf]
      %v430 = vld [vmem:[%s336 + $0xc] sm:$0xf]
      %v431 = vld [vmem:[%s336 + $0x10] sm:$0xf]
      %v432 = vld [vmem:[%s336 + $0x14] sm:$0xf]
      %v433 = vld [vmem:[%s336 + $0x18] sm:$0xf]
      %v434 = vld [vmem:[%s336 + $0x1c] sm:$0xf]
      %v435 = vld [vmem:[%s336 + $0x20] sm:$0xf]
      %v436 = vld [vmem:[%s336 + $0x24] sm:$0xf]
      %v437 = vld [vmem:[%s336 + $0x28] sm:$0xf]
      %v438 = vld [vmem:[%s336 + $0x2c] sm:$0xf]
      %v439 = vld [vmem:[%s336 + $0x30] sm:$0xf]
      %v440 = vld [vmem:[%s336 + $0x34] sm:$0xf]
      %v441 = vld [vmem:[%s336 + $0x38] sm:$0xf]
      %v442 = vld [vmem:[%s336 + $0x3c] sm:$0xf]
      %v443 = vld [vmem:[%s336 + $0x40] sm:$0xf]
      %v444 = vld [vmem:[%s336 + $0x44] sm:$0xf]
      %v445 = vld [vmem:[%s336 + $0x48] sm:$0xf]
      %v446 = vld [vmem:[%s336 + $0x4c] sm:$0xf]
      %v447 = vld [vmem:[%s336 + $0x50] sm:$0xf]
      %v448 = vld [vmem:[%s336 + $0x54] sm:$0xf]
      %v449 = vld [vmem:[%s336 + $0x58] sm:$0xf]
      %v450 = vld [vmem:[%s336 + $0x5c] sm:$0xf]
      %v451 = vld [vmem:[%s336 + $0x60] sm:$0xf]
      %v452 = vld [vmem:[%s336 + $0x64] sm:$0xf]
      %v453 = vld [vmem:[%s336 + $0x68] sm:$0xf]
      %v454 = vld [vmem:[%s336 + $0x6c] sm:$0xf]
      %v455 = vld [vmem:[%s336 + $0x70] sm:$0xf]
      %v456 = vld [vmem:[%s336 + $0x74] sm:$0xf]
      %v457 = vld [vmem:[%s336 + $0x78] sm:$0xf]
      %v458 = vld [vmem:[%s336 + $0x7c] sm:$0xf]
      %v459 = vld [vmem:[%s336 + $0x80] sm:$0xf]
      %v460 = vld [vmem:[%s336 + $0x84] sm:$0xf]
      %v461 = vld [vmem:[%s336 + $0x88] sm:$0xf]
      %v462 = vld [vmem:[%s336 + $0x8c] sm:$0xf]
      %v463 = vld [vmem:[%s336 + $0x90] sm:$0xf]
      %v464 = vld [vmem:[%s336 + $0x94] sm:$0xf]
      %v465 = vld [vmem:[%s336 + $0x98] sm:$0xf]
      %v466 = vld [vmem:[%s336 + $0x9c] sm:$0xf]
      %v467 = vld [vmem:[%s336 + $0xa0] sm:$0xf]
      %v468 = vld [vmem:[%s336 + $0xa4] sm:$0xf]
      %v469 = vld [vmem:[%s336 + $0xa8] sm:$0xf]
      %v470 = vld [vmem:[%s336 + $0xac] sm:$0xf]
      %v471 = vld [vmem:[%s336 + $0xb0] sm:$0xf]
      %v472 = vld [vmem:[%s336 + $0xb4] sm:$0xf]
      %v473 = vld [vmem:[%s336 + $0xb8] sm:$0xf]
      %v474 = vld [vmem:[%s336 + $0xbc] sm:$0xf]
      %v475 = vld [vmem:[%s336 + $0xc0] sm:$0xf]
      %v476 = vld [vmem:[%s336 + $0xc4] sm:$0xf]
      %v477 = vld [vmem:[%s336 + $0xc8] sm:$0xf]
      %v478 = vld [vmem:[%s336 + $0xcc] sm:$0xf]
      %v479 = vld [vmem:[%s336 + $0xd0] sm:$0xf]
      %v480 = vld [vmem:[%s336 + $0xd4] sm:$0xf]
      %v481 = vld [vmem:[%s336 + $0xd8] sm:$0xf]
      %v482 = vld [vmem:[%s336 + $0xdc] sm:$0xf]
      %v483 = vld [vmem:[%s336 + $0xe0] sm:$0xf]
      %v484 = vld [vmem:[%s336 + $0xe4] sm:$0xf]
      %v485 = vld [vmem:[%s336 + $0xe8] sm:$0xf]
      %v486 = vld [vmem:[%s336 + $0xec] sm:$0xf]
      %v487 = vld [vmem:[%s336 + $0xf0] sm:$0xf]
      %v488 = vld [vmem:[%s336 + $0xf4] sm:$0xf]
      %v489 = vld [vmem:[%s336 + $0xf8] sm:$0xf]
      %v490 = vld [vmem:[%s336 + $0xfc] sm:$0xf]
      %v491 = vld [vmem:[%s342] sm:$0xf]
      %v492 = vld [vmem:[%s342 + $0x4] sm:$0xf]
      %v493 = vld [vmem:[%s342 + $0x8] sm:$0xf]
      %v494 = vld [vmem:[%s342 + $0xc] sm:$0xf]
      %v495 = vld [vmem:[%s342 + $0x10] sm:$0xf]
      %v496 = vld [vmem:[%s342 + $0x14] sm:$0xf]
      %v497 = vld [vmem:[%s342 + $0x18] sm:$0xf]
      %v498 = vld [vmem:[%s342 + $0x1c] sm:$0xf]
      %v499 = vld [vmem:[%s342 + $0x20] sm:$0xf]
      %v500 = vld [vmem:[%s342 + $0x24] sm:$0xf]
      %v501 = vld [vmem:[%s342 + $0x28] sm:$0xf]
      %v502 = vld [vmem:[%s342 + $0x2c] sm:$0xf]
      %v503 = vld [vmem:[%s342 + $0x30] sm:$0xf]
      %v504 = vld [vmem:[%s342 + $0x34] sm:$0xf]
      %v505 = vld [vmem:[%s342 + $0x38] sm:$0xf]
      %v506 = vld [vmem:[%s342 + $0x3c] sm:$0xf]
      %v507 = vld [vmem:[%s342 + $0x40] sm:$0xf]
      %v508 = vld [vmem:[%s342 + $0x44] sm:$0xf]
      %v509 = vld [vmem:[%s342 + $0x48] sm:$0xf]
      %v510 = vld [vmem:[%s342 + $0x4c] sm:$0xf]
      %v511 = vld [vmem:[%s342 + $0x50] sm:$0xf]
      %v512 = vld [vmem:[%s342 + $0x54] sm:$0xf]
      %v513 = vld [vmem:[%s342 + $0x58] sm:$0xf]
      %v514 = vld [vmem:[%s342 + $0x5c] sm:$0xf]
      %v515 = vld [vmem:[%s342 + $0x60] sm:$0xf]
      %v516 = vld [vmem:[%s342 + $0x64] sm:$0xf]
      %v517 = vld [vmem:[%s342 + $0x68] sm:$0xf]
      %v518 = vld [vmem:[%s342 + $0x6c] sm:$0xf]
      %v519 = vld [vmem:[%s342 + $0x70] sm:$0xf]
      %v520 = vld [vmem:[%s342 + $0x74] sm:$0xf]
      %v521 = vld [vmem:[%s342 + $0x78] sm:$0xf]
      %v522 = vld [vmem:[%s342 + $0x7c] sm:$0xf]
      %v523 = vld [vmem:[%s342 + $0x80] sm:$0xf]
      %v524 = vld [vmem:[%s342 + $0x84] sm:$0xf]
      %v525 = vld [vmem:[%s342 + $0x88] sm:$0xf]
      %v526 = vld [vmem:[%s342 + $0x8c] sm:$0xf]
      %v527 = vld [vmem:[%s342 + $0x90] sm:$0xf]
      %v528 = vld [vmem:[%s342 + $0x94] sm:$0xf]
      %v529 = vld [vmem:[%s342 + $0x98] sm:$0xf]
      %v530 = vld [vmem:[%s342 + $0x9c] sm:$0xf]
      %v531 = vld [vmem:[%s342 + $0xa0] sm:$0xf]
      %v532 = vld [vmem:[%s342 + $0xa4] sm:$0xf]
      %v533 = vld [vmem:[%s342 + $0xa8] sm:$0xf]
      %v534 = vld [vmem:[%s342 + $0xac] sm:$0xf]
      %v535 = vld [vmem:[%s342 + $0xb0] sm:$0xf]
      %v536 = vld [vmem:[%s342 + $0xb4] sm:$0xf]
      %v537 = vld [vmem:[%s342 + $0xb8] sm:$0xf]
      %v538 = vld [vmem:[%s342 + $0xbc] sm:$0xf]
      %v539 = vld [vmem:[%s342 + $0xc0] sm:$0xf]
      %v540 = vld [vmem:[%s342 + $0xc4] sm:$0xf]
      %v541 = vld [vmem:[%s342 + $0xc8] sm:$0xf]
      %v542 = vld [vmem:[%s342 + $0xcc] sm:$0xf]
      %v543 = vld [vmem:[%s342 + $0xd0] sm:$0xf]
      %v544 = vld [vmem:[%s342 + $0xd4] sm:$0xf]
      %v545 = vld [vmem:[%s342 + $0xd8] sm:$0xf]
      %v546 = vld [vmem:[%s342 + $0xdc] sm:$0xf]
      %v547 = vld [vmem:[%s342 + $0xe0] sm:$0xf]
      %v548 = vld [vmem:[%s342 + $0xe4] sm:$0xf]
      %v549 = vld [vmem:[%s342 + $0xe8] sm:$0xf]
      %v550 = vld [vmem:[%s342 + $0xec] sm:$0xf]
      %v551 = vld [vmem:[%s342 + $0xf0] sm:$0xf]
      %v552 = vld [vmem:[%s342 + $0xf4] sm:$0xf]
      %v553 = vld [vmem:[%s342 + $0xf8] sm:$0xf]
      %v554 = vld [vmem:[%s342 + $0xfc] sm:$0xf]
      %v619 = vunpack.c.l.b16 %v363
      %v620 = vunpack.c.l.b16 %v364
      %v621 = vunpack.c.l.b16 %v365
      %v622 = vunpack.c.l.b16 %v366
      %v623 = vunpack.c.l.b16 %v367
      %v624 = vunpack.c.l.b16 %v368
      %v625 = vunpack.c.l.b16 %v369
      %v626 = vunpack.c.l.b16 %v370
      %v627 = vunpack.c.l.b16 %v371
      %v628 = vunpack.c.l.b16 %v372
      %v629 = vunpack.c.l.b16 %v373
      %v630 = vunpack.c.l.b16 %v374
      %v631 = vunpack.c.l.b16 %v375
      %v632 = vunpack.c.l.b16 %v376
      %v633 = vunpack.c.l.b16 %v377
      %v634 = vunpack.c.l.b16 %v378
      %v635 = vunpack.c.l.b16 %v379
      %v636 = vunpack.c.l.b16 %v380
      %v637 = vunpack.c.l.b16 %v381
      %v638 = vunpack.c.l.b16 %v382
      %v639 = vunpack.c.l.b16 %v383
      %v640 = vunpack.c.l.b16 %v384
      %v641 = vunpack.c.l.b16 %v385
      %v642 = vunpack.c.l.b16 %v386
      %v643 = vunpack.c.l.b16 %v387
      %v644 = vunpack.c.l.b16 %v388
      %v645 = vunpack.c.l.b16 %v389
      %v646 = vunpack.c.l.b16 %v390
      %v647 = vunpack.c.l.b16 %v391
      %v648 = vunpack.c.l.b16 %v392
      %v649 = vunpack.c.l.b16 %v393
      %v650 = vunpack.c.l.b16 %v394
      %v651 = vunpack.c.l.b16 %v395
      %v652 = vunpack.c.l.b16 %v396
      %v653 = vunpack.c.l.b16 %v397
      %v654 = vunpack.c.l.b16 %v398
      %v655 = vunpack.c.l.b16 %v399
      %v656 = vunpack.c.l.b16 %v400
      %v657 = vunpack.c.l.b16 %v401
      %v658 = vunpack.c.l.b16 %v402
      %v659 = vunpack.c.l.b16 %v403
      %v660 = vunpack.c.l.b16 %v404
      %v661 = vunpack.c.l.b16 %v405
      %v662 = vunpack.c.l.b16 %v406
      %v663 = vunpack.c.l.b16 %v407
      %v664 = vunpack.c.l.b16 %v408
      %v665 = vunpack.c.l.b16 %v409
      %v666 = vunpack.c.l.b16 %v410
      %v667 = vunpack.c.l.b16 %v411
      %v668 = vunpack.c.l.b16 %v412
      %v669 = vunpack.c.l.b16 %v413
      %v670 = vunpack.c.l.b16 %v414
      %v671 = vunpack.c.l.b16 %v415
      %v672 = vunpack.c.l.b16 %v416
      %v673 = vunpack.c.l.b16 %v417
      %v674 = vunpack.c.l.b16 %v418
      %v675 = vunpack.c.l.b16 %v419
      %v676 = vunpack.c.l.b16 %v420
      %v677 = vunpack.c.l.b16 %v421
      %v678 = vunpack.c.l.b16 %v422
      %v679 = vunpack.c.l.b16 %v423
      %v680 = vunpack.c.l.b16 %v424
      %v681 = vunpack.c.l.b16 %v425
      %v682 = vunpack.c.l.b16 %v426
      %v683 = vpack.c.b16 %v620, %v619
      %v684 = vpack.c.b16 %v622, %v621
      %v685 = vpack.c.b16 %v624, %v623
      %v686 = vpack.c.b16 %v626, %v625
      %v687 = vpack.c.b16 %v628, %v627
      %v688 = vpack.c.b16 %v630, %v629
      %v689 = vpack.c.b16 %v632, %v631
      %v690 = vpack.c.b16 %v634, %v633
      %v691 = vpack.c.b16 %v636, %v635
      %v692 = vpack.c.b16 %v638, %v637
      %v693 = vpack.c.b16 %v640, %v639
      %v694 = vpack.c.b16 %v642, %v641
      %v695 = vpack.c.b16 %v644, %v643
      %v696 = vpack.c.b16 %v646, %v645
      %v697 = vpack.c.b16 %v648, %v647
      %v698 = vpack.c.b16 %v650, %v649
      %v699 = vpack.c.b16 %v652, %v651
      %v700 = vpack.c.b16 %v654, %v653
      %v701 = vpack.c.b16 %v656, %v655
      %v702 = vpack.c.b16 %v658, %v657
      %v703 = vpack.c.b16 %v660, %v659
      %v704 = vpack.c.b16 %v662, %v661
      %v705 = vpack.c.b16 %v664, %v663
      %v706 = vpack.c.b16 %v666, %v665
      %v707 = vpack.c.b16 %v668, %v667
      %v708 = vpack.c.b16 %v670, %v669
      %v709 = vpack.c.b16 %v672, %v671
      %v710 = vpack.c.b16 %v674, %v673
      %v711 = vpack.c.b16 %v676, %v675
      %v712 = vpack.c.b16 %v678, %v677
      %v713 = vpack.c.b16 %v680, %v679
      %v714 = vpack.c.b16 %v682, %v681
      %v811 = vunpack.c.l.b16 %v427
      %v812 = vunpack.c.l.b16 %v428
      %v813 = vunpack.c.l.b16 %v429
      %v814 = vunpack.c.l.b16 %v430
      %v815 = vunpack.c.l.b16 %v431
      %v816 = vunpack.c.l.b16 %v432
      %v817 = vunpack.c.l.b16 %v433
      %v818 = vunpack.c.l.b16 %v434
      %v819 = vunpack.c.l.b16 %v435
      %v820 = vunpack.c.l.b16 %v436
      %v821 = vunpack.c.l.b16 %v437
      %v822 = vunpack.c.l.b16 %v438
      %v823 = vunpack.c.l.b16 %v439
      %v824 = vunpack.c.l.b16 %v440
      %v825 = vunpack.c.l.b16 %v441
      %v826 = vunpack.c.l.b16 %v442
      %v827 = vunpack.c.l.b16 %v443
      %v828 = vunpack.c.l.b16 %v444
      %v829 = vunpack.c.l.b16 %v445
      %v830 = vunpack.c.l.b16 %v446
      %v831 = vunpack.c.l.b16 %v447
      %v832 = vunpack.c.l.b16 %v448
      %v833 = vunpack.c.l.b16 %v449
      %v834 = vunpack.c.l.b16 %v450
      %v835 = vunpack.c.l.b16 %v451
      %v836 = vunpack.c.l.b16 %v452
      %v837 = vunpack.c.l.b16 %v453
      %v838 = vunpack.c.l.b16 %v454
      %v839 = vunpack.c.l.b16 %v455
      %v840 = vunpack.c.l.b16 %v456
      %v841 = vunpack.c.l.b16 %v457
      %v842 = vunpack.c.l.b16 %v458
      %v843 = vunpack.c.l.b16 %v459
      %v844 = vunpack.c.l.b16 %v460
      %v845 = vunpack.c.l.b16 %v461
      %v846 = vunpack.c.l.b16 %v462
      %v847 = vunpack.c.l.b16 %v463
      %v848 = vunpack.c.l.b16 %v464
      %v849 = vunpack.c.l.b16 %v465
      %v850 = vunpack.c.l.b16 %v466
      %v851 = vunpack.c.l.b16 %v467
      %v852 = vunpack.c.l.b16 %v468
      %v853 = vunpack.c.l.b16 %v469
      %v854 = vunpack.c.l.b16 %v470
      %v855 = vunpack.c.l.b16 %v471
      %v856 = vunpack.c.l.b16 %v472
      %v857 = vunpack.c.l.b16 %v473
      %v858 = vunpack.c.l.b16 %v474
      %v859 = vunpack.c.l.b16 %v475
      %v860 = vunpack.c.l.b16 %v476
      %v861 = vunpack.c.l.b16 %v477
      %v862 = vunpack.c.l.b16 %v478
      %v863 = vunpack.c.l.b16 %v479
      %v864 = vunpack.c.l.b16 %v480
      %v865 = vunpack.c.l.b16 %v481
      %v866 = vunpack.c.l.b16 %v482
      %v867 = vunpack.c.l.b16 %v483
      %v868 = vunpack.c.l.b16 %v484
      %v869 = vunpack.c.l.b16 %v485
      %v870 = vunpack.c.l.b16 %v486
      %v871 = vunpack.c.l.b16 %v487
      %v872 = vunpack.c.l.b16 %v488
      %v873 = vunpack.c.l.b16 %v489
      %v874 = vunpack.c.l.b16 %v490
      %v875 = vpack.c.b16 %v812, %v811
      %v876 = vpack.c.b16 %v814, %v813
      %v877 = vpack.c.b16 %v816, %v815
      %v878 = vpack.c.b16 %v818, %v817
      %v879 = vpack.c.b16 %v820, %v819
      %v880 = vpack.c.b16 %v822, %v821
      %v881 = vpack.c.b16 %v824, %v823
      %v882 = vpack.c.b16 %v826, %v825
      %v883 = vpack.c.b16 %v828, %v827
      %v884 = vpack.c.b16 %v830, %v829
      %v885 = vpack.c.b16 %v832, %v831
      %v886 = vpack.c.b16 %v834, %v833
      %v887 = vpack.c.b16 %v836, %v835
      %v888 = vpack.c.b16 %v838, %v837
      %v889 = vpack.c.b16 %v840, %v839
      %v890 = vpack.c.b16 %v842, %v841
      %v891 = vpack.c.b16 %v844, %v843
      %v892 = vpack.c.b16 %v846, %v845
      %v893 = vpack.c.b16 %v848, %v847
      %v894 = vpack.c.b16 %v850, %v849
      %v895 = vpack.c.b16 %v852, %v851
      %v896 = vpack.c.b16 %v854, %v853
      %v897 = vpack.c.b16 %v856, %v855
      %v898 = vpack.c.b16 %v858, %v857
      %v899 = vpack.c.b16 %v860, %v859
      %v900 = vpack.c.b16 %v862, %v861
      %v901 = vpack.c.b16 %v864, %v863
      %v902 = vpack.c.b16 %v866, %v865
      %v903 = vpack.c.b16 %v868, %v867
      %v904 = vpack.c.b16 %v870, %v869
      %v905 = vpack.c.b16 %v872, %v871
      %v906 = vpack.c.b16 %v874, %v873
      %v1003 = vunpack.c.l.b16 %v491
      %v1004 = vunpack.c.l.b16 %v492
      %v1005 = vunpack.c.l.b16 %v493
      %v1006 = vunpack.c.l.b16 %v494
      %v1007 = vunpack.c.l.b16 %v495
      %v1008 = vunpack.c.l.b16 %v496
      %v1009 = vunpack.c.l.b16 %v497
      %v1010 = vunpack.c.l.b16 %v498
      %v1011 = vunpack.c.l.b16 %v499
      %v1012 = vunpack.c.l.b16 %v500
      %v1013 = vunpack.c.l.b16 %v501
      %v1014 = vunpack.c.l.b16 %v502
      %v1015 = vunpack.c.l.b16 %v503
      %v1016 = vunpack.c.l.b16 %v504
      %v1017 = vunpack.c.l.b16 %v505
      %v1018 = vunpack.c.l.b16 %v506
      %v1019 = vunpack.c.l.b16 %v507
      %v1020 = vunpack.c.l.b16 %v508
      %v1021 = vunpack.c.l.b16 %v509
      %v1022 = vunpack.c.l.b16 %v510
      %v1023 = vunpack.c.l.b16 %v511
      %v1024 = vunpack.c.l.b16 %v512
      %v1025 = vunpack.c.l.b16 %v513
      %v1026 = vunpack.c.l.b16 %v514
      %v1027 = vunpack.c.l.b16 %v515
      %v1028 = vunpack.c.l.b16 %v516
      %v1029 = vunpack.c.l.b16 %v517
      %v1030 = vunpack.c.l.b16 %v518
      %v1031 = vunpack.c.l.b16 %v519
      %v1032 = vunpack.c.l.b16 %v520
      %v1033 = vunpack.c.l.b16 %v521
      %v1034 = vunpack.c.l.b16 %v522
      %v1035 = vunpack.c.l.b16 %v523
      %v1036 = vunpack.c.l.b16 %v524
      %v1037 = vunpack.c.l.b16 %v525
      %v1038 = vunpack.c.l.b16 %v526
      %v1039 = vunpack.c.l.b16 %v527
      %v1040 = vunpack.c.l.b16 %v528
      %v1041 = vunpack.c.l.b16 %v529
      %v1042 = vunpack.c.l.b16 %v530
      %v1043 = vunpack.c.l.b16 %v531
      %v1044 = vunpack.c.l.b16 %v532
      %v1045 = vunpack.c.l.b16 %v533
      %v1046 = vunpack.c.l.b16 %v534
      %v1047 = vunpack.c.l.b16 %v535
      %v1048 = vunpack.c.l.b16 %v536
      %v1049 = vunpack.c.l.b16 %v537
      %v1050 = vunpack.c.l.b16 %v538
      %v1051 = vunpack.c.l.b16 %v539
      %v1052 = vunpack.c.l.b16 %v540
      %v1053 = vunpack.c.l.b16 %v541
      %v1054 = vunpack.c.l.b16 %v542
      %v1055 = vunpack.c.l.b16 %v543
      %v1056 = vunpack.c.l.b16 %v544
      %v1057 = vunpack.c.l.b16 %v545
      %v1058 = vunpack.c.l.b16 %v546
      %v1059 = vunpack.c.l.b16 %v547
      %v1060 = vunpack.c.l.b16 %v548
      %v1061 = vunpack.c.l.b16 %v549
      %v1062 = vunpack.c.l.b16 %v550
      %v1063 = vunpack.c.l.b16 %v551
      %v1064 = vunpack.c.l.b16 %v552
      %v1065 = vunpack.c.l.b16 %v553
      %v1066 = vunpack.c.l.b16 %v554
      %v1067 = vpack.c.b16 %v1004, %v1003
      %v1068 = vpack.c.b16 %v1006, %v1005
      %v1069 = vpack.c.b16 %v1008, %v1007
      %v1070 = vpack.c.b16 %v1010, %v1009
      %v1071 = vpack.c.b16 %v1012, %v1011
      %v1072 = vpack.c.b16 %v1014, %v1013
      %v1073 = vpack.c.b16 %v1016, %v1015
      %v1074 = vpack.c.b16 %v1018, %v1017
      %v1075 = vpack.c.b16 %v1020, %v1019
      %v1076 = vpack.c.b16 %v1022, %v1021
      %v1077 = vpack.c.b16 %v1024, %v1023
      %v1078 = vpack.c.b16 %v1026, %v1025
      %v1079 = vpack.c.b16 %v1028, %v1027
      %v1080 = vpack.c.b16 %v1030, %v1029
      %v1081 = vpack.c.b16 %v1032, %v1031
      %v1082 = vpack.c.b16 %v1034, %v1033
      %v1083 = vpack.c.b16 %v1036, %v1035
      %v1084 = vpack.c.b16 %v1038, %v1037
      %v1085 = vpack.c.b16 %v1040, %v1039
      %v1086 = vpack.c.b16 %v1042, %v1041
      %v1087 = vpack.c.b16 %v1044, %v1043
      %v1088 = vpack.c.b16 %v1046, %v1045
      %v1089 = vpack.c.b16 %v1048, %v1047
      %v1090 = vpack.c.b16 %v1050, %v1049
      %v1091 = vpack.c.b16 %v1052, %v1051
      %v1092 = vpack.c.b16 %v1054, %v1053
      %v1093 = vpack.c.b16 %v1056, %v1055
      %v1094 = vpack.c.b16 %v1058, %v1057
      %v1095 = vpack.c.b16 %v1060, %v1059
      %v1096 = vpack.c.b16 %v1062, %v1061
      %v1097 = vpack.c.b16 %v1064, %v1063
      %v1098 = vpack.c.b16 %v1066, %v1065
      %v1131 = vld [vmem:[%s3] sm:$0xf]
      %v1132 = vld [vmem:[%s3 + $0x4] sm:$0xf]
      %v1133 = vld [vmem:[%s3 + $0x8] sm:$0xf]
      %v1134 = vld [vmem:[%s3 + $0xc] sm:$0xf]
      %v1135 = vld [vmem:[%s3 + $0x10] sm:$0xf]
      %v1136 = vld [vmem:[%s3 + $0x14] sm:$0xf]
      %v1137 = vld [vmem:[%s3 + $0x18] sm:$0xf]
      %v1138 = vld [vmem:[%s3 + $0x1c] sm:$0xf]
      %v1139 = vld [vmem:[%s3 + $0x20] sm:$0xf]
      %v1140 = vld [vmem:[%s3 + $0x24] sm:$0xf]
      %v1141 = vld [vmem:[%s3 + $0x28] sm:$0xf]
      %v1142 = vld [vmem:[%s3 + $0x2c] sm:$0xf]
      %v1143 = vld [vmem:[%s3 + $0x30] sm:$0xf]
      %v1144 = vld [vmem:[%s3 + $0x34] sm:$0xf]
      %v1145 = vld [vmem:[%s3 + $0x38] sm:$0xf]
      %v1146 = vld [vmem:[%s3 + $0x3c] sm:$0xf]
      %v1147 = vld [vmem:[%s3 + $0x40] sm:$0xf]
      %v1148 = vld [vmem:[%s3 + $0x44] sm:$0xf]
      %v1149 = vld [vmem:[%s3 + $0x48] sm:$0xf]
      %v1150 = vld [vmem:[%s3 + $0x4c] sm:$0xf]
      %v1151 = vld [vmem:[%s3 + $0x50] sm:$0xf]
      %v1152 = vld [vmem:[%s3 + $0x54] sm:$0xf]
      %v1153 = vld [vmem:[%s3 + $0x58] sm:$0xf]
      %v1154 = vld [vmem:[%s3 + $0x5c] sm:$0xf]
      %v1155 = vld [vmem:[%s3 + $0x60] sm:$0xf]
      %v1156 = vld [vmem:[%s3 + $0x64] sm:$0xf]
      %v1157 = vld [vmem:[%s3 + $0x68] sm:$0xf]
      %v1158 = vld [vmem:[%s3 + $0x6c] sm:$0xf]
      %v1159 = vld [vmem:[%s3 + $0x70] sm:$0xf]
      %v1160 = vld [vmem:[%s3 + $0x74] sm:$0xf]
      %v1161 = vld [vmem:[%s3 + $0x78] sm:$0xf]
      %v1162 = vld [vmem:[%s3 + $0x7c] sm:$0xf]
      %v1163 = vld [vmem:[%s3 + $0x80] sm:$0xf]
      %v1164 = vld [vmem:[%s3 + $0x84] sm:$0xf]
      %v1165 = vld [vmem:[%s3 + $0x88] sm:$0xf]
      %v1166 = vld [vmem:[%s3 + $0x8c] sm:$0xf]
      %v1167 = vld [vmem:[%s3 + $0x90] sm:$0xf]
      %v1168 = vld [vmem:[%s3 + $0x94] sm:$0xf]
      %v1169 = vld [vmem:[%s3 + $0x98] sm:$0xf]
      %v1170 = vld [vmem:[%s3 + $0x9c] sm:$0xf]
      %v1171 = vld [vmem:[%s3 + $0xa0] sm:$0xf]
      %v1172 = vld [vmem:[%s3 + $0xa4] sm:$0xf]
      %v1173 = vld [vmem:[%s3 + $0xa8] sm:$0xf]
      %v1174 = vld [vmem:[%s3 + $0xac] sm:$0xf]
      %v1175 = vld [vmem:[%s3 + $0xb0] sm:$0xf]
      %v1176 = vld [vmem:[%s3 + $0xb4] sm:$0xf]
      %v1177 = vld [vmem:[%s3 + $0xb8] sm:$0xf]
      %v1178 = vld [vmem:[%s3 + $0xbc] sm:$0xf]
      %v1179 = vld [vmem:[%s4] sm:$0x1]
      %v1181 = vlaneseq
      %v1182 = vshrl.u32 %v1181, 7
      %v1183 = vsub.s32 0, %v1182
      %v1184 = vrot.slane %v1179, %v1183
      %v1234 = vunpack.c.l.b16 %v1131
      %v1235 = vunpack.c.l.b16 %v1132
      %v1236 = vunpack.c.l.b16 %v1133
      %v1237 = vunpack.c.l.b16 %v1134
      %v1238 = vunpack.c.l.b16 %v1135
      %v1239 = vunpack.c.l.b16 %v1136
      %v1240 = vunpack.c.l.b16 %v1137
      %v1241 = vunpack.c.l.b16 %v1138
      %v1242 = vunpack.c.l.b16 %v1139
      %v1243 = vunpack.c.l.b16 %v1140
      %v1244 = vunpack.c.l.b16 %v1141
      %v1245 = vunpack.c.l.b16 %v1142
      %v1246 = vunpack.c.l.b16 %v1143
      %v1247 = vunpack.c.l.b16 %v1144
      %v1248 = vunpack.c.l.b16 %v1145
      %v1249 = vunpack.c.l.b16 %v1146
      %v1250 = vunpack.c.l.b16 %v1147
      %v1251 = vunpack.c.l.b16 %v1148
      %v1252 = vunpack.c.l.b16 %v1149
      %v1253 = vunpack.c.l.b16 %v1150
      %v1254 = vunpack.c.l.b16 %v1151
      %v1255 = vunpack.c.l.b16 %v1152
      %v1256 = vunpack.c.l.b16 %v1153
      %v1257 = vunpack.c.l.b16 %v1154
      %v1258 = vunpack.c.l.b16 %v1155
      %v1259 = vunpack.c.l.b16 %v1156
      %v1260 = vunpack.c.l.b16 %v1157
      %v1261 = vunpack.c.l.b16 %v1158
      %v1262 = vunpack.c.l.b16 %v1159
      %v1263 = vunpack.c.l.b16 %v1160
      %v1264 = vunpack.c.l.b16 %v1161
      %v1265 = vunpack.c.l.b16 %v1162
      %v1266 = vunpack.c.l.b16 %v1163
      %v1267 = vunpack.c.l.b16 %v1164
      %v1268 = vunpack.c.l.b16 %v1165
      %v1269 = vunpack.c.l.b16 %v1166
      %v1270 = vunpack.c.l.b16 %v1167
      %v1271 = vunpack.c.l.b16 %v1168
      %v1272 = vunpack.c.l.b16 %v1169
      %v1273 = vunpack.c.l.b16 %v1170
      %v1274 = vunpack.c.l.b16 %v1171
      %v1275 = vunpack.c.l.b16 %v1172
      %v1276 = vunpack.c.l.b16 %v1173
      %v1277 = vunpack.c.l.b16 %v1174
      %v1278 = vunpack.c.l.b16 %v1175
      %v1279 = vunpack.c.l.b16 %v1176
      %v1280 = vunpack.c.l.b16 %v1177
      %v1281 = vunpack.c.l.b16 %v1178
      %v1282 = vpack.c.b16 %v1235, %v1234
      %v1283 = vpack.c.b16 %v1237, %v1236
      %v1284 = vpack.c.b16 %v1239, %v1238
      %v1285 = vpack.c.b16 %v1241, %v1240
      %v1286 = vpack.c.b16 %v1243, %v1242
      %v1287 = vpack.c.b16 %v1245, %v1244
      %v1288 = vpack.c.b16 %v1247, %v1246
      %v1289 = vpack.c.b16 %v1249, %v1248
      %v1290 = vpack.c.b16 %v1251, %v1250
      %v1291 = vpack.c.b16 %v1253, %v1252
      %v1292 = vpack.c.b16 %v1255, %v1254
      %v1293 = vpack.c.b16 %v1257, %v1256
      %v1294 = vpack.c.b16 %v1259, %v1258
      %v1295 = vpack.c.b16 %v1261, %v1260
      %v1296 = vpack.c.b16 %v1263, %v1262
      %v1297 = vpack.c.b16 %v1265, %v1264
      %v1298 = vpack.c.b16 %v1267, %v1266
      %v1299 = vpack.c.b16 %v1269, %v1268
      %v1300 = vpack.c.b16 %v1271, %v1270
      %v1301 = vpack.c.b16 %v1273, %v1272
      %v1302 = vpack.c.b16 %v1275, %v1274
      %v1303 = vpack.c.b16 %v1277, %v1276
      %v1304 = vpack.c.b16 %v1279, %v1278
      %v1305 = vpack.c.b16 %v1281, %v1280
      %1330 = vmatprep.subr.bf16.mxu0 0
      %1331 = vmatpush1.bf16.msra.mxu0 %v1282
      %1332 = vmatprep.subr.bf16.mxu0 0
      %1333 = vmatpush1.bf16.msra.mxu0 %v1283
      %1334 = vmatprep.subr.bf16.mxu0 0
      %1335 = vmatpush1.bf16.msra.mxu0 %v1284
      %1336 = vmatprep.subr.bf16.mxu0 0
      %1337 = vmatpush1.bf16.msra.mxu0 %v1285
      %1338 = vmatprep.subr.bf16.mxu0 0
      %1339 = vmatpush1.bf16.msra.mxu0 %v1286
      %1340 = vmatprep.subr.bf16.mxu0 0
      %1341 = vmatpush1.bf16.msra.mxu0 %v1287
      %1342 = vmatprep.subr.bf16.mxu0 0
      %1343 = vmatpush1.bf16.msra.mxu0 %v1288
      %1344 = vmatprep.subr.bf16.mxu0 0
      %1345 = vmatpush1.bf16.msra.mxu0 %v1289
      %1346 = vmatprep.subr.bf16.mxu0 0
      %1347 = vmatpush1.bf16.msra.mxu0 %v1290
      %1348 = vmatprep.subr.bf16.mxu0 0
      %1349 = vmatpush1.bf16.msra.mxu0 %v1291
      %1350 = vmatprep.subr.bf16.mxu0 0
      %1351 = vmatpush1.bf16.msra.mxu0 %v1292
      %1352 = vmatprep.subr.bf16.mxu0 0
      %1353 = vmatpush1.bf16.msra.mxu0 %v1293
      %1354 = vmatprep.subr.bf16.mxu0 0
      %1355 = vmatpush1.bf16.msra.mxu0 %v1294
      %1356 = vmatprep.subr.bf16.mxu0 0
      %1357 = vmatpush1.bf16.msra.mxu0 %v1295
      %1358 = vmatprep.subr.bf16.mxu0 0
      %1359 = vmatpush1.bf16.msra.mxu0 %v1296
      %1360 = vmatprep.subr.bf16.mxu0 0
      %1361 = vmatpush1.bf16.msra.mxu0 %v1297
      %1362 = vmatprep.mubr.bf16.mxu0 %v875
      %1363 = vmatmul.mubr.bf16.gmra.mrb[0].mxu0 %v683
      %v1364 = vpop.f32.mrb[0].mxu0
      %v1365 = vadd.f32 %v1184, %v1364
      %v1366 = vpop.f32.mrb[0].mxu0
      %v1367 = vpop.f32.mrb[0].mxu0
      %v1368 = vadd.f32 %v1184, %v1367
      %v1369 = vpop.f32.mrb[0].mxu0
      %1370 = vmatprep.mubr.bf16.mxu0 %v876
      %1371 = vmatmul.mubr.bf16.gmra.mrb[0].mxu0 %v684
      %v1372 = vpop.f32.mrb[0].mxu0
      %v1373 = vadd.f32 %v1184, %v1372
      %v1374 = vpop.f32.mrb[0].mxu0
      %v1375 = vpop.f32.mrb[0].mxu0
      %v1376 = vadd.f32 %v1184, %v1375
      %v1377 = vpop.f32.mrb[0].mxu0
      %1378 = vmatprep.mubr.bf16.mxu0 %v877
      %1379 = vmatmul.mubr.bf16.gmra.mrb[0].mxu0 %v685
      %v1380 = vpop.f32.mrb[0].mxu0
      %v1381 = vadd.f32 %v1184, %v1380
      %v1382 = vpop.f32.mrb[0].mxu0
      %v1383 = vpop.f32.mrb[0].mxu0
      %v1384 = vadd.f32 %v1184, %v1383
      %v1385 = vpop.f32.mrb[0].mxu0
      %1386 = vmatprep.mubr.bf16.mxu0 %v878
      %1387 = vmatmul.mubr.bf16.gmra.mrb[0].mxu0 %v686
      %v1388 = vpop.f32.mrb[0].mxu0
      %v1389 = vadd.f32 %v1184, %v1388
      %v1390 = vpop.f32.mrb[0].mxu0
      %v1391 = vpop.f32.mrb[0].mxu0
      %v1392 = vadd.f32 %v1184, %v1391
      %v1393 = vpop.f32.mrb[0].mxu0
      %1394 = vmatprep.mubr.bf16.mxu0 %v879
      %1395 = vmatmul.mubr.bf16.gmra.mrb[0].mxu0 %v687
      %v1396 = vpop.f32.mrb[0].mxu0
      %v1397 = vadd.f32 %v1184, %v1396
      %v1398 = vpop.f32.mrb[0].mxu0
      %v1399 = vpop.f32.mrb[0].mxu0
      %v1400 = vadd.f32 %v1184, %v1399
      %v1401 = vpop.f32.mrb[0].mxu0
      %1402 = vmatprep.mubr.bf16.mxu0 %v880
      %1403 = vmatmul.mubr.bf16.gmra.mrb[0].mxu0 %v688
      %v1404 = vpop.f32.mrb[0].mxu0
      %v1405 = vadd.f32 %v1184, %v1404
      %v1406 = vpop.f32.mrb[0].mxu0
      %v1407 = vpop.f32.mrb[0].mxu0
      %v1408 = vadd.f32 %v1184, %v1407
      %v1409 = vpop.f32.mrb[0].mxu0
      %1410 = vmatprep.mubr.bf16.mxu0 %v881
      %1411 = vmatmul.mubr.bf16.gmra.mrb[0].mxu0 %v689
      %v1412 = vpop.f32.mrb[0].mxu0
      %v1413 = vadd.f32 %v1184, %v1412
      %v1414 = vpop.f32.mrb[0].mxu0
      %v1415 = vpop.f32.mrb[0].mxu0
      %v1416 = vadd.f32 %v1184, %v1415
      %v1417 = vpop.f32.mrb[0].mxu0
      %1418 = vmatprep.mubr.bf16.mxu0 %v882
      %1419 = vmatmul.mubr.bf16.gmra.mrb[0].mxu0 %v690
      %v1420 = vpop.f32.mrb[0].mxu0
      %v1421 = vadd.f32 %v1184, %v1420
      %v1422 = vpop.f32.mrb[0].mxu0
      %v1423 = vpop.f32.mrb[0].mxu0
      %v1424 = vadd.f32 %v1184, %v1423
      %v1425 = vpop.f32.mrb[0].mxu0
      %1426 = vmatprep.mubr.bf16.mxu0 %v883
      %1427 = vmatmul.mubr.bf16.gmra.mrb[0].mxu0 %v691
      %v1428 = vpop.f32.mrb[0].mxu0
      %v1429 = vadd.f32 %v1184, %v1428
      %v1430 = vpop.f32.mrb[0].mxu0
      %v1431 = vpop.f32.mrb[0].mxu0
      %v1432 = vadd.f32 %v1184, %v1431
      %v1433 = vpop.f32.mrb[0].mxu0
      %1434 = vmatprep.mubr.bf16.mxu0 %v884
      %1435 = vmatmul.mubr.bf16.gmra.mrb[0].mxu0 %v692
      %v1436 = vpop.f32.mrb[0].mxu0
      %v1437 = vadd.f32 %v1184, %v1436
      %v1438 = vpop.f32.mrb[0].mxu0
      %v1439 = vpop.f32.mrb[0].mxu0
      %v1440 = vadd.f32 %v1184, %v1439
      %v1441 = vpop.f32.mrb[0].mxu0
      %1442 = vmatprep.mubr.bf16.mxu0 %v885
      %1443 = vmatmul.mubr.bf16.gmra.mrb[0].mxu0 %v693
      %v1444 = vpop.f32.mrb[0].mxu0
      %v1445 = vadd.f32 %v1184, %v1444
      %v1446 = vpop.f32.mrb[0].mxu0
      %v1447 = vpop.f32.mrb[0].mxu0
      %v1448 = vadd.f32 %v1184, %v1447
      %v1449 = vpop.f32.mrb[0].mxu0
      %1450 = vmatprep.mubr.bf16.mxu0 %v886
      %1451 = vmatmul.mubr.bf16.gmra.mrb[0].mxu0 %v694
      %v1452 = vpop.f32.mrb[0].mxu0
      %v1453 = vadd.f32 %v1184, %v1452
      %v1454 = vpop.f32.mrb[0].mxu0
      %v1455 = vpop.f32.mrb[0].mxu0
      %v1456 = vadd.f32 %v1184, %v1455
      %v1457 = vpop.f32.mrb[0].mxu0
      %1458 = vmatprep.mubr.bf16.mxu0 %v887
      %1459 = vmatmul.mubr.bf16.gmra.mrb[0].mxu0 %v695
      %v1460 = vpop.f32.mrb[0].mxu0
      %v1461 = vadd.f32 %v1184, %v1460
      %v1462 = vpop.f32.mrb[0].mxu0
      %v1463 = vpop.f32.mrb[0].mxu0
      %v1464 = vadd.f32 %v1184, %v1463
      %v1465 = vpop.f32.mrb[0].mxu0
      %1466 = vmatprep.mubr.bf16.mxu0 %v888
      %1467 = vmatmul.mubr.bf16.gmra.mrb[0].mxu0 %v696
      %v1468 = vpop.f32.mrb[0].mxu0
      %v1469 = vadd.f32 %v1184, %v1468
      %v1470 = vpop.f32.mrb[0].mxu0
      %v1471 = vpop.f32.mrb[0].mxu0
      %v1472 = vadd.f32 %v1184, %v1471
      %v1473 = vpop.f32.mrb[0].mxu0
      %1474 = vmatprep.mubr.bf16.mxu0 %v889
      %1475 = vmatmul.mubr.bf16.gmra.mrb[0].mxu0 %v697
      %v1476 = vpop.f32.mrb[0].mxu0
      %v1477 = vadd.f32 %v1184, %v1476
      %v1478 = vpop.f32.mrb[0].mxu0
      %v1479 = vpop.f32.mrb[0].mxu0
      %v1480 = vadd.f32 %v1184, %v1479
      %v1481 = vpop.f32.mrb[0].mxu0
      %1482 = vmatprep.mubr.bf16.mxu0 %v890
      %1483 = vmatmul.mubr.bf16.gmra.mrb[0].mxu0 %v698
      %v1484 = vpop.f32.mrb[0].mxu0
      %v1485 = vadd.f32 %v1184, %v1484
      %v1486 = vpop.f32.mrb[0].mxu0
      %v1487 = vpop.f32.mrb[0].mxu0
      %v1488 = vadd.f32 %v1184, %v1487
      %v1489 = vpop.f32.mrb[0].mxu0
      %1490 = vmatprep.mubr.bf16.mxu0 %v891
      %1491 = vmatmul.mubr.bf16.gmra.mrb[0].mxu0 %v699
      %v1492 = vpop.f32.mrb[0].mxu0
      %v1493 = vadd.f32 %v1184, %v1492
      %v1494 = vpop.f32.mrb[0].mxu0
      %v1495 = vpop.f32.mrb[0].mxu0
      %v1496 = vadd.f32 %v1184, %v1495
      %v1497 = vpop.f32.mrb[0].mxu0
      %1498 = vmatprep.mubr.bf16.mxu0 %v892
      %1499 = vmatmul.mubr.bf16.gmra.mrb[0].mxu0 %v700
      %v1500 = vpop.f32.mrb[0].mxu0
      %v1501 = vadd.f32 %v1184, %v1500
      %v1502 = vpop.f32.mrb[0].mxu0
      %v1503 = vpop.f32.mrb[0].mxu0
      %v1504 = vadd.f32 %v1184, %v1503
      %v1505 = vpop.f32.mrb[0].mxu0
      %1506 = vmatprep.mubr.bf16.mxu0 %v893
      %1507 = vmatmul.mubr.bf16.gmra.mrb[0].mxu0 %v701
      %v1508 = vpop.f32.mrb[0].mxu0
      %v1509 = vadd.f32 %v1184, %v1508
      %v1510 = vpop.f32.mrb[0].mxu0
      %v1511 = vpop.f32.mrb[0].mxu0
      %v1512 = vadd.f32 %v1184, %v1511
      %v1513 = vpop.f32.mrb[0].mxu0
      %1514 = vmatprep.mubr.bf16.mxu0 %v894
      %1515 = vmatmul.mubr.bf16.gmra.mrb[0].mxu0 %v702
      %v1516 = vpop.f32.mrb[0].mxu0
      %v1517 = vadd.f32 %v1184, %v1516
      %v1518 = vpop.f32.mrb[0].mxu0
      %v1519 = vpop.f32.mrb[0].mxu0
      %v1520 = vadd.f32 %v1184, %v1519
      %v1521 = vpop.f32.mrb[0].mxu0
      %1522 = vmatprep.mubr.bf16.mxu0 %v895
      %1523 = vmatmul.mubr.bf16.gmra.mrb[0].mxu0 %v703
      %v1524 = vpop.f32.mrb[0].mxu0
      %v1525 = vadd.f32 %v1184, %v1524
      %v1526 = vpop.f32.mrb[0].mxu0
      %v1527 = vpop.f32.mrb[0].mxu0
      %v1528 = vadd.f32 %v1184, %v1527
      %v1529 = vpop.f32.mrb[0].mxu0
      %1530 = vmatprep.mubr.bf16.mxu0 %v896
      %1531 = vmatmul.mubr.bf16.gmra.mrb[0].mxu0 %v704
      %v1532 = vpop.f32.mrb[0].mxu0
      %v1533 = vadd.f32 %v1184, %v1532
      %v1534 = vpop.f32.mrb[0].mxu0
      %v1535 = vpop.f32.mrb[0].mxu0
      %v1536 = vadd.f32 %v1184, %v1535
      %v1537 = vpop.f32.mrb[0].mxu0
      %1538 = vmatprep.mubr.bf16.mxu0 %v897
      %1539 = vmatmul.mubr.bf16.gmra.mrb[0].mxu0 %v705
      %v1540 = vpop.f32.mrb[0].mxu0
      %v1541 = vadd.f32 %v1184, %v1540
      %v1542 = vpop.f32.mrb[0].mxu0
      %v1543 = vpop.f32.mrb[0].mxu0
      %v1544 = vadd.f32 %v1184, %v1543
      %v1545 = vpop.f32.mrb[0].mxu0
      %1546 = vmatprep.mubr.bf16.mxu0 %v898
      %1547 = vmatmul.mubr.bf16.gmra.mrb[0].mxu0 %v706
      %v1548 = vpop.f32.mrb[0].mxu0
      %v1549 = vadd.f32 %v1184, %v1548
      %v1550 = vpop.f32.mrb[0].mxu0
      %v1551 = vpop.f32.mrb[0].mxu0
      %v1552 = vadd.f32 %v1184, %v1551
      %v1553 = vpop.f32.mrb[0].mxu0
      %1554 = vmatprep.mubr.bf16.mxu0 %v899
      %1555 = vmatmul.mubr.bf16.gmra.mrb[0].mxu0 %v707
      %v1556 = vpop.f32.mrb[0].mxu0
      %v1557 = vadd.f32 %v1184, %v1556
      %v1558 = vpop.f32.mrb[0].mxu0
      %v1559 = vpop.f32.mrb[0].mxu0
      %v1560 = vadd.f32 %v1184, %v1559
      %v1561 = vpop.f32.mrb[0].mxu0
      %1562 = vmatprep.mubr.bf16.mxu0 %v900
      %1563 = vmatmul.mubr.bf16.gmra.mrb[0].mxu0 %v708
      %v1564 = vpop.f32.mrb[0].mxu0
      %v1565 = vadd.f32 %v1184, %v1564
      %v1566 = vpop.f32.mrb[0].mxu0
      %v1567 = vpop.f32.mrb[0].mxu0
      %v1568 = vadd.f32 %v1184, %v1567
      %v1569 = vpop.f32.mrb[0].mxu0
      %1570 = vmatprep.mubr.bf16.mxu0 %v901
      %1571 = vmatmul.mubr.bf16.gmra.mrb[0].mxu0 %v709
      %v1572 = vpop.f32.mrb[0].mxu0
      %v1573 = vadd.f32 %v1184, %v1572
      %v1574 = vpop.f32.mrb[0].mxu0
      %v1575 = vpop.f32.mrb[0].mxu0
      %v1576 = vadd.f32 %v1184, %v1575
      %v1577 = vpop.f32.mrb[0].mxu0
      %1578 = vmatprep.mubr.bf16.mxu0 %v902
      %1579 = vmatmul.mubr.bf16.gmra.mrb[0].mxu0 %v710
      %v1580 = vpop.f32.mrb[0].mxu0
      %v1581 = vadd.f32 %v1184, %v1580
      %v1582 = vpop.f32.mrb[0].mxu0
      %v1583 = vpop.f32.mrb[0].mxu0
      %v1584 = vadd.f32 %v1184, %v1583
      %v1585 = vpop.f32.mrb[0].mxu0
      %1586 = vmatprep.mubr.bf16.mxu0 %v903
      %1587 = vmatmul.mubr.bf16.gmra.mrb[0].mxu0 %v711
      %v1588 = vpop.f32.mrb[0].mxu0
      %v1589 = vadd.f32 %v1184, %v1588
      %v1590 = vpop.f32.mrb[0].mxu0
      %v1591 = vpop.f32.mrb[0].mxu0
      %v1592 = vadd.f32 %v1184, %v1591
      %v1593 = vpop.f32.mrb[0].mxu0
      %1594 = vmatprep.mubr.bf16.mxu0 %v904
      %1595 = vmatmul.mubr.bf16.gmra.mrb[0].mxu0 %v712
      %v1596 = vpop.f32.mrb[0].mxu0
      %v1597 = vadd.f32 %v1184, %v1596
      %v1598 = vpop.f32.mrb[0].mxu0
      %v1599 = vpop.f32.mrb[0].mxu0
      %v1600 = vadd.f32 %v1184, %v1599
      %v1601 = vpop.f32.mrb[0].mxu0
      %1602 = vmatprep.mubr.bf16.mxu0 %v905
      %1603 = vmatmul.mubr.bf16.gmra.mrb[0].mxu0 %v713
      %v1604 = vpop.f32.mrb[0].mxu0
      %v1605 = vadd.f32 %v1184, %v1604
      %v1606 = vpop.f32.mrb[0].mxu0
      %v1607 = vpop.f32.mrb[0].mxu0
      %v1608 = vadd.f32 %v1184, %v1607
      %v1609 = vpop.f32.mrb[0].mxu0
      %1610 = vmatprep.mubr.bf16.mxu0 %v906
      %1611 = vmatmul.mubr.bf16.gmra.mrb[0].mxu0 %v714
      %v1612 = vpop.f32.mrb[0].mxu0
      %v1613 = vadd.f32 %v1184, %v1612
      %v1614 = vpop.f32.mrb[0].mxu0
      %v1615 = vpop.f32.mrb[0].mxu0
      %v1616 = vadd.f32 %v1184, %v1615
      %v1617 = vpop.f32.mrb[0].mxu0
      %1618 = vdwg.mxu0
      %1619 = vmatprep.subr.bf16.mxu0 0
      %1620 = vmatpush1.bf16.msra.mxu0 %v1298
      %1621 = vmatprep.subr.bf16.mxu0 0
      %1622 = vmatpush1.bf16.msra.mxu0 %v1299
      %1623 = vmatprep.subr.bf16.mxu0 0
      %1624 = vmatpush1.bf16.msra.mxu0 %v1300
      %1625 = vmatprep.subr.bf16.mxu0 0
      %1626 = vmatpush1.bf16.msra.mxu0 %v1301
      %1627 = vmatprep.subr.bf16.mxu0 0
      %1628 = vmatpush1.bf16.msra.mxu0 %v1302
      %1629 = vmatprep.subr.bf16.mxu0 0
      %1630 = vmatpush1.bf16.msra.mxu0 %v1303
      %1631 = vmatprep.subr.bf16.mxu0 0
      %1632 = vmatpush1.bf16.msra.mxu0 %v1304
      %1633 = vmatprep.subr.bf16.mxu0 0
      %1634 = vmatpush1.bf16.msra.mxu0 %v1305
      %1635 = vmatprep.subr.bf16.mxu0 0
      %1636 = vmatpush1.bf16.msra.mxu0 0
      %1637 = vmatprep.subr.bf16.mxu0 0
      %1638 = vmatpush1.bf16.msra.mxu0 0
      %1639 = vmatprep.subr.bf16.mxu0 0
      %1640 = vmatpush1.bf16.msra.mxu0 0
      %1641 = vmatprep.subr.bf16.mxu0 0
      %1642 = vmatpush1.bf16.msra.mxu0 0
      %1643 = vmatprep.subr.bf16.mxu0 0
      %1644 = vmatpush1.bf16.msra.mxu0 0
      %1645 = vmatprep.subr.bf16.mxu0 0
      %1646 = vmatpush1.bf16.msra.mxu0 0
      %1647 = vmatprep.subr.bf16.mxu0 0
      %1648 = vmatpush1.bf16.msra.mxu0 0
      %1649 = vmatprep.subr.bf16.mxu0 0
      %1650 = vmatpush1.bf16.msra.mxu0 0
      %1651 = vmatprep.mubr.bf16.mxu0 0
      %1652 = vmatmul.mubr.bf16.gmra.mrb[0].mxu0 %v1067
      %v1653 = vpop.f32.mrb[0].mxu0
      %v1654 = vadd.f32 %v1365, %v1653
      %v1655 = vpop.f32.mrb[0].mxu0
      %v1656 = vpop.f32.mrb[0].mxu0
      %v1657 = vadd.f32 %v1368, %v1656
      %v1658 = vpop.f32.mrb[0].mxu0
      %1659 = vmatprep.mubr.bf16.mxu0 0
      %1660 = vmatmul.mubr.bf16.gmra.mrb[0].mxu0 %v1068
      %v1661 = vpop.f32.mrb[0].mxu0
      %v1662 = vadd.f32 %v1373, %v1661
      %v1663 = vpop.f32.mrb[0].mxu0
      %v1664 = vpop.f32.mrb[0].mxu0
      %v1665 = vadd.f32 %v1376, %v1664
      %v1666 = vpop.f32.mrb[0].mxu0
      %1667 = vmatprep.mubr.bf16.mxu0 0
      %1668 = vmatmul.mubr.bf16.gmra.mrb[0].mxu0 %v1069
      %v1669 = vpop.f32.mrb[0].mxu0
      %v1670 = vadd.f32 %v1381, %v1669
      %v1671 = vpop.f32.mrb[0].mxu0
      %v1672 = vpop.f32.mrb[0].mxu0
      %v1673 = vadd.f32 %v1384, %v1672
      %v1674 = vpop.f32.mrb[0].mxu0
      %1675 = vmatprep.mubr.bf16.mxu0 0
      %1676 = vmatmul.mubr.bf16.gmra.mrb[0].mxu0 %v1070
      %v1677 = vpop.f32.mrb[0].mxu0
      %v1678 = vadd.f32 %v1389, %v1677
      %v1679 = vpop.f32.mrb[0].mxu0
      %v1680 = vpop.f32.mrb[0].mxu0
      %v1681 = vadd.f32 %v1392, %v1680
      %v1682 = vpop.f32.mrb[0].mxu0
      %1683 = vmatprep.mubr.bf16.mxu0 0
      %1684 = vmatmul.mubr.bf16.gmra.mrb[0].mxu0 %v1071
      %v1685 = vpop.f32.mrb[0].mxu0
      %v1686 = vadd.f32 %v1397, %v1685
      %v1687 = vpop.f32.mrb[0].mxu0
      %v1688 = vpop.f32.mrb[0].mxu0
      %v1689 = vadd.f32 %v1400, %v1688
      %v1690 = vpop.f32.mrb[0].mxu0
      %1691 = vmatprep.mubr.bf16.mxu0 0
      %1692 = vmatmul.mubr.bf16.gmra.mrb[0].mxu0 %v1072
      %v1693 = vpop.f32.mrb[0].mxu0
      %v1694 = vadd.f32 %v1405, %v1693
      %v1695 = vpop.f32.mrb[0].mxu0
      %v1696 = vpop.f32.mrb[0].mxu0
      %v1697 = vadd.f32 %v1408, %v1696
      %v1698 = vpop.f32.mrb[0].mxu0
      %1699 = vmatprep.mubr.bf16.mxu0 0
      %1700 = vmatmul.mubr.bf16.gmra.mrb[0].mxu0 %v1073
      %v1701 = vpop.f32.mrb[0].mxu0
      %v1702 = vadd.f32 %v1413, %v1701
      %v1703 = vpop.f32.mrb[0].mxu0
      %v1704 = vpop.f32.mrb[0].mxu0
      %v1705 = vadd.f32 %v1416, %v1704
      %v1706 = vpop.f32.mrb[0].mxu0
      %1707 = vmatprep.mubr.bf16.mxu0 0
      %1708 = vmatmul.mubr.bf16.gmra.mrb[0].mxu0 %v1074
      %v1709 = vpop.f32.mrb[0].mxu0
      %v1710 = vadd.f32 %v1421, %v1709
      %v1711 = vpop.f32.mrb[0].mxu0
      %v1712 = vpop.f32.mrb[0].mxu0
      %v1713 = vadd.f32 %v1424, %v1712
      %v1714 = vpop.f32.mrb[0].mxu0
      %1715 = vmatprep.mubr.bf16.mxu0 0
      %1716 = vmatmul.mubr.bf16.gmra.mrb[0].mxu0 %v1075
      %v1717 = vpop.f32.mrb[0].mxu0
      %v1718 = vadd.f32 %v1429, %v1717
      %v1719 = vpop.f32.mrb[0].mxu0
      %v1720 = vpop.f32.mrb[0].mxu0
      %v1721 = vadd.f32 %v1432, %v1720
      %v1722 = vpop.f32.mrb[0].mxu0
      %1723 = vmatprep.mubr.bf16.mxu0 0
      %1724 = vmatmul.mubr.bf16.gmra.mrb[0].mxu0 %v1076
      %v1725 = vpop.f32.mrb[0].mxu0
      %v1726 = vadd.f32 %v1437, %v1725
      %v1727 = vpop.f32.mrb[0].mxu0
      %v1728 = vpop.f32.mrb[0].mxu0
      %v1729 = vadd.f32 %v1440, %v1728
      %v1730 = vpop.f32.mrb[0].mxu0
      %1731 = vmatprep.mubr.bf16.mxu0 0
      %1732 = vmatmul.mubr.bf16.gmra.mrb[0].mxu0 %v1077
      %v1733 = vpop.f32.mrb[0].mxu0
      %v1734 = vadd.f32 %v1445, %v1733
      %v1735 = vpop.f32.mrb[0].mxu0
      %v1736 = vpop.f32.mrb[0].mxu0
      %v1737 = vadd.f32 %v1448, %v1736
      %v1738 = vpop.f32.mrb[0].mxu0
      %1739 = vmatprep.mubr.bf16.mxu0 0
      %1740 = vmatmul.mubr.bf16.gmra.mrb[0].mxu0 %v1078
      %v1741 = vpop.f32.mrb[0].mxu0
      %v1742 = vadd.f32 %v1453, %v1741
      %v1743 = vpop.f32.mrb[0].mxu0
      %v1744 = vpop.f32.mrb[0].mxu0
      %v1745 = vadd.f32 %v1456, %v1744
      %v1746 = vpop.f32.mrb[0].mxu0
      %1747 = vmatprep.mubr.bf16.mxu0 0
      %1748 = vmatmul.mubr.bf16.gmra.mrb[0].mxu0 %v1079
      %v1749 = vpop.f32.mrb[0].mxu0
      %v1750 = vadd.f32 %v1461, %v1749
      %v1751 = vpop.f32.mrb[0].mxu0
      %v1752 = vpop.f32.mrb[0].mxu0
      %v1753 = vadd.f32 %v1464, %v1752
      %v1754 = vpop.f32.mrb[0].mxu0
      %1755 = vmatprep.mubr.bf16.mxu0 0
      %1756 = vmatmul.mubr.bf16.gmra.mrb[0].mxu0 %v1080
      %v1757 = vpop.f32.mrb[0].mxu0
      %v1758 = vadd.f32 %v1469, %v1757
      %v1759 = vpop.f32.mrb[0].mxu0
      %v1760 = vpop.f32.mrb[0].mxu0
      %v1761 = vadd.f32 %v1472, %v1760
      %v1762 = vpop.f32.mrb[0].mxu0
      %1763 = vmatprep.mubr.bf16.mxu0 0
      %1764 = vmatmul.mubr.bf16.gmra.mrb[0].mxu0 %v1081
      %v1765 = vpop.f32.mrb[0].mxu0
      %v1766 = vadd.f32 %v1477, %v1765
      %v1767 = vpop.f32.mrb[0].mxu0
      %v1768 = vpop.f32.mrb[0].mxu0
      %v1769 = vadd.f32 %v1480, %v1768
      %v1770 = vpop.f32.mrb[0].mxu0
      %1771 = vmatprep.mubr.bf16.mxu0 0
      %1772 = vmatmul.mubr.bf16.gmra.mrb[0].mxu0 %v1082
      %v1773 = vpop.f32.mrb[0].mxu0
      %v1774 = vadd.f32 %v1485, %v1773
      %v1775 = vpop.f32.mrb[0].mxu0
      %v1776 = vpop.f32.mrb[0].mxu0
      %v1777 = vadd.f32 %v1488, %v1776
      %v1778 = vpop.f32.mrb[0].mxu0
      %1779 = vmatprep.mubr.bf16.mxu0 0
      %1780 = vmatmul.mubr.bf16.gmra.mrb[0].mxu0 %v1083
      %v1781 = vpop.f32.mrb[0].mxu0
      %v1782 = vadd.f32 %v1493, %v1781
      %v1783 = vpop.f32.mrb[0].mxu0
      %v1784 = vpop.f32.mrb[0].mxu0
      %v1785 = vadd.f32 %v1496, %v1784
      %v1786 = vpop.f32.mrb[0].mxu0
      %1787 = vmatprep.mubr.bf16.mxu0 0
      %1788 = vmatmul.mubr.bf16.gmra.mrb[0].mxu0 %v1084
      %v1789 = vpop.f32.mrb[0].mxu0
      %v1790 = vadd.f32 %v1501, %v1789
      %v1791 = vpop.f32.mrb[0].mxu0
      %v1792 = vpop.f32.mrb[0].mxu0
      %v1793 = vadd.f32 %v1504, %v1792
      %v1794 = vpop.f32.mrb[0].mxu0
      %1795 = vmatprep.mubr.bf16.mxu0 0
      %1796 = vmatmul.mubr.bf16.gmra.mrb[0].mxu0 %v1085
      %v1797 = vpop.f32.mrb[0].mxu0
      %v1798 = vadd.f32 %v1509, %v1797
      %v1799 = vpop.f32.mrb[0].mxu0
      %v1800 = vpop.f32.mrb[0].mxu0
      %v1801 = vadd.f32 %v1512, %v1800
      %v1802 = vpop.f32.mrb[0].mxu0
      %1803 = vmatprep.mubr.bf16.mxu0 0
      %1804 = vmatmul.mubr.bf16.gmra.mrb[0].mxu0 %v1086
      %v1805 = vpop.f32.mrb[0].mxu0
      %v1806 = vadd.f32 %v1517, %v1805
      %v1807 = vpop.f32.mrb[0].mxu0
      %v1808 = vpop.f32.mrb[0].mxu0
      %v1809 = vadd.f32 %v1520, %v1808
      %v1810 = vpop.f32.mrb[0].mxu0
      %1811 = vmatprep.mubr.bf16.mxu0 0
      %1812 = vmatmul.mubr.bf16.gmra.mrb[0].mxu0 %v1087
      %v1813 = vpop.f32.mrb[0].mxu0
      %v1814 = vadd.f32 %v1525, %v1813
      %v1815 = vpop.f32.mrb[0].mxu0
      %v1816 = vpop.f32.mrb[0].mxu0
      %v1817 = vadd.f32 %v1528, %v1816
      %v1818 = vpop.f32.mrb[0].mxu0
      %1819 = vmatprep.mubr.bf16.mxu0 0
      %1820 = vmatmul.mubr.bf16.gmra.mrb[0].mxu0 %v1088
      %v1821 = vpop.f32.mrb[0].mxu0
      %v1822 = vadd.f32 %v1533, %v1821
      %v1823 = vpop.f32.mrb[0].mxu0
      %v1824 = vpop.f32.mrb[0].mxu0
      %v1825 = vadd.f32 %v1536, %v1824
      %v1826 = vpop.f32.mrb[0].mxu0
      %1827 = vmatprep.mubr.bf16.mxu0 0
      %1828 = vmatmul.mubr.bf16.gmra.mrb[0].mxu0 %v1089
      %v1829 = vpop.f32.mrb[0].mxu0
      %v1830 = vadd.f32 %v1541, %v1829
      %v1831 = vpop.f32.mrb[0].mxu0
      %v1832 = vpop.f32.mrb[0].mxu0
      %v1833 = vadd.f32 %v1544, %v1832
      %v1834 = vpop.f32.mrb[0].mxu0
      %1835 = vmatprep.mubr.bf16.mxu0 0
      %1836 = vmatmul.mubr.bf16.gmra.mrb[0].mxu0 %v1090
      %v1837 = vpop.f32.mrb[0].mxu0
      %v1838 = vadd.f32 %v1549, %v1837
      %v1839 = vpop.f32.mrb[0].mxu0
      %v1840 = vpop.f32.mrb[0].mxu0
      %v1841 = vadd.f32 %v1552, %v1840
      %v1842 = vpop.f32.mrb[0].mxu0
      %1843 = vmatprep.mubr.bf16.mxu0 0
      %1844 = vmatmul.mubr.bf16.gmra.mrb[0].mxu0 %v1091
      %v1845 = vpop.f32.mrb[0].mxu0
      %v1846 = vadd.f32 %v1557, %v1845
      %v1847 = vpop.f32.mrb[0].mxu0
      %v1848 = vpop.f32.mrb[0].mxu0
      %v1849 = vadd.f32 %v1560, %v1848
      %v1850 = vpop.f32.mrb[0].mxu0
      %1851 = vmatprep.mubr.bf16.mxu0 0
      %1852 = vmatmul.mubr.bf16.gmra.mrb[0].mxu0 %v1092
      %v1853 = vpop.f32.mrb[0].mxu0
      %v1854 = vadd.f32 %v1565, %v1853
      %v1855 = vpop.f32.mrb[0].mxu0
      %v1856 = vpop.f32.mrb[0].mxu0
      %v1857 = vadd.f32 %v1568, %v1856
      %v1858 = vpop.f32.mrb[0].mxu0
      %1859 = vmatprep.mubr.bf16.mxu0 0
      %1860 = vmatmul.mubr.bf16.gmra.mrb[0].mxu0 %v1093
      %v1861 = vpop.f32.mrb[0].mxu0
      %v1862 = vadd.f32 %v1573, %v1861
      %v1863 = vpop.f32.mrb[0].mxu0
      %v1864 = vpop.f32.mrb[0].mxu0
      %v1865 = vadd.f32 %v1576, %v1864
      %v1866 = vpop.f32.mrb[0].mxu0
      %1867 = vmatprep.mubr.bf16.mxu0 0
      %1868 = vmatmul.mubr.bf16.gmra.mrb[0].mxu0 %v1094
      %v1869 = vpop.f32.mrb[0].mxu0
      %v1870 = vadd.f32 %v1581, %v1869
      %v1871 = vpop.f32.mrb[0].mxu0
      %v1872 = vpop.f32.mrb[0].mxu0
      %v1873 = vadd.f32 %v1584, %v1872
      %v1874 = vpop.f32.mrb[0].mxu0
      %1875 = vmatprep.mubr.bf16.mxu0 0
      %1876 = vmatmul.mubr.bf16.gmra.mrb[0].mxu0 %v1095
      %v1877 = vpop.f32.mrb[0].mxu0
      %v1878 = vadd.f32 %v1589, %v1877
      %v1879 = vpop.f32.mrb[0].mxu0
      %v1880 = vpop.f32.mrb[0].mxu0
      %v1881 = vadd.f32 %v1592, %v1880
      %v1882 = vpop.f32.mrb[0].mxu0
      %1883 = vmatprep.mubr.bf16.mxu0 0
      %1884 = vmatmul.mubr.bf16.gmra.mrb[0].mxu0 %v1096
      %v1885 = vpop.f32.mrb[0].mxu0
      %v1886 = vadd.f32 %v1597, %v1885
      %v1887 = vpop.f32.mrb[0].mxu0
      %v1888 = vpop.f32.mrb[0].mxu0
      %v1889 = vadd.f32 %v1600, %v1888
      %v1890 = vpop.f32.mrb[0].mxu0
      %1891 = vmatprep.mubr.bf16.mxu0 0
      %1892 = vmatmul.mubr.bf16.gmra.mrb[0].mxu0 %v1097
      %v1893 = vpop.f32.mrb[0].mxu0
      %v1894 = vadd.f32 %v1605, %v1893
      %v1895 = vpop.f32.mrb[0].mxu0
      %v1896 = vpop.f32.mrb[0].mxu0
      %v1897 = vadd.f32 %v1608, %v1896
      %v1898 = vpop.f32.mrb[0].mxu0
      %1899 = vmatprep.mubr.bf16.mxu0 0
      %1900 = vmatmul.mubr.bf16.gmra.mrb[0].mxu0 %v1098
      %v1901 = vpop.f32.mrb[0].mxu0
      %v1902 = vadd.f32 %v1613, %v1901
      %v1903 = vpop.f32.mrb[0].mxu0
      %v1904 = vpop.f32.mrb[0].mxu0
      %v1905 = vadd.f32 %v1616, %v1904
      %v1906 = vpop.f32.mrb[0].mxu0
      %1907 = vdwg.mxu0
      %v1908 = vmax.f32 %v1654, 0.0
      %v1909 = vmax.f32 %v1657, 0.0
      %v1910 = vmax.f32 %v1662, 0.0
      %v1911 = vmax.f32 %v1665, 0.0
      %v1912 = vmax.f32 %v1670, 0.0
      %v1913 = vmax.f32 %v1673, 0.0
      %v1914 = vmax.f32 %v1678, 0.0
      %v1915 = vmax.f32 %v1681, 0.0
      %v1916 = vmax.f32 %v1686, 0.0
      %v1917 = vmax.f32 %v1689, 0.0
      %v1918 = vmax.f32 %v1694, 0.0
      %v1919 = vmax.f32 %v1697, 0.0
      %v1920 = vmax.f32 %v1702, 0.0
      %v1921 = vmax.f32 %v1705, 0.0
      %v1922 = vmax.f32 %v1710, 0.0
      %v1923 = vmax.f32 %v1713, 0.0
      %v1924 = vmax.f32 %v1718, 0.0
      %v1925 = vmax.f32 %v1721, 0.0
      %v1926 = vmax.f32 %v1726, 0.0
      %v1927 = vmax.f32 %v1729, 0.0
      %v1928 = vmax.f32 %v1734, 0.0
      %v1929 = vmax.f32 %v1737, 0.0
      %v1930 = vmax.f32 %v1742, 0.0
      %v1931 = vmax.f32 %v1745, 0.0
      %v1932 = vmax.f32 %v1750, 0.0
      %v1933 = vmax.f32 %v1753, 0.0
      %v1934 = vmax.f32 %v1758, 0.0
      %v1935 = vmax.f32 %v1761, 0.0
      %v1936 = vmax.f32 %v1766, 0.0
      %v1937 = vmax.f32 %v1769, 0.0
      %v1938 = vmax.f32 %v1774, 0.0
      %v1939 = vmax.f32 %v1777, 0.0
      %v1940 = vmax.f32 %v1782, 0.0
      %v1941 = vmax.f32 %v1785, 0.0
      %v1942 = vmax.f32 %v1790, 0.0
      %v1943 = vmax.f32 %v1793, 0.0
      %v1944 = vmax.f32 %v1798, 0.0
      %v1945 = vmax.f32 %v1801, 0.0
      %v1946 = vmax.f32 %v1806, 0.0
      %v1947 = vmax.f32 %v1809, 0.0
      %v1948 = vmax.f32 %v1814, 0.0
      %v1949 = vmax.f32 %v1817, 0.0
      %v1950 = vmax.f32 %v1822, 0.0
      %v1951 = vmax.f32 %v1825, 0.0
      %v1952 = vmax.f32 %v1830, 0.0
      %v1953 = vmax.f32 %v1833, 0.0
      %v1954 = vmax.f32 %v1838, 0.0
      %v1955 = vmax.f32 %v1841, 0.0
      %v1956 = vmax.f32 %v1846, 0.0
      %v1957 = vmax.f32 %v1849, 0.0
      %v1958 = vmax.f32 %v1854, 0.0
      %v1959 = vmax.f32 %v1857, 0.0
      %v1960 = vmax.f32 %v1862, 0.0
      %v1961 = vmax.f32 %v1865, 0.0
      %v1962 = vmax.f32 %v1870, 0.0
      %v1963 = vmax.f32 %v1873, 0.0
      %v1964 = vmax.f32 %v1878, 0.0
      %v1965 = vmax.f32 %v1881, 0.0
      %v1966 = vmax.f32 %v1886, 0.0
      %v1967 = vmax.f32 %v1889, 0.0
      %v1968 = vmax.f32 %v1894, 0.0
      %v1969 = vmax.f32 %v1897, 0.0
      %v1970 = vmax.f32 %v1902, 0.0
      %v1971 = vmax.f32 %v1905, 0.0
      %v1972 = vpack.c.bf16 %v1909, %v1908
      %v1973 = vpack.c.bf16 %v1911, %v1910
      %v1974 = vpack.c.bf16 %v1913, %v1912
      %v1975 = vpack.c.bf16 %v1915, %v1914
      %v1976 = vpack.c.bf16 %v1917, %v1916
      %v1977 = vpack.c.bf16 %v1919, %v1918
      %v1978 = vpack.c.bf16 %v1921, %v1920
      %v1979 = vpack.c.bf16 %v1923, %v1922
      %v1980 = vpack.c.bf16 %v1925, %v1924
      %v1981 = vpack.c.bf16 %v1927, %v1926
      %v1982 = vpack.c.bf16 %v1929, %v1928
      %v1983 = vpack.c.bf16 %v1931, %v1930
      %v1984 = vpack.c.bf16 %v1933, %v1932
      %v1985 = vpack.c.bf16 %v1935, %v1934
      %v1986 = vpack.c.bf16 %v1937, %v1936
      %v1987 = vpack.c.bf16 %v1939, %v1938
      %v1988 = vpack.c.bf16 %v1941, %v1940
      %v1989 = vpack.c.bf16 %v1943, %v1942
      %v1990 = vpack.c.bf16 %v1945, %v1944
      %v1991 = vpack.c.bf16 %v1947, %v1946
      %v1992 = vpack.c.bf16 %v1949, %v1948
      %v1993 = vpack.c.bf16 %v1951, %v1950
      %v1994 = vpack.c.bf16 %v1953, %v1952
      %v1995 = vpack.c.bf16 %v1955, %v1954
      %v1996 = vpack.c.bf16 %v1957, %v1956
      %v1997 = vpack.c.bf16 %v1959, %v1958
      %v1998 = vpack.c.bf16 %v1961, %v1960
      %v1999 = vpack.c.bf16 %v1963, %v1962
      %v2000 = vpack.c.bf16 %v1965, %v1964
      %v2001 = vpack.c.bf16 %v1967, %v1966
      %v2002 = vpack.c.bf16 %v1969, %v1968
      %v2003 = vpack.c.bf16 %v1971, %v1970
      %v2036 = vunpack.c.l.b16 %v1972
      %v2037 = vunpack.c.h.b16 %v1972
      %v2038 = vunpack.c.l.b16 %v1973
      %v2039 = vunpack.c.h.b16 %v1973
      %v2040 = vunpack.c.l.b16 %v1974
      %v2041 = vunpack.c.h.b16 %v1974
      %v2042 = vunpack.c.l.b16 %v1975
      %v2043 = vunpack.c.h.b16 %v1975
      %v2044 = vunpack.c.l.b16 %v1976
      %v2045 = vunpack.c.h.b16 %v1976
      %v2046 = vunpack.c.l.b16 %v1977
      %v2047 = vunpack.c.h.b16 %v1977
      %v2048 = vunpack.c.l.b16 %v1978
      %v2049 = vunpack.c.h.b16 %v1978
      %v2050 = vunpack.c.l.b16 %v1979
      %v2051 = vunpack.c.h.b16 %v1979
      %v2052 = vunpack.c.l.b16 %v1980
      %v2053 = vunpack.c.h.b16 %v1980
      %v2054 = vunpack.c.l.b16 %v1981
      %v2055 = vunpack.c.h.b16 %v1981
      %v2056 = vunpack.c.l.b16 %v1982
      %v2057 = vunpack.c.h.b16 %v1982
      %v2058 = vunpack.c.l.b16 %v1983
      %v2059 = vunpack.c.h.b16 %v1983
      %v2060 = vunpack.c.l.b16 %v1984
      %v2061 = vunpack.c.h.b16 %v1984
      %v2062 = vunpack.c.l.b16 %v1985
      %v2063 = vunpack.c.h.b16 %v1985
      %v2064 = vunpack.c.l.b16 %v1986
      %v2065 = vunpack.c.h.b16 %v1986
      %v2066 = vunpack.c.l.b16 %v1987
      %v2067 = vunpack.c.h.b16 %v1987
      %v2068 = vunpack.c.l.b16 %v1988
      %v2069 = vunpack.c.h.b16 %v1988
      %v2070 = vunpack.c.l.b16 %v1989
      %v2071 = vunpack.c.h.b16 %v1989
      %v2072 = vunpack.c.l.b16 %v1990
      %v2073 = vunpack.c.h.b16 %v1990
      %v2074 = vunpack.c.l.b16 %v1991
      %v2075 = vunpack.c.h.b16 %v1991
      %v2076 = vunpack.c.l.b16 %v1992
      %v2077 = vunpack.c.h.b16 %v1992
      %v2078 = vunpack.c.l.b16 %v1993
      %v2079 = vunpack.c.h.b16 %v1993
      %v2080 = vunpack.c.l.b16 %v1994
      %v2081 = vunpack.c.h.b16 %v1994
      %v2082 = vunpack.c.l.b16 %v1995
      %v2083 = vunpack.c.h.b16 %v1995
      %v2084 = vunpack.c.l.b16 %v1996
      %v2085 = vunpack.c.h.b16 %v1996
      %v2086 = vunpack.c.l.b16 %v1997
      %v2087 = vunpack.c.h.b16 %v1997
      %v2088 = vunpack.c.l.b16 %v1998
      %v2089 = vunpack.c.h.b16 %v1998
      %v2090 = vunpack.c.l.b16 %v1999
      %v2091 = vunpack.c.h.b16 %v1999
      %v2092 = vunpack.c.l.b16 %v2000
      %v2093 = vunpack.c.h.b16 %v2000
      %v2094 = vunpack.c.l.b16 %v2001
      %v2095 = vunpack.c.h.b16 %v2001
      %v2096 = vunpack.c.l.b16 %v2002
      %v2097 = vunpack.c.h.b16 %v2002
      %v2098 = vunpack.c.l.b16 %v2003
      %v2099 = vunpack.c.h.b16 %v2003
      %v2100 = vpack.c.b16 %v2036, %v2036
      %v2101 = vpack.c.b16 %v2037, %v2037
      %v2102 = vpack.c.b16 %v2038, %v2038
      %v2103 = vpack.c.b16 %v2039, %v2039
      %v2104 = vpack.c.b16 %v2040, %v2040
      %v2105 = vpack.c.b16 %v2041, %v2041
      %v2106 = vpack.c.b16 %v2042, %v2042
      %v2107 = vpack.c.b16 %v2043, %v2043
      %v2108 = vpack.c.b16 %v2044, %v2044
      %v2109 = vpack.c.b16 %v2045, %v2045
      %v2110 = vpack.c.b16 %v2046, %v2046
      %v2111 = vpack.c.b16 %v2047, %v2047
      %v2112 = vpack.c.b16 %v2048, %v2048
      %v2113 = vpack.c.b16 %v2049, %v2049
      %v2114 = vpack.c.b16 %v2050, %v2050
      %v2115 = vpack.c.b16 %v2051, %v2051
      %v2116 = vpack.c.b16 %v2052, %v2052
      %v2117 = vpack.c.b16 %v2053, %v2053
      %v2118 = vpack.c.b16 %v2054, %v2054
      %v2119 = vpack.c.b16 %v2055, %v2055
      %v2120 = vpack.c.b16 %v2056, %v2056
      %v2121 = vpack.c.b16 %v2057, %v2057
      %v2122 = vpack.c.b16 %v2058, %v2058
      %v2123 = vpack.c.b16 %v2059, %v2059
      %v2124 = vpack.c.b16 %v2060, %v2060
      %v2125 = vpack.c.b16 %v2061, %v2061
      %v2126 = vpack.c.b16 %v2062, %v2062
      %v2127 = vpack.c.b16 %v2063, %v2063
      %v2128 = vpack.c.b16 %v2064, %v2064
      %v2129 = vpack.c.b16 %v2065, %v2065
      %v2130 = vpack.c.b16 %v2066, %v2066
      %v2131 = vpack.c.b16 %v2067, %v2067
      %v2132 = vpack.c.b16 %v2068, %v2068
      %v2133 = vpack.c.b16 %v2069, %v2069
      %v2134 = vpack.c.b16 %v2070, %v2070
      %v2135 = vpack.c.b16 %v2071, %v2071
      %v2136 = vpack.c.b16 %v2072, %v2072
      %v2137 = vpack.c.b16 %v2073, %v2073
      %v2138 = vpack.c.b16 %v2074, %v2074
      %v2139 = vpack.c.b16 %v2075, %v2075
      %v2140 = vpack.c.b16 %v2076, %v2076
      %v2141 = vpack.c.b16 %v2077, %v2077
      %v2142 = vpack.c.b16 %v2078, %v2078
      %v2143 = vpack.c.b16 %v2079, %v2079
      %v2144 = vpack.c.b16 %v2080, %v2080
      %v2145 = vpack.c.b16 %v2081, %v2081
      %v2146 = vpack.c.b16 %v2082, %v2082
      %v2147 = vpack.c.b16 %v2083, %v2083
      %v2148 = vpack.c.b16 %v2084, %v2084
      %v2149 = vpack.c.b16 %v2085, %v2085
      %v2150 = vpack.c.b16 %v2086, %v2086
      %v2151 = vpack.c.b16 %v2087, %v2087
      %v2152 = vpack.c.b16 %v2088, %v2088
      %v2153 = vpack.c.b16 %v2089, %v2089
      %v2154 = vpack.c.b16 %v2090, %v2090
      %v2155 = vpack.c.b16 %v2091, %v2091
      %v2156 = vpack.c.b16 %v2092, %v2092
      %v2157 = vpack.c.b16 %v2093, %v2093
      %v2158 = vpack.c.b16 %v2094, %v2094
      %v2159 = vpack.c.b16 %v2095, %v2095
      %v2160 = vpack.c.b16 %v2096, %v2096
      %v2161 = vpack.c.b16 %v2097, %v2097
      %v2162 = vpack.c.b16 %v2098, %v2098
      %v2163 = vpack.c.b16 %v2099, %v2099
      %2228 = vst [vmem:[%s354] sm:$0xf] %v2100
      %2229 = vst [vmem:[%s354 + $0x4] sm:$0xf] %v2101
      %2230 = vst [vmem:[%s354 + $0x8] sm:$0xf] %v2102
      %2231 = vst [vmem:[%s354 + $0xc] sm:$0xf] %v2103
      %2232 = vst [vmem:[%s354 + $0x10] sm:$0xf] %v2104
      %2233 = vst [vmem:[%s354 + $0x14] sm:$0xf] %v2105
      %2234 = vst [vmem:[%s354 + $0x18] sm:$0xf] %v2106
      %2235 = vst [vmem:[%s354 + $0x1c] sm:$0xf] %v2107
      %2236 = vst [vmem:[%s354 + $0x20] sm:$0xf] %v2108
      %2237 = vst [vmem:[%s354 + $0x24] sm:$0xf] %v2109
      %2238 = vst [vmem:[%s354 + $0x28] sm:$0xf] %v2110
      %2239 = vst [vmem:[%s354 + $0x2c] sm:$0xf] %v2111
      %2240 = vst [vmem:[%s354 + $0x30] sm:$0xf] %v2112
      %2241 = vst [vmem:[%s354 + $0x34] sm:$0xf] %v2113
      %2242 = vst [vmem:[%s354 + $0x38] sm:$0xf] %v2114
      %2243 = vst [vmem:[%s354 + $0x3c] sm:$0xf] %v2115
      %2244 = vst [vmem:[%s354 + $0x40] sm:$0xf] %v2116
      %2245 = vst [vmem:[%s354 + $0x44] sm:$0xf] %v2117
      %2246 = vst [vmem:[%s354 + $0x48] sm:$0xf] %v2118
      %2247 = vst [vmem:[%s354 + $0x4c] sm:$0xf] %v2119
      %2248 = vst [vmem:[%s354 + $0x50] sm:$0xf] %v2120
      %2249 = vst [vmem:[%s354 + $0x54] sm:$0xf] %v2121
      %2250 = vst [vmem:[%s354 + $0x58] sm:$0xf] %v2122
      %2251 = vst [vmem:[%s354 + $0x5c] sm:$0xf] %v2123
      %2252 = vst [vmem:[%s354 + $0x60] sm:$0xf] %v2124
      %2253 = vst [vmem:[%s354 + $0x64] sm:$0xf] %v2125
      %2254 = vst [vmem:[%s354 + $0x68] sm:$0xf] %v2126
      %2255 = vst [vmem:[%s354 + $0x6c] sm:$0xf] %v2127
      %2256 = vst [vmem:[%s354 + $0x70] sm:$0xf] %v2128
      %2257 = vst [vmem:[%s354 + $0x74] sm:$0xf] %v2129
      %2258 = vst [vmem:[%s354 + $0x78] sm:$0xf] %v2130
      %2259 = vst [vmem:[%s354 + $0x7c] sm:$0xf] %v2131
      %2260 = vst [vmem:[%s354 + $0x80] sm:$0xf] %v2132
      %2261 = vst [vmem:[%s354 + $0x84] sm:$0xf] %v2133
      %2262 = vst [vmem:[%s354 + $0x88] sm:$0xf] %v2134
      %2263 = vst [vmem:[%s354 + $0x8c] sm:$0xf] %v2135
      %2264 = vst [vmem:[%s354 + $0x90] sm:$0xf] %v2136
      %2265 = vst [vmem:[%s354 + $0x94] sm:$0xf] %v2137
      %2266 = vst [vmem:[%s354 + $0x98] sm:$0xf] %v2138
      %2267 = vst [vmem:[%s354 + $0x9c] sm:$0xf] %v2139
      %2268 = vst [vmem:[%s354 + $0xa0] sm:$0xf] %v2140
      %2269 = vst [vmem:[%s354 + $0xa4] sm:$0xf] %v2141
      %2270 = vst [vmem:[%s354 + $0xa8] sm:$0xf] %v2142
      %2271 = vst [vmem:[%s354 + $0xac] sm:$0xf] %v2143
      %2272 = vst [vmem:[%s354 + $0xb0] sm:$0xf] %v2144
      %2273 = vst [vmem:[%s354 + $0xb4] sm:$0xf] %v2145
      %2274 = vst [vmem:[%s354 + $0xb8] sm:$0xf] %v2146
      %2275 = vst [vmem:[%s354 + $0xbc] sm:$0xf] %v2147
      %2276 = vst [vmem:[%s354 + $0xc0] sm:$0xf] %v2148
      %2277 = vst [vmem:[%s354 + $0xc4] sm:$0xf] %v2149
      %2278 = vst [vmem:[%s354 + $0xc8] sm:$0xf] %v2150
      %2279 = vst [vmem:[%s354 + $0xcc] sm:$0xf] %v2151
      %2280 = vst [vmem:[%s354 + $0xd0] sm:$0xf] %v2152
      %2281 = vst [vmem:[%s354 + $0xd4] sm:$0xf] %v2153
      %2282 = vst [vmem:[%s354 + $0xd8] sm:$0xf] %v2154
      %2283 = vst [vmem:[%s354 + $0xdc] sm:$0xf] %v2155
      %2284 = vst [vmem:[%s354 + $0xe0] sm:$0xf] %v2156
      %2285 = vst [vmem:[%s354 + $0xe4] sm:$0xf] %v2157
      %2286 = vst [vmem:[%s354 + $0xe8] sm:$0xf] %v2158
      %2287 = vst [vmem:[%s354 + $0xec] sm:$0xf] %v2159
      %2288 = vst [vmem:[%s354 + $0xf0] sm:$0xf] %v2160
      %2289 = vst [vmem:[%s354 + $0xf4] sm:$0xf] %v2161
      %2290 = vst [vmem:[%s354 + $0xf8] sm:$0xf] %v2162
      %2291 = vst [vmem:[%s354 + $0xfc] sm:$0xf] %v2163
      %v2292 = vld [vmem:[%s348] sm:$0xff]
      %v2293 = vld [vmem:[%s348 + $0x8] sm:$0xff]
      %v2294 = vld [vmem:[%s348 + $0x10] sm:$0xff]
      %v2295 = vld [vmem:[%s348 + $0x18] sm:$0xff]
      %v2296 = vld [vmem:[%s348 + $0x20] sm:$0xff]
      %v2297 = vld [vmem:[%s348 + $0x28] sm:$0xff]
      %v2298 = vld [vmem:[%s348 + $0x30] sm:$0xff]
      %v2299 = vld [vmem:[%s348 + $0x38] sm:$0xff]
      %v2300 = vld [vmem:[%s348 + $0x40] sm:$0xff]
      %v2301 = vld [vmem:[%s348 + $0x48] sm:$0xff]
      %v2302 = vld [vmem:[%s348 + $0x50] sm:$0xff]
      %v2303 = vld [vmem:[%s348 + $0x58] sm:$0xff]
      %v2304 = vld [vmem:[%s348 + $0x60] sm:$0xff]
      %v2305 = vld [vmem:[%s348 + $0x68] sm:$0xff]
      %v2306 = vld [vmem:[%s348 + $0x70] sm:$0xff]
      %v2307 = vld [vmem:[%s348 + $0x78] sm:$0xff]
      %v2308 = vld [vmem:[%s348 + $0x80] sm:$0xff]
      %v2309 = vld [vmem:[%s348 + $0x88] sm:$0xff]
      %v2310 = vld [vmem:[%s348 + $0x90] sm:$0xff]
      %v2311 = vld [vmem:[%s348 + $0x98] sm:$0xff]
      %v2312 = vld [vmem:[%s348 + $0xa0] sm:$0xff]
      %v2313 = vld [vmem:[%s348 + $0xa8] sm:$0xff]
      %v2314 = vld [vmem:[%s348 + $0xb0] sm:$0xff]
      %v2315 = vld [vmem:[%s348 + $0xb8] sm:$0xff]
      %v2316 = vld [vmem:[%s348 + $0xc0] sm:$0xff]
      %v2317 = vld [vmem:[%s348 + $0xc8] sm:$0xff]
      %v2318 = vld [vmem:[%s348 + $0xd0] sm:$0xff]
      %v2319 = vld [vmem:[%s348 + $0xd8] sm:$0xff]
      %v2320 = vld [vmem:[%s348 + $0xe0] sm:$0xff]
      %v2321 = vld [vmem:[%s348 + $0xe8] sm:$0xff]
      %v2322 = vld [vmem:[%s348 + $0xf0] sm:$0xff]
      %v2323 = vld [vmem:[%s348 + $0xf8] sm:$0xff]
      %v2324 = vld [vmem:[%s348 + $0x100] sm:$0xff]
      %v2325 = vld [vmem:[%s348 + $0x108] sm:$0xff]
      %v2326 = vld [vmem:[%s348 + $0x110] sm:$0xff]
      %v2327 = vld [vmem:[%s348 + $0x118] sm:$0xff]
      %v2328 = vld [vmem:[%s348 + $0x120] sm:$0xff]
      %v2329 = vld [vmem:[%s348 + $0x128] sm:$0xff]
      %v2330 = vld [vmem:[%s348 + $0x130] sm:$0xff]
      %v2331 = vld [vmem:[%s348 + $0x138] sm:$0xff]
      %v2332 = vld [vmem:[%s348 + $0x140] sm:$0xff]
      %v2333 = vld [vmem:[%s348 + $0x148] sm:$0xff]
      %v2334 = vld [vmem:[%s348 + $0x150] sm:$0xff]
      %v2335 = vld [vmem:[%s348 + $0x158] sm:$0xff]
      %v2336 = vld [vmem:[%s348 + $0x160] sm:$0xff]
      %v2337 = vld [vmem:[%s348 + $0x168] sm:$0xff]
      %v2338 = vld [vmem:[%s348 + $0x170] sm:$0xff]
      %v2339 = vld [vmem:[%s348 + $0x178] sm:$0xff]
      %v2340 = vld [vmem:[%s348 + $0x180] sm:$0xff]
      %v2341 = vld [vmem:[%s348 + $0x188] sm:$0xff]
      %v2342 = vld [vmem:[%s348 + $0x190] sm:$0xff]
      %v2343 = vld [vmem:[%s348 + $0x198] sm:$0xff]
      %v2344 = vld [vmem:[%s348 + $0x1a0] sm:$0xff]
      %v2345 = vld [vmem:[%s348 + $0x1a8] sm:$0xff]
      %v2346 = vld [vmem:[%s348 + $0x1b0] sm:$0xff]
      %v2347 = vld [vmem:[%s348 + $0x1b8] sm:$0xff]
      %v2348 = vld [vmem:[%s348 + $0x1c0] sm:$0xff]
      %v2349 = vld [vmem:[%s348 + $0x1c8] sm:$0xff]
      %v2350 = vld [vmem:[%s348 + $0x1d0] sm:$0xff]
      %v2351 = vld [vmem:[%s348 + $0x1d8] sm:$0xff]
      %v2352 = vld [vmem:[%s348 + $0x1e0] sm:$0xff]
      %v2353 = vld [vmem:[%s348 + $0x1e8] sm:$0xff]
      %v2354 = vld [vmem:[%s348 + $0x1f0] sm:$0xff]
      %v2355 = vld [vmem:[%s348 + $0x1f8] sm:$0xff]
      %v2356 = vmax.f32 %v1908, %v2292
      %v2357 = vmax.f32 %v1909, %v2293
      %v2358 = vmax.f32 %v1910, %v2294
      %v2359 = vmax.f32 %v1911, %v2295
      %v2360 = vmax.f32 %v1912, %v2296
      %v2361 = vmax.f32 %v1913, %v2297
      %v2362 = vmax.f32 %v1914, %v2298
      %v2363 = vmax.f32 %v1915, %v2299
      %v2364 = vmax.f32 %v1916, %v2300
      %v2365 = vmax.f32 %v1917, %v2301
      %v2366 = vmax.f32 %v1918, %v2302
      %v2367 = vmax.f32 %v1919, %v2303
      %v2368 = vmax.f32 %v1920, %v2304
      %v2369 = vmax.f32 %v1921, %v2305
      %v2370 = vmax.f32 %v1922, %v2306
      %v2371 = vmax.f32 %v1923, %v2307
      %v2372 = vmax.f32 %v1924, %v2308
      %v2373 = vmax.f32 %v1925, %v2309
      %v2374 = vmax.f32 %v1926, %v2310
      %v2375 = vmax.f32 %v1927, %v2311
      %v2376 = vmax.f32 %v1928, %v2312
      %v2377 = vmax.f32 %v1929, %v2313
      %v2378 = vmax.f32 %v1930, %v2314
      %v2379 = vmax.f32 %v1931, %v2315
      %v2380 = vmax.f32 %v1932, %v2316
      %v2381 = vmax.f32 %v1933, %v2317
      %v2382 = vmax.f32 %v1934, %v2318
      %v2383 = vmax.f32 %v1935, %v2319
      %v2384 = vmax.f32 %v1936, %v2320
      %v2385 = vmax.f32 %v1937, %v2321
      %v2386 = vmax.f32 %v1938, %v2322
      %v2387 = vmax.f32 %v1939, %v2323
      %v2388 = vmax.f32 %v1940, %v2324
      %v2389 = vmax.f32 %v1941, %v2325
      %v2390 = vmax.f32 %v1942, %v2326
      %v2391 = vmax.f32 %v1943, %v2327
      %v2392 = vmax.f32 %v1944, %v2328
      %v2393 = vmax.f32 %v1945, %v2329
      %v2394 = vmax.f32 %v1946, %v2330
      %v2395 = vmax.f32 %v1947, %v2331
      %v2396 = vmax.f32 %v1948, %v2332
      %v2397 = vmax.f32 %v1949, %v2333
      %v2398 = vmax.f32 %v1950, %v2334
      %v2399 = vmax.f32 %v1951, %v2335
      %v2400 = vmax.f32 %v1952, %v2336
      %v2401 = vmax.f32 %v1953, %v2337
      %v2402 = vmax.f32 %v1954, %v2338
      %v2403 = vmax.f32 %v1955, %v2339
      %v2404 = vmax.f32 %v1956, %v2340
      %v2405 = vmax.f32 %v1957, %v2341
      %v2406 = vmax.f32 %v1958, %v2342
      %v2407 = vmax.f32 %v1959, %v2343
      %v2408 = vmax.f32 %v1960, %v2344
      %v2409 = vmax.f32 %v1961, %v2345
      %v2410 = vmax.f32 %v1962, %v2346
      %v2411 = vmax.f32 %v1963, %v2347
      %v2412 = vmax.f32 %v1964, %v2348
      %v2413 = vmax.f32 %v1965, %v2349
      %v2414 = vmax.f32 %v1966, %v2350
      %v2415 = vmax.f32 %v1967, %v2351
      %v2416 = vmax.f32 %v1968, %v2352
      %v2417 = vmax.f32 %v1969, %v2353
      %v2418 = vmax.f32 %v1970, %v2354
      %v2419 = vmax.f32 %v1971, %v2355
      %2420 = vst [vmem:[%s360] sm:$0xff] %v2356
      %2421 = vst [vmem:[%s360 + $0x8] sm:$0xff] %v2357
      %2422 = vst [vmem:[%s360 + $0x10] sm:$0xff] %v2358
      %2423 = vst [vmem:[%s360 + $0x18] sm:$0xff] %v2359
      %2424 = vst [vmem:[%s360 + $0x20] sm:$0xff] %v2360
      %2425 = vst [vmem:[%s360 + $0x28] sm:$0xff] %v2361
      %2426 = vst [vmem:[%s360 + $0x30] sm:$0xff] %v2362
      %2427 = vst [vmem:[%s360 + $0x38] sm:$0xff] %v2363
      %2428 = vst [vmem:[%s360 + $0x40] sm:$0xff] %v2364
      %2429 = vst [vmem:[%s360 + $0x48] sm:$0xff] %v2365
      %2430 = vst [vmem:[%s360 + $0x50] sm:$0xff] %v2366
      %2431 = vst [vmem:[%s360 + $0x58] sm:$0xff] %v2367
      %2432 = vst [vmem:[%s360 + $0x60] sm:$0xff] %v2368
      %2433 = vst [vmem:[%s360 + $0x68] sm:$0xff] %v2369
      %2434 = vst [vmem:[%s360 + $0x70] sm:$0xff] %v2370
      %2435 = vst [vmem:[%s360 + $0x78] sm:$0xff] %v2371
      %2436 = vst [vmem:[%s360 + $0x80] sm:$0xff] %v2372
      %2437 = vst [vmem:[%s360 + $0x88] sm:$0xff] %v2373
      %2438 = vst [vmem:[%s360 + $0x90] sm:$0xff] %v2374
      %2439 = vst [vmem:[%s360 + $0x98] sm:$0xff] %v2375
      %2440 = vst [vmem:[%s360 + $0xa0] sm:$0xff] %v2376
      %2441 = vst [vmem:[%s360 + $0xa8] sm:$0xff] %v2377
      %2442 = vst [vmem:[%s360 + $0xb0] sm:$0xff] %v2378
      %2443 = vst [vmem:[%s360 + $0xb8] sm:$0xff] %v2379
      %2444 = vst [vmem:[%s360 + $0xc0] sm:$0xff] %v2380
      %2445 = vst [vmem:[%s360 + $0xc8] sm:$0xff] %v2381
      %2446 = vst [vmem:[%s360 + $0xd0] sm:$0xff] %v2382
      %2447 = vst [vmem:[%s360 + $0xd8] sm:$0xff] %v2383
      %2448 = vst [vmem:[%s360 + $0xe0] sm:$0xff] %v2384
      %2449 = vst [vmem:[%s360 + $0xe8] sm:$0xff] %v2385
      %2450 = vst [vmem:[%s360 + $0xf0] sm:$0xff] %v2386
      %2451 = vst [vmem:[%s360 + $0xf8] sm:$0xff] %v2387
      %2452 = vst [vmem:[%s360 + $0x100] sm:$0xff] %v2388
      %2453 = vst [vmem:[%s360 + $0x108] sm:$0xff] %v2389
      %2454 = vst [vmem:[%s360 + $0x110] sm:$0xff] %v2390
      %2455 = vst [vmem:[%s360 + $0x118] sm:$0xff] %v2391
      %2456 = vst [vmem:[%s360 + $0x120] sm:$0xff] %v2392
      %2457 = vst [vmem:[%s360 + $0x128] sm:$0xff] %v2393
      %2458 = vst [vmem:[%s360 + $0x130] sm:$0xff] %v2394
      %2459 = vst [vmem:[%s360 + $0x138] sm:$0xff] %v2395
      %2460 = vst [vmem:[%s360 + $0x140] sm:$0xff] %v2396
      %2461 = vst [vmem:[%s360 + $0x148] sm:$0xff] %v2397
      %2462 = vst [vmem:[%s360 + $0x150] sm:$0xff] %v2398
      %2463 = vst [vmem:[%s360 + $0x158] sm:$0xff] %v2399
      %2464 = vst [vmem:[%s360 + $0x160] sm:$0xff] %v2400
      %2465 = vst [vmem:[%s360 + $0x168] sm:$0xff] %v2401
      %2466 = vst [vmem:[%s360 + $0x170] sm:$0xff] %v2402
      %2467 = vst [vmem:[%s360 + $0x178] sm:$0xff] %v2403
      %2468 = vst [vmem:[%s360 + $0x180] sm:$0xff] %v2404
      %2469 = vst [vmem:[%s360 + $0x188] sm:$0xff] %v2405
      %2470 = vst [vmem:[%s360 + $0x190] sm:$0xff] %v2406
      %2471 = vst [vmem:[%s360 + $0x198] sm:$0xff] %v2407
      %2472 = vst [vmem:[%s360 + $0x1a0] sm:$0xff] %v2408
      %2473 = vst [vmem:[%s360 + $0x1a8] sm:$0xff] %v2409
      %2474 = vst [vmem:[%s360 + $0x1b0] sm:$0xff] %v2410
      %2475 = vst [vmem:[%s360 + $0x1b8] sm:$0xff] %v2411
      %2476 = vst [vmem:[%s360 + $0x1c0] sm:$0xff] %v2412
      %2477 = vst [vmem:[%s360 + $0x1c8] sm:$0xff] %v2413
      %2478 = vst [vmem:[%s360 + $0x1d0] sm:$0xff] %v2414
      %2479 = vst [vmem:[%s360 + $0x1d8] sm:$0xff] %v2415
      %2480 = vst [vmem:[%s360 + $0x1e0] sm:$0xff] %v2416
      %2481 = vst [vmem:[%s360 + $0x1e8] sm:$0xff] %v2417
      %2482 = vst [vmem:[%s360 + $0x1f0] sm:$0xff] %v2418
      %2483 = vst [vmem:[%s360 + $0x1f8] sm:$0xff] %v2419
      %s2484 = smul.u32 64, %s19
      %p2485 = scmp.lt.s32.totalorder %s2484, 127
      %s2486 = scalar_select %p2485, %s2484, 127
      %s2487 = smul.addr %s2486, 4
      %s2488 = scalar_lea.vmem %s6, %s2487
      %s2489 = smul.u32 64, %s19
      %p2490 = scmp.lt.s32.totalorder %s2489, 127
      %s2491 = scalar_select %p2490, %s2489, 127
      %s2492 = smul.addr %s2491, 8
      %s2493 = scalar_lea.vmem %s7, %s2492
      // Predicated region
      $region45: #{dea_gnn_jk_forward.12} parent=43 // pred_check
        %p2494 = pneg %p183
      $region46: #{dea_gnn_jk_forward.12} parent=43 // pred_check_branch
        %2496 = sbr.rel (%p2494) target = $region48
      $region47: #{dea_gnn_jk_forward.12} parent=43 // pred_region
        %s2497 = smul.u32 64, %s19
      $region48: #{dea_gnn_jk_forward.12} parent=43 // pred_fallthru
        _
      // Predicated region
      $region49: #{dea_gnn_jk_forward.12} parent=43 // pred_check
        %p2498 = pneg %p209
      $region50: #{dea_gnn_jk_forward.12} parent=43 // pred_check_branch
        %2500 = sbr.rel (%p2498) target = $region52
      $region51: #{dea_gnn_jk_forward.12} parent=43 // pred_region
        %s2501 = smul.u32 64, %s19
      $region52: #{dea_gnn_jk_forward.12} parent=43 // pred_fallthru
        _
    $region44: #{dea_gnn_jk_forward.12} parent=5 // pred_fallthru
      _
    %p2502 = scmp.le.s32.totalorder 2, %s14
    // Predicated region
    $region53: #{dea_gnn_jk_forward.12} parent=5 // pred_check
      %p2503 = pneg %p2502
    $region54: #{dea_gnn_jk_forward.12} parent=5 // pred_check_branch
      %2505 = sbr.rel (%p2503) target = $region56
    $region55: #{dea_gnn_jk_forward.12} parent=5 // pred_region
      %s2506 = ssub.s32 %s14, 2
      // Predicated region
      $region57: #{dea_gnn_jk_forward.12} parent=55 // pred_check
        %p2507 = pneg %p189
      $region58: #{dea_gnn_jk_forward.12} parent=55 // pred_check_branch
        %2509 = sbr.rel (%p2507) target = $region60
      $region59: #{dea_gnn_jk_forward.12} parent=55 // pred_region
        %s2510 = smul.u32 64, %s20
        %p2511 = scmp.lt.s32.totalorder %s2510, 127
        %s2512 = scalar_select %p2511, %s2510, 127
        %s2513 = smul.addr %s2512, 4
        %s2514 = scalar_lea.vmem %s6, %s2513
      $region60: #{dea_gnn_jk_forward.12} parent=55 // pred_fallthru
        _
      // Predicated region
      $region61: #{dea_gnn_jk_forward.12} parent=55 // pred_check
        %p2515 = pneg %p215
      $region62: #{dea_gnn_jk_forward.12} parent=55 // pred_check_branch
        %2517 = sbr.rel (%p2515) target = $region64
      $region63: #{dea_gnn_jk_forward.12} parent=55 // pred_region
        %s2518 = smul.u32 64, %s20
        %p2519 = scmp.lt.s32.totalorder %s2518, 127
        %s2520 = scalar_select %p2519, %s2518, 127
        %s2521 = smul.addr %s2520, 8
        %s2522 = scalar_lea.vmem %s7, %s2521
      $region64: #{dea_gnn_jk_forward.12} parent=55 // pred_fallthru
        _
    $region56: #{dea_gnn_jk_forward.12} parent=5 // pred_fallthru
      _
  $region6: #{dea_gnn_jk_forward.12} parent=0 // loop_footer
    %s18 = sadd.s32 1, %s14
  $region7: #{dea_gnn_jk_forward.12} parent=0 // loop_footer_branch
    %13 = sbr.rel target = $region3
  $region8: #{dea_gnn_jk_forward.12} parent=0 // loop_exit
    _

// kernel: dea_gnn_jk_forward.10
$region0: #{dea_gnn_jk_forward.10}
  #allocation0 [shape = 'u32[]', space=smem, size = 0x4, offset = 0x4, fixed_abs, tag = 'smem constant byte address 0x4 - core index']
  #allocation1 [shape = 'u32[144,128]{1,0:T(1,128)}', space=vmem, size = 0x12000, scoped, tag = 'internal scratch']
  #allocation2 [shape = 'f32[512,128]{1,0:T(8,128)}', space=vmem, size = 0x40000, scoped, tag = 'scratch operand']
  %s0 = inlined_call_operand.vmem [shape: bf16[1024,1024], index: 0, kind: input, shape index: {}]
  %s1 = inlined_call_operand.vmem [shape: bf16[1024,128], index: 1, kind: input, shape index: {}]
  %s2 = inlined_call_operand.vmem [shape: bf16[1024,128], index: 2, kind: output, shape index: {}]
  %s3 = sld [smem:[#allocation0]]
  $region72: #{dea_gnn_jk_forward.10} parent=0
    _
  %s5 = ssub.s32 1, %s3
  %s6 = scalar_select 0, %s5, %s3
  $region1: #{dea_gnn_jk_forward.10} parent=0
    #allocation3 [shape = 'u8[1048576]{0}', space=vmem, size = 0x100000, scoped, tag = 'input window, operand 0']
    loop: start=0, step=1, limit=6
    $region2: #{dea_gnn_jk_forward.10} parent=1 // loop_pre_header
      _
    $region3: #{dea_gnn_jk_forward.10} parent=1 // loop_header
      %s8 = sphi 0, %s12
      %p9 = scmp.ge.s32.totalorder %s8, 6
      %s15 = sphi 0, %s27
      %s16 = sphi 0, %s23
      %s17 = sphi 0, %s15
      %s18 = sphi 0, %s16
      %s19 = sphi 0, %s17
      %s20 = sphi 0, %s18
      %s32 = sphi 0, %s34
      %s35 = sphi 0, %s32
      %s36 = sphi 0, %s35
      %s52 = sphi 0, %s36
      %s56 = sphi 0, %s56
      %s58 = sphi 0, %s56
      %s59 = sphi 0, %s58
      %s73 = sphi 0, %s59
      %s79 = sphi 0, %s81
      %s82 = sphi 0, %s79
      %s83 = sphi 0, %s82
      %s99 = sphi 0, %s83
    $region4: #{dea_gnn_jk_forward.10} parent=1 // loop_header_branch
      %11 = sbr.rel (%p9) target = $region8
    $region5: #{dea_gnn_jk_forward.10} parent=1 // loop_body
      %s13 = ssub.s32 %s8, 1
      %s14 = ssub.s32 %s8, 2
      %s21 = sadd.s32 1, %s16
      %p22 = scmp.ge.s32.totalorder %s21, 2
      %s23 = scalar_select %p22, 0, %s21
      %s24 = sadd.s32 1, %s15
      %s25 = scalar_select %p22, %s24, %s15
      %p26 = scmp.ge.s32.totalorder %s25, 2
      %s27 = scalar_select %p26, 0, %s25
      %s28 = ssub.s32 %s15, %s27
      %s29 = ssub.s32 %s16, %s23
      %s30 = sor.u32 %s28, %s29
      %p31 = scmp.eq.s32.totalorder %s30, 0
      %s33 = sadd.s32 %s32, 1
      %s34 = scalar_select %p31, %s32, %s33
      %p37 = pneg %p31
      %p38 = scmp.eq.s32.totalorder %s8, 3
      %p39 = por %p37, %p38
      %p40 = scmp.ne.s32.totalorder %s32, %s35
      %p41 = scmp.eq.s32.totalorder %s8, 0
      %p42 = por %p40, %p41
      %p43 = scmp.ne.s32.totalorder %s32, %s35
      %p44 = scmp.eq.s32.totalorder %s13, 3
      %p45 = por %p43, %p44
      %p46 = scmp.ne.s32.totalorder %s35, %s36
      %p47 = scmp.eq.s32.totalorder %s13, 0
      %p48 = por %p46, %p47
      %p49 = scmp.ne.s32.totalorder %s35, %s36
      %p50 = scmp.eq.s32.totalorder %s14, 3
      %p51 = por %p49, %p50
      %p53 = scmp.ne.s32.totalorder %s36, %s52
      %p54 = scmp.eq.s32.totalorder %s14, 0
      %p55 = por %p53, %p54
      %s57 = sadd.s32 %s56, 1
      %p60 = scmp.eq.s32.totalorder %s8, 3
      %p61 = scmp.ne.s32.totalorder %s56, %s58
      %p62 = scmp.eq.s32.totalorder %s8, 0
      %p63 = por %p61, %p62
      %p64 = scmp.ne.s32.totalorder %s56, %s58
      %p65 = scmp.eq.s32.totalorder %s13, 3
      %p66 = por %p64, %p65
      %p67 = scmp.ne.s32.totalorder %s58, %s59
      %p68 = scmp.eq.s32.totalorder %s13, 0
      %p69 = por %p67, %p68
      %p70 = scmp.ne.s32.totalorder %s58, %s59
      %p71 = scmp.eq.s32.totalorder %s14, 3
      %p72 = por %p70, %p71
      %p74 = scmp.ne.s32.totalorder %s59, %s73
      %p75 = scmp.eq.s32.totalorder %s14, 0
      %p76 = por %p74, %p75
      %s77 = ssub.s32 %s15, %s27
      %p78 = scmp.eq.s32.totalorder %s77, 0
      %s80 = sadd.s32 %s79, 1
      %s81 = scalar_select %p78, %s79, %s80
      %p84 = pneg %p78
      %p85 = scmp.eq.s32.totalorder %s8, 3
      %p86 = por %p84, %p85
      %p87 = scmp.ne.s32.totalorder %s79, %s82
      %p88 = scmp.eq.s32.totalorder %s8, 0
      %p89 = por %p87, %p88
      %p90 = scmp.ne.s32.totalorder %s79, %s82
      %p91 = scmp.eq.s32.totalorder %s13, 3
      %p92 = por %p90, %p91
      %p93 = scmp.ne.s32.totalorder %s82, %s83
      %p94 = scmp.eq.s32.totalorder %s13, 0
      %p95 = por %p93, %p94
      %p96 = scmp.ne.s32.totalorder %s82, %s83
      %p97 = scmp.eq.s32.totalorder %s14, 3
      %p98 = por %p96, %p97
      %p100 = scmp.ne.s32.totalorder %s83, %s99
      %p101 = scmp.eq.s32.totalorder %s14, 0
      %p102 = por %p100, %p101
      %p103 = scmp.le.s32.totalorder 1, %s8
      %p104 = scmp.lt.s32.totalorder %s8, 5
      %p105 = pnand %p103, %p104
      %p106 = pneg %p105
      // Predicated region
      $region9: #{dea_gnn_jk_forward.10} parent=5 // pred_check
        _
      $region10: #{dea_gnn_jk_forward.10} parent=5 // pred_check_branch
        %108 = sbr.rel (%p105) target = $region12
      $region11: #{dea_gnn_jk_forward.10} parent=5 // pred_region
        %s109 = ssub.s32 %s8, 1
        // Predicated region
        $region13: #{dea_gnn_jk_forward.10} parent=11 // pred_check
          %p110 = pneg %p69
        $region14: #{dea_gnn_jk_forward.10} parent=11 // pred_check_branch
          %112 = sbr.rel (%p110) target = $region16
        $region15: #{dea_gnn_jk_forward.10} parent=11 // pred_region
          _
        $region16: #{dea_gnn_jk_forward.10} parent=11 // pred_fallthru
          _
      $region12: #{dea_gnn_jk_forward.10} parent=5 // pred_fallthru
        _
      %p113 = scmp.lt.s32.totalorder %s8, 4
      // Predicated region
      $region17: #{dea_gnn_jk_forward.10} parent=5 // pred_check
        %p114 = pneg %p113
      $region18: #{dea_gnn_jk_forward.10} parent=5 // pred_check_branch
        %116 = sbr.rel (%p114) target = $region20
      $region19: #{dea_gnn_jk_forward.10} parent=5 // pred_region
        // Predicated region
        $region21: #{dea_gnn_jk_forward.10} parent=19 // pred_check
          %p117 = pneg %p42
        $region22: #{dea_gnn_jk_forward.10} parent=19 // pred_check_branch
          %119 = sbr.rel (%p117) target = $region24
        $region23: #{dea_gnn_jk_forward.10} parent=19 // pred_region
          %s120 = sand.u32 %s32, 1
          %s121 = sand.u32 %s32, 1
          %s122 = smul.addr %s121, 1024
          %s123 = scalar_lea.vmem [#allocation3], %s122
          %s124 = smul.u32 64, %s15
          %s125 = smul.u32 4, %s16
          %s126 = smul.addr %s124, 8
          %s127 = sadd.s32 %s125, %s126
          %s128 = smul.addr %s127, 4
          %s129 = scalar_lea.vmem %s0, %s128
          // Predicated region
          $region25: #{dea_gnn_jk_forward.10} parent=23 // pred_check
            _
          $region26: #{dea_gnn_jk_forward.10} parent=23 // pred_check_branch
            %131 = sbr.rel (0) target = $region28
          $region27: #{dea_gnn_jk_forward.10} parent=23 // pred_region
            // Predicated region
            $region29: #{dea_gnn_jk_forward.10} parent=27 // pred_check
              _
            $region30: #{dea_gnn_jk_forward.10} parent=27 // pred_check_branch
              %133 = sbr.rel (0) target = $region32
            $region31: #{dea_gnn_jk_forward.10} parent=27 // pred_region
              loop: start=0, step=1, limit=1
              $region33: #{dea_gnn_jk_forward.10} parent=31 // loop_pre_header
                _
              $region34: #{dea_gnn_jk_forward.10} parent=31 // loop_header
                %s135 = sphi 0, %s139
                %p136 = scmp.ge.s32.totalorder %s135, 1
                %s140 = sphi %s129, %s129
                %s141 = sphi %s123, %s123
              $region35: #{dea_gnn_jk_forward.10} parent=31 // loop_header_branch
                %138 = sbr.rel (%p136) target = $region39
              $region36: #{dea_gnn_jk_forward.10} parent=31 // loop_body
                %v142 = vld [vmem:[%s140] sm:$0xff]
                %143 = vst [vmem:[%s141] sm:$0xff] %v142
                %v144 = vld [vmem:[%s140 + $0x8] sm:$0xff]
                %145 = vst [vmem:[%s141 + $0x8] sm:$0xff] %v144
                %v146 = vld [vmem:[%s140 + $0x20] sm:$0xff]
                %147 = vst [vmem:[%s141 + $0x10] sm:$0xff] %v146
                %v148 = vld [vmem:[%s140 + $0x28] sm:$0xff]
                %149 = vst [vmem:[%s141 + $0x18] sm:$0xff] %v148
                %v150 = vld [vmem:[%s140 + $0x40] sm:$0xff]
                %151 = vst [vmem:[%s141 + $0x20] sm:$0xff] %v150
                %v152 = vld [vmem:[%s140 + $0x48] sm:$0xff]
                %153 = vst [vmem:[%s141 + $0x28] sm:$0xff] %v152
                %v154 = vld [vmem:[%s140 + $0x60] sm:$0xff]
                %155 = vst [vmem:[%s141 + $0x30] sm:$0xff] %v154
                %v156 = vld [vmem:[%s140 + $0x68] sm:$0xff]
                %157 = vst [vmem:[%s141 + $0x38] sm:$0xff] %v156
                %v158 = vld [vmem:[%s140 + $0x80] sm:$0xff]
                %159 = vst [vmem:[%s141 + $0x40] sm:$0xff] %v158
                %v160 = vld [vmem:[%s140 + $0x88] sm:$0xff]
                %161 = vst [vmem:[%s141 + $0x48] sm:$0xff] %v160
                %v162 = vld [vmem:[%s140 + $0xa0] sm:$0xff]
                %163 = vst [vmem:[%s141 + $0x50] sm:$0xff] %v162
                %v164 = vld [vmem:[%s140 + $0xa8] sm:$0xff]
                %165 = vst [vmem:[%s141 + $0x58] sm:$0xff] %v164
                %v166 = vld [vmem:[%s140 + $0xc0] sm:$0xff]
                %167 = vst [vmem:[%s141 + $0x60] sm:$0xff] %v166
                %v168 = vld [vmem:[%s140 + $0xc8] sm:$0xff]
                %169 = vst [vmem:[%s141 + $0x68] sm:$0xff] %v168
                %v170 = vld [vmem:[%s140 + $0xe0] sm:$0xff]
                %171 = vst [vmem:[%s141 + $0x70] sm:$0xff] %v170
                %v172 = vld [vmem:[%s140 + $0xe8] sm:$0xff]
                %173 = vst [vmem:[%s141 + $0x78] sm:$0xff] %v172
                %v174 = vld [vmem:[%s140 + $0x100] sm:$0xff]
                %175 = vst [vmem:[%s141 + $0x80] sm:$0xff] %v174
                %v176 = vld [vmem:[%s140 + $0x108] sm:$0xff]
                %177 = vst [vmem:[%s141 + $0x88] sm:$0xff] %v176
                %v178 = vld [vmem:[%s140 + $0x120] sm:$0xff]
                %179 = vst [vmem:[%s141 + $0x90] sm:$0xff] %v178
                %v180 = vld [vmem:[%s140 + $0x128] sm:$0xff]
                %181 = vst [vmem:[%s141 + $0x98] sm:$0xff] %v180
                %v182 = vld [vmem:[%s140 + $0x140] sm:$0xff]
                %183 = vst [vmem:[%s141 + $0xa0] sm:$0xff] %v182
                %v184 = vld [vmem:[%s140 + $0x148] sm:$0xff]
                %185 = vst [vmem:[%s141 + $0xa8] sm:$0xff] %v184
                %v186 = vld [vmem:[%s140 + $0x160] sm:$0xff]
                %187 = vst [vmem:[%s141 + $0xb0] sm:$0xff] %v186
                %v188 = vld [vmem:[%s140 + $0x168] sm:$0xff]
                %189 = vst [vmem:[%s141 + $0xb8] sm:$0xff] %v188
                %v190 = vld [vmem:[%s140 + $0x180] sm:$0xff]
                %191 = vst [vmem:[%s141 + $0xc0] sm:$0xff] %v190
                %v192 = vld [vmem:[%s140 + $0x188] sm:$0xff]
                %193 = vst [vmem:[%s141 + $0xc8] sm:$0xff] %v192
                %v194 = vld [vmem:[%s140 + $0x1a0] sm:$0xff]
                %195 = vst [vmem:[%s141 + $0xd0] sm:$0xff] %v194
                %v196 = vld [vmem:[%s140 + $0x1a8] sm:$0xff]
                %197 = vst [vmem:[%s141 + $0xd8] sm:$0xff] %v196
                %v198 = vld [vmem:[%s140 + $0x1c0] sm:$0xff]
                %199 = vst [vmem:[%s141 + $0xe0] sm:$0xff] %v198
                %v200 = vld [vmem:[%s140 + $0x1c8] sm:$0xff]
                %201 = vst [vmem:[%s141 + $0xe8] sm:$0xff] %v200
                %v202 = vld [vmem:[%s140 + $0x1e0] sm:$0xff]
                %203 = vst [vmem:[%s141 + $0xf0] sm:$0xff] %v202
                %v204 = vld [vmem:[%s140 + $0x1e8] sm:$0xff]
                %205 = vst [vmem:[%s141 + $0xf8] sm:$0xff] %v204
                %v206 = vld [vmem:[%s140 + $0x200] sm:$0xff]
                %207 = vst [vmem:[%s141 + $0x100] sm:$0xff] %v206
                %v208 = vld [vmem:[%s140 + $0x208] sm:$0xff]
                %209 = vst [vmem:[%s141 + $0x108] sm:$0xff] %v208
                %v210 = vld [vmem:[%s140 + $0x220] sm:$0xff]
                %211 = vst [vmem:[%s141 + $0x110] sm:$0xff] %v210
                %v212 = vld [vmem:[%s140 + $0x228] sm:$0xff]
                %213 = vst [vmem:[%s141 + $0x118] sm:$0xff] %v212
                %v214 = vld [vmem:[%s140 + $0x240] sm:$0xff]
                %215 = vst [vmem:[%s141 + $0x120] sm:$0xff] %v214
                %v216 = vld [vmem:[%s140 + $0x248] sm:$0xff]
                %217 = vst [vmem:[%s141 + $0x128] sm:$0xff] %v216
                %v218 = vld [vmem:[%s140 + $0x260] sm:$0xff]
                %219 = vst [vmem:[%s141 + $0x130] sm:$0xff] %v218
                %v220 = vld [vmem:[%s140 + $0x268] sm:$0xff]
                %221 = vst [vmem:[%s141 + $0x138] sm:$0xff] %v220
                %v222 = vld [vmem:[%s140 + $0x280] sm:$0xff]
                %223 = vst [vmem:[%s141 + $0x140] sm:$0xff] %v222
                %v224 = vld [vmem:[%s140 + $0x288] sm:$0xff]
                %225 = vst [vmem:[%s141 + $0x148] sm:$0xff] %v224
                %v226 = vld [vmem:[%s140 + $0x2a0] sm:$0xff]
                %227 = vst [vmem:[%s141 + $0x150] sm:$0xff] %v226
                %v228 = vld [vmem:[%s140 + $0x2a8] sm:$0xff]
                %229 = vst [vmem:[%s141 + $0x158] sm:$0xff] %v228
                %v230 = vld [vmem:[%s140 + $0x2c0] sm:$0xff]
                %231 = vst [vmem:[%s141 + $0x160] sm:$0xff] %v230
                %v232 = vld [vmem:[%s140 + $0x2c8] sm:$0xff]
                %233 = vst [vmem:[%s141 + $0x168] sm:$0xff] %v232
                %v234 = vld [vmem:[%s140 + $0x2e0] sm:$0xff]
                %235 = vst [vmem:[%s141 + $0x170] sm:$0xff] %v234
                %v236 = vld [vmem:[%s140 + $0x2e8] sm:$0xff]
                %237 = vst [vmem:[%s141 + $0x178] sm:$0xff] %v236
                %v238 = vld [vmem:[%s140 + $0x300] sm:$0xff]
                %239 = vst [vmem:[%s141 + $0x180] sm:$0xff] %v238
                %v240 = vld [vmem:[%s140 + $0x308] sm:$0xff]
                %241 = vst [vmem:[%s141 + $0x188] sm:$0xff] %v240
                %v242 = vld [vmem:[%s140 + $0x320] sm:$0xff]
                %243 = vst [vmem:[%s141 + $0x190] sm:$0xff] %v242
                %v244 = vld [vmem:[%s140 + $0x328] sm:$0xff]
                %245 = vst [vmem:[%s141 + $0x198] sm:$0xff] %v244
                %v246 = vld [vmem:[%s140 + $0x340] sm:$0xff]
                %247 = vst [vmem:[%s141 + $0x1a0] sm:$0xff] %v246
                %v248 = vld [vmem:[%s140 + $0x348] sm:$0xff]
                %249 = vst [vmem:[%s141 + $0x1a8] sm:$0xff] %v248
                %v250 = vld [vmem:[%s140 + $0x360] sm:$0xff]
                %251 = vst [vmem:[%s141 + $0x1b0] sm:$0xff] %v250
                %v252 = vld [vmem:[%s140 + $0x368] sm:$0xff]
                %253 = vst [vmem:[%s141 + $0x1b8] sm:$0xff] %v252
                %v254 = vld [vmem:[%s140 + $0x380] sm:$0xff]
                %255 = vst [vmem:[%s141 + $0x1c0] sm:$0xff] %v254
                %v256 = vld [vmem:[%s140 + $0x388] sm:$0xff]
                %257 = vst [vmem:[%s141 + $0x1c8] sm:$0xff] %v256
                %v258 = vld [vmem:[%s140 + $0x3a0] sm:$0xff]
                %259 = vst [vmem:[%s141 + $0x1d0] sm:$0xff] %v258
                %v260 = vld [vmem:[%s140 + $0x3a8] sm:$0xff]
                %261 = vst [vmem:[%s141 + $0x1d8] sm:$0xff] %v260
                %v262 = vld [vmem:[%s140 + $0x3c0] sm:$0xff]
                %263 = vst [vmem:[%s141 + $0x1e0] sm:$0xff] %v262
                %v264 = vld [vmem:[%s140 + $0x3c8] sm:$0xff]
                %265 = vst [vmem:[%s141 + $0x1e8] sm:$0xff] %v264
                %v266 = vld [vmem:[%s140 + $0x3e0] sm:$0xff]
                %267 = vst [vmem:[%s141 + $0x1f0] sm:$0xff] %v266
                %v268 = vld [vmem:[%s140 + $0x3e8] sm:$0xff]
                %269 = vst [vmem:[%s141 + $0x1f8] sm:$0xff] %v268
                %v270 = vld [vmem:[%s140 + $0x400] sm:$0xff]
                %271 = vst [vmem:[%s141 + $0x200] sm:$0xff] %v270
                %v272 = vld [vmem:[%s140 + $0x408] sm:$0xff]
                %273 = vst [vmem:[%s141 + $0x208] sm:$0xff] %v272
                %v274 = vld [vmem:[%s140 + $0x420] sm:$0xff]
                %275 = vst [vmem:[%s141 + $0x210] sm:$0xff] %v274
                %v276 = vld [vmem:[%s140 + $0x428] sm:$0xff]
                %277 = vst [vmem:[%s141 + $0x218] sm:$0xff] %v276
                %v278 = vld [vmem:[%s140 + $0x440] sm:$0xff]
                %279 = vst [vmem:[%s141 + $0x220] sm:$0xff] %v278
                %v280 = vld [vmem:[%s140 + $0x448] sm:$0xff]
                %281 = vst [vmem:[%s141 + $0x228] sm:$0xff] %v280
                %v282 = vld [vmem:[%s140 + $0x460] sm:$0xff]
                %283 = vst [vmem:[%s141 + $0x230] sm:$0xff] %v282
                %v284 = vld [vmem:[%s140 + $0x468] sm:$0xff]
                %285 = vst [vmem:[%s141 + $0x238] sm:$0xff] %v284
                %v286 = vld [vmem:[%s140 + $0x480] sm:$0xff]
                %287 = vst [vmem:[%s141 + $0x240] sm:$0xff] %v286
                %v288 = vld [vmem:[%s140 + $0x488] sm:$0xff]
                %289 = vst [vmem:[%s141 + $0x248] sm:$0xff] %v288
                %v290 = vld [vmem:[%s140 + $0x4a0] sm:$0xff]
                %291 = vst [vmem:[%s141 + $0x250] sm:$0xff] %v290
                %v292 = vld [vmem:[%s140 + $0x4a8] sm:$0xff]
                %293 = vst [vmem:[%s141 + $0x258] sm:$0xff] %v292
                %v294 = vld [vmem:[%s140 + $0x4c0] sm:$0xff]
                %295 = vst [vmem:[%s141 + $0x260] sm:$0xff] %v294
                %v296 = vld [vmem:[%s140 + $0x4c8] sm:$0xff]
                %297 = vst [vmem:[%s141 + $0x268] sm:$0xff] %v296
                %v298 = vld [vmem:[%s140 + $0x4e0] sm:$0xff]
                %299 = vst [vmem:[%s141 + $0x270] sm:$0xff] %v298
                %v300 = vld [vmem:[%s140 + $0x4e8] sm:$0xff]
                %301 = vst [vmem:[%s141 + $0x278] sm:$0xff] %v300
                %v302 = vld [vmem:[%s140 + $0x500] sm:$0xff]
                %303 = vst [vmem:[%s141 + $0x280] sm:$0xff] %v302
                %v304 = vld [vmem:[%s140 + $0x508] sm:$0xff]
                %305 = vst [vmem:[%s141 + $0x288] sm:$0xff] %v304
                %v306 = vld [vmem:[%s140 + $0x520] sm:$0xff]
                %307 = vst [vmem:[%s141 + $0x290] sm:$0xff] %v306
                %v308 = vld [vmem:[%s140 + $0x528] sm:$0xff]
                %309 = vst [vmem:[%s141 + $0x298] sm:$0xff] %v308
                %v310 = vld [vmem:[%s140 + $0x540] sm:$0xff]
                %311 = vst [vmem:[%s141 + $0x2a0] sm:$0xff] %v310
                %v312 = vld [vmem:[%s140 + $0x548] sm:$0xff]
                %313 = vst [vmem:[%s141 + $0x2a8] sm:$0xff] %v312
                %v314 = vld [vmem:[%s140 + $0x560] sm:$0xff]
                %315 = vst [vmem:[%s141 + $0x2b0] sm:$0xff] %v314
                %v316 = vld [vmem:[%s140 + $0x568] sm:$0xff]
                %317 = vst [vmem:[%s141 + $0x2b8] sm:$0xff] %v316
                %v318 = vld [vmem:[%s140 + $0x580] sm:$0xff]
                %319 = vst [vmem:[%s141 + $0x2c0] sm:$0xff] %v318
                %v320 = vld [vmem:[%s140 + $0x588] sm:$0xff]
                %321 = vst [vmem:[%s141 + $0x2c8] sm:$0xff] %v320
                %v322 = vld [vmem:[%s140 + $0x5a0] sm:$0xff]
                %323 = vst [vmem:[%s141 + $0x2d0] sm:$0xff] %v322
                %v324 = vld [vmem:[%s140 + $0x5a8] sm:$0xff]
                %325 = vst [vmem:[%s141 + $0x2d8] sm:$0xff] %v324
                %v326 = vld [vmem:[%s140 + $0x5c0] sm:$0xff]
                %327 = vst [vmem:[%s141 + $0x2e0] sm:$0xff] %v326
                %v328 = vld [vmem:[%s140 + $0x5c8] sm:$0xff]
                %329 = vst [vmem:[%s141 + $0x2e8] sm:$0xff] %v328
                %v330 = vld [vmem:[%s140 + $0x5e0] sm:$0xff]
                %331 = vst [vmem:[%s141 + $0x2f0] sm:$0xff] %v330
                %v332 = vld [vmem:[%s140 + $0x5e8] sm:$0xff]
                %333 = vst [vmem:[%s141 + $0x2f8] sm:$0xff] %v332
                %v334 = vld [vmem:[%s140 + $0x600] sm:$0xff]
                %335 = vst [vmem:[%s141 + $0x300] sm:$0xff] %v334
                %v336 = vld [vmem:[%s140 + $0x608] sm:$0xff]
                %337 = vst [vmem:[%s141 + $0x308] sm:$0xff] %v336
                %v338 = vld [vmem:[%s140 + $0x620] sm:$0xff]
                %339 = vst [vmem:[%s141 + $0x310] sm:$0xff] %v338
                %v340 = vld [vmem:[%s140 + $0x628] sm:$0xff]
                %341 = vst [vmem:[%s141 + $0x318] sm:$0xff] %v340
                %v342 = vld [vmem:[%s140 + $0x640] sm:$0xff]
                %343 = vst [vmem:[%s141 + $0x320] sm:$0xff] %v342
                %v344 = vld [vmem:[%s140 + $0x648] sm:$0xff]
                %345 = vst [vmem:[%s141 + $0x328] sm:$0xff] %v344
                %v346 = vld [vmem:[%s140 + $0x660] sm:$0xff]
                %347 = vst [vmem:[%s141 + $0x330] sm:$0xff] %v346
                %v348 = vld [vmem:[%s140 + $0x668] sm:$0xff]
                %349 = vst [vmem:[%s141 + $0x338] sm:$0xff] %v348
                %v350 = vld [vmem:[%s140 + $0x680] sm:$0xff]
                %351 = vst [vmem:[%s141 + $0x340] sm:$0xff] %v350
                %v352 = vld [vmem:[%s140 + $0x688] sm:$0xff]
                %353 = vst [vmem:[%s141 + $0x348] sm:$0xff] %v352
                %v354 = vld [vmem:[%s140 + $0x6a0] sm:$0xff]
                %355 = vst [vmem:[%s141 + $0x350] sm:$0xff] %v354
                %v356 = vld [vmem:[%s140 + $0x6a8] sm:$0xff]
                %357 = vst [vmem:[%s141 + $0x358] sm:$0xff] %v356
                %v358 = vld [vmem:[%s140 + $0x6c0] sm:$0xff]
                %359 = vst [vmem:[%s141 + $0x360] sm:$0xff] %v358
                %v360 = vld [vmem:[%s140 + $0x6c8] sm:$0xff]
                %361 = vst [vmem:[%s141 + $0x368] sm:$0xff] %v360
                %v362 = vld [vmem:[%s140 + $0x6e0] sm:$0xff]
                %363 = vst [vmem:[%s141 + $0x370] sm:$0xff] %v362
                %v364 = vld [vmem:[%s140 + $0x6e8] sm:$0xff]
                %365 = vst [vmem:[%s141 + $0x378] sm:$0xff] %v364
                %v366 = vld [vmem:[%s140 + $0x700] sm:$0xff]
                %367 = vst [vmem:[%s141 + $0x380] sm:$0xff] %v366
                %v368 = vld [vmem:[%s140 + $0x708] sm:$0xff]
                %369 = vst [vmem:[%s141 + $0x388] sm:$0xff] %v368
                %v370 = vld [vmem:[%s140 + $0x720] sm:$0xff]
                %371 = vst [vmem:[%s141 + $0x390] sm:$0xff] %v370
                %v372 = vld [vmem:[%s140 + $0x728] sm:$0xff]
                %373 = vst [vmem:[%s141 + $0x398] sm:$0xff] %v372
                %v374 = vld [vmem:[%s140 + $0x740] sm:$0xff]
                %375 = vst [vmem:[%s141 + $0x3a0] sm:$0xff] %v374
                %v376 = vld [vmem:[%s140 + $0x748] sm:$0xff]
                %377 = vst [vmem:[%s141 + $0x3a8] sm:$0xff] %v376
                %v378 = vld [vmem:[%s140 + $0x760] sm:$0xff]
                %379 = vst [vmem:[%s141 + $0x3b0] sm:$0xff] %v378
                %v380 = vld [vmem:[%s140 + $0x768] sm:$0xff]
                %381 = vst [vmem:[%s141 + $0x3b8] sm:$0xff] %v380
                %v382 = vld [vmem:[%s140 + $0x780] sm:$0xff]
                %383 = vst [vmem:[%s141 + $0x3c0] sm:$0xff] %v382
                %v384 = vld [vmem:[%s140 + $0x788] sm:$0xff]
                %385 = vst [vmem:[%s141 + $0x3c8] sm:$0xff] %v384
                %v386 = vld [vmem:[%s140 + $0x7a0] sm:$0xff]
                %387 = vst [vmem:[%s141 + $0x3d0] sm:$0xff] %v386
                %v388 = vld [vmem:[%s140 + $0x7a8] sm:$0xff]
                %389 = vst [vmem:[%s141 + $0x3d8] sm:$0xff] %v388
                %v390 = vld [vmem:[%s140 + $0x7c0] sm:$0xff]
                %391 = vst [vmem:[%s141 + $0x3e0] sm:$0xff] %v390
                %v392 = vld [vmem:[%s140 + $0x7c8] sm:$0xff]
                %393 = vst [vmem:[%s141 + $0x3e8] sm:$0xff] %v392
                %v394 = vld [vmem:[%s140 + $0x7e0] sm:$0xff]
                %395 = vst [vmem:[%s141 + $0x3f0] sm:$0xff] %v394
                %v396 = vld [vmem:[%s140 + $0x7e8] sm:$0xff]
                %397 = vst [vmem:[%s141 + $0x3f8] sm:$0xff] %v396
              $region37: #{dea_gnn_jk_forward.10} parent=31 // loop_footer
                %s139 = sadd.s32 1, %s135
              $region38: #{dea_gnn_jk_forward.10} parent=31 // loop_footer_branch
                %134 = sbr.rel target = $region34
              $region39: #{dea_gnn_jk_forward.10} parent=31 // loop_exit
                _
            $region32: #{dea_gnn_jk_forward.10} parent=27 // pred_fallthru
              _
            // Predicated region
            $region40: #{dea_gnn_jk_forward.10} parent=27 // pred_check
              _
            $region41: #{dea_gnn_jk_forward.10} parent=27 // pred_check_branch
              %399 = sbr.rel target = $region43
            $region42: #{dea_gnn_jk_forward.10} parent=27 // pred_region
              _
            $region43: #{dea_gnn_jk_forward.10} parent=27 // pred_fallthru
              _
          $region28: #{dea_gnn_jk_forward.10} parent=23 // pred_fallthru
            _
          %400 = vnop
        $region24: #{dea_gnn_jk_forward.10} parent=19 // pred_fallthru
          _
      $region20: #{dea_gnn_jk_forward.10} parent=5 // pred_fallthru
        _
      %p401 = scmp.le.s32.totalorder 1, %s8
      %p402 = scmp.lt.s32.totalorder %s8, 5
      %p403 = pnand %p401, %p402
      %p404 = pneg %p403
      // Predicated region
      $region44: #{dea_gnn_jk_forward.10} parent=5 // pred_check
        _
      $region45: #{dea_gnn_jk_forward.10} parent=5 // pred_check_branch
        %406 = sbr.rel (%p403) target = $region47
      $region46: #{dea_gnn_jk_forward.10} parent=5 // pred_region
        %s407 = ssub.s32 %s8, 1
        %s408 = sand.u32 %s35, 1
        %s409 = sand.u32 %s35, 1
        %s410 = smul.addr %s409, 1024
        %s411 = scalar_lea.vmem [#allocation3], %s410
        // Predicated region
        $region48: #{dea_gnn_jk_forward.10} parent=46 // pred_check
          %p412 = pneg %p48
        $region49: #{dea_gnn_jk_forward.10} parent=46 // pred_check_branch
          %414 = sbr.rel (%p412) target = $region51
        $region50: #{dea_gnn_jk_forward.10} parent=46 // pred_region
          _
        $region51: #{dea_gnn_jk_forward.10} parent=46 // pred_fallthru
          _
        %s415 = sand.u32 %s35, 1
        %s416 = sand.u32 %s35, 1
        %s417 = smul.addr %s416, 1024
        %s418 = scalar_lea.vmem [#allocation3], %s417
        %p419 = pneg %p48
        %p420 = pneg %p45
        %p421 = pneg %p69
        %p422 = pneg %p66
        %p423 = pneg %p95
        %p424 = pneg %p92
        %s425 = smul.u32 64, %s17
        %p426 = scmp.lt.s32.totalorder %s425, 127
        %s427 = scalar_select %p426, %s425, 127
        %s428 = smul.addr %s427, 4
        %s429 = scalar_lea.vmem %s2, %s428
        %s430 = smul.u32 64, %s17
        %s431 = smul.u32 4, %s18
        %s432 = smul.u32 64, %s17
        %p433 = scmp.lt.s32.totalorder %s432, 127
        %s434 = scalar_select %p433, %s432, 127
        %s435 = smul.addr %s434, 4
        %s436 = scalar_lea.vmem %s2, %s435
        %s437 = smul.u32 64, %s17
        %p439 = scmp.eq.s32.totalorder %s18, 0
        // Predicated region
        $region52: #{dea_gnn_jk_forward.10} parent=46 // pred_check
          %p440 = pneg %p439
        $region53: #{dea_gnn_jk_forward.10} parent=46 // pred_check_branch
          %442 = sbr.rel (%p440) target = $region55
        $region54: #{dea_gnn_jk_forward.10} parent=46 // pred_region
          %443 = vst [vmem:[#allocation2] sm:$0xff] 0.0
          %444 = vst [vmem:[#allocation2 + $0x8] sm:$0xff] 0.0
          %445 = vst [vmem:[#allocation2 + $0x10] sm:$0xff] 0.0
          %446 = vst [vmem:[#allocation2 + $0x18] sm:$0xff] 0.0
          %447 = vst [vmem:[#allocation2 + $0x20] sm:$0xff] 0.0
          %448 = vst [vmem:[#allocation2 + $0x28] sm:$0xff] 0.0
          %449 = vst [vmem:[#allocation2 + $0x30] sm:$0xff] 0.0
          %450 = vst [vmem:[#allocation2 + $0x38] sm:$0xff] 0.0
          %451 = vst [vmem:[#allocation2 + $0x40] sm:$0xff] 0.0
          %452 = vst [vmem:[#allocation2 + $0x48] sm:$0xff] 0.0
          %453 = vst [vmem:[#allocation2 + $0x50] sm:$0xff] 0.0
          %454 = vst [vmem:[#allocation2 + $0x58] sm:$0xff] 0.0
          %455 = vst [vmem:[#allocation2 + $0x60] sm:$0xff] 0.0
          %456 = vst [vmem:[#allocation2 + $0x68] sm:$0xff] 0.0
          %457 = vst [vmem:[#allocation2 + $0x70] sm:$0xff] 0.0
          %458 = vst [vmem:[#allocation2 + $0x78] sm:$0xff] 0.0
          %459 = vst [vmem:[#allocation2 + $0x80] sm:$0xff] 0.0
          %460 = vst [vmem:[#allocation2 + $0x88] sm:$0xff] 0.0
          %461 = vst [vmem:[#allocation2 + $0x90] sm:$0xff] 0.0
          %462 = vst [vmem:[#allocation2 + $0x98] sm:$0xff] 0.0
          %463 = vst [vmem:[#allocation2 + $0xa0] sm:$0xff] 0.0
          %464 = vst [vmem:[#allocation2 + $0xa8] sm:$0xff] 0.0
          %465 = vst [vmem:[#allocation2 + $0xb0] sm:$0xff] 0.0
          %466 = vst [vmem:[#allocation2 + $0xb8] sm:$0xff] 0.0
          %467 = vst [vmem:[#allocation2 + $0xc0] sm:$0xff] 0.0
          %468 = vst [vmem:[#allocation2 + $0xc8] sm:$0xff] 0.0
          %469 = vst [vmem:[#allocation2 + $0xd0] sm:$0xff] 0.0
          %470 = vst [vmem:[#allocation2 + $0xd8] sm:$0xff] 0.0
          %471 = vst [vmem:[#allocation2 + $0xe0] sm:$0xff] 0.0
          %472 = vst [vmem:[#allocation2 + $0xe8] sm:$0xff] 0.0
          %473 = vst [vmem:[#allocation2 + $0xf0] sm:$0xff] 0.0
          %474 = vst [vmem:[#allocation2 + $0xf8] sm:$0xff] 0.0
          %475 = vst [vmem:[#allocation2 + $0x100] sm:$0xff] 0.0
          %476 = vst [vmem:[#allocation2 + $0x108] sm:$0xff] 0.0
          %477 = vst [vmem:[#allocation2 + $0x110] sm:$0xff] 0.0
          %478 = vst [vmem:[#allocation2 + $0x118] sm:$0xff] 0.0
          %479 = vst [vmem:[#allocation2 + $0x120] sm:$0xff] 0.0
          %480 = vst [vmem:[#allocation2 + $0x128] sm:$0xff] 0.0
          %481 = vst [vmem:[#allocation2 + $0x130] sm:$0xff] 0.0
          %482 = vst [vmem:[#allocation2 + $0x138] sm:$0xff] 0.0
          %483 = vst [vmem:[#allocation2 + $0x140] sm:$0xff] 0.0
          %484 = vst [vmem:[#allocation2 + $0x148] sm:$0xff] 0.0
          %485 = vst [vmem:[#allocation2 + $0x150] sm:$0xff] 0.0
          %486 = vst [vmem:[#allocation2 + $0x158] sm:$0xff] 0.0
          %487 = vst [vmem:[#allocation2 + $0x160] sm:$0xff] 0.0
          %488 = vst [vmem:[#allocation2 + $0x168] sm:$0xff] 0.0
          %489 = vst [vmem:[#allocation2 + $0x170] sm:$0xff] 0.0
          %490 = vst [vmem:[#allocation2 + $0x178] sm:$0xff] 0.0
          %491 = vst [vmem:[#allocation2 + $0x180] sm:$0xff] 0.0
          %492 = vst [vmem:[#allocation2 + $0x188] sm:$0xff] 0.0
          %493 = vst [vmem:[#allocation2 + $0x190] sm:$0xff] 0.0
          %494 = vst [vmem:[#allocation2 + $0x198] sm:$0xff] 0.0
          %495 = vst [vmem:[#allocation2 + $0x1a0] sm:$0xff] 0.0
          %496 = vst [vmem:[#allocation2 + $0x1a8] sm:$0xff] 0.0
          %497 = vst [vmem:[#allocation2 + $0x1b0] sm:$0xff] 0.0
          %498 = vst [vmem:[#allocation2 + $0x1b8] sm:$0xff] 0.0
          %499 = vst [vmem:[#allocation2 + $0x1c0] sm:$0xff] 0.0
          %500 = vst [vmem:[#allocation2 + $0x1c8] sm:$0xff] 0.0
          %501 = vst [vmem:[#allocation2 + $0x1d0] sm:$0xff] 0.0
          %502 = vst [vmem:[#allocation2 + $0x1d8] sm:$0xff] 0.0
          %503 = vst [vmem:[#allocation2 + $0x1e0] sm:$0xff] 0.0
          %504 = vst [vmem:[#allocation2 + $0x1e8] sm:$0xff] 0.0
          %505 = vst [vmem:[#allocation2 + $0x1f0] sm:$0xff] 0.0
          %506 = vst [vmem:[#allocation2 + $0x1f8] sm:$0xff] 0.0
        $region55: #{dea_gnn_jk_forward.10} parent=46 // pred_fallthru
          _
        %s507 = smul.u32 %s18, 512
        %s508 = sshra.s32 %s507, 3
        %s509 = sand.u32 %s507, 7
        %s510 = smul.addr %s508, 4
        %s511 = scalar_lea.vmem %s1, %s510
        %v512 = vld [vmem:[%s511] sm:$0xf]
        %v513 = vld [vmem:[%s511 + $0x4] sm:$0xf]
        %v514 = vld [vmem:[%s511 + $0x8] sm:$0xf]
        %v515 = vld [vmem:[%s511 + $0xc] sm:$0xf]
        %v516 = vld [vmem:[%s511 + $0x10] sm:$0xf]
        %v517 = vld [vmem:[%s511 + $0x14] sm:$0xf]
        %v518 = vld [vmem:[%s511 + $0x18] sm:$0xf]
        %v519 = vld [vmem:[%s511 + $0x1c] sm:$0xf]
        %v520 = vld [vmem:[%s511 + $0x20] sm:$0xf]
        %v521 = vld [vmem:[%s511 + $0x24] sm:$0xf]
        %v522 = vld [vmem:[%s511 + $0x28] sm:$0xf]
        %v523 = vld [vmem:[%s511 + $0x2c] sm:$0xf]
        %v524 = vld [vmem:[%s511 + $0x30] sm:$0xf]
        %v525 = vld [vmem:[%s511 + $0x34] sm:$0xf]
        %v526 = vld [vmem:[%s511 + $0x38] sm:$0xf]
        %v527 = vld [vmem:[%s511 + $0x3c] sm:$0xf]
        %v528 = vld [vmem:[%s511 + $0x40] sm:$0xf]
        %v529 = vld [vmem:[%s511 + $0x44] sm:$0xf]
        %v530 = vld [vmem:[%s511 + $0x48] sm:$0xf]
        %v531 = vld [vmem:[%s511 + $0x4c] sm:$0xf]
        %v532 = vld [vmem:[%s511 + $0x50] sm:$0xf]
        %v533 = vld [vmem:[%s511 + $0x54] sm:$0xf]
        %v534 = vld [vmem:[%s511 + $0x58] sm:$0xf]
        %v535 = vld [vmem:[%s511 + $0x5c] sm:$0xf]
        %v536 = vld [vmem:[%s511 + $0x60] sm:$0xf]
        %v537 = vld [vmem:[%s511 + $0x64] sm:$0xf]
        %v538 = vld [vmem:[%s511 + $0x68] sm:$0xf]
        %v539 = vld [vmem:[%s511 + $0x6c] sm:$0xf]
        %v540 = vld [vmem:[%s511 + $0x70] sm:$0xf]
        %v541 = vld [vmem:[%s511 + $0x74] sm:$0xf]
        %v542 = vld [vmem:[%s511 + $0x78] sm:$0xf]
        %v543 = vld [vmem:[%s511 + $0x7c] sm:$0xf]
        %v544 = vld [vmem:[%s511 + $0x80] sm:$0xf]
        %v545 = vld [vmem:[%s511 + $0x84] sm:$0xf]
        %v546 = vld [vmem:[%s511 + $0x88] sm:$0xf]
        %v547 = vld [vmem:[%s511 + $0x8c] sm:$0xf]
        %v548 = vld [vmem:[%s511 + $0x90] sm:$0xf]
        %v549 = vld [vmem:[%s511 + $0x94] sm:$0xf]
        %v550 = vld [vmem:[%s511 + $0x98] sm:$0xf]
        %v551 = vld [vmem:[%s511 + $0x9c] sm:$0xf]
        %v552 = vld [vmem:[%s511 + $0xa0] sm:$0xf]
        %v553 = vld [vmem:[%s511 + $0xa4] sm:$0xf]
        %v554 = vld [vmem:[%s511 + $0xa8] sm:$0xf]
        %v555 = vld [vmem:[%s511 + $0xac] sm:$0xf]
        %v556 = vld [vmem:[%s511 + $0xb0] sm:$0xf]
        %v557 = vld [vmem:[%s511 + $0xb4] sm:$0xf]
        %v558 = vld [vmem:[%s511 + $0xb8] sm:$0xf]
        %v559 = vld [vmem:[%s511 + $0xbc] sm:$0xf]
        %v560 = vld [vmem:[%s511 + $0xc0] sm:$0xf]
        %v561 = vld [vmem:[%s511 + $0xc4] sm:$0xf]
        %v562 = vld [vmem:[%s511 + $0xc8] sm:$0xf]
        %v563 = vld [vmem:[%s511 + $0xcc] sm:$0xf]
        %v564 = vld [vmem:[%s511 + $0xd0] sm:$0xf]
        %v565 = vld [vmem:[%s511 + $0xd4] sm:$0xf]
        %v566 = vld [vmem:[%s511 + $0xd8] sm:$0xf]
        %v567 = vld [vmem:[%s511 + $0xdc] sm:$0xf]
        %v568 = vld [vmem:[%s511 + $0xe0] sm:$0xf]
        %v569 = vld [vmem:[%s511 + $0xe4] sm:$0xf]
        %v570 = vld [vmem:[%s511 + $0xe8] sm:$0xf]
        %v571 = vld [vmem:[%s511 + $0xec] sm:$0xf]
        %v572 = vld [vmem:[%s511 + $0xf0] sm:$0xf]
        %v573 = vld [vmem:[%s511 + $0xf4] sm:$0xf]
        %v574 = vld [vmem:[%s511 + $0xf8] sm:$0xf]
        %v575 = vld [vmem:[%s511 + $0xfc] sm:$0xf]
        %v576 = vld [vmem:[#allocation2] sm:$0xff]
        %v577 = vld [vmem:[#allocation2 + $0x8] sm:$0xff]
        %v578 = vld [vmem:[#allocation2 + $0x10] sm:$0xff]
        %v579 = vld [vmem:[#allocation2 + $0x18] sm:$0xff]
        %v580 = vld [vmem:[#allocation2 + $0x20] sm:$0xff]
        %v581 = vld [vmem:[#allocation2 + $0x28] sm:$0xff]
        %v582 = vld [vmem:[#allocation2 + $0x30] sm:$0xff]
        %v583 = vld [vmem:[#allocation2 + $0x38] sm:$0xff]
        %v584 = vld [vmem:[#allocation2 + $0x40] sm:$0xff]
        %v585 = vld [vmem:[#allocation2 + $0x48] sm:$0xff]
        %v586 = vld [vmem:[#allocation2 + $0x50] sm:$0xff]
        %v587 = vld [vmem:[#allocation2 + $0x58] sm:$0xff]
        %v588 = vld [vmem:[#allocation2 + $0x60] sm:$0xff]
        %v589 = vld [vmem:[#allocation2 + $0x68] sm:$0xff]
        %v590 = vld [vmem:[#allocation2 + $0x70] sm:$0xff]
        %v591 = vld [vmem:[#allocation2 + $0x78] sm:$0xff]
        %v592 = vld [vmem:[#allocation2 + $0x80] sm:$0xff]
        %v593 = vld [vmem:[#allocation2 + $0x88] sm:$0xff]
        %v594 = vld [vmem:[#allocation2 + $0x90] sm:$0xff]
        %v595 = vld [vmem:[#allocation2 + $0x98] sm:$0xff]
        %v596 = vld [vmem:[#allocation2 + $0xa0] sm:$0xff]
        %v597 = vld [vmem:[#allocation2 + $0xa8] sm:$0xff]
        %v598 = vld [vmem:[#allocation2 + $0xb0] sm:$0xff]
        %v599 = vld [vmem:[#allocation2 + $0xb8] sm:$0xff]
        %v600 = vld [vmem:[#allocation2 + $0xc0] sm:$0xff]
        %v601 = vld [vmem:[#allocation2 + $0xc8] sm:$0xff]
        %v602 = vld [vmem:[#allocation2 + $0xd0] sm:$0xff]
        %v603 = vld [vmem:[#allocation2 + $0xd8] sm:$0xff]
        %v604 = vld [vmem:[#allocation2 + $0xe0] sm:$0xff]
        %v605 = vld [vmem:[#allocation2 + $0xe8] sm:$0xff]
        %v606 = vld [vmem:[#allocation2 + $0xf0] sm:$0xff]
        %v607 = vld [vmem:[#allocation2 + $0xf8] sm:$0xff]
        %v608 = vld [vmem:[#allocation2 + $0x100] sm:$0xff]
        %v609 = vld [vmem:[#allocation2 + $0x108] sm:$0xff]
        %v610 = vld [vmem:[#allocation2 + $0x110] sm:$0xff]
        %v611 = vld [vmem:[#allocation2 + $0x118] sm:$0xff]
        %v612 = vld [vmem:[#allocation2 + $0x120] sm:$0xff]
        %v613 = vld [vmem:[#allocation2 + $0x128] sm:$0xff]
        %v614 = vld [vmem:[#allocation2 + $0x130] sm:$0xff]
        %v615 = vld [vmem:[#allocation2 + $0x138] sm:$0xff]
        %v616 = vld [vmem:[#allocation2 + $0x140] sm:$0xff]
        %v617 = vld [vmem:[#allocation2 + $0x148] sm:$0xff]
        %v618 = vld [vmem:[#allocation2 + $0x150] sm:$0xff]
        %v619 = vld [vmem:[#allocation2 + $0x158] sm:$0xff]
        %v620 = vld [vmem:[#allocation2 + $0x160] sm:$0xff]
        %v621 = vld [vmem:[#allocation2 + $0x168] sm:$0xff]
        %v622 = vld [vmem:[#allocation2 + $0x170] sm:$0xff]
        %v623 = vld [vmem:[#allocation2 + $0x178] sm:$0xff]
        %v624 = vld [vmem:[#allocation2 + $0x180] sm:$0xff]
        %v625 = vld [vmem:[#allocation2 + $0x188] sm:$0xff]
        %v626 = vld [vmem:[#allocation2 + $0x190] sm:$0xff]
        %v627 = vld [vmem:[#allocation2 + $0x198] sm:$0xff]
        %v628 = vld [vmem:[#allocation2 + $0x1a0] sm:$0xff]
        %v629 = vld [vmem:[#allocation2 + $0x1a8] sm:$0xff]
        %v630 = vld [vmem:[#allocation2 + $0x1b0] sm:$0xff]
        %v631 = vld [vmem:[#allocation2 + $0x1b8] sm:$0xff]
        %v632 = vld [vmem:[#allocation2 + $0x1c0] sm:$0xff]
        %v633 = vld [vmem:[#allocation2 + $0x1c8] sm:$0xff]
        %v634 = vld [vmem:[#allocation2 + $0x1d0] sm:$0xff]
        %v635 = vld [vmem:[#allocation2 + $0x1d8] sm:$0xff]
        %v636 = vld [vmem:[#allocation2 + $0x1e0] sm:$0xff]
        %v637 = vld [vmem:[#allocation2 + $0x1e8] sm:$0xff]
        %v638 = vld [vmem:[#allocation2 + $0x1f0] sm:$0xff]
        %v639 = vld [vmem:[#allocation2 + $0x1f8] sm:$0xff]
        %v640 = vld [vmem:[%s411] sm:$0xff]
        %v641 = vld [vmem:[%s411 + $0x8] sm:$0xff]
        %v642 = vld [vmem:[%s411 + $0x10] sm:$0xff]
        %v643 = vld [vmem:[%s411 + $0x18] sm:$0xff]
        %v644 = vld [vmem:[%s411 + $0x20] sm:$0xff]
        %v645 = vld [vmem:[%s411 + $0x28] sm:$0xff]
        %v646 = vld [vmem:[%s411 + $0x30] sm:$0xff]
        %v647 = vld [vmem:[%s411 + $0x38] sm:$0xff]
        %v648 = vld [vmem:[%s411 + $0x40] sm:$0xff]
        %v649 = vld [vmem:[%s411 + $0x48] sm:$0xff]
        %v650 = vld [vmem:[%s411 + $0x50] sm:$0xff]
        %v651 = vld [vmem:[%s411 + $0x58] sm:$0xff]
        %v652 = vld [vmem:[%s411 + $0x60] sm:$0xff]
        %v653 = vld [vmem:[%s411 + $0x68] sm:$0xff]
        %v654 = vld [vmem:[%s411 + $0x70] sm:$0xff]
        %v655 = vld [vmem:[%s411 + $0x78] sm:$0xff]
        %v656 = vld [vmem:[%s411 + $0x80] sm:$0xff]
        %v657 = vld [vmem:[%s411 + $0x88] sm:$0xff]
        %v658 = vld [vmem:[%s411 + $0x90] sm:$0xff]
        %v659 = vld [vmem:[%s411 + $0x98] sm:$0xff]
        %v660 = vld [vmem:[%s411 + $0xa0] sm:$0xff]
        %v661 = vld [vmem:[%s411 + $0xa8] sm:$0xff]
        %v662 = vld [vmem:[%s411 + $0xb0] sm:$0xff]
        %v663 = vld [vmem:[%s411 + $0xb8] sm:$0xff]
        %v664 = vld [vmem:[%s411 + $0xc0] sm:$0xff]
        %v665 = vld [vmem:[%s411 + $0xc8] sm:$0xff]
        %v666 = vld [vmem:[%s411 + $0xd0] sm:$0xff]
        %v667 = vld [vmem:[%s411 + $0xd8] sm:$0xff]
        %v668 = vld [vmem:[%s411 + $0xe0] sm:$0xff]
        %v669 = vld [vmem:[%s411 + $0xe8] sm:$0xff]
        %v670 = vld [vmem:[%s411 + $0xf0] sm:$0xff]
        %v671 = vld [vmem:[%s411 + $0xf8] sm:$0xff]
        %v672 = vld [vmem:[%s411 + $0x100] sm:$0xff]
        %v673 = vld [vmem:[%s411 + $0x108] sm:$0xff]
        %v674 = vld [vmem:[%s411 + $0x110] sm:$0xff]
        %v675 = vld [vmem:[%s411 + $0x118] sm:$0xff]
        %v676 = vld [vmem:[%s411 + $0x120] sm:$0xff]
        %v677 = vld [vmem:[%s411 + $0x128] sm:$0xff]
        %v678 = vld [vmem:[%s411 + $0x130] sm:$0xff]
        %v679 = vld [vmem:[%s411 + $0x138] sm:$0xff]
        %v680 = vld [vmem:[%s411 + $0x140] sm:$0xff]
        %v681 = vld [vmem:[%s411 + $0x148] sm:$0xff]
        %v682 = vld [vmem:[%s411 + $0x150] sm:$0xff]
        %v683 = vld [vmem:[%s411 + $0x158] sm:$0xff]
        %v684 = vld [vmem:[%s411 + $0x160] sm:$0xff]
        %v685 = vld [vmem:[%s411 + $0x168] sm:$0xff]
        %v686 = vld [vmem:[%s411 + $0x170] sm:$0xff]
        %v687 = vld [vmem:[%s411 + $0x178] sm:$0xff]
        %v688 = vld [vmem:[%s411 + $0x180] sm:$0xff]
        %v689 = vld [vmem:[%s411 + $0x188] sm:$0xff]
        %v690 = vld [vmem:[%s411 + $0x190] sm:$0xff]
        %v691 = vld [vmem:[%s411 + $0x198] sm:$0xff]
        %v692 = vld [vmem:[%s411 + $0x1a0] sm:$0xff]
        %v693 = vld [vmem:[%s411 + $0x1a8] sm:$0xff]
        %v694 = vld [vmem:[%s411 + $0x1b0] sm:$0xff]
        %v695 = vld [vmem:[%s411 + $0x1b8] sm:$0xff]
        %v696 = vld [vmem:[%s411 + $0x1c0] sm:$0xff]
        %v697 = vld [vmem:[%s411 + $0x1c8] sm:$0xff]
        %v698 = vld [vmem:[%s411 + $0x1d0] sm:$0xff]
        %v699 = vld [vmem:[%s411 + $0x1d8] sm:$0xff]
        %v700 = vld [vmem:[%s411 + $0x1e0] sm:$0xff]
        %v701 = vld [vmem:[%s411 + $0x1e8] sm:$0xff]
        %v702 = vld [vmem:[%s411 + $0x1f0] sm:$0xff]
        %v703 = vld [vmem:[%s411 + $0x1f8] sm:$0xff]
        %v704 = vld [vmem:[%s411 + $0x200] sm:$0xff]
        %v705 = vld [vmem:[%s411 + $0x208] sm:$0xff]
        %v706 = vld [vmem:[%s411 + $0x210] sm:$0xff]
        %v707 = vld [vmem:[%s411 + $0x218] sm:$0xff]
        %v708 = vld [vmem:[%s411 + $0x220] sm:$0xff]
        %v709 = vld [vmem:[%s411 + $0x228] sm:$0xff]
        %v710 = vld [vmem:[%s411 + $0x230] sm:$0xff]
        %v711 = vld [vmem:[%s411 + $0x238] sm:$0xff]
        %v712 = vld [vmem:[%s411 + $0x240] sm:$0xff]
        %v713 = vld [vmem:[%s411 + $0x248] sm:$0xff]
        %v714 = vld [vmem:[%s411 + $0x250] sm:$0xff]
        %v715 = vld [vmem:[%s411 + $0x258] sm:$0xff]
        %v716 = vld [vmem:[%s411 + $0x260] sm:$0xff]
        %v717 = vld [vmem:[%s411 + $0x268] sm:$0xff]
        %v718 = vld [vmem:[%s411 + $0x270] sm:$0xff]
        %v719 = vld [vmem:[%s411 + $0x278] sm:$0xff]
        %v720 = vld [vmem:[%s411 + $0x280] sm:$0xff]
        %v721 = vld [vmem:[%s411 + $0x288] sm:$0xff]
        %v722 = vld [vmem:[%s411 + $0x290] sm:$0xff]
        %v723 = vld [vmem:[%s411 + $0x298] sm:$0xff]
        %v724 = vld [vmem:[%s411 + $0x2a0] sm:$0xff]
        %v725 = vld [vmem:[%s411 + $0x2a8] sm:$0xff]
        %v726 = vld [vmem:[%s411 + $0x2b0] sm:$0xff]
        %v727 = vld [vmem:[%s411 + $0x2b8] sm:$0xff]
        %v728 = vld [vmem:[%s411 + $0x2c0] sm:$0xff]
        %v729 = vld [vmem:[%s411 + $0x2c8] sm:$0xff]
        %v730 = vld [vmem:[%s411 + $0x2d0] sm:$0xff]
        %v731 = vld [vmem:[%s411 + $0x2d8] sm:$0xff]
        %v732 = vld [vmem:[%s411 + $0x2e0] sm:$0xff]
        %v733 = vld [vmem:[%s411 + $0x2e8] sm:$0xff]
        %v734 = vld [vmem:[%s411 + $0x2f0] sm:$0xff]
        %v735 = vld [vmem:[%s411 + $0x2f8] sm:$0xff]
        %v736 = vld [vmem:[%s411 + $0x300] sm:$0xff]
        %v737 = vld [vmem:[%s411 + $0x308] sm:$0xff]
        %v738 = vld [vmem:[%s411 + $0x310] sm:$0xff]
        %v739 = vld [vmem:[%s411 + $0x318] sm:$0xff]
        %v740 = vld [vmem:[%s411 + $0x320] sm:$0xff]
        %v741 = vld [vmem:[%s411 + $0x328] sm:$0xff]
        %v742 = vld [vmem:[%s411 + $0x330] sm:$0xff]
        %v743 = vld [vmem:[%s411 + $0x338] sm:$0xff]
        %v744 = vld [vmem:[%s411 + $0x340] sm:$0xff]
        %v745 = vld [vmem:[%s411 + $0x348] sm:$0xff]
        %v746 = vld [vmem:[%s411 + $0x350] sm:$0xff]
        %v747 = vld [vmem:[%s411 + $0x358] sm:$0xff]
        %v748 = vld [vmem:[%s411 + $0x360] sm:$0xff]
        %v749 = vld [vmem:[%s411 + $0x368] sm:$0xff]
        %v750 = vld [vmem:[%s411 + $0x370] sm:$0xff]
        %v751 = vld [vmem:[%s411 + $0x378] sm:$0xff]
        %v752 = vld [vmem:[%s411 + $0x380] sm:$0xff]
        %v753 = vld [vmem:[%s411 + $0x388] sm:$0xff]
        %v754 = vld [vmem:[%s411 + $0x390] sm:$0xff]
        %v755 = vld [vmem:[%s411 + $0x398] sm:$0xff]
        %v756 = vld [vmem:[%s411 + $0x3a0] sm:$0xff]
        %v757 = vld [vmem:[%s411 + $0x3a8] sm:$0xff]
        %v758 = vld [vmem:[%s411 + $0x3b0] sm:$0xff]
        %v759 = vld [vmem:[%s411 + $0x3b8] sm:$0xff]
        %v760 = vld [vmem:[%s411 + $0x3c0] sm:$0xff]
        %v761 = vld [vmem:[%s411 + $0x3c8] sm:$0xff]
        %v762 = vld [vmem:[%s411 + $0x3d0] sm:$0xff]
        %v763 = vld [vmem:[%s411 + $0x3d8] sm:$0xff]
        %v764 = vld [vmem:[%s411 + $0x3e0] sm:$0xff]
        %v765 = vld [vmem:[%s411 + $0x3e8] sm:$0xff]
        %v766 = vld [vmem:[%s411 + $0x3f0] sm:$0xff]
        %v767 = vld [vmem:[%s411 + $0x3f8] sm:$0xff]
        %v896 = vunpack.c.l.b16 %v640
        %v897 = vunpack.c.h.b16 %v640
        %v898 = vunpack.c.l.b16 %v641
        %v899 = vunpack.c.h.b16 %v641
        %v900 = vunpack.c.l.b16 %v642
        %v901 = vunpack.c.h.b16 %v642
        %v902 = vunpack.c.l.b16 %v643
        %v903 = vunpack.c.h.b16 %v643
        %v904 = vunpack.c.l.b16 %v644
        %v905 = vunpack.c.h.b16 %v644
        %v906 = vunpack.c.l.b16 %v645
        %v907 = vunpack.c.h.b16 %v645
        %v908 = vunpack.c.l.b16 %v646
        %v909 = vunpack.c.h.b16 %v646
        %v910 = vunpack.c.l.b16 %v647
        %v911 = vunpack.c.h.b16 %v647
        %v912 = vunpack.c.l.b16 %v648
        %v913 = vunpack.c.h.b16 %v648
        %v914 = vunpack.c.l.b16 %v649
        %v915 = vunpack.c.h.b16 %v649
        %v916 = vunpack.c.l.b16 %v650
        %v917 = vunpack.c.h.b16 %v650
        %v918 = vunpack.c.l.b16 %v651
        %v919 = vunpack.c.h.b16 %v651
        %v920 = vunpack.c.l.b16 %v652
        %v921 = vunpack.c.h.b16 %v652
        %v922 = vunpack.c.l.b16 %v653
        %v923 = vunpack.c.h.b16 %v653
        %v924 = vunpack.c.l.b16 %v654
        %v925 = vunpack.c.h.b16 %v654
        %v926 = vunpack.c.l.b16 %v655
        %v927 = vunpack.c.h.b16 %v655
        %v928 = vunpack.c.l.b16 %v656
        %v929 = vunpack.c.h.b16 %v656
        %v930 = vunpack.c.l.b16 %v657
        %v931 = vunpack.c.h.b16 %v657
        %v932 = vunpack.c.l.b16 %v658
        %v933 = vunpack.c.h.b16 %v658
        %v934 = vunpack.c.l.b16 %v659
        %v935 = vunpack.c.h.b16 %v659
        %v936 = vunpack.c.l.b16 %v660
        %v937 = vunpack.c.h.b16 %v660
        %v938 = vunpack.c.l.b16 %v661
        %v939 = vunpack.c.h.b16 %v661
        %v940 = vunpack.c.l.b16 %v662
        %v941 = vunpack.c.h.b16 %v662
        %v942 = vunpack.c.l.b16 %v663
        %v943 = vunpack.c.h.b16 %v663
        %v944 = vunpack.c.l.b16 %v664
        %v945 = vunpack.c.h.b16 %v664
        %v946 = vunpack.c.l.b16 %v665
        %v947 = vunpack.c.h.b16 %v665
        %v948 = vunpack.c.l.b16 %v666
        %v949 = vunpack.c.h.b16 %v666
        %v950 = vunpack.c.l.b16 %v667
        %v951 = vunpack.c.h.b16 %v667
        %v952 = vunpack.c.l.b16 %v668
        %v953 = vunpack.c.h.b16 %v668
        %v954 = vunpack.c.l.b16 %v669
        %v955 = vunpack.c.h.b16 %v669
        %v956 = vunpack.c.l.b16 %v670
        %v957 = vunpack.c.h.b16 %v670
        %v958 = vunpack.c.l.b16 %v671
        %v959 = vunpack.c.h.b16 %v671
        %v960 = vunpack.c.l.b16 %v672
        %v961 = vunpack.c.h.b16 %v672
        %v962 = vunpack.c.l.b16 %v673
        %v963 = vunpack.c.h.b16 %v673
        %v964 = vunpack.c.l.b16 %v674
        %v965 = vunpack.c.h.b16 %v674
        %v966 = vunpack.c.l.b16 %v675
        %v967 = vunpack.c.h.b16 %v675
        %v968 = vunpack.c.l.b16 %v676
        %v969 = vunpack.c.h.b16 %v676
        %v970 = vunpack.c.l.b16 %v677
        %v971 = vunpack.c.h.b16 %v677
        %v972 = vunpack.c.l.b16 %v678
        %v973 = vunpack.c.h.b16 %v678
        %v974 = vunpack.c.l.b16 %v679
        %v975 = vunpack.c.h.b16 %v679
        %v976 = vunpack.c.l.b16 %v680
        %v977 = vunpack.c.h.b16 %v680
        %v978 = vunpack.c.l.b16 %v681
        %v979 = vunpack.c.h.b16 %v681
        %v980 = vunpack.c.l.b16 %v682
        %v981 = vunpack.c.h.b16 %v682
        %v982 = vunpack.c.l.b16 %v683
        %v983 = vunpack.c.h.b16 %v683
        %v984 = vunpack.c.l.b16 %v684
        %v985 = vunpack.c.h.b16 %v684
        %v986 = vunpack.c.l.b16 %v685
        %v987 = vunpack.c.h.b16 %v685
        %v988 = vunpack.c.l.b16 %v686
        %v989 = vunpack.c.h.b16 %v686
        %v990 = vunpack.c.l.b16 %v687
        %v991 = vunpack.c.h.b16 %v687
        %v992 = vunpack.c.l.b16 %v688
        %v993 = vunpack.c.h.b16 %v688
        %v994 = vunpack.c.l.b16 %v689
        %v995 = vunpack.c.h.b16 %v689
        %v996 = vunpack.c.l.b16 %v690
        %v997 = vunpack.c.h.b16 %v690
        %v998 = vunpack.c.l.b16 %v691
        %v999 = vunpack.c.h.b16 %v691
        %v1000 = vunpack.c.l.b16 %v692
        %v1001 = vunpack.c.h.b16 %v692
        %v1002 = vunpack.c.l.b16 %v693
        %v1003 = vunpack.c.h.b16 %v693
        %v1004 = vunpack.c.l.b16 %v694
        %v1005 = vunpack.c.h.b16 %v694
        %v1006 = vunpack.c.l.b16 %v695
        %v1007 = vunpack.c.h.b16 %v695
        %v1008 = vunpack.c.l.b16 %v696
        %v1009 = vunpack.c.h.b16 %v696
        %v1010 = vunpack.c.l.b16 %v697
        %v1011 = vunpack.c.h.b16 %v697
        %v1012 = vunpack.c.l.b16 %v698
        %v1013 = vunpack.c.h.b16 %v698
        %v1014 = vunpack.c.l.b16 %v699
        %v1015 = vunpack.c.h.b16 %v699
        %v1016 = vunpack.c.l.b16 %v700
        %v1017 = vunpack.c.h.b16 %v700
        %v1018 = vunpack.c.l.b16 %v701
        %v1019 = vunpack.c.h.b16 %v701
        %v1020 = vunpack.c.l.b16 %v702
        %v1021 = vunpack.c.h.b16 %v702
        %v1022 = vunpack.c.l.b16 %v703
        %v1023 = vunpack.c.h.b16 %v703
        %v1024 = vunpack.c.l.b16 %v704
        %v1025 = vunpack.c.h.b16 %v704
        %v1026 = vunpack.c.l.b16 %v705
        %v1027 = vunpack.c.h.b16 %v705
        %v1028 = vunpack.c.l.b16 %v706
        %v1029 = vunpack.c.h.b16 %v706
        %v1030 = vunpack.c.l.b16 %v707
        %v1031 = vunpack.c.h.b16 %v707
        %v1032 = vunpack.c.l.b16 %v708
        %v1033 = vunpack.c.h.b16 %v708
        %v1034 = vunpack.c.l.b16 %v709
        %v1035 = vunpack.c.h.b16 %v709
        %v1036 = vunpack.c.l.b16 %v710
        %v1037 = vunpack.c.h.b16 %v710
        %v1038 = vunpack.c.l.b16 %v711
        %v1039 = vunpack.c.h.b16 %v711
        %v1040 = vunpack.c.l.b16 %v712
        %v1041 = vunpack.c.h.b16 %v712
        %v1042 = vunpack.c.l.b16 %v713
        %v1043 = vunpack.c.h.b16 %v713
        %v1044 = vunpack.c.l.b16 %v714
        %v1045 = vunpack.c.h.b16 %v714
        %v1046 = vunpack.c.l.b16 %v715
        %v1047 = vunpack.c.h.b16 %v715
        %v1048 = vunpack.c.l.b16 %v716
        %v1049 = vunpack.c.h.b16 %v716
        %v1050 = vunpack.c.l.b16 %v717
        %v1051 = vunpack.c.h.b16 %v717
        %v1052 = vunpack.c.l.b16 %v718
        %v1053 = vunpack.c.h.b16 %v718
        %v1054 = vunpack.c.l.b16 %v719
        %v1055 = vunpack.c.h.b16 %v719
        %v1056 = vunpack.c.l.b16 %v720
        %v1057 = vunpack.c.h.b16 %v720
        %v1058 = vunpack.c.l.b16 %v721
        %v1059 = vunpack.c.h.b16 %v721
        %v1060 = vunpack.c.l.b16 %v722
        %v1061 = vunpack.c.h.b16 %v722
        %v1062 = vunpack.c.l.b16 %v723
        %v1063 = vunpack.c.h.b16 %v723
        %v1064 = vunpack.c.l.b16 %v724
        %v1065 = vunpack.c.h.b16 %v724
        %v1066 = vunpack.c.l.b16 %v725
        %v1067 = vunpack.c.h.b16 %v725
        %v1068 = vunpack.c.l.b16 %v726
        %v1069 = vunpack.c.h.b16 %v726
        %v1070 = vunpack.c.l.b16 %v727
        %v1071 = vunpack.c.h.b16 %v727
        %v1072 = vunpack.c.l.b16 %v728
        %v1073 = vunpack.c.h.b16 %v728
        %v1074 = vunpack.c.l.b16 %v729
        %v1075 = vunpack.c.h.b16 %v729
        %v1076 = vunpack.c.l.b16 %v730
        %v1077 = vunpack.c.h.b16 %v730
        %v1078 = vunpack.c.l.b16 %v731
        %v1079 = vunpack.c.h.b16 %v731
        %v1080 = vunpack.c.l.b16 %v732
        %v1081 = vunpack.c.h.b16 %v732
        %v1082 = vunpack.c.l.b16 %v733
        %v1083 = vunpack.c.h.b16 %v733
        %v1084 = vunpack.c.l.b16 %v734
        %v1085 = vunpack.c.h.b16 %v734
        %v1086 = vunpack.c.l.b16 %v735
        %v1087 = vunpack.c.h.b16 %v735
        %v1088 = vunpack.c.l.b16 %v736
        %v1089 = vunpack.c.h.b16 %v736
        %v1090 = vunpack.c.l.b16 %v737
        %v1091 = vunpack.c.h.b16 %v737
        %v1092 = vunpack.c.l.b16 %v738
        %v1093 = vunpack.c.h.b16 %v738
        %v1094 = vunpack.c.l.b16 %v739
        %v1095 = vunpack.c.h.b16 %v739
        %v1096 = vunpack.c.l.b16 %v740
        %v1097 = vunpack.c.h.b16 %v740
        %v1098 = vunpack.c.l.b16 %v741
        %v1099 = vunpack.c.h.b16 %v741
        %v1100 = vunpack.c.l.b16 %v742
        %v1101 = vunpack.c.h.b16 %v742
        %v1102 = vunpack.c.l.b16 %v743
        %v1103 = vunpack.c.h.b16 %v743
        %v1104 = vunpack.c.l.b16 %v744
        %v1105 = vunpack.c.h.b16 %v744
        %v1106 = vunpack.c.l.b16 %v745
        %v1107 = vunpack.c.h.b16 %v745
        %v1108 = vunpack.c.l.b16 %v746
        %v1109 = vunpack.c.h.b16 %v746
        %v1110 = vunpack.c.l.b16 %v747
        %v1111 = vunpack.c.h.b16 %v747
        %v1112 = vunpack.c.l.b16 %v748
        %v1113 = vunpack.c.h.b16 %v748
        %v1114 = vunpack.c.l.b16 %v749
        %v1115 = vunpack.c.h.b16 %v749
        %v1116 = vunpack.c.l.b16 %v750
        %v1117 = vunpack.c.h.b16 %v750
        %v1118 = vunpack.c.l.b16 %v751
        %v1119 = vunpack.c.h.b16 %v751
        %v1120 = vunpack.c.l.b16 %v752
        %v1121 = vunpack.c.h.b16 %v752
        %v1122 = vunpack.c.l.b16 %v753
        %v1123 = vunpack.c.h.b16 %v753
        %v1124 = vunpack.c.l.b16 %v754
        %v1125 = vunpack.c.h.b16 %v754
        %v1126 = vunpack.c.l.b16 %v755
        %v1127 = vunpack.c.h.b16 %v755
        %v1128 = vunpack.c.l.b16 %v756
        %v1129 = vunpack.c.h.b16 %v756
        %v1130 = vunpack.c.l.b16 %v757
        %v1131 = vunpack.c.h.b16 %v757
        %v1132 = vunpack.c.l.b16 %v758
        %v1133 = vunpack.c.h.b16 %v758
        %v1134 = vunpack.c.l.b16 %v759
        %v1135 = vunpack.c.h.b16 %v759
        %v1136 = vunpack.c.l.b16 %v760
        %v1137 = vunpack.c.h.b16 %v760
        %v1138 = vunpack.c.l.b16 %v761
        %v1139 = vunpack.c.h.b16 %v761
        %v1140 = vunpack.c.l.b16 %v762
        %v1141 = vunpack.c.h.b16 %v762
        %v1142 = vunpack.c.l.b16 %v763
        %v1143 = vunpack.c.h.b16 %v763
        %v1144 = vunpack.c.l.b16 %v764
        %v1145 = vunpack.c.h.b16 %v764
        %v1146 = vunpack.c.l.b16 %v765
        %v1147 = vunpack.c.h.b16 %v765
        %v1148 = vunpack.c.l.b16 %v766
        %v1149 = vunpack.c.h.b16 %v766
        %v1150 = vunpack.c.l.b16 %v767
        %v1151 = vunpack.c.h.b16 %v767
        %v1152 = vpack.c.b16 %v900, %v896
        %v1153 = vpack.c.b16 %v901, %v897
        %v1154 = vpack.c.b16 %v902, %v898
        %v1155 = vpack.c.b16 %v903, %v899
        %v1156 = vpack.c.b16 %v908, %v904
        %v1157 = vpack.c.b16 %v909, %v905
        %v1158 = vpack.c.b16 %v910, %v906
        %v1159 = vpack.c.b16 %v911, %v907
        %v1160 = vpack.c.b16 %v916, %v912
        %v1161 = vpack.c.b16 %v917, %v913
        %v1162 = vpack.c.b16 %v918, %v914
        %v1163 = vpack.c.b16 %v919, %v915
        %v1164 = vpack.c.b16 %v924, %v920
        %v1165 = vpack.c.b16 %v925, %v921
        %v1166 = vpack.c.b16 %v926, %v922
        %v1167 = vpack.c.b16 %v927, %v923
        %v1168 = vpack.c.b16 %v932, %v928
        %v1169 = vpack.c.b16 %v933, %v929
        %v1170 = vpack.c.b16 %v934, %v930
        %v1171 = vpack.c.b16 %v935, %v931
        %v1172 = vpack.c.b16 %v940, %v936
        %v1173 = vpack.c.b16 %v941, %v937
        %v1174 = vpack.c.b16 %v942, %v938
        %v1175 = vpack.c.b16 %v943, %v939
        %v1176 = vpack.c.b16 %v948, %v944
        %v1177 = vpack.c.b16 %v949, %v945
        %v1178 = vpack.c.b16 %v950, %v946
        %v1179 = vpack.c.b16 %v951, %v947
        %v1180 = vpack.c.b16 %v956, %v952
        %v1181 = vpack.c.b16 %v957, %v953
        %v1182 = vpack.c.b16 %v958, %v954
        %v1183 = vpack.c.b16 %v959, %v955
        %v1184 = vpack.c.b16 %v964, %v960
        %v1185 = vpack.c.b16 %v965, %v961
        %v1186 = vpack.c.b16 %v966, %v962
        %v1187 = vpack.c.b16 %v967, %v963
        %v1188 = vpack.c.b16 %v972, %v968
        %v1189 = vpack.c.b16 %v973, %v969
        %v1190 = vpack.c.b16 %v974, %v970
        %v1191 = vpack.c.b16 %v975, %v971
        %v1192 = vpack.c.b16 %v980, %v976
        %v1193 = vpack.c.b16 %v981, %v977
        %v1194 = vpack.c.b16 %v982, %v978
        %v1195 = vpack.c.b16 %v983, %v979
        %v1196 = vpack.c.b16 %v988, %v984
        %v1197 = vpack.c.b16 %v989, %v985
        %v1198 = vpack.c.b16 %v990, %v986
        %v1199 = vpack.c.b16 %v991, %v987
        %v1200 = vpack.c.b16 %v996, %v992
        %v1201 = vpack.c.b16 %v997, %v993
        %v1202 = vpack.c.b16 %v998, %v994
        %v1203 = vpack.c.b16 %v999, %v995
        %v1204 = vpack.c.b16 %v1004, %v1000
        %v1205 = vpack.c.b16 %v1005, %v1001
        %v1206 = vpack.c.b16 %v1006, %v1002
        %v1207 = vpack.c.b16 %v1007, %v1003
        %v1208 = vpack.c.b16 %v1012, %v1008
        %v1209 = vpack.c.b16 %v1013, %v1009
        %v1210 = vpack.c.b16 %v1014, %v1010
        %v1211 = vpack.c.b16 %v1015, %v1011
        %v1212 = vpack.c.b16 %v1020, %v1016
        %v1213 = vpack.c.b16 %v1021, %v1017
        %v1214 = vpack.c.b16 %v1022, %v1018
        %v1215 = vpack.c.b16 %v1023, %v1019
        %v1216 = vpack.c.b16 %v1028, %v1024
        %v1217 = vpack.c.b16 %v1029, %v1025
        %v1218 = vpack.c.b16 %v1030, %v1026
        %v1219 = vpack.c.b16 %v1031, %v1027
        %v1220 = vpack.c.b16 %v1036, %v1032
        %v1221 = vpack.c.b16 %v1037, %v1033
        %v1222 = vpack.c.b16 %v1038, %v1034
        %v1223 = vpack.c.b16 %v1039, %v1035
        %v1224 = vpack.c.b16 %v1044, %v1040
        %v1225 = vpack.c.b16 %v1045, %v1041
        %v1226 = vpack.c.b16 %v1046, %v1042
        %v1227 = vpack.c.b16 %v1047, %v1043
        %v1228 = vpack.c.b16 %v1052, %v1048
        %v1229 = vpack.c.b16 %v1053, %v1049
        %v1230 = vpack.c.b16 %v1054, %v1050
        %v1231 = vpack.c.b16 %v1055, %v1051
        %v1232 = vpack.c.b16 %v1060, %v1056
        %v1233 = vpack.c.b16 %v1061, %v1057
        %v1234 = vpack.c.b16 %v1062, %v1058
        %v1235 = vpack.c.b16 %v1063, %v1059
        %v1236 = vpack.c.b16 %v1068, %v1064
        %v1237 = vpack.c.b16 %v1069, %v1065
        %v1238 = vpack.c.b16 %v1070, %v1066
        %v1239 = vpack.c.b16 %v1071, %v1067
        %v1240 = vpack.c.b16 %v1076, %v1072
        %v1241 = vpack.c.b16 %v1077, %v1073
        %v1242 = vpack.c.b16 %v1078, %v1074
        %v1243 = vpack.c.b16 %v1079, %v1075
        %v1244 = vpack.c.b16 %v1084, %v1080
        %v1245 = vpack.c.b16 %v1085, %v1081
        %v1246 = vpack.c.b16 %v1086, %v1082
        %v1247 = vpack.c.b16 %v1087, %v1083
        %v1248 = vpack.c.b16 %v1092, %v1088
        %v1249 = vpack.c.b16 %v1093, %v1089
        %v1250 = vpack.c.b16 %v1094, %v1090
        %v1251 = vpack.c.b16 %v1095, %v1091
        %v1252 = vpack.c.b16 %v1100, %v1096
        %v1253 = vpack.c.b16 %v1101, %v1097
        %v1254 = vpack.c.b16 %v1102, %v1098
        %v1255 = vpack.c.b16 %v1103, %v1099
        %v1256 = vpack.c.b16 %v1108, %v1104
        %v1257 = vpack.c.b16 %v1109, %v1105
        %v1258 = vpack.c.b16 %v1110, %v1106
        %v1259 = vpack.c.b16 %v1111, %v1107
        %v1260 = vpack.c.b16 %v1116, %v1112
        %v1261 = vpack.c.b16 %v1117, %v1113
        %v1262 = vpack.c.b16 %v1118, %v1114
        %v1263 = vpack.c.b16 %v1119, %v1115
        %v1264 = vpack.c.b16 %v1124, %v1120
        %v1265 = vpack.c.b16 %v1125, %v1121
        %v1266 = vpack.c.b16 %v1126, %v1122
        %v1267 = vpack.c.b16 %v1127, %v1123
        %v1268 = vpack.c.b16 %v1132, %v1128
        %v1269 = vpack.c.b16 %v1133, %v1129
        %v1270 = vpack.c.b16 %v1134, %v1130
        %v1271 = vpack.c.b16 %v1135, %v1131
        %v1272 = vpack.c.b16 %v1140, %v1136
        %v1273 = vpack.c.b16 %v1141, %v1137
        %v1274 = vpack.c.b16 %v1142, %v1138
        %v1275 = vpack.c.b16 %v1143, %v1139
        %v1276 = vpack.c.b16 %v1148, %v1144
        %v1277 = vpack.c.b16 %v1149, %v1145
        %v1278 = vpack.c.b16 %v1150, %v1146
        %v1279 = vpack.c.b16 %v1151, %v1147
        %v1472 = vunpack.c.l.b16 %v512
        %v1473 = vunpack.c.l.b16 %v513
        %v1474 = vunpack.c.l.b16 %v514
        %v1475 = vunpack.c.l.b16 %v515
        %v1476 = vunpack.c.l.b16 %v516
        %v1477 = vunpack.c.l.b16 %v517
        %v1478 = vunpack.c.l.b16 %v518
        %v1479 = vunpack.c.l.b16 %v519
        %v1480 = vunpack.c.l.b16 %v520
        %v1481 = vunpack.c.l.b16 %v521
        %v1482 = vunpack.c.l.b16 %v522
        %v1483 = vunpack.c.l.b16 %v523
        %v1484 = vunpack.c.l.b16 %v524
        %v1485 = vunpack.c.l.b16 %v525
        %v1486 = vunpack.c.l.b16 %v526
        %v1487 = vunpack.c.l.b16 %v527
        %v1488 = vunpack.c.l.b16 %v528
        %v1489 = vunpack.c.l.b16 %v529
        %v1490 = vunpack.c.l.b16 %v530
        %v1491 = vunpack.c.l.b16 %v531
        %v1492 = vunpack.c.l.b16 %v532
        %v1493 = vunpack.c.l.b16 %v533
        %v1494 = vunpack.c.l.b16 %v534
        %v1495 = vunpack.c.l.b16 %v535
        %v1496 = vunpack.c.l.b16 %v536
        %v1497 = vunpack.c.l.b16 %v537
        %v1498 = vunpack.c.l.b16 %v538
        %v1499 = vunpack.c.l.b16 %v539
        %v1500 = vunpack.c.l.b16 %v540
        %v1501 = vunpack.c.l.b16 %v541
        %v1502 = vunpack.c.l.b16 %v542
        %v1503 = vunpack.c.l.b16 %v543
        %v1504 = vunpack.c.l.b16 %v544
        %v1505 = vunpack.c.l.b16 %v545
        %v1506 = vunpack.c.l.b16 %v546
        %v1507 = vunpack.c.l.b16 %v547
        %v1508 = vunpack.c.l.b16 %v548
        %v1509 = vunpack.c.l.b16 %v549
        %v1510 = vunpack.c.l.b16 %v550
        %v1511 = vunpack.c.l.b16 %v551
        %v1512 = vunpack.c.l.b16 %v552
        %v1513 = vunpack.c.l.b16 %v553
        %v1514 = vunpack.c.l.b16 %v554
        %v1515 = vunpack.c.l.b16 %v555
        %v1516 = vunpack.c.l.b16 %v556
        %v1517 = vunpack.c.l.b16 %v557
        %v1518 = vunpack.c.l.b16 %v558
        %v1519 = vunpack.c.l.b16 %v559
        %v1520 = vunpack.c.l.b16 %v560
        %v1521 = vunpack.c.l.b16 %v561
        %v1522 = vunpack.c.l.b16 %v562
        %v1523 = vunpack.c.l.b16 %v563
        %v1524 = vunpack.c.l.b16 %v564
        %v1525 = vunpack.c.l.b16 %v565
        %v1526 = vunpack.c.l.b16 %v566
        %v1527 = vunpack.c.l.b16 %v567
        %v1528 = vunpack.c.l.b16 %v568
        %v1529 = vunpack.c.l.b16 %v569
        %v1530 = vunpack.c.l.b16 %v570
        %v1531 = vunpack.c.l.b16 %v571
        %v1532 = vunpack.c.l.b16 %v572
        %v1533 = vunpack.c.l.b16 %v573
        %v1534 = vunpack.c.l.b16 %v574
        %v1535 = vunpack.c.l.b16 %v575
        %v1536 = vpack.c.b16 %v1473, %v1472
        %v1537 = vpack.c.b16 %v1475, %v1474
        %v1538 = vpack.c.b16 %v1477, %v1476
        %v1539 = vpack.c.b16 %v1479, %v1478
        %v1540 = vpack.c.b16 %v1481, %v1480
        %v1541 = vpack.c.b16 %v1483, %v1482
        %v1542 = vpack.c.b16 %v1485, %v1484
        %v1543 = vpack.c.b16 %v1487, %v1486
        %v1544 = vpack.c.b16 %v1489, %v1488
        %v1545 = vpack.c.b16 %v1491, %v1490
        %v1546 = vpack.c.b16 %v1493, %v1492
        %v1547 = vpack.c.b16 %v1495, %v1494
        %v1548 = vpack.c.b16 %v1497, %v1496
        %v1549 = vpack.c.b16 %v1499, %v1498
        %v1550 = vpack.c.b16 %v1501, %v1500
        %v1551 = vpack.c.b16 %v1503, %v1502
        %v1552 = vpack.c.b16 %v1505, %v1504
        %v1553 = vpack.c.b16 %v1507, %v1506
        %v1554 = vpack.c.b16 %v1509, %v1508
        %v1555 = vpack.c.b16 %v1511, %v1510
        %v1556 = vpack.c.b16 %v1513, %v1512
        %v1557 = vpack.c.b16 %v1515, %v1514
        %v1558 = vpack.c.b16 %v1517, %v1516
        %v1559 = vpack.c.b16 %v1519, %v1518
        %v1560 = vpack.c.b16 %v1521, %v1520
        %v1561 = vpack.c.b16 %v1523, %v1522
        %v1562 = vpack.c.b16 %v1525, %v1524
        %v1563 = vpack.c.b16 %v1527, %v1526
        %v1564 = vpack.c.b16 %v1529, %v1528
        %v1565 = vpack.c.b16 %v1531, %v1530
        %v1566 = vpack.c.b16 %v1533, %v1532
        %v1567 = vpack.c.b16 %v1535, %v1534
        %1600 = vmatprep.subr.bf16.mxu0 0
        %1601 = vmatpush1.bf16.msra.mxu0 %v1536
        %1602 = vmatprep.subr.bf16.mxu0 0
        %1603 = vmatpush1.bf16.msra.mxu0 %v1537
        %1604 = vmatprep.subr.bf16.mxu0 0
        %1605 = vmatpush1.bf16.msra.mxu0 %v1538
        %1606 = vmatprep.subr.bf16.mxu0 0
        %1607 = vmatpush1.bf16.msra.mxu0 %v1539
        %1608 = vmatprep.subr.bf16.mxu0 0
        %1609 = vmatpush1.bf16.msra.mxu0 %v1540
        %1610 = vmatprep.subr.bf16.mxu0 0
        %1611 = vmatpush1.bf16.msra.mxu0 %v1541
        %1612 = vmatprep.subr.bf16.mxu0 0
        %1613 = vmatpush1.bf16.msra.mxu0 %v1542
        %1614 = vmatprep.subr.bf16.mxu0 0
        %1615 = vmatpush1.bf16.msra.mxu0 %v1543
        %1616 = vmatprep.subr.bf16.mxu0 0
        %1617 = vmatpush1.bf16.msra.mxu0 %v1544
        %1618 = vmatprep.subr.bf16.mxu0 0
        %1619 = vmatpush1.bf16.msra.mxu0 %v1545
        %1620 = vmatprep.subr.bf16.mxu0 0
        %1621 = vmatpush1.bf16.msra.mxu0 %v1546
        %1622 = vmatprep.subr.bf16.mxu0 0
        %1623 = vmatpush1.bf16.msra.mxu0 %v1547
        %1624 = vmatprep.subr.bf16.mxu0 0
        %1625 = vmatpush1.bf16.msra.mxu0 %v1548
        %1626 = vmatprep.subr.bf16.mxu0 0
        %1627 = vmatpush1.bf16.msra.mxu0 %v1549
        %1628 = vmatprep.subr.bf16.mxu0 0
        %1629 = vmatpush1.bf16.msra.mxu0 %v1550
        %1630 = vmatprep.subr.bf16.mxu0 0
        %1631 = vmatpush1.bf16.msra.mxu0 %v1551
        %1632 = vmatprep.mubr.bf16.mxu0 %v1153
        %1633 = vmatmul.mubr.bf16.gmra.mrb[0].mxu0 %v1152
        %v1634 = vpop.f32.mrb[0].mxu0
        %v1635 = vadd.f32 0.0, %v1634
        %v1636 = vpop.f32.mrb[0].mxu0
        %v1637 = vpop.f32.mrb[0].mxu0
        %v1638 = vadd.f32 0.0, %v1637
        %v1639 = vpop.f32.mrb[0].mxu0
        %1640 = vmatprep.mubr.bf16.mxu0 %v1157
        %1641 = vmatmul.mubr.bf16.gmra.mrb[0].mxu0 %v1156
        %v1642 = vpop.f32.mrb[0].mxu0
        %v1643 = vadd.f32 0.0, %v1642
        %v1644 = vpop.f32.mrb[0].mxu0
        %v1645 = vpop.f32.mrb[0].mxu0
        %v1646 = vadd.f32 0.0, %v1645
        %v1647 = vpop.f32.mrb[0].mxu0
        %1648 = vmatprep.mubr.bf16.mxu0 %v1161
        %1649 = vmatmul.mubr.bf16.gmra.mrb[0].mxu0 %v1160
        %v1650 = vpop.f32.mrb[0].mxu0
        %v1651 = vadd.f32 0.0, %v1650
        %v1652 = vpop.f32.mrb[0].mxu0
        %v1653 = vpop.f32.mrb[0].mxu0
        %v1654 = vadd.f32 0.0, %v1653
        %v1655 = vpop.f32.mrb[0].mxu0
        %1656 = vmatprep.mubr.bf16.mxu0 %v1165
        %1657 = vmatmul.mubr.bf16.gmra.mrb[0].mxu0 %v1164
        %v1658 = vpop.f32.mrb[0].mxu0
        %v1659 = vadd.f32 0.0, %v1658
        %v1660 = vpop.f32.mrb[0].mxu0
        %v1661 = vpop.f32.mrb[0].mxu0
        %v1662 = vadd.f32 0.0, %v1661
        %v1663 = vpop.f32.mrb[0].mxu0
        %1664 = vmatprep.mubr.bf16.mxu0 %v1169
        %1665 = vmatmul.mubr.bf16.gmra.mrb[0].mxu0 %v1168
        %v1666 = vpop.f32.mrb[0].mxu0
        %v1667 = vadd.f32 0.0, %v1666
        %v1668 = vpop.f32.mrb[0].mxu0
        %v1669 = vpop.f32.mrb[0].mxu0
        %v1670 = vadd.f32 0.0, %v1669
        %v1671 = vpop.f32.mrb[0].mxu0
        %1672 = vmatprep.mubr.bf16.mxu0 %v1173
        %1673 = vmatmul.mubr.bf16.gmra.mrb[0].mxu0 %v1172
        %v1674 = vpop.f32.mrb[0].mxu0
        %v1675 = vadd.f32 0.0, %v1674
        %v1676 = vpop.f32.mrb[0].mxu0
        %v1677 = vpop.f32.mrb[0].mxu0
        %v1678 = vadd.f32 0.0, %v1677
        %v1679 = vpop.f32.mrb[0].mxu0
        %1680 = vmatprep.mubr.bf16.mxu0 %v1177
        %1681 = vmatmul.mubr.bf16.gmra.mrb[0].mxu0 %v1176
        %v1682 = vpop.f32.mrb[0].mxu0
        %v1683 = vadd.f32 0.0, %v1682
        %v1684 = vpop.f32.mrb[0].mxu0
        %v1685 = vpop.f32.mrb[0].mxu0
        %v1686 = vadd.f32 0.0, %v1685
        %v1687 = vpop.f32.mrb[0].mxu0
        %1688 = vmatprep.mubr.bf16.mxu0 %v1181
        %1689 = vmatmul.mubr.bf16.gmra.mrb[0].mxu0 %v1180
        %v1690 = vpop.f32.mrb[0].mxu0
        %v1691 = vadd.f32 0.0, %v1690
        %v1692 = vpop.f32.mrb[0].mxu0
        %v1693 = vpop.f32.mrb[0].mxu0
        %v1694 = vadd.f32 0.0, %v1693
        %v1695 = vpop.f32.mrb[0].mxu0
        %1696 = vmatprep.mubr.bf16.mxu0 %v1185
        %1697 = vmatmul.mubr.bf16.gmra.mrb[0].mxu0 %v1184
        %v1698 = vpop.f32.mrb[0].mxu0
        %v1699 = vadd.f32 0.0, %v1698
        %v1700 = vpop.f32.mrb[0].mxu0
        %v1701 = vpop.f32.mrb[0].mxu0
        %v1702 = vadd.f32 0.0, %v1701
        %v1703 = vpop.f32.mrb[0].mxu0
        %1704 = vmatprep.mubr.bf16.mxu0 %v1189
        %1705 = vmatmul.mubr.bf16.gmra.mrb[0].mxu0 %v1188
        %v1706 = vpop.f32.mrb[0].mxu0
        %v1707 = vadd.f32 0.0, %v1706
        %v1708 = vpop.f32.mrb[0].mxu0
        %v1709 = vpop.f32.mrb[0].mxu0
        %v1710 = vadd.f32 0.0, %v1709
        %v1711 = vpop.f32.mrb[0].mxu0
        %1712 = vmatprep.mubr.bf16.mxu0 %v1193
        %1713 = vmatmul.mubr.bf16.gmra.mrb[0].mxu0 %v1192
        %v1714 = vpop.f32.mrb[0].mxu0
        %v1715 = vadd.f32 0.0, %v1714
        %v1716 = vpop.f32.mrb[0].mxu0
        %v1717 = vpop.f32.mrb[0].mxu0
        %v1718 = vadd.f32 0.0, %v1717
        %v1719 = vpop.f32.mrb[0].mxu0
        %1720 = vmatprep.mubr.bf16.mxu0 %v1197
        %1721 = vmatmul.mubr.bf16.gmra.mrb[0].mxu0 %v1196
        %v1722 = vpop.f32.mrb[0].mxu0
        %v1723 = vadd.f32 0.0, %v1722
        %v1724 = vpop.f32.mrb[0].mxu0
        %v1725 = vpop.f32.mrb[0].mxu0
        %v1726 = vadd.f32 0.0, %v1725
        %v1727 = vpop.f32.mrb[0].mxu0
        %1728 = vmatprep.mubr.bf16.mxu0 %v1201
        %1729 = vmatmul.mubr.bf16.gmra.mrb[0].mxu0 %v1200
        %v1730 = vpop.f32.mrb[0].mxu0
        %v1731 = vadd.f32 0.0, %v1730
        %v1732 = vpop.f32.mrb[0].mxu0
        %v1733 = vpop.f32.mrb[0].mxu0
        %v1734 = vadd.f32 0.0, %v1733
        %v1735 = vpop.f32.mrb[0].mxu0
        %1736 = vmatprep.mubr.bf16.mxu0 %v1205
        %1737 = vmatmul.mubr.bf16.gmra.mrb[0].mxu0 %v1204
        %v1738 = vpop.f32.mrb[0].mxu0
        %v1739 = vadd.f32 0.0, %v1738
        %v1740 = vpop.f32.mrb[0].mxu0
        %v1741 = vpop.f32.mrb[0].mxu0
        %v1742 = vadd.f32 0.0, %v1741
        %v1743 = vpop.f32.mrb[0].mxu0
        %1744 = vmatprep.mubr.bf16.mxu0 %v1209
        %1745 = vmatmul.mubr.bf16.gmra.mrb[0].mxu0 %v1208
        %v1746 = vpop.f32.mrb[0].mxu0
        %v1747 = vadd.f32 0.0, %v1746
        %v1748 = vpop.f32.mrb[0].mxu0
        %v1749 = vpop.f32.mrb[0].mxu0
        %v1750 = vadd.f32 0.0, %v1749
        %v1751 = vpop.f32.mrb[0].mxu0
        %1752 = vmatprep.mubr.bf16.mxu0 %v1213
        %1753 = vmatmul.mubr.bf16.gmra.mrb[0].mxu0 %v1212
        %v1754 = vpop.f32.mrb[0].mxu0
        %v1755 = vadd.f32 0.0, %v1754
        %v1756 = vpop.f32.mrb[0].mxu0
        %v1757 = vpop.f32.mrb[0].mxu0
        %v1758 = vadd.f32 0.0, %v1757
        %v1759 = vpop.f32.mrb[0].mxu0
        %1760 = vmatprep.mubr.bf16.mxu0 %v1217
        %1761 = vmatmul.mubr.bf16.gmra.mrb[0].mxu0 %v1216
        %v1762 = vpop.f32.mrb[0].mxu0
        %v1763 = vadd.f32 0.0, %v1762
        %v1764 = vpop.f32.mrb[0].mxu0
        %v1765 = vpop.f32.mrb[0].mxu0
        %v1766 = vadd.f32 0.0, %v1765
        %v1767 = vpop.f32.mrb[0].mxu0
        %1768 = vmatprep.mubr.bf16.mxu0 %v1221
        %1769 = vmatmul.mubr.bf16.gmra.mrb[0].mxu0 %v1220
        %v1770 = vpop.f32.mrb[0].mxu0
        %v1771 = vadd.f32 0.0, %v1770
        %v1772 = vpop.f32.mrb[0].mxu0
        %v1773 = vpop.f32.mrb[0].mxu0
        %v1774 = vadd.f32 0.0, %v1773
        %v1775 = vpop.f32.mrb[0].mxu0
        %1776 = vmatprep.mubr.bf16.mxu0 %v1225
        %1777 = vmatmul.mubr.bf16.gmra.mrb[0].mxu0 %v1224
        %v1778 = vpop.f32.mrb[0].mxu0
        %v1779 = vadd.f32 0.0, %v1778
        %v1780 = vpop.f32.mrb[0].mxu0
        %v1781 = vpop.f32.mrb[0].mxu0
        %v1782 = vadd.f32 0.0, %v1781
        %v1783 = vpop.f32.mrb[0].mxu0
        %1784 = vmatprep.mubr.bf16.mxu0 %v1229
        %1785 = vmatmul.mubr.bf16.gmra.mrb[0].mxu0 %v1228
        %v1786 = vpop.f32.mrb[0].mxu0
        %v1787 = vadd.f32 0.0, %v1786
        %v1788 = vpop.f32.mrb[0].mxu0
        %v1789 = vpop.f32.mrb[0].mxu0
        %v1790 = vadd.f32 0.0, %v1789
        %v1791 = vpop.f32.mrb[0].mxu0
        %1792 = vmatprep.mubr.bf16.mxu0 %v1233
        %1793 = vmatmul.mubr.bf16.gmra.mrb[0].mxu0 %v1232
        %v1794 = vpop.f32.mrb[0].mxu0
        %v1795 = vadd.f32 0.0, %v1794
        %v1796 = vpop.f32.mrb[0].mxu0
        %v1797 = vpop.f32.mrb[0].mxu0
        %v1798 = vadd.f32 0.0, %v1797
        %v1799 = vpop.f32.mrb[0].mxu0
        %1800 = vmatprep.mubr.bf16.mxu0 %v1237
        %1801 = vmatmul.mubr.bf16.gmra.mrb[0].mxu0 %v1236
        %v1802 = vpop.f32.mrb[0].mxu0
        %v1803 = vadd.f32 0.0, %v1802
        %v1804 = vpop.f32.mrb[0].mxu0
        %v1805 = vpop.f32.mrb[0].mxu0
        %v1806 = vadd.f32 0.0, %v1805
        %v1807 = vpop.f32.mrb[0].mxu0
        %1808 = vmatprep.mubr.bf16.mxu0 %v1241
        %1809 = vmatmul.mubr.bf16.gmra.mrb[0].mxu0 %v1240
        %v1810 = vpop.f32.mrb[0].mxu0
        %v1811 = vadd.f32 0.0, %v1810
        %v1812 = vpop.f32.mrb[0].mxu0
        %v1813 = vpop.f32.mrb[0].mxu0
        %v1814 = vadd.f32 0.0, %v1813
        %v1815 = vpop.f32.mrb[0].mxu0
        %1816 = vmatprep.mubr.bf16.mxu0 %v1245
        %1817 = vmatmul.mubr.bf16.gmra.mrb[0].mxu0 %v1244
        %v1818 = vpop.f32.mrb[0].mxu0
        %v1819 = vadd.f32 0.0, %v1818
        %v1820 = vpop.f32.mrb[0].mxu0
        %v1821 = vpop.f32.mrb[0].mxu0
        %v1822 = vadd.f32 0.0, %v1821
        %v1823 = vpop.f32.mrb[0].mxu0
        %1824 = vmatprep.mubr.bf16.mxu0 %v1249
        %1825 = vmatmul.mubr.bf16.gmra.mrb[0].mxu0 %v1248
        %v1826 = vpop.f32.mrb[0].mxu0
        %v1827 = vadd.f32 0.0, %v1826
        %v1828 = vpop.f32.mrb[0].mxu0
        %v1829 = vpop.f32.mrb[0].mxu0
        %v1830 = vadd.f32 0.0, %v1829
        %v1831 = vpop.f32.mrb[0].mxu0
        %1832 = vmatprep.mubr.bf16.mxu0 %v1253
        %1833 = vmatmul.mubr.bf16.gmra.mrb[0].mxu0 %v1252
        %v1834 = vpop.f32.mrb[0].mxu0
        %v1835 = vadd.f32 0.0, %v1834
        %v1836 = vpop.f32.mrb[0].mxu0
        %v1837 = vpop.f32.mrb[0].mxu0
        %v1838 = vadd.f32 0.0, %v1837
        %v1839 = vpop.f32.mrb[0].mxu0
        %1840 = vmatprep.mubr.bf16.mxu0 %v1257
        %1841 = vmatmul.mubr.bf16.gmra.mrb[0].mxu0 %v1256
        %v1842 = vpop.f32.mrb[0].mxu0
        %v1843 = vadd.f32 0.0, %v1842
        %v1844 = vpop.f32.mrb[0].mxu0
        %v1845 = vpop.f32.mrb[0].mxu0
        %v1846 = vadd.f32 0.0, %v1845
        %v1847 = vpop.f32.mrb[0].mxu0
        %1848 = vmatprep.mubr.bf16.mxu0 %v1261
        %1849 = vmatmul.mubr.bf16.gmra.mrb[0].mxu0 %v1260
        %v1850 = vpop.f32.mrb[0].mxu0
        %v1851 = vadd.f32 0.0, %v1850
        %v1852 = vpop.f32.mrb[0].mxu0
        %v1853 = vpop.f32.mrb[0].mxu0
        %v1854 = vadd.f32 0.0, %v1853
        %v1855 = vpop.f32.mrb[0].mxu0
        %1856 = vmatprep.mubr.bf16.mxu0 %v1265
        %1857 = vmatmul.mubr.bf16.gmra.mrb[0].mxu0 %v1264
        %v1858 = vpop.f32.mrb[0].mxu0
        %v1859 = vadd.f32 0.0, %v1858
        %v1860 = vpop.f32.mrb[0].mxu0
        %v1861 = vpop.f32.mrb[0].mxu0
        %v1862 = vadd.f32 0.0, %v1861
        %v1863 = vpop.f32.mrb[0].mxu0
        %1864 = vmatprep.mubr.bf16.mxu0 %v1269
        %1865 = vmatmul.mubr.bf16.gmra.mrb[0].mxu0 %v1268
        %v1866 = vpop.f32.mrb[0].mxu0
        %v1867 = vadd.f32 0.0, %v1866
        %v1868 = vpop.f32.mrb[0].mxu0
        %v1869 = vpop.f32.mrb[0].mxu0
        %v1870 = vadd.f32 0.0, %v1869
        %v1871 = vpop.f32.mrb[0].mxu0
        %1872 = vmatprep.mubr.bf16.mxu0 %v1273
        %1873 = vmatmul.mubr.bf16.gmra.mrb[0].mxu0 %v1272
        %v1874 = vpop.f32.mrb[0].mxu0
        %v1875 = vadd.f32 0.0, %v1874
        %v1876 = vpop.f32.mrb[0].mxu0
        %v1877 = vpop.f32.mrb[0].mxu0
        %v1878 = vadd.f32 0.0, %v1877
        %v1879 = vpop.f32.mrb[0].mxu0
        %1880 = vmatprep.mubr.bf16.mxu0 %v1277
        %1881 = vmatmul.mubr.bf16.gmra.mrb[0].mxu0 %v1276
        %v1882 = vpop.f32.mrb[0].mxu0
        %v1883 = vadd.f32 0.0, %v1882
        %v1884 = vpop.f32.mrb[0].mxu0
        %v1885 = vpop.f32.mrb[0].mxu0
        %v1886 = vadd.f32 0.0, %v1885
        %v1887 = vpop.f32.mrb[0].mxu0
        %1888 = vdwg.mxu0
        %1889 = vmatprep.subr.bf16.mxu0 0
        %1890 = vmatpush1.bf16.msra.mxu0 %v1552
        %1891 = vmatprep.subr.bf16.mxu0 0
        %1892 = vmatpush1.bf16.msra.mxu0 %v1553
        %1893 = vmatprep.subr.bf16.mxu0 0
        %1894 = vmatpush1.bf16.msra.mxu0 %v1554
        %1895 = vmatprep.subr.bf16.mxu0 0
        %1896 = vmatpush1.bf16.msra.mxu0 %v1555
        %1897 = vmatprep.subr.bf16.mxu0 0
        %1898 = vmatpush1.bf16.msra.mxu0 %v1556
        %1899 = vmatprep.subr.bf16.mxu0 0
        %1900 = vmatpush1.bf16.msra.mxu0 %v1557
        %1901 = vmatprep.subr.bf16.mxu0 0
        %1902 = vmatpush1.bf16.msra.mxu0 %v1558
        %1903 = vmatprep.subr.bf16.mxu0 0
        %1904 = vmatpush1.bf16.msra.mxu0 %v1559
        %1905 = vmatprep.subr.bf16.mxu0 0
        %1906 = vmatpush1.bf16.msra.mxu0 %v1560
        %1907 = vmatprep.subr.bf16.mxu0 0
        %1908 = vmatpush1.bf16.msra.mxu0 %v1561
        %1909 = vmatprep.subr.bf16.mxu0 0
        %1910 = vmatpush1.bf16.msra.mxu0 %v1562
        %1911 = vmatprep.subr.bf16.mxu0 0
        %1912 = vmatpush1.bf16.msra.mxu0 %v1563
        %1913 = vmatprep.subr.bf16.mxu0 0
        %1914 = vmatpush1.bf16.msra.mxu0 %v1564
        %1915 = vmatprep.subr.bf16.mxu0 0
        %1916 = vmatpush1.bf16.msra.mxu0 %v1565
        %1917 = vmatprep.subr.bf16.mxu0 0
        %1918 = vmatpush1.bf16.msra.mxu0 %v1566
        %1919 = vmatprep.subr.bf16.mxu0 0
        %1920 = vmatpush1.bf16.msra.mxu0 %v1567
        %1921 = vmatprep.mubr.bf16.mxu0 %v1155
        %1922 = vmatmul.mubr.bf16.gmra.mrb[0].mxu0 %v1154
        %v1923 = vpop.f32.mrb[0].mxu0
        %v1924 = vadd.f32 %v1635, %v1923
        %v1925 = vpop.f32.mrb[0].mxu0
        %v1926 = vpop.f32.mrb[0].mxu0
        %v1927 = vadd.f32 %v1638, %v1926
        %v1928 = vpop.f32.mrb[0].mxu0
        %1929 = vmatprep.mubr.bf16.mxu0 %v1159
        %1930 = vmatmul.mubr.bf16.gmra.mrb[0].mxu0 %v1158
        %v1931 = vpop.f32.mrb[0].mxu0
        %v1932 = vadd.f32 %v1643, %v1931
        %v1933 = vpop.f32.mrb[0].mxu0
        %v1934 = vpop.f32.mrb[0].mxu0
        %v1935 = vadd.f32 %v1646, %v1934
        %v1936 = vpop.f32.mrb[0].mxu0
        %1937 = vmatprep.mubr.bf16.mxu0 %v1163
        %1938 = vmatmul.mubr.bf16.gmra.mrb[0].mxu0 %v1162
        %v1939 = vpop.f32.mrb[0].mxu0
        %v1940 = vadd.f32 %v1651, %v1939
        %v1941 = vpop.f32.mrb[0].mxu0
        %v1942 = vpop.f32.mrb[0].mxu0
        %v1943 = vadd.f32 %v1654, %v1942
        %v1944 = vpop.f32.mrb[0].mxu0
        %1945 = vmatprep.mubr.bf16.mxu0 %v1167
        %1946 = vmatmul.mubr.bf16.gmra.mrb[0].mxu0 %v1166
        %v1947 = vpop.f32.mrb[0].mxu0
        %v1948 = vadd.f32 %v1659, %v1947
        %v1949 = vpop.f32.mrb[0].mxu0
        %v1950 = vpop.f32.mrb[0].mxu0
        %v1951 = vadd.f32 %v1662, %v1950
        %v1952 = vpop.f32.mrb[0].mxu0
        %1953 = vmatprep.mubr.bf16.mxu0 %v1171
        %1954 = vmatmul.mubr.bf16.gmra.mrb[0].mxu0 %v1170
        %v1955 = vpop.f32.mrb[0].mxu0
        %v1956 = vadd.f32 %v1667, %v1955
        %v1957 = vpop.f32.mrb[0].mxu0
        %v1958 = vpop.f32.mrb[0].mxu0
        %v1959 = vadd.f32 %v1670, %v1958
        %v1960 = vpop.f32.mrb[0].mxu0
        %1961 = vmatprep.mubr.bf16.mxu0 %v1175
        %1962 = vmatmul.mubr.bf16.gmra.mrb[0].mxu0 %v1174
        %v1963 = vpop.f32.mrb[0].mxu0
        %v1964 = vadd.f32 %v1675, %v1963
        %v1965 = vpop.f32.mrb[0].mxu0
        %v1966 = vpop.f32.mrb[0].mxu0
        %v1967 = vadd.f32 %v1678, %v1966
        %v1968 = vpop.f32.mrb[0].mxu0
        %1969 = vmatprep.mubr.bf16.mxu0 %v1179
        %1970 = vmatmul.mubr.bf16.gmra.mrb[0].mxu0 %v1178
        %v1971 = vpop.f32.mrb[0].mxu0
        %v1972 = vadd.f32 %v1683, %v1971
        %v1973 = vpop.f32.mrb[0].mxu0
        %v1974 = vpop.f32.mrb[0].mxu0
        %v1975 = vadd.f32 %v1686, %v1974
        %v1976 = vpop.f32.mrb[0].mxu0
        %1977 = vmatprep.mubr.bf16.mxu0 %v1183
        %1978 = vmatmul.mubr.bf16.gmra.mrb[0].mxu0 %v1182
        %v1979 = vpop.f32.mrb[0].mxu0
        %v1980 = vadd.f32 %v1691, %v1979
        %v1981 = vpop.f32.mrb[0].mxu0
        %v1982 = vpop.f32.mrb[0].mxu0
        %v1983 = vadd.f32 %v1694, %v1982
        %v1984 = vpop.f32.mrb[0].mxu0
        %1985 = vmatprep.mubr.bf16.mxu0 %v1187
        %1986 = vmatmul.mubr.bf16.gmra.mrb[0].mxu0 %v1186
        %v1987 = vpop.f32.mrb[0].mxu0
        %v1988 = vadd.f32 %v1699, %v1987
        %v1989 = vpop.f32.mrb[0].mxu0
        %v1990 = vpop.f32.mrb[0].mxu0
        %v1991 = vadd.f32 %v1702, %v1990
        %v1992 = vpop.f32.mrb[0].mxu0
        %1993 = vmatprep.mubr.bf16.mxu0 %v1191
        %1994 = vmatmul.mubr.bf16.gmra.mrb[0].mxu0 %v1190
        %v1995 = vpop.f32.mrb[0].mxu0
        %v1996 = vadd.f32 %v1707, %v1995
        %v1997 = vpop.f32.mrb[0].mxu0
        %v1998 = vpop.f32.mrb[0].mxu0
        %v1999 = vadd.f32 %v1710, %v1998
        %v2000 = vpop.f32.mrb[0].mxu0
        %2001 = vmatprep.mubr.bf16.mxu0 %v1195
        %2002 = vmatmul.mubr.bf16.gmra.mrb[0].mxu0 %v1194
        %v2003 = vpop.f32.mrb[0].mxu0
        %v2004 = vadd.f32 %v1715, %v2003
        %v2005 = vpop.f32.mrb[0].mxu0
        %v2006 = vpop.f32.mrb[0].mxu0
        %v2007 = vadd.f32 %v1718, %v2006
        %v2008 = vpop.f32.mrb[0].mxu0
        %2009 = vmatprep.mubr.bf16.mxu0 %v1199
        %2010 = vmatmul.mubr.bf16.gmra.mrb[0].mxu0 %v1198
        %v2011 = vpop.f32.mrb[0].mxu0
        %v2012 = vadd.f32 %v1723, %v2011
        %v2013 = vpop.f32.mrb[0].mxu0
        %v2014 = vpop.f32.mrb[0].mxu0
        %v2015 = vadd.f32 %v1726, %v2014
        %v2016 = vpop.f32.mrb[0].mxu0
        %2017 = vmatprep.mubr.bf16.mxu0 %v1203
        %2018 = vmatmul.mubr.bf16.gmra.mrb[0].mxu0 %v1202
        %v2019 = vpop.f32.mrb[0].mxu0
        %v2020 = vadd.f32 %v1731, %v2019
        %v2021 = vpop.f32.mrb[0].mxu0
        %v2022 = vpop.f32.mrb[0].mxu0
        %v2023 = vadd.f32 %v1734, %v2022
        %v2024 = vpop.f32.mrb[0].mxu0
        %2025 = vmatprep.mubr.bf16.mxu0 %v1207
        %2026 = vmatmul.mubr.bf16.gmra.mrb[0].mxu0 %v1206
        %v2027 = vpop.f32.mrb[0].mxu0
        %v2028 = vadd.f32 %v1739, %v2027
        %v2029 = vpop.f32.mrb[0].mxu0
        %v2030 = vpop.f32.mrb[0].mxu0
        %v2031 = vadd.f32 %v1742, %v2030
        %v2032 = vpop.f32.mrb[0].mxu0
        %2033 = vmatprep.mubr.bf16.mxu0 %v1211
        %2034 = vmatmul.mubr.bf16.gmra.mrb[0].mxu0 %v1210
        %v2035 = vpop.f32.mrb[0].mxu0
        %v2036 = vadd.f32 %v1747, %v2035
        %v2037 = vpop.f32.mrb[0].mxu0
        %v2038 = vpop.f32.mrb[0].mxu0
        %v2039 = vadd.f32 %v1750, %v2038
        %v2040 = vpop.f32.mrb[0].mxu0
        %2041 = vmatprep.mubr.bf16.mxu0 %v1215
        %2042 = vmatmul.mubr.bf16.gmra.mrb[0].mxu0 %v1214
        %v2043 = vpop.f32.mrb[0].mxu0
        %v2044 = vadd.f32 %v1755, %v2043
        %v2045 = vpop.f32.mrb[0].mxu0
        %v2046 = vpop.f32.mrb[0].mxu0
        %v2047 = vadd.f32 %v1758, %v2046
        %v2048 = vpop.f32.mrb[0].mxu0
        %2049 = vmatprep.mubr.bf16.mxu0 %v1219
        %2050 = vmatmul.mubr.bf16.gmra.mrb[0].mxu0 %v1218
        %v2051 = vpop.f32.mrb[0].mxu0
        %v2052 = vadd.f32 %v1763, %v2051
        %v2053 = vpop.f32.mrb[0].mxu0
        %v2054 = vpop.f32.mrb[0].mxu0
        %v2055 = vadd.f32 %v1766, %v2054
        %v2056 = vpop.f32.mrb[0].mxu0
        %2057 = vmatprep.mubr.bf16.mxu0 %v1223
        %2058 = vmatmul.mubr.bf16.gmra.mrb[0].mxu0 %v1222
        %v2059 = vpop.f32.mrb[0].mxu0
        %v2060 = vadd.f32 %v1771, %v2059
        %v2061 = vpop.f32.mrb[0].mxu0
        %v2062 = vpop.f32.mrb[0].mxu0
        %v2063 = vadd.f32 %v1774, %v2062
        %v2064 = vpop.f32.mrb[0].mxu0
        %2065 = vmatprep.mubr.bf16.mxu0 %v1227
        %2066 = vmatmul.mubr.bf16.gmra.mrb[0].mxu0 %v1226
        %v2067 = vpop.f32.mrb[0].mxu0
        %v2068 = vadd.f32 %v1779, %v2067
        %v2069 = vpop.f32.mrb[0].mxu0
        %v2070 = vpop.f32.mrb[0].mxu0
        %v2071 = vadd.f32 %v1782, %v2070
        %v2072 = vpop.f32.mrb[0].mxu0
        %2073 = vmatprep.mubr.bf16.mxu0 %v1231
        %2074 = vmatmul.mubr.bf16.gmra.mrb[0].mxu0 %v1230
        %v2075 = vpop.f32.mrb[0].mxu0
        %v2076 = vadd.f32 %v1787, %v2075
        %v2077 = vpop.f32.mrb[0].mxu0
        %v2078 = vpop.f32.mrb[0].mxu0
        %v2079 = vadd.f32 %v1790, %v2078
        %v2080 = vpop.f32.mrb[0].mxu0
        %2081 = vmatprep.mubr.bf16.mxu0 %v1235
        %2082 = vmatmul.mubr.bf16.gmra.mrb[0].mxu0 %v1234
        %v2083 = vpop.f32.mrb[0].mxu0
        %v2084 = vadd.f32 %v1795, %v2083
        %v2085 = vpop.f32.mrb[0].mxu0
        %v2086 = vpop.f32.mrb[0].mxu0
        %v2087 = vadd.f32 %v1798, %v2086
        %v2088 = vpop.f32.mrb[0].mxu0
        %2089 = vmatprep.mubr.bf16.mxu0 %v1239
        %2090 = vmatmul.mubr.bf16.gmra.mrb[0].mxu0 %v1238
        %v2091 = vpop.f32.mrb[0].mxu0
        %v2092 = vadd.f32 %v1803, %v2091
        %v2093 = vpop.f32.mrb[0].mxu0
        %v2094 = vpop.f32.mrb[0].mxu0
        %v2095 = vadd.f32 %v1806, %v2094
        %v2096 = vpop.f32.mrb[0].mxu0
        %2097 = vmatprep.mubr.bf16.mxu0 %v1243
        %2098 = vmatmul.mubr.bf16.gmra.mrb[0].mxu0 %v1242
        %v2099 = vpop.f32.mrb[0].mxu0
        %v2100 = vadd.f32 %v1811, %v2099
        %v2101 = vpop.f32.mrb[0].mxu0
        %v2102 = vpop.f32.mrb[0].mxu0
        %v2103 = vadd.f32 %v1814, %v2102
        %v2104 = vpop.f32.mrb[0].mxu0
        %2105 = vmatprep.mubr.bf16.mxu0 %v1247
        %2106 = vmatmul.mubr.bf16.gmra.mrb[0].mxu0 %v1246
        %v2107 = vpop.f32.mrb[0].mxu0
        %v2108 = vadd.f32 %v1819, %v2107
        %v2109 = vpop.f32.mrb[0].mxu0
        %v2110 = vpop.f32.mrb[0].mxu0
        %v2111 = vadd.f32 %v1822, %v2110
        %v2112 = vpop.f32.mrb[0].mxu0
        %2113 = vmatprep.mubr.bf16.mxu0 %v1251
        %2114 = vmatmul.mubr.bf16.gmra.mrb[0].mxu0 %v1250
        %v2115 = vpop.f32.mrb[0].mxu0
        %v2116 = vadd.f32 %v1827, %v2115
        %v2117 = vpop.f32.mrb[0].mxu0
        %v2118 = vpop.f32.mrb[0].mxu0
        %v2119 = vadd.f32 %v1830, %v2118
        %v2120 = vpop.f32.mrb[0].mxu0
        %2121 = vmatprep.mubr.bf16.mxu0 %v1255
        %2122 = vmatmul.mubr.bf16.gmra.mrb[0].mxu0 %v1254
        %v2123 = vpop.f32.mrb[0].mxu0
        %v2124 = vadd.f32 %v1835, %v2123
        %v2125 = vpop.f32.mrb[0].mxu0
        %v2126 = vpop.f32.mrb[0].mxu0
        %v2127 = vadd.f32 %v1838, %v2126
        %v2128 = vpop.f32.mrb[0].mxu0
        %2129 = vmatprep.mubr.bf16.mxu0 %v1259
        %2130 = vmatmul.mubr.bf16.gmra.mrb[0].mxu0 %v1258
        %v2131 = vpop.f32.mrb[0].mxu0
        %v2132 = vadd.f32 %v1843, %v2131
        %v2133 = vpop.f32.mrb[0].mxu0
        %v2134 = vpop.f32.mrb[0].mxu0
        %v2135 = vadd.f32 %v1846, %v2134
        %v2136 = vpop.f32.mrb[0].mxu0
        %2137 = vmatprep.mubr.bf16.mxu0 %v1263
        %2138 = vmatmul.mubr.bf16.gmra.mrb[0].mxu0 %v1262
        %v2139 = vpop.f32.mrb[0].mxu0
        %v2140 = vadd.f32 %v1851, %v2139
        %v2141 = vpop.f32.mrb[0].mxu0
        %v2142 = vpop.f32.mrb[0].mxu0
        %v2143 = vadd.f32 %v1854, %v2142
        %v2144 = vpop.f32.mrb[0].mxu0
        %2145 = vmatprep.mubr.bf16.mxu0 %v1267
        %2146 = vmatmul.mubr.bf16.gmra.mrb[0].mxu0 %v1266
        %v2147 = vpop.f32.mrb[0].mxu0
        %v2148 = vadd.f32 %v1859, %v2147
        %v2149 = vpop.f32.mrb[0].mxu0
        %v2150 = vpop.f32.mrb[0].mxu0
        %v2151 = vadd.f32 %v1862, %v2150
        %v2152 = vpop.f32.mrb[0].mxu0
        %2153 = vmatprep.mubr.bf16.mxu0 %v1271
        %2154 = vmatmul.mubr.bf16.gmra.mrb[0].mxu0 %v1270
        %v2155 = vpop.f32.mrb[0].mxu0
        %v2156 = vadd.f32 %v1867, %v2155
        %v2157 = vpop.f32.mrb[0].mxu0
        %v2158 = vpop.f32.mrb[0].mxu0
        %v2159 = vadd.f32 %v1870, %v2158
        %v2160 = vpop.f32.mrb[0].mxu0
        %2161 = vmatprep.mubr.bf16.mxu0 %v1275
        %2162 = vmatmul.mubr.bf16.gmra.mrb[0].mxu0 %v1274
        %v2163 = vpop.f32.mrb[0].mxu0
        %v2164 = vadd.f32 %v1875, %v2163
        %v2165 = vpop.f32.mrb[0].mxu0
        %v2166 = vpop.f32.mrb[0].mxu0
        %v2167 = vadd.f32 %v1878, %v2166
        %v2168 = vpop.f32.mrb[0].mxu0
        %2169 = vmatprep.mubr.bf16.mxu0 %v1279
        %2170 = vmatmul.mubr.bf16.gmra.mrb[0].mxu0 %v1278
        %v2171 = vpop.f32.mrb[0].mxu0
        %v2172 = vadd.f32 %v1883, %v2171
        %v2173 = vpop.f32.mrb[0].mxu0
        %v2174 = vpop.f32.mrb[0].mxu0
        %v2175 = vadd.f32 %v1886, %v2174
        %v2176 = vpop.f32.mrb[0].mxu0
        %2177 = vdwg.mxu0
        %v2178 = vadd.f32 %v576, %v1924
        %v2179 = vadd.f32 %v577, %v1927
        %v2180 = vadd.f32 %v578, %v1932
        %v2181 = vadd.f32 %v579, %v1935
        %v2182 = vadd.f32 %v580, %v1940
        %v2183 = vadd.f32 %v581, %v1943
        %v2184 = vadd.f32 %v582, %v1948
        %v2185 = vadd.f32 %v583, %v1951
        %v2186 = vadd.f32 %v584, %v1956
        %v2187 = vadd.f32 %v585, %v1959
        %v2188 = vadd.f32 %v586, %v1964
        %v2189 = vadd.f32 %v587, %v1967
        %v2190 = vadd.f32 %v588, %v1972
        %v2191 = vadd.f32 %v589, %v1975
        %v2192 = vadd.f32 %v590, %v1980
        %v2193 = vadd.f32 %v591, %v1983
        %v2194 = vadd.f32 %v592, %v1988
        %v2195 = vadd.f32 %v593, %v1991
        %v2196 = vadd.f32 %v594, %v1996
        %v2197 = vadd.f32 %v595, %v1999
        %v2198 = vadd.f32 %v596, %v2004
        %v2199 = vadd.f32 %v597, %v2007
        %v2200 = vadd.f32 %v598, %v2012
        %v2201 = vadd.f32 %v599, %v2015
        %v2202 = vadd.f32 %v600, %v2020
        %v2203 = vadd.f32 %v601, %v2023
        %v2204 = vadd.f32 %v602, %v2028
        %v2205 = vadd.f32 %v603, %v2031
        %v2206 = vadd.f32 %v604, %v2036
        %v2207 = vadd.f32 %v605, %v2039
        %v2208 = vadd.f32 %v606, %v2044
        %v2209 = vadd.f32 %v607, %v2047
        %v2210 = vadd.f32 %v608, %v2052
        %v2211 = vadd.f32 %v609, %v2055
        %v2212 = vadd.f32 %v610, %v2060
        %v2213 = vadd.f32 %v611, %v2063
        %v2214 = vadd.f32 %v612, %v2068
        %v2215 = vadd.f32 %v613, %v2071
        %v2216 = vadd.f32 %v614, %v2076
        %v2217 = vadd.f32 %v615, %v2079
        %v2218 = vadd.f32 %v616, %v2084
        %v2219 = vadd.f32 %v617, %v2087
        %v2220 = vadd.f32 %v618, %v2092
        %v2221 = vadd.f32 %v619, %v2095
        %v2222 = vadd.f32 %v620, %v2100
        %v2223 = vadd.f32 %v621, %v2103
        %v2224 = vadd.f32 %v622, %v2108
        %v2225 = vadd.f32 %v623, %v2111
        %v2226 = vadd.f32 %v624, %v2116
        %v2227 = vadd.f32 %v625, %v2119
        %v2228 = vadd.f32 %v626, %v2124
        %v2229 = vadd.f32 %v627, %v2127
        %v2230 = vadd.f32 %v628, %v2132
        %v2231 = vadd.f32 %v629, %v2135
        %v2232 = vadd.f32 %v630, %v2140
        %v2233 = vadd.f32 %v631, %v2143
        %v2234 = vadd.f32 %v632, %v2148
        %v2235 = vadd.f32 %v633, %v2151
        %v2236 = vadd.f32 %v634, %v2156
        %v2237 = vadd.f32 %v635, %v2159
        %v2238 = vadd.f32 %v636, %v2164
        %v2239 = vadd.f32 %v637, %v2167
        %v2240 = vadd.f32 %v638, %v2172
        %v2241 = vadd.f32 %v639, %v2175
        %2242 = vst [vmem:[#allocation2] sm:$0xff] %v2178
        %2243 = vst [vmem:[#allocation2 + $0x8] sm:$0xff] %v2179
        %2244 = vst [vmem:[#allocation2 + $0x10] sm:$0xff] %v2180
        %2245 = vst [vmem:[#allocation2 + $0x18] sm:$0xff] %v2181
        %2246 = vst [vmem:[#allocation2 + $0x20] sm:$0xff] %v2182
        %2247 = vst [vmem:[#allocation2 + $0x28] sm:$0xff] %v2183
        %2248 = vst [vmem:[#allocation2 + $0x30] sm:$0xff] %v2184
        %2249 = vst [vmem:[#allocation2 + $0x38] sm:$0xff] %v2185
        %2250 = vst [vmem:[#allocation2 + $0x40] sm:$0xff] %v2186
        %2251 = vst [vmem:[#allocation2 + $0x48] sm:$0xff] %v2187
        %2252 = vst [vmem:[#allocation2 + $0x50] sm:$0xff] %v2188
        %2253 = vst [vmem:[#allocation2 + $0x58] sm:$0xff] %v2189
        %2254 = vst [vmem:[#allocation2 + $0x60] sm:$0xff] %v2190
        %2255 = vst [vmem:[#allocation2 + $0x68] sm:$0xff] %v2191
        %2256 = vst [vmem:[#allocation2 + $0x70] sm:$0xff] %v2192
        %2257 = vst [vmem:[#allocation2 + $0x78] sm:$0xff] %v2193
        %2258 = vst [vmem:[#allocation2 + $0x80] sm:$0xff] %v2194
        %2259 = vst [vmem:[#allocation2 + $0x88] sm:$0xff] %v2195
        %2260 = vst [vmem:[#allocation2 + $0x90] sm:$0xff] %v2196
        %2261 = vst [vmem:[#allocation2 + $0x98] sm:$0xff] %v2197
        %2262 = vst [vmem:[#allocation2 + $0xa0] sm:$0xff] %v2198
        %2263 = vst [vmem:[#allocation2 + $0xa8] sm:$0xff] %v2199
        %2264 = vst [vmem:[#allocation2 + $0xb0] sm:$0xff] %v2200
        %2265 = vst [vmem:[#allocation2 + $0xb8] sm:$0xff] %v2201
        %2266 = vst [vmem:[#allocation2 + $0xc0] sm:$0xff] %v2202
        %2267 = vst [vmem:[#allocation2 + $0xc8] sm:$0xff] %v2203
        %2268 = vst [vmem:[#allocation2 + $0xd0] sm:$0xff] %v2204
        %2269 = vst [vmem:[#allocation2 + $0xd8] sm:$0xff] %v2205
        %2270 = vst [vmem:[#allocation2 + $0xe0] sm:$0xff] %v2206
        %2271 = vst [vmem:[#allocation2 + $0xe8] sm:$0xff] %v2207
        %2272 = vst [vmem:[#allocation2 + $0xf0] sm:$0xff] %v2208
        %2273 = vst [vmem:[#allocation2 + $0xf8] sm:$0xff] %v2209
        %2274 = vst [vmem:[#allocation2 + $0x100] sm:$0xff] %v2210
        %2275 = vst [vmem:[#allocation2 + $0x108] sm:$0xff] %v2211
        %2276 = vst [vmem:[#allocation2 + $0x110] sm:$0xff] %v2212
        %2277 = vst [vmem:[#allocation2 + $0x118] sm:$0xff] %v2213
        %2278 = vst [vmem:[#allocation2 + $0x120] sm:$0xff] %v2214
        %2279 = vst [vmem:[#allocation2 + $0x128] sm:$0xff] %v2215
        %2280 = vst [vmem:[#allocation2 + $0x130] sm:$0xff] %v2216
        %2281 = vst [vmem:[#allocation2 + $0x138] sm:$0xff] %v2217
        %2282 = vst [vmem:[#allocation2 + $0x140] sm:$0xff] %v2218
        %2283 = vst [vmem:[#allocation2 + $0x148] sm:$0xff] %v2219
        %2284 = vst [vmem:[#allocation2 + $0x150] sm:$0xff] %v2220
        %2285 = vst [vmem:[#allocation2 + $0x158] sm:$0xff] %v2221
        %2286 = vst [vmem:[#allocation2 + $0x160] sm:$0xff] %v2222
        %2287 = vst [vmem:[#allocation2 + $0x168] sm:$0xff] %v2223
        %2288 = vst [vmem:[#allocation2 + $0x170] sm:$0xff] %v2224
        %2289 = vst [vmem:[#allocation2 + $0x178] sm:$0xff] %v2225
        %2290 = vst [vmem:[#allocation2 + $0x180] sm:$0xff] %v2226
        %2291 = vst [vmem:[#allocation2 + $0x188] sm:$0xff] %v2227
        %2292 = vst [vmem:[#allocation2 + $0x190] sm:$0xff] %v2228
        %2293 = vst [vmem:[#allocation2 + $0x198] sm:$0xff] %v2229
        %2294 = vst [vmem:[#allocation2 + $0x1a0] sm:$0xff] %v2230
        %2295 = vst [vmem:[#allocation2 + $0x1a8] sm:$0xff] %v2231
        %2296 = vst [vmem:[#allocation2 + $0x1b0] sm:$0xff] %v2232
        %2297 = vst [vmem:[#allocation2 + $0x1b8] sm:$0xff] %v2233
        %2298 = vst [vmem:[#allocation2 + $0x1c0] sm:$0xff] %v2234
        %2299 = vst [vmem:[#allocation2 + $0x1c8] sm:$0xff] %v2235
        %2300 = vst [vmem:[#allocation2 + $0x1d0] sm:$0xff] %v2236
        %2301 = vst [vmem:[#allocation2 + $0x1d8] sm:$0xff] %v2237
        %2302 = vst [vmem:[#allocation2 + $0x1e0] sm:$0xff] %v2238
        %2303 = vst [vmem:[#allocation2 + $0x1e8] sm:$0xff] %v2239
        %2304 = vst [vmem:[#allocation2 + $0x1f0] sm:$0xff] %v2240
        %2305 = vst [vmem:[#allocation2 + $0x1f8] sm:$0xff] %v2241
        %p2306 = scmp.eq.s32.totalorder %s18, 1
        // Predicated region
        $region56: #{dea_gnn_jk_forward.10} parent=46 // pred_check
          %p2307 = pneg %p2306
        $region57: #{dea_gnn_jk_forward.10} parent=46 // pred_check_branch
          %2309 = sbr.rel (%p2307) target = $region59
        $region58: #{dea_gnn_jk_forward.10} parent=46 // pred_region
          %v2310 = vld [vmem:[#allocation2] sm:$0xff]
          %v2311 = vld [vmem:[#allocation2 + $0x8] sm:$0xff]
          %v2312 = vld [vmem:[#allocation2 + $0x10] sm:$0xff]
          %v2313 = vld [vmem:[#allocation2 + $0x18] sm:$0xff]
          %v2314 = vld [vmem:[#allocation2 + $0x20] sm:$0xff]
          %v2315 = vld [vmem:[#allocation2 + $0x28] sm:$0xff]
          %v2316 = vld [vmem:[#allocation2 + $0x30] sm:$0xff]
          %v2317 = vld [vmem:[#allocation2 + $0x38] sm:$0xff]
          %v2318 = vld [vmem:[#allocation2 + $0x40] sm:$0xff]
          %v2319 = vld [vmem:[#allocation2 + $0x48] sm:$0xff]
          %v2320 = vld [vmem:[#allocation2 + $0x50] sm:$0xff]
          %v2321 = vld [vmem:[#allocation2 + $0x58] sm:$0xff]
          %v2322 = vld [vmem:[#allocation2 + $0x60] sm:$0xff]
          %v2323 = vld [vmem:[#allocation2 + $0x68] sm:$0xff]
          %v2324 = vld [vmem:[#allocation2 + $0x70] sm:$0xff]
          %v2325 = vld [vmem:[#allocation2 + $0x78] sm:$0xff]
          %v2326 = vld [vmem:[#allocation2 + $0x80] sm:$0xff]
          %v2327 = vld [vmem:[#allocation2 + $0x88] sm:$0xff]
          %v2328 = vld [vmem:[#allocation2 + $0x90] sm:$0xff]
          %v2329 = vld [vmem:[#allocation2 + $0x98] sm:$0xff]
          %v2330 = vld [vmem:[#allocation2 + $0xa0] sm:$0xff]
          %v2331 = vld [vmem:[#allocation2 + $0xa8] sm:$0xff]
          %v2332 = vld [vmem:[#allocation2 + $0xb0] sm:$0xff]
          %v2333 = vld [vmem:[#allocation2 + $0xb8] sm:$0xff]
          %v2334 = vld [vmem:[#allocation2 + $0xc0] sm:$0xff]
          %v2335 = vld [vmem:[#allocation2 + $0xc8] sm:$0xff]
          %v2336 = vld [vmem:[#allocation2 + $0xd0] sm:$0xff]
          %v2337 = vld [vmem:[#allocation2 + $0xd8] sm:$0xff]
          %v2338 = vld [vmem:[#allocation2 + $0xe0] sm:$0xff]
          %v2339 = vld [vmem:[#allocation2 + $0xe8] sm:$0xff]
          %v2340 = vld [vmem:[#allocation2 + $0xf0] sm:$0xff]
          %v2341 = vld [vmem:[#allocation2 + $0xf8] sm:$0xff]
          %v2342 = vld [vmem:[#allocation2 + $0x100] sm:$0xff]
          %v2343 = vld [vmem:[#allocation2 + $0x108] sm:$0xff]
          %v2344 = vld [vmem:[#allocation2 + $0x110] sm:$0xff]
          %v2345 = vld [vmem:[#allocation2 + $0x118] sm:$0xff]
          %v2346 = vld [vmem:[#allocation2 + $0x120] sm:$0xff]
          %v2347 = vld [vmem:[#allocation2 + $0x128] sm:$0xff]
          %v2348 = vld [vmem:[#allocation2 + $0x130] sm:$0xff]
          %v2349 = vld [vmem:[#allocation2 + $0x138] sm:$0xff]
          %v2350 = vld [vmem:[#allocation2 + $0x140] sm:$0xff]
          %v2351 = vld [vmem:[#allocation2 + $0x148] sm:$0xff]
          %v2352 = vld [vmem:[#allocation2 + $0x150] sm:$0xff]
          %v2353 = vld [vmem:[#allocation2 + $0x158] sm:$0xff]
          %v2354 = vld [vmem:[#allocation2 + $0x160] sm:$0xff]
          %v2355 = vld [vmem:[#allocation2 + $0x168] sm:$0xff]
          %v2356 = vld [vmem:[#allocation2 + $0x170] sm:$0xff]
          %v2357 = vld [vmem:[#allocation2 + $0x178] sm:$0xff]
          %v2358 = vld [vmem:[#allocation2 + $0x180] sm:$0xff]
          %v2359 = vld [vmem:[#allocation2 + $0x188] sm:$0xff]
          %v2360 = vld [vmem:[#allocation2 + $0x190] sm:$0xff]
          %v2361 = vld [vmem:[#allocation2 + $0x198] sm:$0xff]
          %v2362 = vld [vmem:[#allocation2 + $0x1a0] sm:$0xff]
          %v2363 = vld [vmem:[#allocation2 + $0x1a8] sm:$0xff]
          %v2364 = vld [vmem:[#allocation2 + $0x1b0] sm:$0xff]
          %v2365 = vld [vmem:[#allocation2 + $0x1b8] sm:$0xff]
          %v2366 = vld [vmem:[#allocation2 + $0x1c0] sm:$0xff]
          %v2367 = vld [vmem:[#allocation2 + $0x1c8] sm:$0xff]
          %v2368 = vld [vmem:[#allocation2 + $0x1d0] sm:$0xff]
          %v2369 = vld [vmem:[#allocation2 + $0x1d8] sm:$0xff]
          %v2370 = vld [vmem:[#allocation2 + $0x1e0] sm:$0xff]
          %v2371 = vld [vmem:[#allocation2 + $0x1e8] sm:$0xff]
          %v2372 = vld [vmem:[#allocation2 + $0x1f0] sm:$0xff]
          %v2373 = vld [vmem:[#allocation2 + $0x1f8] sm:$0xff]
          %v2374 = vpack.c.bf16 %v2311, %v2310
          %v2375 = vpack.c.bf16 %v2313, %v2312
          %v2376 = vpack.c.bf16 %v2315, %v2314
          %v2377 = vpack.c.bf16 %v2317, %v2316
          %v2378 = vpack.c.bf16 %v2319, %v2318
          %v2379 = vpack.c.bf16 %v2321, %v2320
          %v2380 = vpack.c.bf16 %v2323, %v2322
          %v2381 = vpack.c.bf16 %v2325, %v2324
          %v2382 = vpack.c.bf16 %v2327, %v2326
          %v2383 = vpack.c.bf16 %v2329, %v2328
          %v2384 = vpack.c.bf16 %v2331, %v2330
          %v2385 = vpack.c.bf16 %v2333, %v2332
          %v2386 = vpack.c.bf16 %v2335, %v2334
          %v2387 = vpack.c.bf16 %v2337, %v2336
          %v2388 = vpack.c.bf16 %v2339, %v2338
          %v2389 = vpack.c.bf16 %v2341, %v2340
          %v2390 = vpack.c.bf16 %v2343, %v2342
          %v2391 = vpack.c.bf16 %v2345, %v2344
          %v2392 = vpack.c.bf16 %v2347, %v2346
          %v2393 = vpack.c.bf16 %v2349, %v2348
          %v2394 = vpack.c.bf16 %v2351, %v2350
          %v2395 = vpack.c.bf16 %v2353, %v2352
          %v2396 = vpack.c.bf16 %v2355, %v2354
          %v2397 = vpack.c.bf16 %v2357, %v2356
          %v2398 = vpack.c.bf16 %v2359, %v2358
          %v2399 = vpack.c.bf16 %v2361, %v2360
          %v2400 = vpack.c.bf16 %v2363, %v2362
          %v2401 = vpack.c.bf16 %v2365, %v2364
          %v2402 = vpack.c.bf16 %v2367, %v2366
          %v2403 = vpack.c.bf16 %v2369, %v2368
          %v2404 = vpack.c.bf16 %v2371, %v2370
          %v2405 = vpack.c.bf16 %v2373, %v2372
          %v2438 = vunpack.c.l.b16 %v2374
          %v2439 = vunpack.c.h.b16 %v2374
          %v2440 = vunpack.c.l.b16 %v2375
          %v2441 = vunpack.c.h.b16 %v2375
          %v2442 = vunpack.c.l.b16 %v2376
          %v2443 = vunpack.c.h.b16 %v2376
          %v2444 = vunpack.c.l.b16 %v2377
          %v2445 = vunpack.c.h.b16 %v2377
          %v2446 = vunpack.c.l.b16 %v2378
          %v2447 = vunpack.c.h.b16 %v2378
          %v2448 = vunpack.c.l.b16 %v2379
          %v2449 = vunpack.c.h.b16 %v2379
          %v2450 = vunpack.c.l.b16 %v2380
          %v2451 = vunpack.c.h.b16 %v2380
          %v2452 = vunpack.c.l.b16 %v2381
          %v2453 = vunpack.c.h.b16 %v2381
          %v2454 = vunpack.c.l.b16 %v2382
          %v2455 = vunpack.c.h.b16 %v2382
          %v2456 = vunpack.c.l.b16 %v2383
          %v2457 = vunpack.c.h.b16 %v2383
          %v2458 = vunpack.c.l.b16 %v2384
          %v2459 = vunpack.c.h.b16 %v2384
          %v2460 = vunpack.c.l.b16 %v2385
          %v2461 = vunpack.c.h.b16 %v2385
          %v2462 = vunpack.c.l.b16 %v2386
          %v2463 = vunpack.c.h.b16 %v2386
          %v2464 = vunpack.c.l.b16 %v2387
          %v2465 = vunpack.c.h.b16 %v2387
          %v2466 = vunpack.c.l.b16 %v2388
          %v2467 = vunpack.c.h.b16 %v2388
          %v2468 = vunpack.c.l.b16 %v2389
          %v2469 = vunpack.c.h.b16 %v2389
          %v2470 = vunpack.c.l.b16 %v2390
          %v2471 = vunpack.c.h.b16 %v2390
          %v2472 = vunpack.c.l.b16 %v2391
          %v2473 = vunpack.c.h.b16 %v2391
          %v2474 = vunpack.c.l.b16 %v2392
          %v2475 = vunpack.c.h.b16 %v2392
          %v2476 = vunpack.c.l.b16 %v2393
          %v2477 = vunpack.c.h.b16 %v2393
          %v2478 = vunpack.c.l.b16 %v2394
          %v2479 = vunpack.c.h.b16 %v2394
          %v2480 = vunpack.c.l.b16 %v2395
          %v2481 = vunpack.c.h.b16 %v2395
          %v2482 = vunpack.c.l.b16 %v2396
          %v2483 = vunpack.c.h.b16 %v2396
          %v2484 = vunpack.c.l.b16 %v2397
          %v2485 = vunpack.c.h.b16 %v2397
          %v2486 = vunpack.c.l.b16 %v2398
          %v2487 = vunpack.c.h.b16 %v2398
          %v2488 = vunpack.c.l.b16 %v2399
          %v2489 = vunpack.c.h.b16 %v2399
          %v2490 = vunpack.c.l.b16 %v2400
          %v2491 = vunpack.c.h.b16 %v2400
          %v2492 = vunpack.c.l.b16 %v2401
          %v2493 = vunpack.c.h.b16 %v2401
          %v2494 = vunpack.c.l.b16 %v2402
          %v2495 = vunpack.c.h.b16 %v2402
          %v2496 = vunpack.c.l.b16 %v2403
          %v2497 = vunpack.c.h.b16 %v2403
          %v2498 = vunpack.c.l.b16 %v2404
          %v2499 = vunpack.c.h.b16 %v2404
          %v2500 = vunpack.c.l.b16 %v2405
          %v2501 = vunpack.c.h.b16 %v2405
          %v2502 = vpack.c.b16 %v2438, %v2438
          %v2503 = vpack.c.b16 %v2439, %v2439
          %v2504 = vpack.c.b16 %v2440, %v2440
          %v2505 = vpack.c.b16 %v2441, %v2441
          %v2506 = vpack.c.b16 %v2442, %v2442
          %v2507 = vpack.c.b16 %v2443, %v2443
          %v2508 = vpack.c.b16 %v2444, %v2444
          %v2509 = vpack.c.b16 %v2445, %v2445
          %v2510 = vpack.c.b16 %v2446, %v2446
          %v2511 = vpack.c.b16 %v2447, %v2447
          %v2512 = vpack.c.b16 %v2448, %v2448
          %v2513 = vpack.c.b16 %v2449, %v2449
          %v2514 = vpack.c.b16 %v2450, %v2450
          %v2515 = vpack.c.b16 %v2451, %v2451
          %v2516 = vpack.c.b16 %v2452, %v2452
          %v2517 = vpack.c.b16 %v2453, %v2453
          %v2518 = vpack.c.b16 %v2454, %v2454
          %v2519 = vpack.c.b16 %v2455, %v2455
          %v2520 = vpack.c.b16 %v2456, %v2456
          %v2521 = vpack.c.b16 %v2457, %v2457
          %v2522 = vpack.c.b16 %v2458, %v2458
          %v2523 = vpack.c.b16 %v2459, %v2459
          %v2524 = vpack.c.b16 %v2460, %v2460
          %v2525 = vpack.c.b16 %v2461, %v2461
          %v2526 = vpack.c.b16 %v2462, %v2462
          %v2527 = vpack.c.b16 %v2463, %v2463
          %v2528 = vpack.c.b16 %v2464, %v2464
          %v2529 = vpack.c.b16 %v2465, %v2465
          %v2530 = vpack.c.b16 %v2466, %v2466
          %v2531 = vpack.c.b16 %v2467, %v2467
          %v2532 = vpack.c.b16 %v2468, %v2468
          %v2533 = vpack.c.b16 %v2469, %v2469
          %v2534 = vpack.c.b16 %v2470, %v2470
          %v2535 = vpack.c.b16 %v2471, %v2471
          %v2536 = vpack.c.b16 %v2472, %v2472
          %v2537 = vpack.c.b16 %v2473, %v2473
          %v2538 = vpack.c.b16 %v2474, %v2474
          %v2539 = vpack.c.b16 %v2475, %v2475
          %v2540 = vpack.c.b16 %v2476, %v2476
          %v2541 = vpack.c.b16 %v2477, %v2477
          %v2542 = vpack.c.b16 %v2478, %v2478
          %v2543 = vpack.c.b16 %v2479, %v2479
          %v2544 = vpack.c.b16 %v2480, %v2480
          %v2545 = vpack.c.b16 %v2481, %v2481
          %v2546 = vpack.c.b16 %v2482, %v2482
          %v2547 = vpack.c.b16 %v2483, %v2483
          %v2548 = vpack.c.b16 %v2484, %v2484
          %v2549 = vpack.c.b16 %v2485, %v2485
          %v2550 = vpack.c.b16 %v2486, %v2486
          %v2551 = vpack.c.b16 %v2487, %v2487
          %v2552 = vpack.c.b16 %v2488, %v2488
          %v2553 = vpack.c.b16 %v2489, %v2489
          %v2554 = vpack.c.b16 %v2490, %v2490
          %v2555 = vpack.c.b16 %v2491, %v2491
          %v2556 = vpack.c.b16 %v2492, %v2492
          %v2557 = vpack.c.b16 %v2493, %v2493
          %v2558 = vpack.c.b16 %v2494, %v2494
          %v2559 = vpack.c.b16 %v2495, %v2495
          %v2560 = vpack.c.b16 %v2496, %v2496
          %v2561 = vpack.c.b16 %v2497, %v2497
          %v2562 = vpack.c.b16 %v2498, %v2498
          %v2563 = vpack.c.b16 %v2499, %v2499
          %v2564 = vpack.c.b16 %v2500, %v2500
          %v2565 = vpack.c.b16 %v2501, %v2501
          %2630 = vst [vmem:[%s436] sm:$0xf] %v2502
          %2631 = vst [vmem:[%s436 + $0x4] sm:$0xf] %v2503
          %2632 = vst [vmem:[%s436 + $0x8] sm:$0xf] %v2504
          %2633 = vst [vmem:[%s436 + $0xc] sm:$0xf] %v2505
          %2634 = vst [vmem:[%s436 + $0x10] sm:$0xf] %v2506
          %2635 = vst [vmem:[%s436 + $0x14] sm:$0xf] %v2507
          %2636 = vst [vmem:[%s436 + $0x18] sm:$0xf] %v2508
          %2637 = vst [vmem:[%s436 + $0x1c] sm:$0xf] %v2509
          %2638 = vst [vmem:[%s436 + $0x20] sm:$0xf] %v2510
          %2639 = vst [vmem:[%s436 + $0x24] sm:$0xf] %v2511
          %2640 = vst [vmem:[%s436 + $0x28] sm:$0xf] %v2512
          %2641 = vst [vmem:[%s436 + $0x2c] sm:$0xf] %v2513
          %2642 = vst [vmem:[%s436 + $0x30] sm:$0xf] %v2514
          %2643 = vst [vmem:[%s436 + $0x34] sm:$0xf] %v2515
          %2644 = vst [vmem:[%s436 + $0x38] sm:$0xf] %v2516
          %2645 = vst [vmem:[%s436 + $0x3c] sm:$0xf] %v2517
          %2646 = vst [vmem:[%s436 + $0x40] sm:$0xf] %v2518
          %2647 = vst [vmem:[%s436 + $0x44] sm:$0xf] %v2519
          %2648 = vst [vmem:[%s436 + $0x48] sm:$0xf] %v2520
          %2649 = vst [vmem:[%s436 + $0x4c] sm:$0xf] %v2521
          %2650 = vst [vmem:[%s436 + $0x50] sm:$0xf] %v2522
          %2651 = vst [vmem:[%s436 + $0x54] sm:$0xf] %v2523
          %2652 = vst [vmem:[%s436 + $0x58] sm:$0xf] %v2524
          %2653 = vst [vmem:[%s436 + $0x5c] sm:$0xf] %v2525
          %2654 = vst [vmem:[%s436 + $0x60] sm:$0xf] %v2526
          %2655 = vst [vmem:[%s436 + $0x64] sm:$0xf] %v2527
          %2656 = vst [vmem:[%s436 + $0x68] sm:$0xf] %v2528
          %2657 = vst [vmem:[%s436 + $0x6c] sm:$0xf] %v2529
          %2658 = vst [vmem:[%s436 + $0x70] sm:$0xf] %v2530
          %2659 = vst [vmem:[%s436 + $0x74] sm:$0xf] %v2531
          %2660 = vst [vmem:[%s436 + $0x78] sm:$0xf] %v2532
          %2661 = vst [vmem:[%s436 + $0x7c] sm:$0xf] %v2533
          %2662 = vst [vmem:[%s436 + $0x80] sm:$0xf] %v2534
          %2663 = vst [vmem:[%s436 + $0x84] sm:$0xf] %v2535
          %2664 = vst [vmem:[%s436 + $0x88] sm:$0xf] %v2536
          %2665 = vst [vmem:[%s436 + $0x8c] sm:$0xf] %v2537
          %2666 = vst [vmem:[%s436 + $0x90] sm:$0xf] %v2538
          %2667 = vst [vmem:[%s436 + $0x94] sm:$0xf] %v2539
          %2668 = vst [vmem:[%s436 + $0x98] sm:$0xf] %v2540
          %2669 = vst [vmem:[%s436 + $0x9c] sm:$0xf] %v2541
          %2670 = vst [vmem:[%s436 + $0xa0] sm:$0xf] %v2542
          %2671 = vst [vmem:[%s436 + $0xa4] sm:$0xf] %v2543
          %2672 = vst [vmem:[%s436 + $0xa8] sm:$0xf] %v2544
          %2673 = vst [vmem:[%s436 + $0xac] sm:$0xf] %v2545
          %2674 = vst [vmem:[%s436 + $0xb0] sm:$0xf] %v2546
          %2675 = vst [vmem:[%s436 + $0xb4] sm:$0xf] %v2547
          %2676 = vst [vmem:[%s436 + $0xb8] sm:$0xf] %v2548
          %2677 = vst [vmem:[%s436 + $0xbc] sm:$0xf] %v2549
          %2678 = vst [vmem:[%s436 + $0xc0] sm:$0xf] %v2550
          %2679 = vst [vmem:[%s436 + $0xc4] sm:$0xf] %v2551
          %2680 = vst [vmem:[%s436 + $0xc8] sm:$0xf] %v2552
          %2681 = vst [vmem:[%s436 + $0xcc] sm:$0xf] %v2553
          %2682 = vst [vmem:[%s436 + $0xd0] sm:$0xf] %v2554
          %2683 = vst [vmem:[%s436 + $0xd4] sm:$0xf] %v2555
          %2684 = vst [vmem:[%s436 + $0xd8] sm:$0xf] %v2556
          %2685 = vst [vmem:[%s436 + $0xdc] sm:$0xf] %v2557
          %2686 = vst [vmem:[%s436 + $0xe0] sm:$0xf] %v2558
          %2687 = vst [vmem:[%s436 + $0xe4] sm:$0xf] %v2559
          %2688 = vst [vmem:[%s436 + $0xe8] sm:$0xf] %v2560
          %2689 = vst [vmem:[%s436 + $0xec] sm:$0xf] %v2561
          %2690 = vst [vmem:[%s436 + $0xf0] sm:$0xf] %v2562
          %2691 = vst [vmem:[%s436 + $0xf4] sm:$0xf] %v2563
          %2692 = vst [vmem:[%s436 + $0xf8] sm:$0xf] %v2564
          %2693 = vst [vmem:[%s436 + $0xfc] sm:$0xf] %v2565
        $region59: #{dea_gnn_jk_forward.10} parent=46 // pred_fallthru
          _
        %s2694 = smul.u32 64, %s17
        %p2695 = scmp.lt.s32.totalorder %s2694, 127
        %s2696 = scalar_select %p2695, %s2694, 127
        %s2697 = smul.addr %s2696, 4
        %s2698 = scalar_lea.vmem %s2, %s2697
        // Predicated region
        $region60: #{dea_gnn_jk_forward.10} parent=46 // pred_check
          %p2699 = pneg %p92
        $region61: #{dea_gnn_jk_forward.10} parent=46 // pred_check_branch
          %2701 = sbr.rel (%p2699) target = $region63
        $region62: #{dea_gnn_jk_forward.10} parent=46 // pred_region
          %s2702 = smul.u32 64, %s17
        $region63: #{dea_gnn_jk_forward.10} parent=46 // pred_fallthru
          _
      $region47: #{dea_gnn_jk_forward.10} parent=5 // pred_fallthru
        _
      %p2703 = scmp.le.s32.totalorder 2, %s8
      // Predicated region
      $region64: #{dea_gnn_jk_forward.10} parent=5 // pred_check
        %p2704 = pneg %p2703
      $region65: #{dea_gnn_jk_forward.10} parent=5 // pred_check_branch
        %2706 = sbr.rel (%p2704) target = $region67
      $region66: #{dea_gnn_jk_forward.10} parent=5 // pred_region
        %s2707 = ssub.s32 %s8, 2
        // Predicated region
        $region68: #{dea_gnn_jk_forward.10} parent=66 // pred_check
          %p2708 = pneg %p98
        $region69: #{dea_gnn_jk_forward.10} parent=66 // pred_check_branch
          %2710 = sbr.rel (%p2708) target = $region71
        $region70: #{dea_gnn_jk_forward.10} parent=66 // pred_region
          %s2711 = smul.u32 64, %s19
          %p2712 = scmp.lt.s32.totalorder %s2711, 127
          %s2713 = scalar_select %p2712, %s2711, 127
          %s2714 = smul.addr %s2713, 4
          %s2715 = scalar_lea.vmem %s2, %s2714
        $region71: #{dea_gnn_jk_forward.10} parent=66 // pred_fallthru
          _
      $region67: #{dea_gnn_jk_forward.10} parent=5 // pred_fallthru
        _
    $region6: #{dea_gnn_jk_forward.10} parent=1 // loop_footer
      %s12 = sadd.s32 1, %s8
    $region7: #{dea_gnn_jk_forward.10} parent=1 // loop_footer_branch
      %7 = sbr.rel target = $region3
    $region8: #{dea_gnn_jk_forward.10} parent=1 // loop_exit
      _

// kernel: dea_gnn_jk_forward.18
$region0: #{dea_gnn_jk_forward.18}
  #allocation0 [shape = 'u32[]', space=smem, size = 0x4, offset = 0x4, fixed_abs, tag = 'smem constant byte address 0x4 - core index']
  #allocation1 [shape = 'u32[144,128]{1,0:T(1,128)}', space=vmem, size = 0x12000, scoped, tag = 'internal scratch']
  %s0 = inlined_call_operand.vmem [shape: bf16[1024,128], index: 0, kind: input, shape index: {}]
  %s1 = inlined_call_operand.vmem [shape: bf16[1024,128], index: 1, kind: input, shape index: {}]
  %s2 = inlined_call_operand.vmem [shape: bf16[1024,128], index: 2, kind: input, shape index: {}]
  %s3 = inlined_call_operand.vmem [shape: bf16[384,128], index: 3, kind: input, shape index: {}]
  %s4 = inlined_call_operand.vmem [shape: f32[1,128], index: 4, kind: input, shape index: {}]
  %s5 = inlined_call_operand.vmem [shape: f32[1024,128], index: 5, kind: input, shape index: {}, may-alias: {5,7}]
  %s6 = inlined_call_operand.hbm [shape: bf16[1024,128], index: 6, kind: output, shape index: {0}]
  %s7 = inlined_call_operand.vmem [shape: f32[1024,128], index: 7, kind: output, shape index: {1}, may-alias: {5,7}]
  %8 = xla_tuple %s6, %s7
  %s9 = sld [smem:[#allocation0]]
  $region65: #{dea_gnn_jk_forward.18} parent=0
    _
  %s11 = ssub.s32 1, %s9
  %s12 = scalar_select 0, %s11, %s9
  $region1: #{dea_gnn_jk_forward.18} parent=0
    #allocation2 [shape = 'u8[262144]{0}', space=vmem, size = 0x40000, scoped, tag = 'output window, operand 0']
    #allocation3 [shape = 's32[2]{0}', space=sflag, size = 0x8, scoped, tag = 'scoped memory for dea_gnn_jk_forward.18']
    %13 = vsyncpa [#allocation3], 0
    %s14 = scalar_lea.sflag [#allocation3], 1
    %15 = vsyncpa %s14, 0
    loop: start=0, step=1, limit=4
    $region2: #{dea_gnn_jk_forward.18} parent=1 // loop_pre_header
      _
    $region3: #{dea_gnn_jk_forward.18} parent=1 // loop_header
      %s17 = sphi 0, %s21
      %p18 = scmp.ge.s32.totalorder %s17, 4
      %s27 = sphi 0, %s29
      %s30 = sphi 0, %s27
      %s31 = sphi 0, %s30
      %s47 = sphi 0, %s31
      %s53 = sphi 0, %s55
      %s56 = sphi 0, %s53
      %s57 = sphi 0, %s56
      %s73 = sphi 0, %s57
      %s79 = sphi 0, %s81
      %s82 = sphi 0, %s79
      %s83 = sphi 0, %s82
      %s99 = sphi 0, %s83
      %s103 = sphi 0, %s103
      %s105 = sphi 0, %s103
      %s106 = sphi 0, %s105
      %s120 = sphi 0, %s106
      %s124 = sphi 0, %s124
      %s126 = sphi 0, %s124
      %s127 = sphi 0, %s126
      %s141 = sphi 0, %s127
      %s147 = sphi 0, %s149
      %s150 = sphi 0, %s147
      %s151 = sphi 0, %s150
      %s167 = sphi 0, %s151
      %s173 = sphi 0, %s175
      %s176 = sphi 0, %s173
      %s177 = sphi 0, %s176
      %s193 = sphi 0, %s177
      %s199 = sphi 0, %s201
      %s202 = sphi 0, %s199
      %s203 = sphi 0, %s202
      %s219 = sphi 0, %s203
    $region4: #{dea_gnn_jk_forward.18} parent=1 // loop_header_branch
      %20 = sbr.rel (%p18) target = $region8
    $region5: #{dea_gnn_jk_forward.18} parent=1 // loop_body
      %s22 = ssub.s32 %s17, 1
      %s23 = ssub.s32 %s17, 2
      %s24 = sadd.s32 %s17, 1
      %s25 = ssub.s32 %s17, %s24
      %p26 = scmp.eq.s32.totalorder %s25, 0
      %s28 = sadd.s32 %s27, 1
      %s29 = scalar_select %p26, %s27, %s28
      %p32 = pneg %p26
      %p33 = scmp.eq.s32.totalorder %s17, 1
      %p34 = por %p32, %p33
      %p35 = scmp.ne.s32.totalorder %s27, %s30
      %p36 = scmp.eq.s32.totalorder %s17, 0
      %p37 = por %p35, %p36
      %p38 = scmp.ne.s32.totalorder %s27, %s30
      %p39 = scmp.eq.s32.totalorder %s22, 1
      %p40 = por %p38, %p39
      %p41 = scmp.ne.s32.totalorder %s30, %s31
      %p42 = scmp.eq.s32.totalorder %s22, 0
      %p43 = por %p41, %p42
      %p44 = scmp.ne.s32.totalorder %s30, %s31
      %p45 = scmp.eq.s32.totalorder %s23, 1
      %p46 = por %p44, %p45
      %p48 = scmp.ne.s32.totalorder %s31, %s47
      %p49 = scmp.eq.s32.totalorder %s23, 0
      %p50 = por %p48, %p49
      %s51 = ssub.s32 %s17, %s24
      %p52 = scmp.eq.s32.totalorder %s51, 0
      %s54 = sadd.s32 %s53, 1
      %s55 = scalar_select %p52, %s53, %s54
      %p58 = pneg %p52
      %p59 = scmp.eq.s32.totalorder %s17, 1
      %p60 = por %p58, %p59
      %p61 = scmp.ne.s32.totalorder %s53, %s56
      %p62 = scmp.eq.s32.totalorder %s17, 0
      %p63 = por %p61, %p62
      %p64 = scmp.ne.s32.totalorder %s53, %s56
      %p65 = scmp.eq.s32.totalorder %s22, 1
      %p66 = por %p64, %p65
      %p67 = scmp.ne.s32.totalorder %s56, %s57
      %p68 = scmp.eq.s32.totalorder %s22, 0
      %p69 = por %p67, %p68
      %p70 = scmp.ne.s32.totalorder %s56, %s57
      %p71 = scmp.eq.s32.totalorder %s23, 1
      %p72 = por %p70, %p71
      %p74 = scmp.ne.s32.totalorder %s57, %s73
      %p75 = scmp.eq.s32.totalorder %s23, 0
      %p76 = por %p74, %p75
      %s77 = ssub.s32 %s17, %s24
      %p78 = scmp.eq.s32.totalorder %s77, 0
      %s80 = sadd.s32 %s79, 1
      %s81 = scalar_select %p78, %s79, %s80
      %p84 = pneg %p78
      %p85 = scmp.eq.s32.totalorder %s17, 1
      %p86 = por %p84, %p85
      %p87 = scmp.ne.s32.totalorder %s79, %s82
      %p88 = scmp.eq.s32.totalorder %s17, 0
      %p89 = por %p87, %p88
      %p90 = scmp.ne.s32.totalorder %s79, %s82
      %p91 = scmp.eq.s32.totalorder %s22, 1
      %p92 = por %p90, %p91
      %p93 = scmp.ne.s32.totalorder %s82, %s83
      %p94 = scmp.eq.s32.totalorder %s22, 0
      %p95 = por %p93, %p94
      %p96 = scmp.ne.s32.totalorder %s82, %s83
      %p97 = scmp.eq.s32.totalorder %s23, 1
      %p98 = por %p96, %p97
      %p100 = scmp.ne.s32.totalorder %s83, %s99
      %p101 = scmp.eq.s32.totalorder %s23, 0
      %p102 = por %p100, %p101
      %s104 = sadd.s32 %s103, 1
      %p107 = scmp.eq.s32.totalorder %s17, 1
      %p108 = scmp.ne.s32.totalorder %s103, %s105
      %p109 = scmp.eq.s32.totalorder %s17, 0
      %p110 = por %p108, %p109
      %p111 = scmp.ne.s32.totalorder %s103, %s105
      %p112 = scmp.eq.s32.totalorder %s22, 1
      %p113 = por %p111, %p112
      %p114 = scmp.ne.s32.totalorder %s105, %s106
      %p115 = scmp.eq.s32.totalorder %s22, 0
      %p116 = por %p114, %p115
      %p117 = scmp.ne.s32.totalorder %s105, %s106
      %p118 = scmp.eq.s32.totalorder %s23, 1
      %p119 = por %p117, %p118
      %p121 = scmp.ne.s32.totalorder %s106, %s120
      %p122 = scmp.eq.s32.totalorder %s23, 0
      %p123 = por %p121, %p122
      %s125 = sadd.s32 %s124, 1
      %p128 = scmp.eq.s32.totalorder %s17, 1
      %p129 = scmp.ne.s32.totalorder %s124, %s126
      %p130 = scmp.eq.s32.totalorder %s17, 0
      %p131 = por %p129, %p130
      %p132 = scmp.ne.s32.totalorder %s124, %s126
      %p133 = scmp.eq.s32.totalorder %s22, 1
      %p134 = por %p132, %p133
      %p135 = scmp.ne.s32.totalorder %s126, %s127
      %p136 = scmp.eq.s32.totalorder %s22, 0
      %p137 = por %p135, %p136
      %p138 = scmp.ne.s32.totalorder %s126, %s127
      %p139 = scmp.eq.s32.totalorder %s23, 1
      %p140 = por %p138, %p139
      %p142 = scmp.ne.s32.totalorder %s127, %s141
      %p143 = scmp.eq.s32.totalorder %s23, 0
      %p144 = por %p142, %p143
      %s145 = ssub.s32 %s17, %s24
      %p146 = scmp.eq.s32.totalorder %s145, 0
      %s148 = sadd.s32 %s147, 1
      %s149 = scalar_select %p146, %s147, %s148
      %p152 = pneg %p146
      %p153 = scmp.eq.s32.totalorder %s17, 1
      %p154 = por %p152, %p153
      %p155 = scmp.ne.s32.totalorder %s147, %s150
      %p156 = scmp.eq.s32.totalorder %s17, 0
      %p157 = por %p155, %p156
      %p158 = scmp.ne.s32.totalorder %s147, %s150
      %p159 = scmp.eq.s32.totalorder %s22, 1
      %p160 = por %p158, %p159
      %p161 = scmp.ne.s32.totalorder %s150, %s151
      %p162 = scmp.eq.s32.totalorder %s22, 0
      %p163 = por %p161, %p162
      %p164 = scmp.ne.s32.totalorder %s150, %s151
      %p165 = scmp.eq.s32.totalorder %s23, 1
      %p166 = por %p164, %p165
      %p168 = scmp.ne.s32.totalorder %s151, %s167
      %p169 = scmp.eq.s32.totalorder %s23, 0
      %p170 = por %p168, %p169
      %s171 = ssub.s32 %s17, %s24
      %p172 = scmp.eq.s32.totalorder %s171, 0
      %s174 = sadd.s32 %s173, 1
      %s175 = scalar_select %p172, %s173, %s174
      %p178 = pneg %p172
      %p179 = scmp.eq.s32.totalorder %s17, 1
      %p180 = por %p178, %p179
      %p181 = scmp.ne.s32.totalorder %s173, %s176
      %p182 = scmp.eq.s32.totalorder %s17, 0
      %p183 = por %p181, %p182
      %p184 = scmp.ne.s32.totalorder %s173, %s176
      %p185 = scmp.eq.s32.totalorder %s22, 1
      %p186 = por %p184, %p185
      %p187 = scmp.ne.s32.totalorder %s176, %s177
      %p188 = scmp.eq.s32.totalorder %s22, 0
      %p189 = por %p187, %p188
      %p190 = scmp.ne.s32.totalorder %s176, %s177
      %p191 = scmp.eq.s32.totalorder %s23, 1
      %p192 = por %p190, %p191
      %p194 = scmp.ne.s32.totalorder %s177, %s193
      %p195 = scmp.eq.s32.totalorder %s23, 0
      %p196 = por %p194, %p195
      %s197 = ssub.s32 %s17, %s24
      %p198 = scmp.eq.s32.totalorder %s197, 0
      %s200 = sadd.s32 %s199, 1
      %s201 = scalar_select %p198, %s199, %s200
      %p204 = pneg %p198
      %p205 = scmp.eq.s32.totalorder %s17, 1
      %p206 = por %p204, %p205
      %p207 = scmp.ne.s32.totalorder %s199, %s202
      %p208 = scmp.eq.s32.totalorder %s17, 0
      %p209 = por %p207, %p208
      %p210 = scmp.ne.s32.totalorder %s199, %s202
      %p211 = scmp.eq.s32.totalorder %s22, 1
      %p212 = por %p210, %p211
      %p213 = scmp.ne.s32.totalorder %s202, %s203
      %p214 = scmp.eq.s32.totalorder %s22, 0
      %p215 = por %p213, %p214
      %p216 = scmp.ne.s32.totalorder %s202, %s203
      %p217 = scmp.eq.s32.totalorder %s23, 1
      %p218 = por %p216, %p217
      %p220 = scmp.ne.s32.totalorder %s203, %s219
      %p221 = scmp.eq.s32.totalorder %s23, 0
      %p222 = por %p220, %p221
      %p223 = scmp.le.s32.totalorder 1, %s17
      %p224 = scmp.lt.s32.totalorder %s17, 3
      %p225 = pnand %p223, %p224
      %p226 = pneg %p225
      // Predicated region
      $region9: #{dea_gnn_jk_forward.18} parent=5 // pred_check
        _
      $region10: #{dea_gnn_jk_forward.18} parent=5 // pred_check_branch
        %228 = sbr.rel (%p225) target = $region12
      $region11: #{dea_gnn_jk_forward.18} parent=5 // pred_region
        %s229 = ssub.s32 %s17, 1
        // Predicated region
        $region13: #{dea_gnn_jk_forward.18} parent=11 // pred_check
          %p230 = pneg %p116
        $region14: #{dea_gnn_jk_forward.18} parent=11 // pred_check_branch
          %232 = sbr.rel (%p230) target = $region16
        $region15: #{dea_gnn_jk_forward.18} parent=11 // pred_region
          _
        $region16: #{dea_gnn_jk_forward.18} parent=11 // pred_fallthru
          _
        // Predicated region
        $region17: #{dea_gnn_jk_forward.18} parent=11 // pred_check
          %p233 = pneg %p137
        $region18: #{dea_gnn_jk_forward.18} parent=11 // pred_check_branch
          %235 = sbr.rel (%p233) target = $region20
        $region19: #{dea_gnn_jk_forward.18} parent=11 // pred_region
          _
        $region20: #{dea_gnn_jk_forward.18} parent=11 // pred_fallthru
          _
      $region12: #{dea_gnn_jk_forward.18} parent=5 // pred_fallthru
        _
      %p236 = scmp.lt.s32.totalorder %s17, 2
      // Predicated region
      $region21: #{dea_gnn_jk_forward.18} parent=5 // pred_check
        %p237 = pneg %p236
      $region22: #{dea_gnn_jk_forward.18} parent=5 // pred_check_branch
        %239 = sbr.rel (%p237) target = $region24
      $region23: #{dea_gnn_jk_forward.18} parent=5 // pred_region
        // Predicated region
        $region25: #{dea_gnn_jk_forward.18} parent=23 // pred_check
          %p240 = pneg %p37
        $region26: #{dea_gnn_jk_forward.18} parent=23 // pred_check_branch
          %242 = sbr.rel (%p240) target = $region28
        $region27: #{dea_gnn_jk_forward.18} parent=23 // pred_region
          %s243 = smul.u32 64, %s17
          %p244 = scmp.lt.s32.totalorder %s243, 127
          %s245 = scalar_select %p244, %s243, 127
          %s246 = smul.addr %s245, 4
          %s247 = scalar_lea.vmem %s0, %s246
          %s248 = smul.u32 64, %s17
        $region28: #{dea_gnn_jk_forward.18} parent=23 // pred_fallthru
          _
        // Predicated region
        $region29: #{dea_gnn_jk_forward.18} parent=23 // pred_check
          %p249 = pneg %p63
        $region30: #{dea_gnn_jk_forward.18} parent=23 // pred_check_branch
          %251 = sbr.rel (%p249) target = $region32
        $region31: #{dea_gnn_jk_forward.18} parent=23 // pred_region
          %s252 = smul.u32 64, %s17
          %p253 = scmp.lt.s32.totalorder %s252, 127
          %s254 = scalar_select %p253, %s252, 127
          %s255 = smul.addr %s254, 4
          %s256 = scalar_lea.vmem %s1, %s255
          %s257 = smul.u32 64, %s17
        $region32: #{dea_gnn_jk_forward.18} parent=23 // pred_fallthru
          _
        // Predicated region
        $region33: #{dea_gnn_jk_forward.18} parent=23 // pred_check
          %p258 = pneg %p89
        $region34: #{dea_gnn_jk_forward.18} parent=23 // pred_check_branch
          %260 = sbr.rel (%p258) target = $region36
        $region35: #{dea_gnn_jk_forward.18} parent=23 // pred_region
          %s261 = smul.u32 64, %s17
          %p262 = scmp.lt.s32.totalorder %s261, 127
          %s263 = scalar_select %p262, %s261, 127
          %s264 = smul.addr %s263, 4
          %s265 = scalar_lea.vmem %s2, %s264
          %s266 = smul.u32 64, %s17
        $region36: #{dea_gnn_jk_forward.18} parent=23 // pred_fallthru
          _
        // Predicated region
        $region37: #{dea_gnn_jk_forward.18} parent=23 // pred_check
          %p267 = pneg %p157
        $region38: #{dea_gnn_jk_forward.18} parent=23 // pred_check_branch
          %269 = sbr.rel (%p267) target = $region40
        $region39: #{dea_gnn_jk_forward.18} parent=23 // pred_region
          %s270 = smul.u32 64, %s17
          %p271 = scmp.lt.s32.totalorder %s270, 127
          %s272 = scalar_select %p271, %s270, 127
          %s273 = smul.addr %s272, 8
          %s274 = scalar_lea.vmem %s5, %s273
          %s275 = smul.u32 64, %s17
        $region40: #{dea_gnn_jk_forward.18} parent=23 // pred_fallthru
          _
      $region24: #{dea_gnn_jk_forward.18} parent=5 // pred_fallthru
        _
      %p276 = scmp.le.s32.totalorder 1, %s17
      %p277 = scmp.lt.s32.totalorder %s17, 3
      %p278 = pnand %p276, %p277
      %p279 = pneg %p278
      // Predicated region
      $region41: #{dea_gnn_jk_forward.18} parent=5 // pred_check
        _
      $region42: #{dea_gnn_jk_forward.18} parent=5 // pred_check_branch
        %281 = sbr.rel (%p278) target = $region44
      $region43: #{dea_gnn_jk_forward.18} parent=5 // pred_region
        %s282 = ssub.s32 %s17, 1
        %s283 = smul.u32 64, %s22
        %p284 = scmp.lt.s32.totalorder %s283, 127
        %s285 = scalar_select %p284, %s283, 127
        %s286 = smul.addr %s285, 4
        %s287 = scalar_lea.vmem %s0, %s286
        %p288 = pneg %p43
        %p289 = pneg %p40
        %s290 = smul.u32 64, %s22
        %p291 = scmp.lt.s32.totalorder %s290, 127
        %s292 = scalar_select %p291, %s290, 127
        %s293 = smul.addr %s292, 4
        %s294 = scalar_lea.vmem %s1, %s293
        %p295 = pneg %p69
        %p296 = pneg %p66
        %s297 = smul.u32 64, %s22
        %p298 = scmp.lt.s32.totalorder %s297, 127
        %s299 = scalar_select %p298, %s297, 127
        %s300 = smul.addr %s299, 4
        %s301 = scalar_lea.vmem %s2, %s300
        %p302 = pneg %p95
        %p303 = pneg %p92
        %p304 = pneg %p116
        %p305 = pneg %p113
        %p306 = pneg %p137
        %p307 = pneg %p134
        %s308 = smul.u32 64, %s22
        %p309 = scmp.lt.s32.totalorder %s308, 127
        %s310 = scalar_select %p309, %s308, 127
        %s311 = smul.addr %s310, 8
        %s312 = scalar_lea.vmem %s5, %s311
        %p313 = pneg %p163
        %p314 = pneg %p160
        %p315 = pneg %p189
        %p316 = pneg %p186
        %s317 = sand.u32 %s176, 1
        %s318 = scalar_lea.sflag [#allocation3], %s317
        %s319 = sand.u32 %s176, 1
        %s320 = smul.addr %s319, 256
        %s321 = scalar_lea.vmem [#allocation2], %s320
        %p322 = pneg %p215
        %p323 = pneg %p212
        %s324 = smul.u32 64, %s22
        %p325 = scmp.lt.s32.totalorder %s324, 127
        %s326 = scalar_select %p325, %s324, 127
        %s327 = smul.addr %s326, 8
        %s328 = scalar_lea.vmem %s7, %s327
        %s329 = smul.u32 64, %s22
        %p330 = scmp.lt.s32.totalorder %s329, 127
        %s331 = scalar_select %p330, %s329, 127
        %s332 = smul.addr %s331, 4
        %s333 = scalar_lea.vmem %s0, %s332
        %s334 = smul.u32 64, %s22
        %s335 = smul.u32 64, %s22
        %p336 = scmp.lt.s32.totalorder %s335, 127
        %s337 = scalar_select %p336, %s335, 127
        %s338 = smul.addr %s337, 4
        %s339 = scalar_lea.vmem %s1, %s338
        %s340 = smul.u32 64, %s22
        %s341 = smul.u32 64, %s22
        %p342 = scmp.lt.s32.totalorder %s341, 127
        %s343 = scalar_select %p342, %s341, 127
        %s344 = smul.addr %s343, 4
        %s345 = scalar_lea.vmem %s2, %s344
        %s346 = smul.u32 64, %s22
        %s347 = smul.u32 64, %s22
        %p348 = scmp.lt.s32.totalorder %s347, 127
        %s349 = scalar_select %p348, %s347, 127
        %s350 = smul.addr %s349, 8
        %s351 = scalar_lea.vmem %s5, %s350
        %s352 = smul.u32 64, %s22
        %s353 = smul.u32 64, %s22
        %s354 = smul.u32 64, %s22
        %p355 = scmp.lt.s32.totalorder %s354, 127
        %s356 = scalar_select %p355, %s354, 127
        %s357 = smul.addr %s356, 8
        %s358 = scalar_lea.vmem %s7, %s357
        %s359 = smul.u32 64, %s22
        %v361 = vld [vmem:[%s333] sm:$0xf]
        %v362 = vld [vmem:[%s333 + $0x4] sm:$0xf]
        %v363 = vld [vmem:[%s333 + $0x8] sm:$0xf]
        %v364 = vld [vmem:[%s333 + $0xc] sm:$0xf]
        %v365 = vld [vmem:[%s333 + $0x10] sm:$0xf]
        %v366 = vld [vmem:[%s333 + $0x14] sm:$0xf]
        %v367 = vld [vmem:[%s333 + $0x18] sm:$0xf]
        %v368 = vld [vmem:[%s333 + $0x1c] sm:$0xf]
        %v369 = vld [vmem:[%s333 + $0x20] sm:$0xf]
        %v370 = vld [vmem:[%s333 + $0x24] sm:$0xf]
        %v371 = vld [vmem:[%s333 + $0x28] sm:$0xf]
        %v372 = vld [vmem:[%s333 + $0x2c] sm:$0xf]
        %v373 = vld [vmem:[%s333 + $0x30] sm:$0xf]
        %v374 = vld [vmem:[%s333 + $0x34] sm:$0xf]
        %v375 = vld [vmem:[%s333 + $0x38] sm:$0xf]
        %v376 = vld [vmem:[%s333 + $0x3c] sm:$0xf]
        %v377 = vld [vmem:[%s333 + $0x40] sm:$0xf]
        %v378 = vld [vmem:[%s333 + $0x44] sm:$0xf]
        %v379 = vld [vmem:[%s333 + $0x48] sm:$0xf]
        %v380 = vld [vmem:[%s333 + $0x4c] sm:$0xf]
        %v381 = vld [vmem:[%s333 + $0x50] sm:$0xf]
        %v382 = vld [vmem:[%s333 + $0x54] sm:$0xf]
        %v383 = vld [vmem:[%s333 + $0x58] sm:$0xf]
        %v384 = vld [vmem:[%s333 + $0x5c] sm:$0xf]
        %v385 = vld [vmem:[%s333 + $0x60] sm:$0xf]
        %v386 = vld [vmem:[%s333 + $0x64] sm:$0xf]
        %v387 = vld [vmem:[%s333 + $0x68] sm:$0xf]
        %v388 = vld [vmem:[%s333 + $0x6c] sm:$0xf]
        %v389 = vld [vmem:[%s333 + $0x70] sm:$0xf]
        %v390 = vld [vmem:[%s333 + $0x74] sm:$0xf]
        %v391 = vld [vmem:[%s333 + $0x78] sm:$0xf]
        %v392 = vld [vmem:[%s333 + $0x7c] sm:$0xf]
        %v393 = vld [vmem:[%s333 + $0x80] sm:$0xf]
        %v394 = vld [vmem:[%s333 + $0x84] sm:$0xf]
        %v395 = vld [vmem:[%s333 + $0x88] sm:$0xf]
        %v396 = vld [vmem:[%s333 + $0x8c] sm:$0xf]
        %v397 = vld [vmem:[%s333 + $0x90] sm:$0xf]
        %v398 = vld [vmem:[%s333 + $0x94] sm:$0xf]
        %v399 = vld [vmem:[%s333 + $0x98] sm:$0xf]
        %v400 = vld [vmem:[%s333 + $0x9c] sm:$0xf]
        %v401 = vld [vmem:[%s333 + $0xa0] sm:$0xf]
        %v402 = vld [vmem:[%s333 + $0xa4] sm:$0xf]
        %v403 = vld [vmem:[%s333 + $0xa8] sm:$0xf]
        %v404 = vld [vmem:[%s333 + $0xac] sm:$0xf]
        %v405 = vld [vmem:[%s333 + $0xb0] sm:$0xf]
        %v406 = vld [vmem:[%s333 + $0xb4] sm:$0xf]
        %v407 = vld [vmem:[%s333 + $0xb8] sm:$0xf]
        %v408 = vld [vmem:[%s333 + $0xbc] sm:$0xf]
        %v409 = vld [vmem:[%s333 + $0xc0] sm:$0xf]
        %v410 = vld [vmem:[%s333 + $0xc4] sm:$0xf]
        %v411 = vld [vmem:[%s333 + $0xc8] sm:$0xf]
        %v412 = vld [vmem:[%s333 + $0xcc] sm:$0xf]
        %v413 = vld [vmem:[%s333 + $0xd0] sm:$0xf]
        %v414 = vld [vmem:[%s333 + $0xd4] sm:$0xf]
        %v415 = vld [vmem:[%s333 + $0xd8] sm:$0xf]
        %v416 = vld [vmem:[%s333 + $0xdc] sm:$0xf]
        %v417 = vld [vmem:[%s333 + $0xe0] sm:$0xf]
        %v418 = vld [vmem:[%s333 + $0xe4] sm:$0xf]
        %v419 = vld [vmem:[%s333 + $0xe8] sm:$0xf]
        %v420 = vld [vmem:[%s333 + $0xec] sm:$0xf]
        %v421 = vld [vmem:[%s333 + $0xf0] sm:$0xf]
        %v422 = vld [vmem:[%s333 + $0xf4] sm:$0xf]
        %v423 = vld [vmem:[%s333 + $0xf8] sm:$0xf]
        %v424 = vld [vmem:[%s333 + $0xfc] sm:$0xf]
        %v425 = vld [vmem:[%s339] sm:$0xf]
        %v426 = vld [vmem:[%s339 + $0x4] sm:$0xf]
        %v427 = vld [vmem:[%s339 + $0x8] sm:$0xf]
        %v428 = vld [vmem:[%s339 + $0xc] sm:$0xf]
        %v429 = vld [vmem:[%s339 + $0x10] sm:$0xf]
        %v430 = vld [vmem:[%s339 + $0x14] sm:$0xf]
        %v431 = vld [vmem:[%s339 + $0x18] sm:$0xf]
        %v432 = vld [vmem:[%s339 + $0x1c] sm:$0xf]
        %v433 = vld [vmem:[%s339 + $0x20] sm:$0xf]
        %v434 = vld [vmem:[%s339 + $0x24] sm:$0xf]
        %v435 = vld [vmem:[%s339 + $0x28] sm:$0xf]
        %v436 = vld [vmem:[%s339 + $0x2c] sm:$0xf]
        %v437 = vld [vmem:[%s339 + $0x30] sm:$0xf]
        %v438 = vld [vmem:[%s339 + $0x34] sm:$0xf]
        %v439 = vld [vmem:[%s339 + $0x38] sm:$0xf]
        %v440 = vld [vmem:[%s339 + $0x3c] sm:$0xf]
        %v441 = vld [vmem:[%s339 + $0x40] sm:$0xf]
        %v442 = vld [vmem:[%s339 + $0x44] sm:$0xf]
        %v443 = vld [vmem:[%s339 + $0x48] sm:$0xf]
        %v444 = vld [vmem:[%s339 + $0x4c] sm:$0xf]
        %v445 = vld [vmem:[%s339 + $0x50] sm:$0xf]
        %v446 = vld [vmem:[%s339 + $0x54] sm:$0xf]
        %v447 = vld [vmem:[%s339 + $0x58] sm:$0xf]
        %v448 = vld [vmem:[%s339 + $0x5c] sm:$0xf]
        %v449 = vld [vmem:[%s339 + $0x60] sm:$0xf]
        %v450 = vld [vmem:[%s339 + $0x64] sm:$0xf]
        %v451 = vld [vmem:[%s339 + $0x68] sm:$0xf]
        %v452 = vld [vmem:[%s339 + $0x6c] sm:$0xf]
        %v453 = vld [vmem:[%s339 + $0x70] sm:$0xf]
        %v454 = vld [vmem:[%s339 + $0x74] sm:$0xf]
        %v455 = vld [vmem:[%s339 + $0x78] sm:$0xf]
        %v456 = vld [vmem:[%s339 + $0x7c] sm:$0xf]
        %v457 = vld [vmem:[%s339 + $0x80] sm:$0xf]
        %v458 = vld [vmem:[%s339 + $0x84] sm:$0xf]
        %v459 = vld [vmem:[%s339 + $0x88] sm:$0xf]
        %v460 = vld [vmem:[%s339 + $0x8c] sm:$0xf]
        %v461 = vld [vmem:[%s339 + $0x90] sm:$0xf]
        %v462 = vld [vmem:[%s339 + $0x94] sm:$0xf]
        %v463 = vld [vmem:[%s339 + $0x98] sm:$0xf]
        %v464 = vld [vmem:[%s339 + $0x9c] sm:$0xf]
        %v465 = vld [vmem:[%s339 + $0xa0] sm:$0xf]
        %v466 = vld [vmem:[%s339 + $0xa4] sm:$0xf]
        %v467 = vld [vmem:[%s339 + $0xa8] sm:$0xf]
        %v468 = vld [vmem:[%s339 + $0xac] sm:$0xf]
        %v469 = vld [vmem:[%s339 + $0xb0] sm:$0xf]
        %v470 = vld [vmem:[%s339 + $0xb4] sm:$0xf]
        %v471 = vld [vmem:[%s339 + $0xb8] sm:$0xf]
        %v472 = vld [vmem:[%s339 + $0xbc] sm:$0xf]
        %v473 = vld [vmem:[%s339 + $0xc0] sm:$0xf]
        %v474 = vld [vmem:[%s339 + $0xc4] sm:$0xf]
        %v475 = vld [vmem:[%s339 + $0xc8] sm:$0xf]
        %v476 = vld [vmem:[%s339 + $0xcc] sm:$0xf]
        %v477 = vld [vmem:[%s339 + $0xd0] sm:$0xf]
        %v478 = vld [vmem:[%s339 + $0xd4] sm:$0xf]
        %v479 = vld [vmem:[%s339 + $0xd8] sm:$0xf]
        %v480 = vld [vmem:[%s339 + $0xdc] sm:$0xf]
        %v481 = vld [vmem:[%s339 + $0xe0] sm:$0xf]
        %v482 = vld [vmem:[%s339 + $0xe4] sm:$0xf]
        %v483 = vld [vmem:[%s339 + $0xe8] sm:$0xf]
        %v484 = vld [vmem:[%s339 + $0xec] sm:$0xf]
        %v485 = vld [vmem:[%s339 + $0xf0] sm:$0xf]
        %v486 = vld [vmem:[%s339 + $0xf4] sm:$0xf]
        %v487 = vld [vmem:[%s339 + $0xf8] sm:$0xf]
        %v488 = vld [vmem:[%s339 + $0xfc] sm:$0xf]
        %v489 = vld [vmem:[%s345] sm:$0xf]
        %v490 = vld [vmem:[%s345 + $0x4] sm:$0xf]
        %v491 = vld [vmem:[%s345 + $0x8] sm:$0xf]
        %v492 = vld [vmem:[%s345 + $0xc] sm:$0xf]
        %v493 = vld [vmem:[%s345 + $0x10] sm:$0xf]
        %v494 = vld [vmem:[%s345 + $0x14] sm:$0xf]
        %v495 = vld [vmem:[%s345 + $0x18] sm:$0xf]
        %v496 = vld [vmem:[%s345 + $0x1c] sm:$0xf]
        %v497 = vld [vmem:[%s345 + $0x20] sm:$0xf]
        %v498 = vld [vmem:[%s345 + $0x24] sm:$0xf]
        %v499 = vld [vmem:[%s345 + $0x28] sm:$0xf]
        %v500 = vld [vmem:[%s345 + $0x2c] sm:$0xf]
        %v501 = vld [vmem:[%s345 + $0x30] sm:$0xf]
        %v502 = vld [vmem:[%s345 + $0x34] sm:$0xf]
        %v503 = vld [vmem:[%s345 + $0x38] sm:$0xf]
        %v504 = vld [vmem:[%s345 + $0x3c] sm:$0xf]
        %v505 = vld [vmem:[%s345 + $0x40] sm:$0xf]
        %v506 = vld [vmem:[%s345 + $0x44] sm:$0xf]
        %v507 = vld [vmem:[%s345 + $0x48] sm:$0xf]
        %v508 = vld [vmem:[%s345 + $0x4c] sm:$0xf]
        %v509 = vld [vmem:[%s345 + $0x50] sm:$0xf]
        %v510 = vld [vmem:[%s345 + $0x54] sm:$0xf]
        %v511 = vld [vmem:[%s345 + $0x58] sm:$0xf]
        %v512 = vld [vmem:[%s345 + $0x5c] sm:$0xf]
        %v513 = vld [vmem:[%s345 + $0x60] sm:$0xf]
        %v514 = vld [vmem:[%s345 + $0x64] sm:$0xf]
        %v515 = vld [vmem:[%s345 + $0x68] sm:$0xf]
        %v516 = vld [vmem:[%s345 + $0x6c] sm:$0xf]
        %v517 = vld [vmem:[%s345 + $0x70] sm:$0xf]
        %v518 = vld [vmem:[%s345 + $0x74] sm:$0xf]
        %v519 = vld [vmem:[%s345 + $0x78] sm:$0xf]
        %v520 = vld [vmem:[%s345 + $0x7c] sm:$0xf]
        %v521 = vld [vmem:[%s345 + $0x80] sm:$0xf]
        %v522 = vld [vmem:[%s345 + $0x84] sm:$0xf]
        %v523 = vld [vmem:[%s345 + $0x88] sm:$0xf]
        %v524 = vld [vmem:[%s345 + $0x8c] sm:$0xf]
        %v525 = vld [vmem:[%s345 + $0x90] sm:$0xf]
        %v526 = vld [vmem:[%s345 + $0x94] sm:$0xf]
        %v527 = vld [vmem:[%s345 + $0x98] sm:$0xf]
        %v528 = vld [vmem:[%s345 + $0x9c] sm:$0xf]
        %v529 = vld [vmem:[%s345 + $0xa0] sm:$0xf]
        %v530 = vld [vmem:[%s345 + $0xa4] sm:$0xf]
        %v531 = vld [vmem:[%s345 + $0xa8] sm:$0xf]
        %v532 = vld [vmem:[%s345 + $0xac] sm:$0xf]
        %v533 = vld [vmem:[%s345 + $0xb0] sm:$0xf]
        %v534 = vld [vmem:[%s345 + $0xb4] sm:$0xf]
        %v535 = vld [vmem:[%s345 + $0xb8] sm:$0xf]
        %v536 = vld [vmem:[%s345 + $0xbc] sm:$0xf]
        %v537 = vld [vmem:[%s345 + $0xc0] sm:$0xf]
        %v538 = vld [vmem:[%s345 + $0xc4] sm:$0xf]
        %v539 = vld [vmem:[%s345 + $0xc8] sm:$0xf]
        %v540 = vld [vmem:[%s345 + $0xcc] sm:$0xf]
        %v541 = vld [vmem:[%s345 + $0xd0] sm:$0xf]
        %v542 = vld [vmem:[%s345 + $0xd4] sm:$0xf]
        %v543 = vld [vmem:[%s345 + $0xd8] sm:$0xf]
        %v544 = vld [vmem:[%s345 + $0xdc] sm:$0xf]
        %v545 = vld [vmem:[%s345 + $0xe0] sm:$0xf]
        %v546 = vld [vmem:[%s345 + $0xe4] sm:$0xf]
        %v547 = vld [vmem:[%s345 + $0xe8] sm:$0xf]
        %v548 = vld [vmem:[%s345 + $0xec] sm:$0xf]
        %v549 = vld [vmem:[%s345 + $0xf0] sm:$0xf]
        %v550 = vld [vmem:[%s345 + $0xf4] sm:$0xf]
        %v551 = vld [vmem:[%s345 + $0xf8] sm:$0xf]
        %v552 = vld [vmem:[%s345 + $0xfc] sm:$0xf]
        %v617 = vunpack.c.l.b16 %v361
        %v618 = vunpack.c.l.b16 %v362
        %v619 = vunpack.c.l.b16 %v363
        %v620 = vunpack.c.l.b16 %v364
        %v621 = vunpack.c.l.b16 %v365
        %v622 = vunpack.c.l.b16 %v366
        %v623 = vunpack.c.l.b16 %v367
        %v624 = vunpack.c.l.b16 %v368
        %v625 = vunpack.c.l.b16 %v369
        %v626 = vunpack.c.l.b16 %v370
        %v627 = vunpack.c.l.b16 %v371
        %v628 = vunpack.c.l.b16 %v372
        %v629 = vunpack.c.l.b16 %v373
        %v630 = vunpack.c.l.b16 %v374
        %v631 = vunpack.c.l.b16 %v375
        %v632 = vunpack.c.l.b16 %v376
        %v633 = vunpack.c.l.b16 %v377
        %v634 = vunpack.c.l.b16 %v378
        %v635 = vunpack.c.l.b16 %v379
        %v636 = vunpack.c.l.b16 %v380
        %v637 = vunpack.c.l.b16 %v381
        %v638 = vunpack.c.l.b16 %v382
        %v639 = vunpack.c.l.b16 %v383
        %v640 = vunpack.c.l.b16 %v384
        %v641 = vunpack.c.l.b16 %v385
        %v642 = vunpack.c.l.b16 %v386
        %v643 = vunpack.c.l.b16 %v387
        %v644 = vunpack.c.l.b16 %v388
        %v645 = vunpack.c.l.b16 %v389
        %v646 = vunpack.c.l.b16 %v390
        %v647 = vunpack.c.l.b16 %v391
        %v648 = vunpack.c.l.b16 %v392
        %v649 = vunpack.c.l.b16 %v393
        %v650 = vunpack.c.l.b16 %v394
        %v651 = vunpack.c.l.b16 %v395
        %v652 = vunpack.c.l.b16 %v396
        %v653 = vunpack.c.l.b16 %v397
        %v654 = vunpack.c.l.b16 %v398
        %v655 = vunpack.c.l.b16 %v399
        %v656 = vunpack.c.l.b16 %v400
        %v657 = vunpack.c.l.b16 %v401
        %v658 = vunpack.c.l.b16 %v402
        %v659 = vunpack.c.l.b16 %v403
        %v660 = vunpack.c.l.b16 %v404
        %v661 = vunpack.c.l.b16 %v405
        %v662 = vunpack.c.l.b16 %v406
        %v663 = vunpack.c.l.b16 %v407
        %v664 = vunpack.c.l.b16 %v408
        %v665 = vunpack.c.l.b16 %v409
        %v666 = vunpack.c.l.b16 %v410
        %v667 = vunpack.c.l.b16 %v411
        %v668 = vunpack.c.l.b16 %v412
        %v669 = vunpack.c.l.b16 %v413
        %v670 = vunpack.c.l.b16 %v414
        %v671 = vunpack.c.l.b16 %v415
        %v672 = vunpack.c.l.b16 %v416
        %v673 = vunpack.c.l.b16 %v417
        %v674 = vunpack.c.l.b16 %v418
        %v675 = vunpack.c.l.b16 %v419
        %v676 = vunpack.c.l.b16 %v420
        %v677 = vunpack.c.l.b16 %v421
        %v678 = vunpack.c.l.b16 %v422
        %v679 = vunpack.c.l.b16 %v423
        %v680 = vunpack.c.l.b16 %v424
        %v681 = vpack.c.b16 %v618, %v617
        %v682 = vpack.c.b16 %v620, %v619
        %v683 = vpack.c.b16 %v622, %v621
        %v684 = vpack.c.b16 %v624, %v623
        %v685 = vpack.c.b16 %v626, %v625
        %v686 = vpack.c.b16 %v628, %v627
        %v687 = vpack.c.b16 %v630, %v629
        %v688 = vpack.c.b16 %v632, %v631
        %v689 = vpack.c.b16 %v634, %v633
        %v690 = vpack.c.b16 %v636, %v635
        %v691 = vpack.c.b16 %v638, %v637
        %v692 = vpack.c.b16 %v640, %v639
        %v693 = vpack.c.b16 %v642, %v641
        %v694 = vpack.c.b16 %v644, %v643
        %v695 = vpack.c.b16 %v646, %v645
        %v696 = vpack.c.b16 %v648, %v647
        %v697 = vpack.c.b16 %v650, %v649
        %v698 = vpack.c.b16 %v652, %v651
        %v699 = vpack.c.b16 %v654, %v653
        %v700 = vpack.c.b16 %v656, %v655
        %v701 = vpack.c.b16 %v658, %v657
        %v702 = vpack.c.b16 %v660, %v659
        %v703 = vpack.c.b16 %v662, %v661
        %v704 = vpack.c.b16 %v664, %v663
        %v705 = vpack.c.b16 %v666, %v665
        %v706 = vpack.c.b16 %v668, %v667
        %v707 = vpack.c.b16 %v670, %v669
        %v708 = vpack.c.b16 %v672, %v671
        %v709 = vpack.c.b16 %v674, %v673
        %v710 = vpack.c.b16 %v676, %v675
        %v711 = vpack.c.b16 %v678, %v677
        %v712 = vpack.c.b16 %v680, %v679
        %v809 = vunpack.c.l.b16 %v425
        %v810 = vunpack.c.l.b16 %v426
        %v811 = vunpack.c.l.b16 %v427
        %v812 = vunpack.c.l.b16 %v428
        %v813 = vunpack.c.l.b16 %v429
        %v814 = vunpack.c.l.b16 %v430
        %v815 = vunpack.c.l.b16 %v431
        %v816 = vunpack.c.l.b16 %v432
        %v817 = vunpack.c.l.b16 %v433
        %v818 = vunpack.c.l.b16 %v434
        %v819 = vunpack.c.l.b16 %v435
        %v820 = vunpack.c.l.b16 %v436
        %v821 = vunpack.c.l.b16 %v437
        %v822 = vunpack.c.l.b16 %v438
        %v823 = vunpack.c.l.b16 %v439
        %v824 = vunpack.c.l.b16 %v440
        %v825 = vunpack.c.l.b16 %v441
        %v826 = vunpack.c.l.b16 %v442
        %v827 = vunpack.c.l.b16 %v443
        %v828 = vunpack.c.l.b16 %v444
        %v829 = vunpack.c.l.b16 %v445
        %v830 = vunpack.c.l.b16 %v446
        %v831 = vunpack.c.l.b16 %v447
        %v832 = vunpack.c.l.b16 %v448
        %v833 = vunpack.c.l.b16 %v449
        %v834 = vunpack.c.l.b16 %v450
        %v835 = vunpack.c.l.b16 %v451
        %v836 = vunpack.c.l.b16 %v452
        %v837 = vunpack.c.l.b16 %v453
        %v838 = vunpack.c.l.b16 %v454
        %v839 = vunpack.c.l.b16 %v455
        %v840 = vunpack.c.l.b16 %v456
        %v841 = vunpack.c.l.b16 %v457
        %v842 = vunpack.c.l.b16 %v458
        %v843 = vunpack.c.l.b16 %v459
        %v844 = vunpack.c.l.b16 %v460
        %v845 = vunpack.c.l.b16 %v461
        %v846 = vunpack.c.l.b16 %v462
        %v847 = vunpack.c.l.b16 %v463
        %v848 = vunpack.c.l.b16 %v464
        %v849 = vunpack.c.l.b16 %v465
        %v850 = vunpack.c.l.b16 %v466
        %v851 = vunpack.c.l.b16 %v467
        %v852 = vunpack.c.l.b16 %v468
        %v853 = vunpack.c.l.b16 %v469
        %v854 = vunpack.c.l.b16 %v470
        %v855 = vunpack.c.l.b16 %v471
        %v856 = vunpack.c.l.b16 %v472
        %v857 = vunpack.c.l.b16 %v473
        %v858 = vunpack.c.l.b16 %v474
        %v859 = vunpack.c.l.b16 %v475
        %v860 = vunpack.c.l.b16 %v476
        %v861 = vunpack.c.l.b16 %v477
        %v862 = vunpack.c.l.b16 %v478
        %v863 = vunpack.c.l.b16 %v479
        %v864 = vunpack.c.l.b16 %v480
        %v865 = vunpack.c.l.b16 %v481
        %v866 = vunpack.c.l.b16 %v482
        %v867 = vunpack.c.l.b16 %v483
        %v868 = vunpack.c.l.b16 %v484
        %v869 = vunpack.c.l.b16 %v485
        %v870 = vunpack.c.l.b16 %v486
        %v871 = vunpack.c.l.b16 %v487
        %v872 = vunpack.c.l.b16 %v488
        %v873 = vpack.c.b16 %v810, %v809
        %v874 = vpack.c.b16 %v812, %v811
        %v875 = vpack.c.b16 %v814, %v813
        %v876 = vpack.c.b16 %v816, %v815
        %v877 = vpack.c.b16 %v818, %v817
        %v878 = vpack.c.b16 %v820, %v819
        %v879 = vpack.c.b16 %v822, %v821
        %v880 = vpack.c.b16 %v824, %v823
        %v881 = vpack.c.b16 %v826, %v825
        %v882 = vpack.c.b16 %v828, %v827
        %v883 = vpack.c.b16 %v830, %v829
        %v884 = vpack.c.b16 %v832, %v831
        %v885 = vpack.c.b16 %v834, %v833
        %v886 = vpack.c.b16 %v836, %v835
        %v887 = vpack.c.b16 %v838, %v837
        %v888 = vpack.c.b16 %v840, %v839
        %v889 = vpack.c.b16 %v842, %v841
        %v890 = vpack.c.b16 %v844, %v843
        %v891 = vpack.c.b16 %v846, %v845
        %v892 = vpack.c.b16 %v848, %v847
        %v893 = vpack.c.b16 %v850, %v849
        %v894 = vpack.c.b16 %v852, %v851
        %v895 = vpack.c.b16 %v854, %v853
        %v896 = vpack.c.b16 %v856, %v855
        %v897 = vpack.c.b16 %v858, %v857
        %v898 = vpack.c.b16 %v860, %v859
        %v899 = vpack.c.b16 %v862, %v861
        %v900 = vpack.c.b16 %v864, %v863
        %v901 = vpack.c.b16 %v866, %v865
        %v902 = vpack.c.b16 %v868, %v867
        %v903 = vpack.c.b16 %v870, %v869
        %v904 = vpack.c.b16 %v872, %v871
        %v1001 = vunpack.c.l.b16 %v489
        %v1002 = vunpack.c.l.b16 %v490
        %v1003 = vunpack.c.l.b16 %v491
        %v1004 = vunpack.c.l.b16 %v492
        %v1005 = vunpack.c.l.b16 %v493
        %v1006 = vunpack.c.l.b16 %v494
        %v1007 = vunpack.c.l.b16 %v495
        %v1008 = vunpack.c.l.b16 %v496
        %v1009 = vunpack.c.l.b16 %v497
        %v1010 = vunpack.c.l.b16 %v498
        %v1011 = vunpack.c.l.b16 %v499
        %v1012 = vunpack.c.l.b16 %v500
        %v1013 = vunpack.c.l.b16 %v501
        %v1014 = vunpack.c.l.b16 %v502
        %v1015 = vunpack.c.l.b16 %v503
        %v1016 = vunpack.c.l.b16 %v504
        %v1017 = vunpack.c.l.b16 %v505
        %v1018 = vunpack.c.l.b16 %v506
        %v1019 = vunpack.c.l.b16 %v507
        %v1020 = vunpack.c.l.b16 %v508
        %v1021 = vunpack.c.l.b16 %v509
        %v1022 = vunpack.c.l.b16 %v510
        %v1023 = vunpack.c.l.b16 %v511
        %v1024 = vunpack.c.l.b16 %v512
        %v1025 = vunpack.c.l.b16 %v513
        %v1026 = vunpack.c.l.b16 %v514
        %v1027 = vunpack.c.l.b16 %v515
        %v1028 = vunpack.c.l.b16 %v516
        %v1029 = vunpack.c.l.b16 %v517
        %v1030 = vunpack.c.l.b16 %v518
        %v1031 = vunpack.c.l.b16 %v519
        %v1032 = vunpack.c.l.b16 %v520
        %v1033 = vunpack.c.l.b16 %v521
        %v1034 = vunpack.c.l.b16 %v522
        %v1035 = vunpack.c.l.b16 %v523
        %v1036 = vunpack.c.l.b16 %v524
        %v1037 = vunpack.c.l.b16 %v525
        %v1038 = vunpack.c.l.b16 %v526
        %v1039 = vunpack.c.l.b16 %v527
        %v1040 = vunpack.c.l.b16 %v528
        %v1041 = vunpack.c.l.b16 %v529
        %v1042 = vunpack.c.l.b16 %v530
        %v1043 = vunpack.c.l.b16 %v531
        %v1044 = vunpack.c.l.b16 %v532
        %v1045 = vunpack.c.l.b16 %v533
        %v1046 = vunpack.c.l.b16 %v534
        %v1047 = vunpack.c.l.b16 %v535
        %v1048 = vunpack.c.l.b16 %v536
        %v1049 = vunpack.c.l.b16 %v537
        %v1050 = vunpack.c.l.b16 %v538
        %v1051 = vunpack.c.l.b16 %v539
        %v1052 = vunpack.c.l.b16 %v540
        %v1053 = vunpack.c.l.b16 %v541
        %v1054 = vunpack.c.l.b16 %v542
        %v1055 = vunpack.c.l.b16 %v543
        %v1056 = vunpack.c.l.b16 %v544
        %v1057 = vunpack.c.l.b16 %v545
        %v1058 = vunpack.c.l.b16 %v546
        %v1059 = vunpack.c.l.b16 %v547
        %v1060 = vunpack.c.l.b16 %v548
        %v1061 = vunpack.c.l.b16 %v549
        %v1062 = vunpack.c.l.b16 %v550
        %v1063 = vunpack.c.l.b16 %v551
        %v1064 = vunpack.c.l.b16 %v552
        %v1065 = vpack.c.b16 %v1002, %v1001
        %v1066 = vpack.c.b16 %v1004, %v1003
        %v1067 = vpack.c.b16 %v1006, %v1005
        %v1068 = vpack.c.b16 %v1008, %v1007
        %v1069 = vpack.c.b16 %v1010, %v1009
        %v1070 = vpack.c.b16 %v1012, %v1011
        %v1071 = vpack.c.b16 %v1014, %v1013
        %v1072 = vpack.c.b16 %v1016, %v1015
        %v1073 = vpack.c.b16 %v1018, %v1017
        %v1074 = vpack.c.b16 %v1020, %v1019
        %v1075 = vpack.c.b16 %v1022, %v1021
        %v1076 = vpack.c.b16 %v1024, %v1023
        %v1077 = vpack.c.b16 %v1026, %v1025
        %v1078 = vpack.c.b16 %v1028, %v1027
        %v1079 = vpack.c.b16 %v1030, %v1029
        %v1080 = vpack.c.b16 %v1032, %v1031
        %v1081 = vpack.c.b16 %v1034, %v1033
        %v1082 = vpack.c.b16 %v1036, %v1035
        %v1083 = vpack.c.b16 %v1038, %v1037
        %v1084 = vpack.c.b16 %v1040, %v1039
        %v1085 = vpack.c.b16 %v1042, %v1041
        %v1086 = vpack.c.b16 %v1044, %v1043
        %v1087 = vpack.c.b16 %v1046, %v1045
        %v1088 = vpack.c.b16 %v1048, %v1047
        %v1089 = vpack.c.b16 %v1050, %v1049
        %v1090 = vpack.c.b16 %v1052, %v1051
        %v1091 = vpack.c.b16 %v1054, %v1053
        %v1092 = vpack.c.b16 %v1056, %v1055
        %v1093 = vpack.c.b16 %v1058, %v1057
        %v1094 = vpack.c.b16 %v1060, %v1059
        %v1095 = vpack.c.b16 %v1062, %v1061
        %v1096 = vpack.c.b16 %v1064, %v1063
        %v1129 = vld [vmem:[%s3] sm:$0xf]
        %v1130 = vld [vmem:[%s3 + $0x4] sm:$0xf]
        %v1131 = vld [vmem:[%s3 + $0x8] sm:$0xf]
        %v1132 = vld [vmem:[%s3 + $0xc] sm:$0xf]
        %v1133 = vld [vmem:[%s3 + $0x10] sm:$0xf]
        %v1134 = vld [vmem:[%s3 + $0x14] sm:$0xf]
        %v1135 = vld [vmem:[%s3 + $0x18] sm:$0xf]
        %v1136 = vld [vmem:[%s3 + $0x1c] sm:$0xf]
        %v1137 = vld [vmem:[%s3 + $0x20] sm:$0xf]
        %v1138 = vld [vmem:[%s3 + $0x24] sm:$0xf]
        %v1139 = vld [vmem:[%s3 + $0x28] sm:$0xf]
        %v1140 = vld [vmem:[%s3 + $0x2c] sm:$0xf]
        %v1141 = vld [vmem:[%s3 + $0x30] sm:$0xf]
        %v1142 = vld [vmem:[%s3 + $0x34] sm:$0xf]
        %v1143 = vld [vmem:[%s3 + $0x38] sm:$0xf]
        %v1144 = vld [vmem:[%s3 + $0x3c] sm:$0xf]
        %v1145 = vld [vmem:[%s3 + $0x40] sm:$0xf]
        %v1146 = vld [vmem:[%s3 + $0x44] sm:$0xf]
        %v1147 = vld [vmem:[%s3 + $0x48] sm:$0xf]
        %v1148 = vld [vmem:[%s3 + $0x4c] sm:$0xf]
        %v1149 = vld [vmem:[%s3 + $0x50] sm:$0xf]
        %v1150 = vld [vmem:[%s3 + $0x54] sm:$0xf]
        %v1151 = vld [vmem:[%s3 + $0x58] sm:$0xf]
        %v1152 = vld [vmem:[%s3 + $0x5c] sm:$0xf]
        %v1153 = vld [vmem:[%s3 + $0x60] sm:$0xf]
        %v1154 = vld [vmem:[%s3 + $0x64] sm:$0xf]
        %v1155 = vld [vmem:[%s3 + $0x68] sm:$0xf]
        %v1156 = vld [vmem:[%s3 + $0x6c] sm:$0xf]
        %v1157 = vld [vmem:[%s3 + $0x70] sm:$0xf]
        %v1158 = vld [vmem:[%s3 + $0x74] sm:$0xf]
        %v1159 = vld [vmem:[%s3 + $0x78] sm:$0xf]
        %v1160 = vld [vmem:[%s3 + $0x7c] sm:$0xf]
        %v1161 = vld [vmem:[%s3 + $0x80] sm:$0xf]
        %v1162 = vld [vmem:[%s3 + $0x84] sm:$0xf]
        %v1163 = vld [vmem:[%s3 + $0x88] sm:$0xf]
        %v1164 = vld [vmem:[%s3 + $0x8c] sm:$0xf]
        %v1165 = vld [vmem:[%s3 + $0x90] sm:$0xf]
        %v1166 = vld [vmem:[%s3 + $0x94] sm:$0xf]
        %v1167 = vld [vmem:[%s3 + $0x98] sm:$0xf]
        %v1168 = vld [vmem:[%s3 + $0x9c] sm:$0xf]
        %v1169 = vld [vmem:[%s3 + $0xa0] sm:$0xf]
        %v1170 = vld [vmem:[%s3 + $0xa4] sm:$0xf]
        %v1171 = vld [vmem:[%s3 + $0xa8] sm:$0xf]
        %v1172 = vld [vmem:[%s3 + $0xac] sm:$0xf]
        %v1173 = vld [vmem:[%s3 + $0xb0] sm:$0xf]
        %v1174 = vld [vmem:[%s3 + $0xb4] sm:$0xf]
        %v1175 = vld [vmem:[%s3 + $0xb8] sm:$0xf]
        %v1176 = vld [vmem:[%s3 + $0xbc] sm:$0xf]
        %v1177 = vld [vmem:[%s4] sm:$0x1]
        %v1179 = vlaneseq
        %v1180 = vshrl.u32 %v1179, 7
        %v1181 = vsub.s32 0, %v1180
        %v1182 = vrot.slane %v1177, %v1181
        %v1232 = vunpack.c.l.b16 %v1129
        %v1233 = vunpack.c.l.b16 %v1130
        %v1234 = vunpack.c.l.b16 %v1131
        %v1235 = vunpack.c.l.b16 %v1132
        %v1236 = vunpack.c.l.b16 %v1133
        %v1237 = vunpack.c.l.b16 %v1134
        %v1238 = vunpack.c.l.b16 %v1135
        %v1239 = vunpack.c.l.b16 %v1136
        %v1240 = vunpack.c.l.b16 %v1137
        %v1241 = vunpack.c.l.b16 %v1138
        %v1242 = vunpack.c.l.b16 %v1139
        %v1243 = vunpack.c.l.b16 %v1140
        %v1244 = vunpack.c.l.b16 %v1141
        %v1245 = vunpack.c.l.b16 %v1142
        %v1246 = vunpack.c.l.b16 %v1143
        %v1247 = vunpack.c.l.b16 %v1144
        %v1248 = vunpack.c.l.b16 %v1145
        %v1249 = vunpack.c.l.b16 %v1146
        %v1250 = vunpack.c.l.b16 %v1147
        %v1251 = vunpack.c.l.b16 %v1148
        %v1252 = vunpack.c.l.b16 %v1149
        %v1253 = vunpack.c.l.b16 %v1150
        %v1254 = vunpack.c.l.b16 %v1151
        %v1255 = vunpack.c.l.b16 %v1152
        %v1256 = vunpack.c.l.b16 %v1153
        %v1257 = vunpack.c.l.b16 %v1154
        %v1258 = vunpack.c.l.b16 %v1155
        %v1259 = vunpack.c.l.b16 %v1156
        %v1260 = vunpack.c.l.b16 %v1157
        %v1261 = vunpack.c.l.b16 %v1158
        %v1262 = vunpack.c.l.b16 %v1159
        %v1263 = vunpack.c.l.b16 %v1160
        %v1264 = vunpack.c.l.b16 %v1161
        %v1265 = vunpack.c.l.b16 %v1162
        %v1266 = vunpack.c.l.b16 %v1163
        %v1267 = vunpack.c.l.b16 %v1164
        %v1268 = vunpack.c.l.b16 %v1165
        %v1269 = vunpack.c.l.b16 %v1166
        %v1270 = vunpack.c.l.b16 %v1167
        %v1271 = vunpack.c.l.b16 %v1168
        %v1272 = vunpack.c.l.b16 %v1169
        %v1273 = vunpack.c.l.b16 %v1170
        %v1274 = vunpack.c.l.b16 %v1171
        %v1275 = vunpack.c.l.b16 %v1172
        %v1276 = vunpack.c.l.b16 %v1173
        %v1277 = vunpack.c.l.b16 %v1174
        %v1278 = vunpack.c.l.b16 %v1175
        %v1279 = vunpack.c.l.b16 %v1176
        %v1280 = vpack.c.b16 %v1233, %v1232
        %v1281 = vpack.c.b16 %v1235, %v1234
        %v1282 = vpack.c.b16 %v1237, %v1236
        %v1283 = vpack.c.b16 %v1239, %v1238
        %v1284 = vpack.c.b16 %v1241, %v1240
        %v1285 = vpack.c.b16 %v1243, %v1242
        %v1286 = vpack.c.b16 %v1245, %v1244
        %v1287 = vpack.c.b16 %v1247, %v1246
        %v1288 = vpack.c.b16 %v1249, %v1248
        %v1289 = vpack.c.b16 %v1251, %v1250
        %v1290 = vpack.c.b16 %v1253, %v1252
        %v1291 = vpack.c.b16 %v1255, %v1254
        %v1292 = vpack.c.b16 %v1257, %v1256
        %v1293 = vpack.c.b16 %v1259, %v1258
        %v1294 = vpack.c.b16 %v1261, %v1260
        %v1295 = vpack.c.b16 %v1263, %v1262
        %v1296 = vpack.c.b16 %v1265, %v1264
        %v1297 = vpack.c.b16 %v1267, %v1266
        %v1298 = vpack.c.b16 %v1269, %v1268
        %v1299 = vpack.c.b16 %v1271, %v1270
        %v1300 = vpack.c.b16 %v1273, %v1272
        %v1301 = vpack.c.b16 %v1275, %v1274
        %v1302 = vpack.c.b16 %v1277, %v1276
        %v1303 = vpack.c.b16 %v1279, %v1278
        %1328 = vmatprep.subr.bf16.mxu0 0
        %1329 = vmatpush1.bf16.msra.mxu0 %v1280
        %1330 = vmatprep.subr.bf16.mxu0 0
        %1331 = vmatpush1.bf16.msra.mxu0 %v1281
        %1332 = vmatprep.subr.bf16.mxu0 0
        %1333 = vmatpush1.bf16.msra.mxu0 %v1282
        %1334 = vmatprep.subr.bf16.mxu0 0
        %1335 = vmatpush1.bf16.msra.mxu0 %v1283
        %1336 = vmatprep.subr.bf16.mxu0 0
        %1337 = vmatpush1.bf16.msra.mxu0 %v1284
        %1338 = vmatprep.subr.bf16.mxu0 0
        %1339 = vmatpush1.bf16.msra.mxu0 %v1285
        %1340 = vmatprep.subr.bf16.mxu0 0
        %1341 = vmatpush1.bf16.msra.mxu0 %v1286
        %1342 = vmatprep.subr.bf16.mxu0 0
        %1343 = vmatpush1.bf16.msra.mxu0 %v1287
        %1344 = vmatprep.subr.bf16.mxu0 0
        %1345 = vmatpush1.bf16.msra.mxu0 %v1288
        %1346 = vmatprep.subr.bf16.mxu0 0
        %1347 = vmatpush1.bf16.msra.mxu0 %v1289
        %1348 = vmatprep.subr.bf16.mxu0 0
        %1349 = vmatpush1.bf16.msra.mxu0 %v1290
        %1350 = vmatprep.subr.bf16.mxu0 0
        %1351 = vmatpush1.bf16.msra.mxu0 %v1291
        %1352 = vmatprep.subr.bf16.mxu0 0
        %1353 = vmatpush1.bf16.msra.mxu0 %v1292
        %1354 = vmatprep.subr.bf16.mxu0 0
        %1355 = vmatpush1.bf16.msra.mxu0 %v1293
        %1356 = vmatprep.subr.bf16.mxu0 0
        %1357 = vmatpush1.bf16.msra.mxu0 %v1294
        %1358 = vmatprep.subr.bf16.mxu0 0
        %1359 = vmatpush1.bf16.msra.mxu0 %v1295
        %1360 = vmatprep.mubr.bf16.mxu0 %v873
        %1361 = vmatmul.mubr.bf16.gmra.mrb[0].mxu0 %v681
        %v1362 = vpop.f32.mrb[0].mxu0
        %v1363 = vadd.f32 %v1182, %v1362
        %v1364 = vpop.f32.mrb[0].mxu0
        %v1365 = vpop.f32.mrb[0].mxu0
        %v1366 = vadd.f32 %v1182, %v1365
        %v1367 = vpop.f32.mrb[0].mxu0
        %1368 = vmatprep.mubr.bf16.mxu0 %v874
        %1369 = vmatmul.mubr.bf16.gmra.mrb[0].mxu0 %v682
        %v1370 = vpop.f32.mrb[0].mxu0
        %v1371 = vadd.f32 %v1182, %v1370
        %v1372 = vpop.f32.mrb[0].mxu0
        %v1373 = vpop.f32.mrb[0].mxu0
        %v1374 = vadd.f32 %v1182, %v1373
        %v1375 = vpop.f32.mrb[0].mxu0
        %1376 = vmatprep.mubr.bf16.mxu0 %v875
        %1377 = vmatmul.mubr.bf16.gmra.mrb[0].mxu0 %v683
        %v1378 = vpop.f32.mrb[0].mxu0
        %v1379 = vadd.f32 %v1182, %v1378
        %v1380 = vpop.f32.mrb[0].mxu0
        %v1381 = vpop.f32.mrb[0].mxu0
        %v1382 = vadd.f32 %v1182, %v1381
        %v1383 = vpop.f32.mrb[0].mxu0
        %1384 = vmatprep.mubr.bf16.mxu0 %v876
        %1385 = vmatmul.mubr.bf16.gmra.mrb[0].mxu0 %v684
        %v1386 = vpop.f32.mrb[0].mxu0
        %v1387 = vadd.f32 %v1182, %v1386
        %v1388 = vpop.f32.mrb[0].mxu0
        %v1389 = vpop.f32.mrb[0].mxu0
        %v1390 = vadd.f32 %v1182, %v1389
        %v1391 = vpop.f32.mrb[0].mxu0
        %1392 = vmatprep.mubr.bf16.mxu0 %v877
        %1393 = vmatmul.mubr.bf16.gmra.mrb[0].mxu0 %v685
        %v1394 = vpop.f32.mrb[0].mxu0
        %v1395 = vadd.f32 %v1182, %v1394
        %v1396 = vpop.f32.mrb[0].mxu0
        %v1397 = vpop.f32.mrb[0].mxu0
        %v1398 = vadd.f32 %v1182, %v1397
        %v1399 = vpop.f32.mrb[0].mxu0
        %1400 = vmatprep.mubr.bf16.mxu0 %v878
        %1401 = vmatmul.mubr.bf16.gmra.mrb[0].mxu0 %v686
        %v1402 = vpop.f32.mrb[0].mxu0
        %v1403 = vadd.f32 %v1182, %v1402
        %v1404 = vpop.f32.mrb[0].mxu0
        %v1405 = vpop.f32.mrb[0].mxu0
        %v1406 = vadd.f32 %v1182, %v1405
        %v1407 = vpop.f32.mrb[0].mxu0
        %1408 = vmatprep.mubr.bf16.mxu0 %v879
        %1409 = vmatmul.mubr.bf16.gmra.mrb[0].mxu0 %v687
        %v1410 = vpop.f32.mrb[0].mxu0
        %v1411 = vadd.f32 %v1182, %v1410
        %v1412 = vpop.f32.mrb[0].mxu0
        %v1413 = vpop.f32.mrb[0].mxu0
        %v1414 = vadd.f32 %v1182, %v1413
        %v1415 = vpop.f32.mrb[0].mxu0
        %1416 = vmatprep.mubr.bf16.mxu0 %v880
        %1417 = vmatmul.mubr.bf16.gmra.mrb[0].mxu0 %v688
        %v1418 = vpop.f32.mrb[0].mxu0
        %v1419 = vadd.f32 %v1182, %v1418
        %v1420 = vpop.f32.mrb[0].mxu0
        %v1421 = vpop.f32.mrb[0].mxu0
        %v1422 = vadd.f32 %v1182, %v1421
        %v1423 = vpop.f32.mrb[0].mxu0
        %1424 = vmatprep.mubr.bf16.mxu0 %v881
        %1425 = vmatmul.mubr.bf16.gmra.mrb[0].mxu0 %v689
        %v1426 = vpop.f32.mrb[0].mxu0
        %v1427 = vadd.f32 %v1182, %v1426
        %v1428 = vpop.f32.mrb[0].mxu0
        %v1429 = vpop.f32.mrb[0].mxu0
        %v1430 = vadd.f32 %v1182, %v1429
        %v1431 = vpop.f32.mrb[0].mxu0
        %1432 = vmatprep.mubr.bf16.mxu0 %v882
        %1433 = vmatmul.mubr.bf16.gmra.mrb[0].mxu0 %v690
        %v1434 = vpop.f32.mrb[0].mxu0
        %v1435 = vadd.f32 %v1182, %v1434
        %v1436 = vpop.f32.mrb[0].mxu0
        %v1437 = vpop.f32.mrb[0].mxu0
        %v1438 = vadd.f32 %v1182, %v1437
        %v1439 = vpop.f32.mrb[0].mxu0
        %1440 = vmatprep.mubr.bf16.mxu0 %v883
        %1441 = vmatmul.mubr.bf16.gmra.mrb[0].mxu0 %v691
        %v1442 = vpop.f32.mrb[0].mxu0
        %v1443 = vadd.f32 %v1182, %v1442
        %v1444 = vpop.f32.mrb[0].mxu0
        %v1445 = vpop.f32.mrb[0].mxu0
        %v1446 = vadd.f32 %v1182, %v1445
        %v1447 = vpop.f32.mrb[0].mxu0
        %1448 = vmatprep.mubr.bf16.mxu0 %v884
        %1449 = vmatmul.mubr.bf16.gmra.mrb[0].mxu0 %v692
        %v1450 = vpop.f32.mrb[0].mxu0
        %v1451 = vadd.f32 %v1182, %v1450
        %v1452 = vpop.f32.mrb[0].mxu0
        %v1453 = vpop.f32.mrb[0].mxu0
        %v1454 = vadd.f32 %v1182, %v1453
        %v1455 = vpop.f32.mrb[0].mxu0
        %1456 = vmatprep.mubr.bf16.mxu0 %v885
        %1457 = vmatmul.mubr.bf16.gmra.mrb[0].mxu0 %v693
        %v1458 = vpop.f32.mrb[0].mxu0
        %v1459 = vadd.f32 %v1182, %v1458
        %v1460 = vpop.f32.mrb[0].mxu0
        %v1461 = vpop.f32.mrb[0].mxu0
        %v1462 = vadd.f32 %v1182, %v1461
        %v1463 = vpop.f32.mrb[0].mxu0
        %1464 = vmatprep.mubr.bf16.mxu0 %v886
        %1465 = vmatmul.mubr.bf16.gmra.mrb[0].mxu0 %v694
        %v1466 = vpop.f32.mrb[0].mxu0
        %v1467 = vadd.f32 %v1182, %v1466
        %v1468 = vpop.f32.mrb[0].mxu0
        %v1469 = vpop.f32.mrb[0].mxu0
        %v1470 = vadd.f32 %v1182, %v1469
        %v1471 = vpop.f32.mrb[0].mxu0
        %1472 = vmatprep.mubr.bf16.mxu0 %v887
        %1473 = vmatmul.mubr.bf16.gmra.mrb[0].mxu0 %v695
        %v1474 = vpop.f32.mrb[0].mxu0
        %v1475 = vadd.f32 %v1182, %v1474
        %v1476 = vpop.f32.mrb[0].mxu0
        %v1477 = vpop.f32.mrb[0].mxu0
        %v1478 = vadd.f32 %v1182, %v1477
        %v1479 = vpop.f32.mrb[0].mxu0
        %1480 = vmatprep.mubr.bf16.mxu0 %v888
        %1481 = vmatmul.mubr.bf16.gmra.mrb[0].mxu0 %v696
        %v1482 = vpop.f32.mrb[0].mxu0
        %v1483 = vadd.f32 %v1182, %v1482
        %v1484 = vpop.f32.mrb[0].mxu0
        %v1485 = vpop.f32.mrb[0].mxu0
        %v1486 = vadd.f32 %v1182, %v1485
        %v1487 = vpop.f32.mrb[0].mxu0
        %1488 = vmatprep.mubr.bf16.mxu0 %v889
        %1489 = vmatmul.mubr.bf16.gmra.mrb[0].mxu0 %v697
        %v1490 = vpop.f32.mrb[0].mxu0
        %v1491 = vadd.f32 %v1182, %v1490
        %v1492 = vpop.f32.mrb[0].mxu0
        %v1493 = vpop.f32.mrb[0].mxu0
        %v1494 = vadd.f32 %v1182, %v1493
        %v1495 = vpop.f32.mrb[0].mxu0
        %1496 = vmatprep.mubr.bf16.mxu0 %v890
        %1497 = vmatmul.mubr.bf16.gmra.mrb[0].mxu0 %v698
        %v1498 = vpop.f32.mrb[0].mxu0
        %v1499 = vadd.f32 %v1182, %v1498
        %v1500 = vpop.f32.mrb[0].mxu0
        %v1501 = vpop.f32.mrb[0].mxu0
        %v1502 = vadd.f32 %v1182, %v1501
        %v1503 = vpop.f32.mrb[0].mxu0
        %1504 = vmatprep.mubr.bf16.mxu0 %v891
        %1505 = vmatmul.mubr.bf16.gmra.mrb[0].mxu0 %v699
        %v1506 = vpop.f32.mrb[0].mxu0
        %v1507 = vadd.f32 %v1182, %v1506
        %v1508 = vpop.f32.mrb[0].mxu0
        %v1509 = vpop.f32.mrb[0].mxu0
        %v1510 = vadd.f32 %v1182, %v1509
        %v1511 = vpop.f32.mrb[0].mxu0
        %1512 = vmatprep.mubr.bf16.mxu0 %v892
        %1513 = vmatmul.mubr.bf16.gmra.mrb[0].mxu0 %v700
        %v1514 = vpop.f32.mrb[0].mxu0
        %v1515 = vadd.f32 %v1182, %v1514
        %v1516 = vpop.f32.mrb[0].mxu0
        %v1517 = vpop.f32.mrb[0].mxu0
        %v1518 = vadd.f32 %v1182, %v1517
        %v1519 = vpop.f32.mrb[0].mxu0
        %1520 = vmatprep.mubr.bf16.mxu0 %v893
        %1521 = vmatmul.mubr.bf16.gmra.mrb[0].mxu0 %v701
        %v1522 = vpop.f32.mrb[0].mxu0
        %v1523 = vadd.f32 %v1182, %v1522
        %v1524 = vpop.f32.mrb[0].mxu0
        %v1525 = vpop.f32.mrb[0].mxu0
        %v1526 = vadd.f32 %v1182, %v1525
        %v1527 = vpop.f32.mrb[0].mxu0
        %1528 = vmatprep.mubr.bf16.mxu0 %v894
        %1529 = vmatmul.mubr.bf16.gmra.mrb[0].mxu0 %v702
        %v1530 = vpop.f32.mrb[0].mxu0
        %v1531 = vadd.f32 %v1182, %v1530
        %v1532 = vpop.f32.mrb[0].mxu0
        %v1533 = vpop.f32.mrb[0].mxu0
        %v1534 = vadd.f32 %v1182, %v1533
        %v1535 = vpop.f32.mrb[0].mxu0
        %1536 = vmatprep.mubr.bf16.mxu0 %v895
        %1537 = vmatmul.mubr.bf16.gmra.mrb[0].mxu0 %v703
        %v1538 = vpop.f32.mrb[0].mxu0
        %v1539 = vadd.f32 %v1182, %v1538
        %v1540 = vpop.f32.mrb[0].mxu0
        %v1541 = vpop.f32.mrb[0].mxu0
        %v1542 = vadd.f32 %v1182, %v1541
        %v1543 = vpop.f32.mrb[0].mxu0
        %1544 = vmatprep.mubr.bf16.mxu0 %v896
        %1545 = vmatmul.mubr.bf16.gmra.mrb[0].mxu0 %v704
        %v1546 = vpop.f32.mrb[0].mxu0
        %v1547 = vadd.f32 %v1182, %v1546
        %v1548 = vpop.f32.mrb[0].mxu0
        %v1549 = vpop.f32.mrb[0].mxu0
        %v1550 = vadd.f32 %v1182, %v1549
        %v1551 = vpop.f32.mrb[0].mxu0
        %1552 = vmatprep.mubr.bf16.mxu0 %v897
        %1553 = vmatmul.mubr.bf16.gmra.mrb[0].mxu0 %v705
        %v1554 = vpop.f32.mrb[0].mxu0
        %v1555 = vadd.f32 %v1182, %v1554
        %v1556 = vpop.f32.mrb[0].mxu0
        %v1557 = vpop.f32.mrb[0].mxu0
        %v1558 = vadd.f32 %v1182, %v1557
        %v1559 = vpop.f32.mrb[0].mxu0
        %1560 = vmatprep.mubr.bf16.mxu0 %v898
        %1561 = vmatmul.mubr.bf16.gmra.mrb[0].mxu0 %v706
        %v1562 = vpop.f32.mrb[0].mxu0
        %v1563 = vadd.f32 %v1182, %v1562
        %v1564 = vpop.f32.mrb[0].mxu0
        %v1565 = vpop.f32.mrb[0].mxu0
        %v1566 = vadd.f32 %v1182, %v1565
        %v1567 = vpop.f32.mrb[0].mxu0
        %1568 = vmatprep.mubr.bf16.mxu0 %v899
        %1569 = vmatmul.mubr.bf16.gmra.mrb[0].mxu0 %v707
        %v1570 = vpop.f32.mrb[0].mxu0
        %v1571 = vadd.f32 %v1182, %v1570
        %v1572 = vpop.f32.mrb[0].mxu0
        %v1573 = vpop.f32.mrb[0].mxu0
        %v1574 = vadd.f32 %v1182, %v1573
        %v1575 = vpop.f32.mrb[0].mxu0
        %1576 = vmatprep.mubr.bf16.mxu0 %v900
        %1577 = vmatmul.mubr.bf16.gmra.mrb[0].mxu0 %v708
        %v1578 = vpop.f32.mrb[0].mxu0
        %v1579 = vadd.f32 %v1182, %v1578
        %v1580 = vpop.f32.mrb[0].mxu0
        %v1581 = vpop.f32.mrb[0].mxu0
        %v1582 = vadd.f32 %v1182, %v1581
        %v1583 = vpop.f32.mrb[0].mxu0
        %1584 = vmatprep.mubr.bf16.mxu0 %v901
        %1585 = vmatmul.mubr.bf16.gmra.mrb[0].mxu0 %v709
        %v1586 = vpop.f32.mrb[0].mxu0
        %v1587 = vadd.f32 %v1182, %v1586
        %v1588 = vpop.f32.mrb[0].mxu0
        %v1589 = vpop.f32.mrb[0].mxu0
        %v1590 = vadd.f32 %v1182, %v1589
        %v1591 = vpop.f32.mrb[0].mxu0
        %1592 = vmatprep.mubr.bf16.mxu0 %v902
        %1593 = vmatmul.mubr.bf16.gmra.mrb[0].mxu0 %v710
        %v1594 = vpop.f32.mrb[0].mxu0
        %v1595 = vadd.f32 %v1182, %v1594
        %v1596 = vpop.f32.mrb[0].mxu0
        %v1597 = vpop.f32.mrb[0].mxu0
        %v1598 = vadd.f32 %v1182, %v1597
        %v1599 = vpop.f32.mrb[0].mxu0
        %1600 = vmatprep.mubr.bf16.mxu0 %v903
        %1601 = vmatmul.mubr.bf16.gmra.mrb[0].mxu0 %v711
        %v1602 = vpop.f32.mrb[0].mxu0
        %v1603 = vadd.f32 %v1182, %v1602
        %v1604 = vpop.f32.mrb[0].mxu0
        %v1605 = vpop.f32.mrb[0].mxu0
        %v1606 = vadd.f32 %v1182, %v1605
        %v1607 = vpop.f32.mrb[0].mxu0
        %1608 = vmatprep.mubr.bf16.mxu0 %v904
        %1609 = vmatmul.mubr.bf16.gmra.mrb[0].mxu0 %v712
        %v1610 = vpop.f32.mrb[0].mxu0
        %v1611 = vadd.f32 %v1182, %v1610
        %v1612 = vpop.f32.mrb[0].mxu0
        %v1613 = vpop.f32.mrb[0].mxu0
        %v1614 = vadd.f32 %v1182, %v1613
        %v1615 = vpop.f32.mrb[0].mxu0
        %1616 = vdwg.mxu0
        %1617 = vmatprep.subr.bf16.mxu0 0
        %1618 = vmatpush1.bf16.msra.mxu0 %v1296
        %1619 = vmatprep.subr.bf16.mxu0 0
        %1620 = vmatpush1.bf16.msra.mxu0 %v1297
        %1621 = vmatprep.subr.bf16.mxu0 0
        %1622 = vmatpush1.bf16.msra.mxu0 %v1298
        %1623 = vmatprep.subr.bf16.mxu0 0
        %1624 = vmatpush1.bf16.msra.mxu0 %v1299
        %1625 = vmatprep.subr.bf16.mxu0 0
        %1626 = vmatpush1.bf16.msra.mxu0 %v1300
        %1627 = vmatprep.subr.bf16.mxu0 0
        %1628 = vmatpush1.bf16.msra.mxu0 %v1301
        %1629 = vmatprep.subr.bf16.mxu0 0
        %1630 = vmatpush1.bf16.msra.mxu0 %v1302
        %1631 = vmatprep.subr.bf16.mxu0 0
        %1632 = vmatpush1.bf16.msra.mxu0 %v1303
        %1633 = vmatprep.subr.bf16.mxu0 0
        %1634 = vmatpush1.bf16.msra.mxu0 0
        %1635 = vmatprep.subr.bf16.mxu0 0
        %1636 = vmatpush1.bf16.msra.mxu0 0
        %1637 = vmatprep.subr.bf16.mxu0 0
        %1638 = vmatpush1.bf16.msra.mxu0 0
        %1639 = vmatprep.subr.bf16.mxu0 0
        %1640 = vmatpush1.bf16.msra.mxu0 0
        %1641 = vmatprep.subr.bf16.mxu0 0
        %1642 = vmatpush1.bf16.msra.mxu0 0
        %1643 = vmatprep.subr.bf16.mxu0 0
        %1644 = vmatpush1.bf16.msra.mxu0 0
        %1645 = vmatprep.subr.bf16.mxu0 0
        %1646 = vmatpush1.bf16.msra.mxu0 0
        %1647 = vmatprep.subr.bf16.mxu0 0
        %1648 = vmatpush1.bf16.msra.mxu0 0
        %1649 = vmatprep.mubr.bf16.mxu0 0
        %1650 = vmatmul.mubr.bf16.gmra.mrb[0].mxu0 %v1065
        %v1651 = vpop.f32.mrb[0].mxu0
        %v1652 = vadd.f32 %v1363, %v1651
        %v1653 = vpop.f32.mrb[0].mxu0
        %v1654 = vpop.f32.mrb[0].mxu0
        %v1655 = vadd.f32 %v1366, %v1654
        %v1656 = vpop.f32.mrb[0].mxu0
        %1657 = vmatprep.mubr.bf16.mxu0 0
        %1658 = vmatmul.mubr.bf16.gmra.mrb[0].mxu0 %v1066
        %v1659 = vpop.f32.mrb[0].mxu0
        %v1660 = vadd.f32 %v1371, %v1659
        %v1661 = vpop.f32.mrb[0].mxu0
        %v1662 = vpop.f32.mrb[0].mxu0
        %v1663 = vadd.f32 %v1374, %v1662
        %v1664 = vpop.f32.mrb[0].mxu0
        %1665 = vmatprep.mubr.bf16.mxu0 0
        %1666 = vmatmul.mubr.bf16.gmra.mrb[0].mxu0 %v1067
        %v1667 = vpop.f32.mrb[0].mxu0
        %v1668 = vadd.f32 %v1379, %v1667
        %v1669 = vpop.f32.mrb[0].mxu0
        %v1670 = vpop.f32.mrb[0].mxu0
        %v1671 = vadd.f32 %v1382, %v1670
        %v1672 = vpop.f32.mrb[0].mxu0
        %1673 = vmatprep.mubr.bf16.mxu0 0
        %1674 = vmatmul.mubr.bf16.gmra.mrb[0].mxu0 %v1068
        %v1675 = vpop.f32.mrb[0].mxu0
        %v1676 = vadd.f32 %v1387, %v1675
        %v1677 = vpop.f32.mrb[0].mxu0
        %v1678 = vpop.f32.mrb[0].mxu0
        %v1679 = vadd.f32 %v1390, %v1678
        %v1680 = vpop.f32.mrb[0].mxu0
        %1681 = vmatprep.mubr.bf16.mxu0 0
        %1682 = vmatmul.mubr.bf16.gmra.mrb[0].mxu0 %v1069
        %v1683 = vpop.f32.mrb[0].mxu0
        %v1684 = vadd.f32 %v1395, %v1683
        %v1685 = vpop.f32.mrb[0].mxu0
        %v1686 = vpop.f32.mrb[0].mxu0
        %v1687 = vadd.f32 %v1398, %v1686
        %v1688 = vpop.f32.mrb[0].mxu0
        %1689 = vmatprep.mubr.bf16.mxu0 0
        %1690 = vmatmul.mubr.bf16.gmra.mrb[0].mxu0 %v1070
        %v1691 = vpop.f32.mrb[0].mxu0
        %v1692 = vadd.f32 %v1403, %v1691
        %v1693 = vpop.f32.mrb[0].mxu0
        %v1694 = vpop.f32.mrb[0].mxu0
        %v1695 = vadd.f32 %v1406, %v1694
        %v1696 = vpop.f32.mrb[0].mxu0
        %1697 = vmatprep.mubr.bf16.mxu0 0
        %1698 = vmatmul.mubr.bf16.gmra.mrb[0].mxu0 %v1071
        %v1699 = vpop.f32.mrb[0].mxu0
        %v1700 = vadd.f32 %v1411, %v1699
        %v1701 = vpop.f32.mrb[0].mxu0
        %v1702 = vpop.f32.mrb[0].mxu0
        %v1703 = vadd.f32 %v1414, %v1702
        %v1704 = vpop.f32.mrb[0].mxu0
        %1705 = vmatprep.mubr.bf16.mxu0 0
        %1706 = vmatmul.mubr.bf16.gmra.mrb[0].mxu0 %v1072
        %v1707 = vpop.f32.mrb[0].mxu0
        %v1708 = vadd.f32 %v1419, %v1707
        %v1709 = vpop.f32.mrb[0].mxu0
        %v1710 = vpop.f32.mrb[0].mxu0
        %v1711 = vadd.f32 %v1422, %v1710
        %v1712 = vpop.f32.mrb[0].mxu0
        %1713 = vmatprep.mubr.bf16.mxu0 0
        %1714 = vmatmul.mubr.bf16.gmra.mrb[0].mxu0 %v1073
        %v1715 = vpop.f32.mrb[0].mxu0
        %v1716 = vadd.f32 %v1427, %v1715
        %v1717 = vpop.f32.mrb[0].mxu0
        %v1718 = vpop.f32.mrb[0].mxu0
        %v1719 = vadd.f32 %v1430, %v1718
        %v1720 = vpop.f32.mrb[0].mxu0
        %1721 = vmatprep.mubr.bf16.mxu0 0
        %1722 = vmatmul.mubr.bf16.gmra.mrb[0].mxu0 %v1074
        %v1723 = vpop.f32.mrb[0].mxu0
        %v1724 = vadd.f32 %v1435, %v1723
        %v1725 = vpop.f32.mrb[0].mxu0
        %v1726 = vpop.f32.mrb[0].mxu0
        %v1727 = vadd.f32 %v1438, %v1726
        %v1728 = vpop.f32.mrb[0].mxu0
        %1729 = vmatprep.mubr.bf16.mxu0 0
        %1730 = vmatmul.mubr.bf16.gmra.mrb[0].mxu0 %v1075
        %v1731 = vpop.f32.mrb[0].mxu0
        %v1732 = vadd.f32 %v1443, %v1731
        %v1733 = vpop.f32.mrb[0].mxu0
        %v1734 = vpop.f32.mrb[0].mxu0
        %v1735 = vadd.f32 %v1446, %v1734
        %v1736 = vpop.f32.mrb[0].mxu0
        %1737 = vmatprep.mubr.bf16.mxu0 0
        %1738 = vmatmul.mubr.bf16.gmra.mrb[0].mxu0 %v1076
        %v1739 = vpop.f32.mrb[0].mxu0
        %v1740 = vadd.f32 %v1451, %v1739
        %v1741 = vpop.f32.mrb[0].mxu0
        %v1742 = vpop.f32.mrb[0].mxu0
        %v1743 = vadd.f32 %v1454, %v1742
        %v1744 = vpop.f32.mrb[0].mxu0
        %1745 = vmatprep.mubr.bf16.mxu0 0
        %1746 = vmatmul.mubr.bf16.gmra.mrb[0].mxu0 %v1077
        %v1747 = vpop.f32.mrb[0].mxu0
        %v1748 = vadd.f32 %v1459, %v1747
        %v1749 = vpop.f32.mrb[0].mxu0
        %v1750 = vpop.f32.mrb[0].mxu0
        %v1751 = vadd.f32 %v1462, %v1750
        %v1752 = vpop.f32.mrb[0].mxu0
        %1753 = vmatprep.mubr.bf16.mxu0 0
        %1754 = vmatmul.mubr.bf16.gmra.mrb[0].mxu0 %v1078
        %v1755 = vpop.f32.mrb[0].mxu0
        %v1756 = vadd.f32 %v1467, %v1755
        %v1757 = vpop.f32.mrb[0].mxu0
        %v1758 = vpop.f32.mrb[0].mxu0
        %v1759 = vadd.f32 %v1470, %v1758
        %v1760 = vpop.f32.mrb[0].mxu0
        %1761 = vmatprep.mubr.bf16.mxu0 0
        %1762 = vmatmul.mubr.bf16.gmra.mrb[0].mxu0 %v1079
        %v1763 = vpop.f32.mrb[0].mxu0
        %v1764 = vadd.f32 %v1475, %v1763
        %v1765 = vpop.f32.mrb[0].mxu0
        %v1766 = vpop.f32.mrb[0].mxu0
        %v1767 = vadd.f32 %v1478, %v1766
        %v1768 = vpop.f32.mrb[0].mxu0
        %1769 = vmatprep.mubr.bf16.mxu0 0
        %1770 = vmatmul.mubr.bf16.gmra.mrb[0].mxu0 %v1080
        %v1771 = vpop.f32.mrb[0].mxu0
        %v1772 = vadd.f32 %v1483, %v1771
        %v1773 = vpop.f32.mrb[0].mxu0
        %v1774 = vpop.f32.mrb[0].mxu0
        %v1775 = vadd.f32 %v1486, %v1774
        %v1776 = vpop.f32.mrb[0].mxu0
        %1777 = vmatprep.mubr.bf16.mxu0 0
        %1778 = vmatmul.mubr.bf16.gmra.mrb[0].mxu0 %v1081
        %v1779 = vpop.f32.mrb[0].mxu0
        %v1780 = vadd.f32 %v1491, %v1779
        %v1781 = vpop.f32.mrb[0].mxu0
        %v1782 = vpop.f32.mrb[0].mxu0
        %v1783 = vadd.f32 %v1494, %v1782
        %v1784 = vpop.f32.mrb[0].mxu0
        %1785 = vmatprep.mubr.bf16.mxu0 0
        %1786 = vmatmul.mubr.bf16.gmra.mrb[0].mxu0 %v1082
        %v1787 = vpop.f32.mrb[0].mxu0
        %v1788 = vadd.f32 %v1499, %v1787
        %v1789 = vpop.f32.mrb[0].mxu0
        %v1790 = vpop.f32.mrb[0].mxu0
        %v1791 = vadd.f32 %v1502, %v1790
        %v1792 = vpop.f32.mrb[0].mxu0
        %1793 = vmatprep.mubr.bf16.mxu0 0
        %1794 = vmatmul.mubr.bf16.gmra.mrb[0].mxu0 %v1083
        %v1795 = vpop.f32.mrb[0].mxu0
        %v1796 = vadd.f32 %v1507, %v1795
        %v1797 = vpop.f32.mrb[0].mxu0
        %v1798 = vpop.f32.mrb[0].mxu0
        %v1799 = vadd.f32 %v1510, %v1798
        %v1800 = vpop.f32.mrb[0].mxu0
        %1801 = vmatprep.mubr.bf16.mxu0 0
        %1802 = vmatmul.mubr.bf16.gmra.mrb[0].mxu0 %v1084
        %v1803 = vpop.f32.mrb[0].mxu0
        %v1804 = vadd.f32 %v1515, %v1803
        %v1805 = vpop.f32.mrb[0].mxu0
        %v1806 = vpop.f32.mrb[0].mxu0
        %v1807 = vadd.f32 %v1518, %v1806
        %v1808 = vpop.f32.mrb[0].mxu0
        %1809 = vmatprep.mubr.bf16.mxu0 0
        %1810 = vmatmul.mubr.bf16.gmra.mrb[0].mxu0 %v1085
        %v1811 = vpop.f32.mrb[0].mxu0
        %v1812 = vadd.f32 %v1523, %v1811
        %v1813 = vpop.f32.mrb[0].mxu0
        %v1814 = vpop.f32.mrb[0].mxu0
        %v1815 = vadd.f32 %v1526, %v1814
        %v1816 = vpop.f32.mrb[0].mxu0
        %1817 = vmatprep.mubr.bf16.mxu0 0
        %1818 = vmatmul.mubr.bf16.gmra.mrb[0].mxu0 %v1086
        %v1819 = vpop.f32.mrb[0].mxu0
        %v1820 = vadd.f32 %v1531, %v1819
        %v1821 = vpop.f32.mrb[0].mxu0
        %v1822 = vpop.f32.mrb[0].mxu0
        %v1823 = vadd.f32 %v1534, %v1822
        %v1824 = vpop.f32.mrb[0].mxu0
        %1825 = vmatprep.mubr.bf16.mxu0 0
        %1826 = vmatmul.mubr.bf16.gmra.mrb[0].mxu0 %v1087
        %v1827 = vpop.f32.mrb[0].mxu0
        %v1828 = vadd.f32 %v1539, %v1827
        %v1829 = vpop.f32.mrb[0].mxu0
        %v1830 = vpop.f32.mrb[0].mxu0
        %v1831 = vadd.f32 %v1542, %v1830
        %v1832 = vpop.f32.mrb[0].mxu0
        %1833 = vmatprep.mubr.bf16.mxu0 0
        %1834 = vmatmul.mubr.bf16.gmra.mrb[0].mxu0 %v1088
        %v1835 = vpop.f32.mrb[0].mxu0
        %v1836 = vadd.f32 %v1547, %v1835
        %v1837 = vpop.f32.mrb[0].mxu0
        %v1838 = vpop.f32.mrb[0].mxu0
        %v1839 = vadd.f32 %v1550, %v1838
        %v1840 = vpop.f32.mrb[0].mxu0
        %1841 = vmatprep.mubr.bf16.mxu0 0
        %1842 = vmatmul.mubr.bf16.gmra.mrb[0].mxu0 %v1089
        %v1843 = vpop.f32.mrb[0].mxu0
        %v1844 = vadd.f32 %v1555, %v1843
        %v1845 = vpop.f32.mrb[0].mxu0
        %v1846 = vpop.f32.mrb[0].mxu0
        %v1847 = vadd.f32 %v1558, %v1846
        %v1848 = vpop.f32.mrb[0].mxu0
        %1849 = vmatprep.mubr.bf16.mxu0 0
        %1850 = vmatmul.mubr.bf16.gmra.mrb[0].mxu0 %v1090
        %v1851 = vpop.f32.mrb[0].mxu0
        %v1852 = vadd.f32 %v1563, %v1851
        %v1853 = vpop.f32.mrb[0].mxu0
        %v1854 = vpop.f32.mrb[0].mxu0
        %v1855 = vadd.f32 %v1566, %v1854
        %v1856 = vpop.f32.mrb[0].mxu0
        %1857 = vmatprep.mubr.bf16.mxu0 0
        %1858 = vmatmul.mubr.bf16.gmra.mrb[0].mxu0 %v1091
        %v1859 = vpop.f32.mrb[0].mxu0
        %v1860 = vadd.f32 %v1571, %v1859
        %v1861 = vpop.f32.mrb[0].mxu0
        %v1862 = vpop.f32.mrb[0].mxu0
        %v1863 = vadd.f32 %v1574, %v1862
        %v1864 = vpop.f32.mrb[0].mxu0
        %1865 = vmatprep.mubr.bf16.mxu0 0
        %1866 = vmatmul.mubr.bf16.gmra.mrb[0].mxu0 %v1092
        %v1867 = vpop.f32.mrb[0].mxu0
        %v1868 = vadd.f32 %v1579, %v1867
        %v1869 = vpop.f32.mrb[0].mxu0
        %v1870 = vpop.f32.mrb[0].mxu0
        %v1871 = vadd.f32 %v1582, %v1870
        %v1872 = vpop.f32.mrb[0].mxu0
        %1873 = vmatprep.mubr.bf16.mxu0 0
        %1874 = vmatmul.mubr.bf16.gmra.mrb[0].mxu0 %v1093
        %v1875 = vpop.f32.mrb[0].mxu0
        %v1876 = vadd.f32 %v1587, %v1875
        %v1877 = vpop.f32.mrb[0].mxu0
        %v1878 = vpop.f32.mrb[0].mxu0
        %v1879 = vadd.f32 %v1590, %v1878
        %v1880 = vpop.f32.mrb[0].mxu0
        %1881 = vmatprep.mubr.bf16.mxu0 0
        %1882 = vmatmul.mubr.bf16.gmra.mrb[0].mxu0 %v1094
        %v1883 = vpop.f32.mrb[0].mxu0
        %v1884 = vadd.f32 %v1595, %v1883
        %v1885 = vpop.f32.mrb[0].mxu0
        %v1886 = vpop.f32.mrb[0].mxu0
        %v1887 = vadd.f32 %v1598, %v1886
        %v1888 = vpop.f32.mrb[0].mxu0
        %1889 = vmatprep.mubr.bf16.mxu0 0
        %1890 = vmatmul.mubr.bf16.gmra.mrb[0].mxu0 %v1095
        %v1891 = vpop.f32.mrb[0].mxu0
        %v1892 = vadd.f32 %v1603, %v1891
        %v1893 = vpop.f32.mrb[0].mxu0
        %v1894 = vpop.f32.mrb[0].mxu0
        %v1895 = vadd.f32 %v1606, %v1894
        %v1896 = vpop.f32.mrb[0].mxu0
        %1897 = vmatprep.mubr.bf16.mxu0 0
        %1898 = vmatmul.mubr.bf16.gmra.mrb[0].mxu0 %v1096
        %v1899 = vpop.f32.mrb[0].mxu0
        %v1900 = vadd.f32 %v1611, %v1899
        %v1901 = vpop.f32.mrb[0].mxu0
        %v1902 = vpop.f32.mrb[0].mxu0
        %v1903 = vadd.f32 %v1614, %v1902
        %v1904 = vpop.f32.mrb[0].mxu0
        %1905 = vdwg.mxu0
        %v1906 = vmax.f32 %v1652, 0.0
        %v1907 = vmax.f32 %v1655, 0.0
        %v1908 = vmax.f32 %v1660, 0.0
        %v1909 = vmax.f32 %v1663, 0.0
        %v1910 = vmax.f32 %v1668, 0.0
        %v1911 = vmax.f32 %v1671, 0.0
        %v1912 = vmax.f32 %v1676, 0.0
        %v1913 = vmax.f32 %v1679, 0.0
        %v1914 = vmax.f32 %v1684, 0.0
        %v1915 = vmax.f32 %v1687, 0.0
        %v1916 = vmax.f32 %v1692, 0.0
        %v1917 = vmax.f32 %v1695, 0.0
        %v1918 = vmax.f32 %v1700, 0.0
        %v1919 = vmax.f32 %v1703, 0.0
        %v1920 = vmax.f32 %v1708, 0.0
        %v1921 = vmax.f32 %v1711, 0.0
        %v1922 = vmax.f32 %v1716, 0.0
        %v1923 = vmax.f32 %v1719, 0.0
        %v1924 = vmax.f32 %v1724, 0.0
        %v1925 = vmax.f32 %v1727, 0.0
        %v1926 = vmax.f32 %v1732, 0.0
        %v1927 = vmax.f32 %v1735, 0.0
        %v1928 = vmax.f32 %v1740, 0.0
        %v1929 = vmax.f32 %v1743, 0.0
        %v1930 = vmax.f32 %v1748, 0.0
        %v1931 = vmax.f32 %v1751, 0.0
        %v1932 = vmax.f32 %v1756, 0.0
        %v1933 = vmax.f32 %v1759, 0.0
        %v1934 = vmax.f32 %v1764, 0.0
        %v1935 = vmax.f32 %v1767, 0.0
        %v1936 = vmax.f32 %v1772, 0.0
        %v1937 = vmax.f32 %v1775, 0.0
        %v1938 = vmax.f32 %v1780, 0.0
        %v1939 = vmax.f32 %v1783, 0.0
        %v1940 = vmax.f32 %v1788, 0.0
        %v1941 = vmax.f32 %v1791, 0.0
        %v1942 = vmax.f32 %v1796, 0.0
        %v1943 = vmax.f32 %v1799, 0.0
        %v1944 = vmax.f32 %v1804, 0.0
        %v1945 = vmax.f32 %v1807, 0.0
        %v1946 = vmax.f32 %v1812, 0.0
        %v1947 = vmax.f32 %v1815, 0.0
        %v1948 = vmax.f32 %v1820, 0.0
        %v1949 = vmax.f32 %v1823, 0.0
        %v1950 = vmax.f32 %v1828, 0.0
        %v1951 = vmax.f32 %v1831, 0.0
        %v1952 = vmax.f32 %v1836, 0.0
        %v1953 = vmax.f32 %v1839, 0.0
        %v1954 = vmax.f32 %v1844, 0.0
        %v1955 = vmax.f32 %v1847, 0.0
        %v1956 = vmax.f32 %v1852, 0.0
        %v1957 = vmax.f32 %v1855, 0.0
        %v1958 = vmax.f32 %v1860, 0.0
        %v1959 = vmax.f32 %v1863, 0.0
        %v1960 = vmax.f32 %v1868, 0.0
        %v1961 = vmax.f32 %v1871, 0.0
        %v1962 = vmax.f32 %v1876, 0.0
        %v1963 = vmax.f32 %v1879, 0.0
        %v1964 = vmax.f32 %v1884, 0.0
        %v1965 = vmax.f32 %v1887, 0.0
        %v1966 = vmax.f32 %v1892, 0.0
        %v1967 = vmax.f32 %v1895, 0.0
        %v1968 = vmax.f32 %v1900, 0.0
        %v1969 = vmax.f32 %v1903, 0.0
        %v1970 = vpack.c.bf16 %v1907, %v1906
        %v1971 = vpack.c.bf16 %v1909, %v1908
        %v1972 = vpack.c.bf16 %v1911, %v1910
        %v1973 = vpack.c.bf16 %v1913, %v1912
        %v1974 = vpack.c.bf16 %v1915, %v1914
        %v1975 = vpack.c.bf16 %v1917, %v1916
        %v1976 = vpack.c.bf16 %v1919, %v1918
        %v1977 = vpack.c.bf16 %v1921, %v1920
        %v1978 = vpack.c.bf16 %v1923, %v1922
        %v1979 = vpack.c.bf16 %v1925, %v1924
        %v1980 = vpack.c.bf16 %v1927, %v1926
        %v1981 = vpack.c.bf16 %v1929, %v1928
        %v1982 = vpack.c.bf16 %v1931, %v1930
        %v1983 = vpack.c.bf16 %v1933, %v1932
        %v1984 = vpack.c.bf16 %v1935, %v1934
        %v1985 = vpack.c.bf16 %v1937, %v1936
        %v1986 = vpack.c.bf16 %v1939, %v1938
        %v1987 = vpack.c.bf16 %v1941, %v1940
        %v1988 = vpack.c.bf16 %v1943, %v1942
        %v1989 = vpack.c.bf16 %v1945, %v1944
        %v1990 = vpack.c.bf16 %v1947, %v1946
        %v1991 = vpack.c.bf16 %v1949, %v1948
        %v1992 = vpack.c.bf16 %v1951, %v1950
        %v1993 = vpack.c.bf16 %v1953, %v1952
        %v1994 = vpack.c.bf16 %v1955, %v1954
        %v1995 = vpack.c.bf16 %v1957, %v1956
        %v1996 = vpack.c.bf16 %v1959, %v1958
        %v1997 = vpack.c.bf16 %v1961, %v1960
        %v1998 = vpack.c.bf16 %v1963, %v1962
        %v1999 = vpack.c.bf16 %v1965, %v1964
        %v2000 = vpack.c.bf16 %v1967, %v1966
        %v2001 = vpack.c.bf16 %v1969, %v1968
        %v2034 = vunpack.c.l.b16 %v1970
        %v2035 = vunpack.c.h.b16 %v1970
        %v2036 = vunpack.c.l.b16 %v1971
        %v2037 = vunpack.c.h.b16 %v1971
        %v2038 = vunpack.c.l.b16 %v1972
        %v2039 = vunpack.c.h.b16 %v1972
        %v2040 = vunpack.c.l.b16 %v1973
        %v2041 = vunpack.c.h.b16 %v1973
        %v2042 = vunpack.c.l.b16 %v1974
        %v2043 = vunpack.c.h.b16 %v1974
        %v2044 = vunpack.c.l.b16 %v1975
        %v2045 = vunpack.c.h.b16 %v1975
        %v2046 = vunpack.c.l.b16 %v1976
        %v2047 = vunpack.c.h.b16 %v1976
        %v2048 = vunpack.c.l.b16 %v1977
        %v2049 = vunpack.c.h.b16 %v1977
        %v2050 = vunpack.c.l.b16 %v1978
        %v2051 = vunpack.c.h.b16 %v1978
        %v2052 = vunpack.c.l.b16 %v1979
        %v2053 = vunpack.c.h.b16 %v1979
        %v2054 = vunpack.c.l.b16 %v1980
        %v2055 = vunpack.c.h.b16 %v1980
        %v2056 = vunpack.c.l.b16 %v1981
        %v2057 = vunpack.c.h.b16 %v1981
        %v2058 = vunpack.c.l.b16 %v1982
        %v2059 = vunpack.c.h.b16 %v1982
        %v2060 = vunpack.c.l.b16 %v1983
        %v2061 = vunpack.c.h.b16 %v1983
        %v2062 = vunpack.c.l.b16 %v1984
        %v2063 = vunpack.c.h.b16 %v1984
        %v2064 = vunpack.c.l.b16 %v1985
        %v2065 = vunpack.c.h.b16 %v1985
        %v2066 = vunpack.c.l.b16 %v1986
        %v2067 = vunpack.c.h.b16 %v1986
        %v2068 = vunpack.c.l.b16 %v1987
        %v2069 = vunpack.c.h.b16 %v1987
        %v2070 = vunpack.c.l.b16 %v1988
        %v2071 = vunpack.c.h.b16 %v1988
        %v2072 = vunpack.c.l.b16 %v1989
        %v2073 = vunpack.c.h.b16 %v1989
        %v2074 = vunpack.c.l.b16 %v1990
        %v2075 = vunpack.c.h.b16 %v1990
        %v2076 = vunpack.c.l.b16 %v1991
        %v2077 = vunpack.c.h.b16 %v1991
        %v2078 = vunpack.c.l.b16 %v1992
        %v2079 = vunpack.c.h.b16 %v1992
        %v2080 = vunpack.c.l.b16 %v1993
        %v2081 = vunpack.c.h.b16 %v1993
        %v2082 = vunpack.c.l.b16 %v1994
        %v2083 = vunpack.c.h.b16 %v1994
        %v2084 = vunpack.c.l.b16 %v1995
        %v2085 = vunpack.c.h.b16 %v1995
        %v2086 = vunpack.c.l.b16 %v1996
        %v2087 = vunpack.c.h.b16 %v1996
        %v2088 = vunpack.c.l.b16 %v1997
        %v2089 = vunpack.c.h.b16 %v1997
        %v2090 = vunpack.c.l.b16 %v1998
        %v2091 = vunpack.c.h.b16 %v1998
        %v2092 = vunpack.c.l.b16 %v1999
        %v2093 = vunpack.c.h.b16 %v1999
        %v2094 = vunpack.c.l.b16 %v2000
        %v2095 = vunpack.c.h.b16 %v2000
        %v2096 = vunpack.c.l.b16 %v2001
        %v2097 = vunpack.c.h.b16 %v2001
        %v2098 = vpack.c.b16 %v2034, %v2034
        %v2099 = vpack.c.b16 %v2035, %v2035
        %v2100 = vpack.c.b16 %v2036, %v2036
        %v2101 = vpack.c.b16 %v2037, %v2037
        %v2102 = vpack.c.b16 %v2038, %v2038
        %v2103 = vpack.c.b16 %v2039, %v2039
        %v2104 = vpack.c.b16 %v2040, %v2040
        %v2105 = vpack.c.b16 %v2041, %v2041
        %v2106 = vpack.c.b16 %v2042, %v2042
        %v2107 = vpack.c.b16 %v2043, %v2043
        %v2108 = vpack.c.b16 %v2044, %v2044
        %v2109 = vpack.c.b16 %v2045, %v2045
        %v2110 = vpack.c.b16 %v2046, %v2046
        %v2111 = vpack.c.b16 %v2047, %v2047
        %v2112 = vpack.c.b16 %v2048, %v2048
        %v2113 = vpack.c.b16 %v2049, %v2049
        %v2114 = vpack.c.b16 %v2050, %v2050
        %v2115 = vpack.c.b16 %v2051, %v2051
        %v2116 = vpack.c.b16 %v2052, %v2052
        %v2117 = vpack.c.b16 %v2053, %v2053
        %v2118 = vpack.c.b16 %v2054, %v2054
        %v2119 = vpack.c.b16 %v2055, %v2055
        %v2120 = vpack.c.b16 %v2056, %v2056
        %v2121 = vpack.c.b16 %v2057, %v2057
        %v2122 = vpack.c.b16 %v2058, %v2058
        %v2123 = vpack.c.b16 %v2059, %v2059
        %v2124 = vpack.c.b16 %v2060, %v2060
        %v2125 = vpack.c.b16 %v2061, %v2061
        %v2126 = vpack.c.b16 %v2062, %v2062
        %v2127 = vpack.c.b16 %v2063, %v2063
        %v2128 = vpack.c.b16 %v2064, %v2064
        %v2129 = vpack.c.b16 %v2065, %v2065
        %v2130 = vpack.c.b16 %v2066, %v2066
        %v2131 = vpack.c.b16 %v2067, %v2067
        %v2132 = vpack.c.b16 %v2068, %v2068
        %v2133 = vpack.c.b16 %v2069, %v2069
        %v2134 = vpack.c.b16 %v2070, %v2070
        %v2135 = vpack.c.b16 %v2071, %v2071
        %v2136 = vpack.c.b16 %v2072, %v2072
        %v2137 = vpack.c.b16 %v2073, %v2073
        %v2138 = vpack.c.b16 %v2074, %v2074
        %v2139 = vpack.c.b16 %v2075, %v2075
        %v2140 = vpack.c.b16 %v2076, %v2076
        %v2141 = vpack.c.b16 %v2077, %v2077
        %v2142 = vpack.c.b16 %v2078, %v2078
        %v2143 = vpack.c.b16 %v2079, %v2079
        %v2144 = vpack.c.b16 %v2080, %v2080
        %v2145 = vpack.c.b16 %v2081, %v2081
        %v2146 = vpack.c.b16 %v2082, %v2082
        %v2147 = vpack.c.b16 %v2083, %v2083
        %v2148 = vpack.c.b16 %v2084, %v2084
        %v2149 = vpack.c.b16 %v2085, %v2085
        %v2150 = vpack.c.b16 %v2086, %v2086
        %v2151 = vpack.c.b16 %v2087, %v2087
        %v2152 = vpack.c.b16 %v2088, %v2088
        %v2153 = vpack.c.b16 %v2089, %v2089
        %v2154 = vpack.c.b16 %v2090, %v2090
        %v2155 = vpack.c.b16 %v2091, %v2091
        %v2156 = vpack.c.b16 %v2092, %v2092
        %v2157 = vpack.c.b16 %v2093, %v2093
        %v2158 = vpack.c.b16 %v2094, %v2094
        %v2159 = vpack.c.b16 %v2095, %v2095
        %v2160 = vpack.c.b16 %v2096, %v2096
        %v2161 = vpack.c.b16 %v2097, %v2097
        %2226 = vst [vmem:[%s321] sm:$0xf] %v2098
        %2227 = vst [vmem:[%s321 + $0x4] sm:$0xf] %v2099
        %2228 = vst [vmem:[%s321 + $0x8] sm:$0xf] %v2100
        %2229 = vst [vmem:[%s321 + $0xc] sm:$0xf] %v2101
        %2230 = vst [vmem:[%s321 + $0x10] sm:$0xf] %v2102
        %2231 = vst [vmem:[%s321 + $0x14] sm:$0xf] %v2103
        %2232 = vst [vmem:[%s321 + $0x18] sm:$0xf] %v2104
        %2233 = vst [vmem:[%s321 + $0x1c] sm:$0xf] %v2105
        %2234 = vst [vmem:[%s321 + $0x20] sm:$0xf] %v2106
        %2235 = vst [vmem:[%s321 + $0x24] sm:$0xf] %v2107
        %2236 = vst [vmem:[%s321 + $0x28] sm:$0xf] %v2108
        %2237 = vst [vmem:[%s321 + $0x2c] sm:$0xf] %v2109
        %2238 = vst [vmem:[%s321 + $0x30] sm:$0xf] %v2110
        %2239 = vst [vmem:[%s321 + $0x34] sm:$0xf] %v2111
        %2240 = vst [vmem:[%s321 + $0x38] sm:$0xf] %v2112
        %2241 = vst [vmem:[%s321 + $0x3c] sm:$0xf] %v2113
        %2242 = vst [vmem:[%s321 + $0x40] sm:$0xf] %v2114
        %2243 = vst [vmem:[%s321 + $0x44] sm:$0xf] %v2115
        %2244 = vst [vmem:[%s321 + $0x48] sm:$0xf] %v2116
        %2245 = vst [vmem:[%s321 + $0x4c] sm:$0xf] %v2117
        %2246 = vst [vmem:[%s321 + $0x50] sm:$0xf] %v2118
        %2247 = vst [vmem:[%s321 + $0x54] sm:$0xf] %v2119
        %2248 = vst [vmem:[%s321 + $0x58] sm:$0xf] %v2120
        %2249 = vst [vmem:[%s321 + $0x5c] sm:$0xf] %v2121
        %2250 = vst [vmem:[%s321 + $0x60] sm:$0xf] %v2122
        %2251 = vst [vmem:[%s321 + $0x64] sm:$0xf] %v2123
        %2252 = vst [vmem:[%s321 + $0x68] sm:$0xf] %v2124
        %2253 = vst [vmem:[%s321 + $0x6c] sm:$0xf] %v2125
        %2254 = vst [vmem:[%s321 + $0x70] sm:$0xf] %v2126
        %2255 = vst [vmem:[%s321 + $0x74] sm:$0xf] %v2127
        %2256 = vst [vmem:[%s321 + $0x78] sm:$0xf] %v2128
        %2257 = vst [vmem:[%s321 + $0x7c] sm:$0xf] %v2129
        %2258 = vst [vmem:[%s321 + $0x80] sm:$0xf] %v2130
        %2259 = vst [vmem:[%s321 + $0x84] sm:$0xf] %v2131
        %2260 = vst [vmem:[%s321 + $0x88] sm:$0xf] %v2132
        %2261 = vst [vmem:[%s321 + $0x8c] sm:$0xf] %v2133
        %2262 = vst [vmem:[%s321 + $0x90] sm:$0xf] %v2134
        %2263 = vst [vmem:[%s321 + $0x94] sm:$0xf] %v2135
        %2264 = vst [vmem:[%s321 + $0x98] sm:$0xf] %v2136
        %2265 = vst [vmem:[%s321 + $0x9c] sm:$0xf] %v2137
        %2266 = vst [vmem:[%s321 + $0xa0] sm:$0xf] %v2138
        %2267 = vst [vmem:[%s321 + $0xa4] sm:$0xf] %v2139
        %2268 = vst [vmem:[%s321 + $0xa8] sm:$0xf] %v2140
        %2269 = vst [vmem:[%s321 + $0xac] sm:$0xf] %v2141
        %2270 = vst [vmem:[%s321 + $0xb0] sm:$0xf] %v2142
        %2271 = vst [vmem:[%s321 + $0xb4] sm:$0xf] %v2143
        %2272 = vst [vmem:[%s321 + $0xb8] sm:$0xf] %v2144
        %2273 = vst [vmem:[%s321 + $0xbc] sm:$0xf] %v2145
        %2274 = vst [vmem:[%s321 + $0xc0] sm:$0xf] %v2146
        %2275 = vst [vmem:[%s321 + $0xc4] sm:$0xf] %v2147
        %2276 = vst [vmem:[%s321 + $0xc8] sm:$0xf] %v2148
        %2277 = vst [vmem:[%s321 + $0xcc] sm:$0xf] %v2149
        %2278 = vst [vmem:[%s321 + $0xd0] sm:$0xf] %v2150
        %2279 = vst [vmem:[%s321 + $0xd4] sm:$0xf] %v2151
        %2280 = vst [vmem:[%s321 + $0xd8] sm:$0xf] %v2152
        %2281 = vst [vmem:[%s321 + $0xdc] sm:$0xf] %v2153
        %2282 = vst [vmem:[%s321 + $0xe0] sm:$0xf] %v2154
        %2283 = vst [vmem:[%s321 + $0xe4] sm:$0xf] %v2155
        %2284 = vst [vmem:[%s321 + $0xe8] sm:$0xf] %v2156
        %2285 = vst [vmem:[%s321 + $0xec] sm:$0xf] %v2157
        %2286 = vst [vmem:[%s321 + $0xf0] sm:$0xf] %v2158
        %2287 = vst [vmem:[%s321 + $0xf4] sm:$0xf] %v2159
        %2288 = vst [vmem:[%s321 + $0xf8] sm:$0xf] %v2160
        %2289 = vst [vmem:[%s321 + $0xfc] sm:$0xf] %v2161
        %v2290 = vld [vmem:[%s351] sm:$0xff]
        %v2291 = vld [vmem:[%s351 + $0x8] sm:$0xff]
        %v2292 = vld [vmem:[%s351 + $0x10] sm:$0xff]
        %v2293 = vld [vmem:[%s351 + $0x18] sm:$0xff]
        %v2294 = vld [vmem:[%s351 + $0x20] sm:$0xff]
        %v2295 = vld [vmem:[%s351 + $0x28] sm:$0xff]
        %v2296 = vld [vmem:[%s351 + $0x30] sm:$0xff]
        %v2297 = vld [vmem:[%s351 + $0x38] sm:$0xff]
        %v2298 = vld [vmem:[%s351 + $0x40] sm:$0xff]
        %v2299 = vld [vmem:[%s351 + $0x48] sm:$0xff]
        %v2300 = vld [vmem:[%s351 + $0x50] sm:$0xff]
        %v2301 = vld [vmem:[%s351 + $0x58] sm:$0xff]
        %v2302 = vld [vmem:[%s351 + $0x60] sm:$0xff]
        %v2303 = vld [vmem:[%s351 + $0x68] sm:$0xff]
        %v2304 = vld [vmem:[%s351 + $0x70] sm:$0xff]
        %v2305 = vld [vmem:[%s351 + $0x78] sm:$0xff]
        %v2306 = vld [vmem:[%s351 + $0x80] sm:$0xff]
        %v2307 = vld [vmem:[%s351 + $0x88] sm:$0xff]
        %v2308 = vld [vmem:[%s351 + $0x90] sm:$0xff]
        %v2309 = vld [vmem:[%s351 + $0x98] sm:$0xff]
        %v2310 = vld [vmem:[%s351 + $0xa0] sm:$0xff]
        %v2311 = vld [vmem:[%s351 + $0xa8] sm:$0xff]
        %v2312 = vld [vmem:[%s351 + $0xb0] sm:$0xff]
        %v2313 = vld [vmem:[%s351 + $0xb8] sm:$0xff]
        %v2314 = vld [vmem:[%s351 + $0xc0] sm:$0xff]
        %v2315 = vld [vmem:[%s351 + $0xc8] sm:$0xff]
        %v2316 = vld [vmem:[%s351 + $0xd0] sm:$0xff]
        %v2317 = vld [vmem:[%s351 + $0xd8] sm:$0xff]
        %v2318 = vld [vmem:[%s351 + $0xe0] sm:$0xff]
        %v2319 = vld [vmem:[%s351 + $0xe8] sm:$0xff]
        %v2320 = vld [vmem:[%s351 + $0xf0] sm:$0xff]
        %v2321 = vld [vmem:[%s351 + $0xf8] sm:$0xff]
        %v2322 = vld [vmem:[%s351 + $0x100] sm:$0xff]
        %v2323 = vld [vmem:[%s351 + $0x108] sm:$0xff]
        %v2324 = vld [vmem:[%s351 + $0x110] sm:$0xff]
        %v2325 = vld [vmem:[%s351 + $0x118] sm:$0xff]
        %v2326 = vld [vmem:[%s351 + $0x120] sm:$0xff]
        %v2327 = vld [vmem:[%s351 + $0x128] sm:$0xff]
        %v2328 = vld [vmem:[%s351 + $0x130] sm:$0xff]
        %v2329 = vld [vmem:[%s351 + $0x138] sm:$0xff]
        %v2330 = vld [vmem:[%s351 + $0x140] sm:$0xff]
        %v2331 = vld [vmem:[%s351 + $0x148] sm:$0xff]
        %v2332 = vld [vmem:[%s351 + $0x150] sm:$0xff]
        %v2333 = vld [vmem:[%s351 + $0x158] sm:$0xff]
        %v2334 = vld [vmem:[%s351 + $0x160] sm:$0xff]
        %v2335 = vld [vmem:[%s351 + $0x168] sm:$0xff]
        %v2336 = vld [vmem:[%s351 + $0x170] sm:$0xff]
        %v2337 = vld [vmem:[%s351 + $0x178] sm:$0xff]
        %v2338 = vld [vmem:[%s351 + $0x180] sm:$0xff]
        %v2339 = vld [vmem:[%s351 + $0x188] sm:$0xff]
        %v2340 = vld [vmem:[%s351 + $0x190] sm:$0xff]
        %v2341 = vld [vmem:[%s351 + $0x198] sm:$0xff]
        %v2342 = vld [vmem:[%s351 + $0x1a0] sm:$0xff]
        %v2343 = vld [vmem:[%s351 + $0x1a8] sm:$0xff]
        %v2344 = vld [vmem:[%s351 + $0x1b0] sm:$0xff]
        %v2345 = vld [vmem:[%s351 + $0x1b8] sm:$0xff]
        %v2346 = vld [vmem:[%s351 + $0x1c0] sm:$0xff]
        %v2347 = vld [vmem:[%s351 + $0x1c8] sm:$0xff]
        %v2348 = vld [vmem:[%s351 + $0x1d0] sm:$0xff]
        %v2349 = vld [vmem:[%s351 + $0x1d8] sm:$0xff]
        %v2350 = vld [vmem:[%s351 + $0x1e0] sm:$0xff]
        %v2351 = vld [vmem:[%s351 + $0x1e8] sm:$0xff]
        %v2352 = vld [vmem:[%s351 + $0x1f0] sm:$0xff]
        %v2353 = vld [vmem:[%s351 + $0x1f8] sm:$0xff]
        %v2354 = vmax.f32 %v1906, %v2290
        %v2355 = vmax.f32 %v1907, %v2291
        %v2356 = vmax.f32 %v1908, %v2292
        %v2357 = vmax.f32 %v1909, %v2293
        %v2358 = vmax.f32 %v1910, %v2294
        %v2359 = vmax.f32 %v1911, %v2295
        %v2360 = vmax.f32 %v1912, %v2296
        %v2361 = vmax.f32 %v1913, %v2297
        %v2362 = vmax.f32 %v1914, %v2298
        %v2363 = vmax.f32 %v1915, %v2299
        %v2364 = vmax.f32 %v1916, %v2300
        %v2365 = vmax.f32 %v1917, %v2301
        %v2366 = vmax.f32 %v1918, %v2302
        %v2367 = vmax.f32 %v1919, %v2303
        %v2368 = vmax.f32 %v1920, %v2304
        %v2369 = vmax.f32 %v1921, %v2305
        %v2370 = vmax.f32 %v1922, %v2306
        %v2371 = vmax.f32 %v1923, %v2307
        %v2372 = vmax.f32 %v1924, %v2308
        %v2373 = vmax.f32 %v1925, %v2309
        %v2374 = vmax.f32 %v1926, %v2310
        %v2375 = vmax.f32 %v1927, %v2311
        %v2376 = vmax.f32 %v1928, %v2312
        %v2377 = vmax.f32 %v1929, %v2313
        %v2378 = vmax.f32 %v1930, %v2314
        %v2379 = vmax.f32 %v1931, %v2315
        %v2380 = vmax.f32 %v1932, %v2316
        %v2381 = vmax.f32 %v1933, %v2317
        %v2382 = vmax.f32 %v1934, %v2318
        %v2383 = vmax.f32 %v1935, %v2319
        %v2384 = vmax.f32 %v1936, %v2320
        %v2385 = vmax.f32 %v1937, %v2321
        %v2386 = vmax.f32 %v1938, %v2322
        %v2387 = vmax.f32 %v1939, %v2323
        %v2388 = vmax.f32 %v1940, %v2324
        %v2389 = vmax.f32 %v1941, %v2325
        %v2390 = vmax.f32 %v1942, %v2326
        %v2391 = vmax.f32 %v1943, %v2327
        %v2392 = vmax.f32 %v1944, %v2328
        %v2393 = vmax.f32 %v1945, %v2329
        %v2394 = vmax.f32 %v1946, %v2330
        %v2395 = vmax.f32 %v1947, %v2331
        %v2396 = vmax.f32 %v1948, %v2332
        %v2397 = vmax.f32 %v1949, %v2333
        %v2398 = vmax.f32 %v1950, %v2334
        %v2399 = vmax.f32 %v1951, %v2335
        %v2400 = vmax.f32 %v1952, %v2336
        %v2401 = vmax.f32 %v1953, %v2337
        %v2402 = vmax.f32 %v1954, %v2338
        %v2403 = vmax.f32 %v1955, %v2339
        %v2404 = vmax.f32 %v1956, %v2340
        %v2405 = vmax.f32 %v1957, %v2341
        %v2406 = vmax.f32 %v1958, %v2342
        %v2407 = vmax.f32 %v1959, %v2343
        %v2408 = vmax.f32 %v1960, %v2344
        %v2409 = vmax.f32 %v1961, %v2345
        %v2410 = vmax.f32 %v1962, %v2346
        %v2411 = vmax.f32 %v1963, %v2347
        %v2412 = vmax.f32 %v1964, %v2348
        %v2413 = vmax.f32 %v1965, %v2349
        %v2414 = vmax.f32 %v1966, %v2350
        %v2415 = vmax.f32 %v1967, %v2351
        %v2416 = vmax.f32 %v1968, %v2352
        %v2417 = vmax.f32 %v1969, %v2353
        %2418 = vst [vmem:[%s358] sm:$0xff] %v2354
        %2419 = vst [vmem:[%s358 + $0x8] sm:$0xff] %v2355
        %2420 = vst [vmem:[%s358 + $0x10] sm:$0xff] %v2356
        %2421 = vst [vmem:[%s358 + $0x18] sm:$0xff] %v2357
        %2422 = vst [vmem:[%s358 + $0x20] sm:$0xff] %v2358
        %2423 = vst [vmem:[%s358 + $0x28] sm:$0xff] %v2359
        %2424 = vst [vmem:[%s358 + $0x30] sm:$0xff] %v2360
        %2425 = vst [vmem:[%s358 + $0x38] sm:$0xff] %v2361
        %2426 = vst [vmem:[%s358 + $0x40] sm:$0xff] %v2362
        %2427 = vst [vmem:[%s358 + $0x48] sm:$0xff] %v2363
        %2428 = vst [vmem:[%s358 + $0x50] sm:$0xff] %v2364
        %2429 = vst [vmem:[%s358 + $0x58] sm:$0xff] %v2365
        %2430 = vst [vmem:[%s358 + $0x60] sm:$0xff] %v2366
        %2431 = vst [vmem:[%s358 + $0x68] sm:$0xff] %v2367
        %2432 = vst [vmem:[%s358 + $0x70] sm:$0xff] %v2368
        %2433 = vst [vmem:[%s358 + $0x78] sm:$0xff] %v2369
        %2434 = vst [vmem:[%s358 + $0x80] sm:$0xff] %v2370
        %2435 = vst [vmem:[%s358 + $0x88] sm:$0xff] %v2371
        %2436 = vst [vmem:[%s358 + $0x90] sm:$0xff] %v2372
        %2437 = vst [vmem:[%s358 + $0x98] sm:$0xff] %v2373
        %2438 = vst [vmem:[%s358 + $0xa0] sm:$0xff] %v2374
        %2439 = vst [vmem:[%s358 + $0xa8] sm:$0xff] %v2375
        %2440 = vst [vmem:[%s358 + $0xb0] sm:$0xff] %v2376
        %2441 = vst [vmem:[%s358 + $0xb8] sm:$0xff] %v2377
        %2442 = vst [vmem:[%s358 + $0xc0] sm:$0xff] %v2378
        %2443 = vst [vmem:[%s358 + $0xc8] sm:$0xff] %v2379
        %2444 = vst [vmem:[%s358 + $0xd0] sm:$0xff] %v2380
        %2445 = vst [vmem:[%s358 + $0xd8] sm:$0xff] %v2381
        %2446 = vst [vmem:[%s358 + $0xe0] sm:$0xff] %v2382
        %2447 = vst [vmem:[%s358 + $0xe8] sm:$0xff] %v2383
        %2448 = vst [vmem:[%s358 + $0xf0] sm:$0xff] %v2384
        %2449 = vst [vmem:[%s358 + $0xf8] sm:$0xff] %v2385
        %2450 = vst [vmem:[%s358 + $0x100] sm:$0xff] %v2386
        %2451 = vst [vmem:[%s358 + $0x108] sm:$0xff] %v2387
        %2452 = vst [vmem:[%s358 + $0x110] sm:$0xff] %v2388
        %2453 = vst [vmem:[%s358 + $0x118] sm:$0xff] %v2389
        %2454 = vst [vmem:[%s358 + $0x120] sm:$0xff] %v2390
        %2455 = vst [vmem:[%s358 + $0x128] sm:$0xff] %v2391
        %2456 = vst [vmem:[%s358 + $0x130] sm:$0xff] %v2392
        %2457 = vst [vmem:[%s358 + $0x138] sm:$0xff] %v2393
        %2458 = vst [vmem:[%s358 + $0x140] sm:$0xff] %v2394
        %2459 = vst [vmem:[%s358 + $0x148] sm:$0xff] %v2395
        %2460 = vst [vmem:[%s358 + $0x150] sm:$0xff] %v2396
        %2461 = vst [vmem:[%s358 + $0x158] sm:$0xff] %v2397
        %2462 = vst [vmem:[%s358 + $0x160] sm:$0xff] %v2398
        %2463 = vst [vmem:[%s358 + $0x168] sm:$0xff] %v2399
        %2464 = vst [vmem:[%s358 + $0x170] sm:$0xff] %v2400
        %2465 = vst [vmem:[%s358 + $0x178] sm:$0xff] %v2401
        %2466 = vst [vmem:[%s358 + $0x180] sm:$0xff] %v2402
        %2467 = vst [vmem:[%s358 + $0x188] sm:$0xff] %v2403
        %2468 = vst [vmem:[%s358 + $0x190] sm:$0xff] %v2404
        %2469 = vst [vmem:[%s358 + $0x198] sm:$0xff] %v2405
        %2470 = vst [vmem:[%s358 + $0x1a0] sm:$0xff] %v2406
        %2471 = vst [vmem:[%s358 + $0x1a8] sm:$0xff] %v2407
        %2472 = vst [vmem:[%s358 + $0x1b0] sm:$0xff] %v2408
        %2473 = vst [vmem:[%s358 + $0x1b8] sm:$0xff] %v2409
        %2474 = vst [vmem:[%s358 + $0x1c0] sm:$0xff] %v2410
        %2475 = vst [vmem:[%s358 + $0x1c8] sm:$0xff] %v2411
        %2476 = vst [vmem:[%s358 + $0x1d0] sm:$0xff] %v2412
        %2477 = vst [vmem:[%s358 + $0x1d8] sm:$0xff] %v2413
        %2478 = vst [vmem:[%s358 + $0x1e0] sm:$0xff] %v2414
        %2479 = vst [vmem:[%s358 + $0x1e8] sm:$0xff] %v2415
        %2480 = vst [vmem:[%s358 + $0x1f0] sm:$0xff] %v2416
        %2481 = vst [vmem:[%s358 + $0x1f8] sm:$0xff] %v2417
        %s2482 = sand.u32 %s176, 1
        %s2483 = scalar_lea.sflag [#allocation3], %s2482
        %s2484 = sand.u32 %s176, 1
        %s2485 = smul.addr %s2484, 256
        %s2486 = scalar_lea.vmem [#allocation2], %s2485
        %s2487 = smul.u32 64, %s22
        %p2488 = scmp.lt.s32.totalorder %s2487, 127
        %s2489 = scalar_select %p2488, %s2487, 127
        %s2490 = smul.addr %s2489, 8
        %s2491 = scalar_lea.vmem %s7, %s2490
        // Predicated region
        $region45: #{dea_gnn_jk_forward.18} parent=43 // pred_check
          %p2492 = pneg %p186
        $region46: #{dea_gnn_jk_forward.18} parent=43 // pred_check_branch
          %2494 = sbr.rel (%p2492) target = $region48
        $region47: #{dea_gnn_jk_forward.18} parent=43 // pred_region
          %s2495 = smul.u32 64, %s22
          %s2497 = ssub.s32 4096, 4096
          %2498 = vsyncadd %s2483, %s2497
          %s2499 = smul.addr %s2495, 64
          %s2500 = scalar_lea.hbm %s6, %s2499
          %s2501 = sshll.u32 %s2486, 4
          %s2502 = int_to_ptr.vmem [resolvable:$true] %s2501
          %2507 = dma.vmem_to_hbm [thread:$0]  %s2502, 4096, %s2500, %s2483, 64, 64, 4
        $region48: #{dea_gnn_jk_forward.18} parent=43 // pred_fallthru
          _
        // Predicated region
        $region49: #{dea_gnn_jk_forward.18} parent=43 // pred_check
          %p2508 = pneg %p212
        $region50: #{dea_gnn_jk_forward.18} parent=43 // pred_check_branch
          %2510 = sbr.rel (%p2508) target = $region52
        $region51: #{dea_gnn_jk_forward.18} parent=43 // pred_region
          %s2511 = smul.u32 64, %s22
        $region52: #{dea_gnn_jk_forward.18} parent=43 // pred_fallthru
          _
      $region44: #{dea_gnn_jk_forward.18} parent=5 // pred_fallthru
        _
      %p2512 = scmp.le.s32.totalorder 2, %s17
      // Predicated region
      $region53: #{dea_gnn_jk_forward.18} parent=5 // pred_check
        %p2513 = pneg %p2512
      $region54: #{dea_gnn_jk_forward.18} parent=5 // pred_check_branch
        %2515 = sbr.rel (%p2513) target = $region56
      $region55: #{dea_gnn_jk_forward.18} parent=5 // pred_region
        %s2516 = ssub.s32 %s17, 2
        // Predicated region
        $region57: #{dea_gnn_jk_forward.18} parent=55 // pred_check
          %p2517 = pneg %p192
        $region58: #{dea_gnn_jk_forward.18} parent=55 // pred_check_branch
          %2519 = sbr.rel (%p2517) target = $region60
        $region59: #{dea_gnn_jk_forward.18} parent=55 // pred_region
          %s2520 = sand.u32 %s177, 1
          %s2521 = scalar_lea.sflag [#allocation3], %s2520
          %s2522 = sand.u32 %s177, 1
          %s2523 = smul.addr %s2522, 256
          %s2524 = scalar_lea.vmem [#allocation2], %s2523
          %2525 = dma.done %s2521, 4096
        $region60: #{dea_gnn_jk_forward.18} parent=55 // pred_fallthru
          _
        // Predicated region
        $region61: #{dea_gnn_jk_forward.18} parent=55 // pred_check
          %p2526 = pneg %p218
        $region62: #{dea_gnn_jk_forward.18} parent=55 // pred_check_branch
          %2528 = sbr.rel (%p2526) target = $region64
        $region63: #{dea_gnn_jk_forward.18} parent=55 // pred_region
          %s2529 = smul.u32 64, %s23
          %p2530 = scmp.lt.s32.totalorder %s2529, 127
          %s2531 = scalar_select %p2530, %s2529, 127
          %s2532 = smul.addr %s2531, 8
          %s2533 = scalar_lea.vmem %s7, %s2532
        $region64: #{dea_gnn_jk_forward.18} parent=55 // pred_fallthru
          _
      $region56: #{dea_gnn_jk_forward.18} parent=5 // pred_fallthru
        _
    $region6: #{dea_gnn_jk_forward.18} parent=1 // loop_footer
      %s21 = sadd.s32 1, %s17
    $region7: #{dea_gnn_jk_forward.18} parent=1 // loop_footer_branch
      %16 = sbr.rel target = $region3
    $region8: #{dea_gnn_jk_forward.18} parent=1 // loop_exit
      _
    %2534 = vsyncpa [#allocation3], 1
    %s2535 = scalar_lea.sflag [#allocation3], 1
    %2536 = vsyncpa %s2535, 1

// kernel: dea_gnn_jk_forward.19
$region0: #{dea_gnn_jk_forward.19}
  #allocation0 [shape = 'u32[]', space=smem, size = 0x4, offset = 0x4, fixed_abs, tag = 'smem constant byte address 0x4 - core index']
  #allocation1 [shape = 'u32[144,128]{1,0:T(1,128)}', space=vmem, size = 0x12000, scoped, tag = 'internal scratch']
  #allocation2 [shape = 'f32[1,1]{1,0:T(1,128)S(1)}', space=vmem, size = 0x200, scoped, tag = 'scoped memory for dea_gnn_jk_forward.19']
  %s0 = inlined_call_operand.vmem [shape: f32[128,512], index: 0, kind: input, shape index: {}]
  %s1 = inlined_call_operand.vmem [shape: f32[128,512], index: 1, kind: input, shape index: {}]
  %s2 = inlined_call_operand.vmem [shape: f32[128,128], index: 2, kind: input, shape index: {}]
  %s3 = inlined_call_operand.vmem [shape: f32[128,1], index: 3, kind: input, shape index: {}]
  %s4 = inlined_call_operand.vmem [shape: f32[128,1], index: 4, kind: input, shape index: {}]
  %s5 = inlined_call_operand.<no memory space> [shape: f32[1,1], index: 5, kind: input, shape index: {}]
  %s6 = inlined_call_operand.hbm [shape: f32[1,512], index: 6, kind: output, shape index: {}]
  %s7 = sld [smem:[#allocation0]]
  $region133: #{dea_gnn_jk_forward.19} parent=0
    _
  %s9 = ssub.s32 1, %s7
  %s10 = scalar_select 0, %s9, %s7
  %v11 = vstv %s5
  %12 = vst [vmem:[#allocation2] sm:$0x1] %v11
  $region1: #{dea_gnn_jk_forward.19} parent=0
    #allocation3 [shape = 'u8[131072]{0}', space=vmem, size = 0x20000, scoped, tag = 'input window, operand 0']
    #allocation4 [shape = 'u8[131072]{0}', space=vmem, size = 0x20000, scoped, tag = 'input window, operand 1']
    #allocation5 [shape = 'u8[1024]{0}', space=vmem, size = 0x400, scoped, tag = 'output window, operand 0']
    #allocation6 [shape = 's32[2]{0}', space=sflag, size = 0x8, scoped, tag = 'scoped memory for dea_gnn_jk_forward.19']
    %13 = vsyncpa [#allocation6], 0
    %s14 = scalar_lea.sflag [#allocation6], 1
    %15 = vsyncpa %s14, 0
    loop: start=0, step=1, limit=6
    $region2: #{dea_gnn_jk_forward.19} parent=1 // loop_pre_header
      _
    $region3: #{dea_gnn_jk_forward.19} parent=1 // loop_header
      %s17 = sphi 0, %s21
      %p18 = scmp.ge.s32.totalorder %s17, 6
      %s27 = sphi 0, %s29
      %s30 = sphi 0, %s27
      %s31 = sphi 0, %s30
      %s47 = sphi 0, %s31
      %s53 = sphi 0, %s55
      %s56 = sphi 0, %s53
      %s57 = sphi 0, %s56
      %s73 = sphi 0, %s57
      %s77 = sphi 0, %s77
      %s79 = sphi 0, %s77
      %s80 = sphi 0, %s79
      %s94 = sphi 0, %s80
      %s98 = sphi 0, %s98
      %s100 = sphi 0, %s98
      %s101 = sphi 0, %s100
      %s115 = sphi 0, %s101
      %s119 = sphi 0, %s119
      %s121 = sphi 0, %s119
      %s122 = sphi 0, %s121
      %s136 = sphi 0, %s122
      %s140 = sphi 0, %s140
      %s142 = sphi 0, %s140
      %s143 = sphi 0, %s142
      %s157 = sphi 0, %s143
      %s163 = sphi 0, %s165
      %s166 = sphi 0, %s163
      %s167 = sphi 0, %s166
      %s183 = sphi 0, %s167
    $region4: #{dea_gnn_jk_forward.19} parent=1 // loop_header_branch
      %20 = sbr.rel (%p18) target = $region8
    $region5: #{dea_gnn_jk_forward.19} parent=1 // loop_body
      %s22 = ssub.s32 %s17, 1
      %s23 = ssub.s32 %s17, 2
      %s24 = sadd.s32 %s17, 1
      %s25 = ssub.s32 %s17, %s24
      %p26 = scmp.eq.s32.totalorder %s25, 0
      %s28 = sadd.s32 %s27, 1
      %s29 = scalar_select %p26, %s27, %s28
      %p32 = pneg %p26
      %p33 = scmp.eq.s32.totalorder %s17, 3
      %p34 = por %p32, %p33
      %p35 = scmp.ne.s32.totalorder %s27, %s30
      %p36 = scmp.eq.s32.totalorder %s17, 0
      %p37 = por %p35, %p36
      %p38 = scmp.ne.s32.totalorder %s27, %s30
      %p39 = scmp.eq.s32.totalorder %s22, 3
      %p40 = por %p38, %p39
      %p41 = scmp.ne.s32.totalorder %s30, %s31
      %p42 = scmp.eq.s32.totalorder %s22, 0
      %p43 = por %p41, %p42
      %p44 = scmp.ne.s32.totalorder %s30, %s31
      %p45 = scmp.eq.s32.totalorder %s23, 3
      %p46 = por %p44, %p45
      %p48 = scmp.ne.s32.totalorder %s31, %s47
      %p49 = scmp.eq.s32.totalorder %s23, 0
      %p50 = por %p48, %p49
      %s51 = ssub.s32 %s17, %s24
      %p52 = scmp.eq.s32.totalorder %s51, 0
      %s54 = sadd.s32 %s53, 1
      %s55 = scalar_select %p52, %s53, %s54
      %p58 = pneg %p52
      %p59 = scmp.eq.s32.totalorder %s17, 3
      %p60 = por %p58, %p59
      %p61 = scmp.ne.s32.totalorder %s53, %s56
      %p62 = scmp.eq.s32.totalorder %s17, 0
      %p63 = por %p61, %p62
      %p64 = scmp.ne.s32.totalorder %s53, %s56
      %p65 = scmp.eq.s32.totalorder %s22, 3
      %p66 = por %p64, %p65
      %p67 = scmp.ne.s32.totalorder %s56, %s57
      %p68 = scmp.eq.s32.totalorder %s22, 0
      %p69 = por %p67, %p68
      %p70 = scmp.ne.s32.totalorder %s56, %s57
      %p71 = scmp.eq.s32.totalorder %s23, 3
      %p72 = por %p70, %p71
      %p74 = scmp.ne.s32.totalorder %s57, %s73
      %p75 = scmp.eq.s32.totalorder %s23, 0
      %p76 = por %p74, %p75
      %s78 = sadd.s32 %s77, 1
      %p81 = scmp.eq.s32.totalorder %s17, 3
      %p82 = scmp.ne.s32.totalorder %s77, %s79
      %p83 = scmp.eq.s32.totalorder %s17, 0
      %p84 = por %p82, %p83
      %p85 = scmp.ne.s32.totalorder %s77, %s79
      %p86 = scmp.eq.s32.totalorder %s22, 3
      %p87 = por %p85, %p86
      %p88 = scmp.ne.s32.totalorder %s79, %s80
      %p89 = scmp.eq.s32.totalorder %s22, 0
      %p90 = por %p88, %p89
      %p91 = scmp.ne.s32.totalorder %s79, %s80
      %p92 = scmp.eq.s32.totalorder %s23, 3
      %p93 = por %p91, %p92
      %p95 = scmp.ne.s32.totalorder %s80, %s94
      %p96 = scmp.eq.s32.totalorder %s23, 0
      %p97 = por %p95, %p96
      %s99 = sadd.s32 %s98, 1
      %p102 = scmp.eq.s32.totalorder %s17, 3
      %p103 = scmp.ne.s32.totalorder %s98, %s100
      %p104 = scmp.eq.s32.totalorder %s17, 0
      %p105 = por %p103, %p104
      %p106 = scmp.ne.s32.totalorder %s98, %s100
      %p107 = scmp.eq.s32.totalorder %s22, 3
      %p108 = por %p106, %p107
      %p109 = scmp.ne.s32.totalorder %s100, %s101
      %p110 = scmp.eq.s32.totalorder %s22, 0
      %p111 = por %p109, %p110
      %p112 = scmp.ne.s32.totalorder %s100, %s101
      %p113 = scmp.eq.s32.totalorder %s23, 3
      %p114 = por %p112, %p113
      %p116 = scmp.ne.s32.totalorder %s101, %s115
      %p117 = scmp.eq.s32.totalorder %s23, 0
      %p118 = por %p116, %p117
      %s120 = sadd.s32 %s119, 1
      %p123 = scmp.eq.s32.totalorder %s17, 3
      %p124 = scmp.ne.s32.totalorder %s119, %s121
      %p125 = scmp.eq.s32.totalorder %s17, 0
      %p126 = por %p124, %p125
      %p127 = scmp.ne.s32.totalorder %s119, %s121
      %p128 = scmp.eq.s32.totalorder %s22, 3
      %p129 = por %p127, %p128
      %p130 = scmp.ne.s32.totalorder %s121, %s122
      %p131 = scmp.eq.s32.totalorder %s22, 0
      %p132 = por %p130, %p131
      %p133 = scmp.ne.s32.totalorder %s121, %s122
      %p134 = scmp.eq.s32.totalorder %s23, 3
      %p135 = por %p133, %p134
      %p137 = scmp.ne.s32.totalorder %s122, %s136
      %p138 = scmp.eq.s32.totalorder %s23, 0
      %p139 = por %p137, %p138
      %s141 = sadd.s32 %s140, 1
      %p144 = scmp.eq.s32.totalorder %s17, 3
      %p145 = scmp.ne.s32.totalorder %s140, %s142
      %p146 = scmp.eq.s32.totalorder %s17, 0
      %p147 = por %p145, %p146
      %p148 = scmp.ne.s32.totalorder %s140, %s142
      %p149 = scmp.eq.s32.totalorder %s22, 3
      %p150 = por %p148, %p149
      %p151 = scmp.ne.s32.totalorder %s142, %s143
      %p152 = scmp.eq.s32.totalorder %s22, 0
      %p153 = por %p151, %p152
      %p154 = scmp.ne.s32.totalorder %s142, %s143
      %p155 = scmp.eq.s32.totalorder %s23, 3
      %p156 = por %p154, %p155
      %p158 = scmp.ne.s32.totalorder %s143, %s157
      %p159 = scmp.eq.s32.totalorder %s23, 0
      %p160 = por %p158, %p159
      %s161 = ssub.s32 %s17, %s24
      %p162 = scmp.eq.s32.totalorder %s161, 0
      %s164 = sadd.s32 %s163, 1
      %s165 = scalar_select %p162, %s163, %s164
      %p168 = pneg %p162
      %p169 = scmp.eq.s32.totalorder %s17, 3
      %p170 = por %p168, %p169
      %p171 = scmp.ne.s32.totalorder %s163, %s166
      %p172 = scmp.eq.s32.totalorder %s17, 0
      %p173 = por %p171, %p172
      %p174 = scmp.ne.s32.totalorder %s163, %s166
      %p175 = scmp.eq.s32.totalorder %s22, 3
      %p176 = por %p174, %p175
      %p177 = scmp.ne.s32.totalorder %s166, %s167
      %p178 = scmp.eq.s32.totalorder %s22, 0
      %p179 = por %p177, %p178
      %p180 = scmp.ne.s32.totalorder %s166, %s167
      %p181 = scmp.eq.s32.totalorder %s23, 3
      %p182 = por %p180, %p181
      %p184 = scmp.ne.s32.totalorder %s167, %s183
      %p185 = scmp.eq.s32.totalorder %s23, 0
      %p186 = por %p184, %p185
      %p187 = scmp.le.s32.totalorder 1, %s17
      %p188 = scmp.lt.s32.totalorder %s17, 5
      %p189 = pnand %p187, %p188
      %p190 = pneg %p189
      // Predicated region
      $region9: #{dea_gnn_jk_forward.19} parent=5 // pred_check
        _
      $region10: #{dea_gnn_jk_forward.19} parent=5 // pred_check_branch
        %192 = sbr.rel (%p189) target = $region12
      $region11: #{dea_gnn_jk_forward.19} parent=5 // pred_region
        %s193 = ssub.s32 %s17, 1
        // Predicated region
        $region13: #{dea_gnn_jk_forward.19} parent=11 // pred_check
          %p194 = pneg %p90
        $region14: #{dea_gnn_jk_forward.19} parent=11 // pred_check_branch
          %196 = sbr.rel (%p194) target = $region16
        $region15: #{dea_gnn_jk_forward.19} parent=11 // pred_region
          _
        $region16: #{dea_gnn_jk_forward.19} parent=11 // pred_fallthru
          _
        // Predicated region
        $region17: #{dea_gnn_jk_forward.19} parent=11 // pred_check
          %p197 = pneg %p111
        $region18: #{dea_gnn_jk_forward.19} parent=11 // pred_check_branch
          %199 = sbr.rel (%p197) target = $region20
        $region19: #{dea_gnn_jk_forward.19} parent=11 // pred_region
          _
        $region20: #{dea_gnn_jk_forward.19} parent=11 // pred_fallthru
          _
        // Predicated region
        $region21: #{dea_gnn_jk_forward.19} parent=11 // pred_check
          %p200 = pneg %p132
        $region22: #{dea_gnn_jk_forward.19} parent=11 // pred_check_branch
          %202 = sbr.rel (%p200) target = $region24
        $region23: #{dea_gnn_jk_forward.19} parent=11 // pred_region
          _
        $region24: #{dea_gnn_jk_forward.19} parent=11 // pred_fallthru
          _
        // Predicated region
        $region25: #{dea_gnn_jk_forward.19} parent=11 // pred_check
          %p203 = pneg %p153
        $region26: #{dea_gnn_jk_forward.19} parent=11 // pred_check_branch
          %205 = sbr.rel (%p203) target = $region28
        $region27: #{dea_gnn_jk_forward.19} parent=11 // pred_region
          _
        $region28: #{dea_gnn_jk_forward.19} parent=11 // pred_fallthru
          _
      $region12: #{dea_gnn_jk_forward.19} parent=5 // pred_fallthru
        _
      %p206 = scmp.lt.s32.totalorder %s17, 4
      // Predicated region
      $region29: #{dea_gnn_jk_forward.19} parent=5 // pred_check
        %p207 = pneg %p206
      $region30: #{dea_gnn_jk_forward.19} parent=5 // pred_check_branch
        %209 = sbr.rel (%p207) target = $region32
      $region31: #{dea_gnn_jk_forward.19} parent=5 // pred_region
        // Predicated region
        $region33: #{dea_gnn_jk_forward.19} parent=31 // pred_check
          %p210 = pneg %p37
        $region34: #{dea_gnn_jk_forward.19} parent=31 // pred_check_branch
          %212 = sbr.rel (%p210) target = $region36
        $region35: #{dea_gnn_jk_forward.19} parent=31 // pred_region
          %s213 = sand.u32 %s27, 1
          %s214 = sand.u32 %s27, 1
          %s215 = smul.addr %s214, 128
          %s216 = scalar_lea.vmem [#allocation3], %s215
          %s217 = smul.addr %s17, 8
          %s218 = scalar_lea.vmem %s0, %s217
          // Predicated region
          $region37: #{dea_gnn_jk_forward.19} parent=35 // pred_check
            _
          $region38: #{dea_gnn_jk_forward.19} parent=35 // pred_check_branch
            %220 = sbr.rel (0) target = $region40
          $region39: #{dea_gnn_jk_forward.19} parent=35 // pred_region
            // Predicated region
            $region41: #{dea_gnn_jk_forward.19} parent=39 // pred_check
              _
            $region42: #{dea_gnn_jk_forward.19} parent=39 // pred_check_branch
              %222 = sbr.rel (0) target = $region44
            $region43: #{dea_gnn_jk_forward.19} parent=39 // pred_region
              // Predicated region
              $region56: #{dea_gnn_jk_forward.19} parent=43 // pred_check
                _
              $region57: #{dea_gnn_jk_forward.19} parent=43 // pred_check_branch
                %267 = sbr.rel (0) target = $region59
              $region58: #{dea_gnn_jk_forward.19} parent=43 // pred_region
                loop: start=0, step=1, limit=1
                $region60: #{dea_gnn_jk_forward.19} parent=58 // loop_pre_header
                  _
                $region61: #{dea_gnn_jk_forward.19} parent=58 // loop_header
                  %s269 = sphi 0, %s273
                  %p270 = scmp.ge.s32.totalorder %s269, 1
                  %s274 = sphi %s218, %s218
                  %s275 = sphi %s216, %s216
                $region62: #{dea_gnn_jk_forward.19} parent=58 // loop_header_branch
                  %272 = sbr.rel (%p270) target = $region66
                $region63: #{dea_gnn_jk_forward.19} parent=58 // loop_body
                  %v276 = vld [vmem:[%s274] sm:$0xff]
                  %277 = vst [vmem:[%s275] sm:$0xff] %v276
                  %v278 = vld [vmem:[%s274 + $0x20] sm:$0xff]
                  %279 = vst [vmem:[%s275 + $0x8] sm:$0xff] %v278
                  %v280 = vld [vmem:[%s274 + $0x40] sm:$0xff]
                  %281 = vst [vmem:[%s275 + $0x10] sm:$0xff] %v280
                  %v282 = vld [vmem:[%s274 + $0x60] sm:$0xff]
                  %283 = vst [vmem:[%s275 + $0x18] sm:$0xff] %v282
                  %v284 = vld [vmem:[%s274 + $0x80] sm:$0xff]
                  %285 = vst [vmem:[%s275 + $0x20] sm:$0xff] %v284
                  %v286 = vld [vmem:[%s274 + $0xa0] sm:$0xff]
                  %287 = vst [vmem:[%s275 + $0x28] sm:$0xff] %v286
                  %v288 = vld [vmem:[%s274 + $0xc0] sm:$0xff]
                  %289 = vst [vmem:[%s275 + $0x30] sm:$0xff] %v288
                  %v290 = vld [vmem:[%s274 + $0xe0] sm:$0xff]
                  %291 = vst [vmem:[%s275 + $0x38] sm:$0xff] %v290
                  %v292 = vld [vmem:[%s274 + $0x100] sm:$0xff]
                  %293 = vst [vmem:[%s275 + $0x40] sm:$0xff] %v292
                  %v294 = vld [vmem:[%s274 + $0x120] sm:$0xff]
                  %295 = vst [vmem:[%s275 + $0x48] sm:$0xff] %v294
                  %v296 = vld [vmem:[%s274 + $0x140] sm:$0xff]
                  %297 = vst [vmem:[%s275 + $0x50] sm:$0xff] %v296
                  %v298 = vld [vmem:[%s274 + $0x160] sm:$0xff]
                  %299 = vst [vmem:[%s275 + $0x58] sm:$0xff] %v298
                  %v300 = vld [vmem:[%s274 + $0x180] sm:$0xff]
                  %301 = vst [vmem:[%s275 + $0x60] sm:$0xff] %v300
                  %v302 = vld [vmem:[%s274 + $0x1a0] sm:$0xff]
                  %303 = vst [vmem:[%s275 + $0x68] sm:$0xff] %v302
                  %v304 = vld [vmem:[%s274 + $0x1c0] sm:$0xff]
                  %305 = vst [vmem:[%s275 + $0x70] sm:$0xff] %v304
                  %v306 = vld [vmem:[%s274 + $0x1e0] sm:$0xff]
                  %307 = vst [vmem:[%s275 + $0x78] sm:$0xff] %v306
                $region64: #{dea_gnn_jk_forward.19} parent=58 // loop_footer
                  %s273 = sadd.s32 1, %s269
                $region65: #{dea_gnn_jk_forward.19} parent=58 // loop_footer_branch
                  %268 = sbr.rel target = $region61
                $region66: #{dea_gnn_jk_forward.19} parent=58 // loop_exit
                  _
              $region59: #{dea_gnn_jk_forward.19} parent=43 // pred_fallthru
                _
              // Predicated region
              $region67: #{dea_gnn_jk_forward.19} parent=43 // pred_check
                _
              $region68: #{dea_gnn_jk_forward.19} parent=43 // pred_check_branch
                %309 = sbr.rel target = $region70
              $region69: #{dea_gnn_jk_forward.19} parent=43 // pred_region
                _
              $region70: #{dea_gnn_jk_forward.19} parent=43 // pred_fallthru
                _
            $region44: #{dea_gnn_jk_forward.19} parent=39 // pred_fallthru
              _
            // Predicated region
            $region45: #{dea_gnn_jk_forward.19} parent=39 // pred_check
              _
            $region46: #{dea_gnn_jk_forward.19} parent=39 // pred_check_branch
              %224 = sbr.rel target = $region48
            $region47: #{dea_gnn_jk_forward.19} parent=39 // pred_region
              loop: start=0, step=1, limit=1
              $region49: #{dea_gnn_jk_forward.19} parent=47 // loop_pre_header
                _
              $region50: #{dea_gnn_jk_forward.19} parent=47 // loop_header
                %s227 = sphi 0, %s231
                %p228 = scmp.ge.s32.totalorder %s227, 1
                %s232 = sphi %s218, %s218
                %s233 = sphi %s216, %s216
              $region51: #{dea_gnn_jk_forward.19} parent=47 // loop_header_branch
                %230 = sbr.rel (%p228) target = $region55
              $region52: #{dea_gnn_jk_forward.19} parent=47 // loop_body
                %v234 = vld [vmem:[%s232] sm:$0xff]
                %235 = vst [vmem:[%s233] sm:$0xff] %v234
                %v236 = vld [vmem:[%s232 + $0x20] sm:$0xff]
                %237 = vst [vmem:[%s233 + $0x8] sm:$0xff] %v236
                %v238 = vld [vmem:[%s232 + $0x40] sm:$0xff]
                %239 = vst [vmem:[%s233 + $0x10] sm:$0xff] %v238
                %v240 = vld [vmem:[%s232 + $0x60] sm:$0xff]
                %241 = vst [vmem:[%s233 + $0x18] sm:$0xff] %v240
                %v242 = vld [vmem:[%s232 + $0x80] sm:$0xff]
                %243 = vst [vmem:[%s233 + $0x20] sm:$0xff] %v242
                %v244 = vld [vmem:[%s232 + $0xa0] sm:$0xff]
                %245 = vst [vmem:[%s233 + $0x28] sm:$0xff] %v244
                %v246 = vld [vmem:[%s232 + $0xc0] sm:$0xff]
                %247 = vst [vmem:[%s233 + $0x30] sm:$0xff] %v246
                %v248 = vld [vmem:[%s232 + $0xe0] sm:$0xff]
                %249 = vst [vmem:[%s233 + $0x38] sm:$0xff] %v248
                %v250 = vld [vmem:[%s232 + $0x100] sm:$0xff]
                %251 = vst [vmem:[%s233 + $0x40] sm:$0xff] %v250
                %v252 = vld [vmem:[%s232 + $0x120] sm:$0xff]
                %253 = vst [vmem:[%s233 + $0x48] sm:$0xff] %v252
                %v254 = vld [vmem:[%s232 + $0x140] sm:$0xff]
                %255 = vst [vmem:[%s233 + $0x50] sm:$0xff] %v254
                %v256 = vld [vmem:[%s232 + $0x160] sm:$0xff]
                %257 = vst [vmem:[%s233 + $0x58] sm:$0xff] %v256
                %v258 = vld [vmem:[%s232 + $0x180] sm:$0xff]
                %259 = vst [vmem:[%s233 + $0x60] sm:$0xff] %v258
                %v260 = vld [vmem:[%s232 + $0x1a0] sm:$0xff]
                %261 = vst [vmem:[%s233 + $0x68] sm:$0xff] %v260
                %v262 = vld [vmem:[%s232 + $0x1c0] sm:$0xff]
                %263 = vst [vmem:[%s233 + $0x70] sm:$0xff] %v262
                %v264 = vld [vmem:[%s232 + $0x1e0] sm:$0xff]
                %265 = vst [vmem:[%s233 + $0x78] sm:$0xff] %v264
              $region53: #{dea_gnn_jk_forward.19} parent=47 // loop_footer
                %s231 = sadd.s32 1, %s227
              $region54: #{dea_gnn_jk_forward.19} parent=47 // loop_footer_branch
                %226 = sbr.rel target = $region50
              $region55: #{dea_gnn_jk_forward.19} parent=47 // loop_exit
                _
            $region48: #{dea_gnn_jk_forward.19} parent=39 // pred_fallthru
              _
          $region40: #{dea_gnn_jk_forward.19} parent=35 // pred_fallthru
            _
          %310 = vnop
        $region36: #{dea_gnn_jk_forward.19} parent=31 // pred_fallthru
          _
        // Predicated region
        $region71: #{dea_gnn_jk_forward.19} parent=31 // pred_check
          %p311 = pneg %p63
        $region72: #{dea_gnn_jk_forward.19} parent=31 // pred_check_branch
          %313 = sbr.rel (%p311) target = $region74
        $region73: #{dea_gnn_jk_forward.19} parent=31 // pred_region
          %s314 = sand.u32 %s53, 1
          %s315 = sand.u32 %s53, 1
          %s316 = smul.addr %s315, 128
          %s317 = scalar_lea.vmem [#allocation4], %s316
          %s318 = smul.addr %s17, 8
          %s319 = scalar_lea.vmem %s1, %s318
          // Predicated region
          $region75: #{dea_gnn_jk_forward.19} parent=73 // pred_check
            _
          $region76: #{dea_gnn_jk_forward.19} parent=73 // pred_check_branch
            %321 = sbr.rel (0) target = $region78
          $region77: #{dea_gnn_jk_forward.19} parent=73 // pred_region
            // Predicated region
            $region79: #{dea_gnn_jk_forward.19} parent=77 // pred_check
              _
            $region80: #{dea_gnn_jk_forward.19} parent=77 // pred_check_branch
              %323 = sbr.rel (0) target = $region82
            $region81: #{dea_gnn_jk_forward.19} parent=77 // pred_region
              // Predicated region
              $region94: #{dea_gnn_jk_forward.19} parent=81 // pred_check
                _
              $region95: #{dea_gnn_jk_forward.19} parent=81 // pred_check_branch
                %368 = sbr.rel (0) target = $region97
              $region96: #{dea_gnn_jk_forward.19} parent=81 // pred_region
                loop: start=0, step=1, limit=1
                $region98: #{dea_gnn_jk_forward.19} parent=96 // loop_pre_header
                  _
                $region99: #{dea_gnn_jk_forward.19} parent=96 // loop_header
                  %s370 = sphi 0, %s374
                  %p371 = scmp.ge.s32.totalorder %s370, 1
                  %s375 = sphi %s319, %s319
                  %s376 = sphi %s317, %s317
                $region100: #{dea_gnn_jk_forward.19} parent=96 // loop_header_branch
                  %373 = sbr.rel (%p371) target = $region104
                $region101: #{dea_gnn_jk_forward.19} parent=96 // loop_body
                  %v377 = vld [vmem:[%s375] sm:$0xff]
                  %378 = vst [vmem:[%s376] sm:$0xff] %v377
                  %v379 = vld [vmem:[%s375 + $0x20] sm:$0xff]
                  %380 = vst [vmem:[%s376 + $0x8] sm:$0xff] %v379
                  %v381 = vld [vmem:[%s375 + $0x40] sm:$0xff]
                  %382 = vst [vmem:[%s376 + $0x10] sm:$0xff] %v381
                  %v383 = vld [vmem:[%s375 + $0x60] sm:$0xff]
                  %384 = vst [vmem:[%s376 + $0x18] sm:$0xff] %v383
                  %v385 = vld [vmem:[%s375 + $0x80] sm:$0xff]
                  %386 = vst [vmem:[%s376 + $0x20] sm:$0xff] %v385
                  %v387 = vld [vmem:[%s375 + $0xa0] sm:$0xff]
                  %388 = vst [vmem:[%s376 + $0x28] sm:$0xff] %v387
                  %v389 = vld [vmem:[%s375 + $0xc0] sm:$0xff]
                  %390 = vst [vmem:[%s376 + $0x30] sm:$0xff] %v389
                  %v391 = vld [vmem:[%s375 + $0xe0] sm:$0xff]
                  %392 = vst [vmem:[%s376 + $0x38] sm:$0xff] %v391
                  %v393 = vld [vmem:[%s375 + $0x100] sm:$0xff]
                  %394 = vst [vmem:[%s376 + $0x40] sm:$0xff] %v393
                  %v395 = vld [vmem:[%s375 + $0x120] sm:$0xff]
                  %396 = vst [vmem:[%s376 + $0x48] sm:$0xff] %v395
                  %v397 = vld [vmem:[%s375 + $0x140] sm:$0xff]
                  %398 = vst [vmem:[%s376 + $0x50] sm:$0xff] %v397
                  %v399 = vld [vmem:[%s375 + $0x160] sm:$0xff]
                  %400 = vst [vmem:[%s376 + $0x58] sm:$0xff] %v399
                  %v401 = vld [vmem:[%s375 + $0x180] sm:$0xff]
                  %402 = vst [vmem:[%s376 + $0x60] sm:$0xff] %v401
                  %v403 = vld [vmem:[%s375 + $0x1a0] sm:$0xff]
                  %404 = vst [vmem:[%s376 + $0x68] sm:$0xff] %v403
                  %v405 = vld [vmem:[%s375 + $0x1c0] sm:$0xff]
                  %406 = vst [vmem:[%s376 + $0x70] sm:$0xff] %v405
                  %v407 = vld [vmem:[%s375 + $0x1e0] sm:$0xff]
                  %408 = vst [vmem:[%s376 + $0x78] sm:$0xff] %v407
                $region102: #{dea_gnn_jk_forward.19} parent=96 // loop_footer
                  %s374 = sadd.s32 1, %s370
                $region103: #{dea_gnn_jk_forward.19} parent=96 // loop_footer_branch
                  %369 = sbr.rel target = $region99
                $region104: #{dea_gnn_jk_forward.19} parent=96 // loop_exit
                  _
              $region97: #{dea_gnn_jk_forward.19} parent=81 // pred_fallthru
                _
              // Predicated region
              $region105: #{dea_gnn_jk_forward.19} parent=81 // pred_check
                _
              $region106: #{dea_gnn_jk_forward.19} parent=81 // pred_check_branch
                %410 = sbr.rel target = $region108
              $region107: #{dea_gnn_jk_forward.19} parent=81 // pred_region
                _
              $region108: #{dea_gnn_jk_forward.19} parent=81 // pred_fallthru
                _
            $region82: #{dea_gnn_jk_forward.19} parent=77 // pred_fallthru
              _
            // Predicated region
            $region83: #{dea_gnn_jk_forward.19} parent=77 // pred_check
              _
            $region84: #{dea_gnn_jk_forward.19} parent=77 // pred_check_branch
              %325 = sbr.rel target = $region86
            $region85: #{dea_gnn_jk_forward.19} parent=77 // pred_region
              loop: start=0, step=1, limit=1
              $region87: #{dea_gnn_jk_forward.19} parent=85 // loop_pre_header
                _
              $region88: #{dea_gnn_jk_forward.19} parent=85 // loop_header
                %s328 = sphi 0, %s332
                %p329 = scmp.ge.s32.totalorder %s328, 1
                %s333 = sphi %s319, %s319
                %s334 = sphi %s317, %s317
              $region89: #{dea_gnn_jk_forward.19} parent=85 // loop_header_branch
                %331 = sbr.rel (%p329) target = $region93
              $region90: #{dea_gnn_jk_forward.19} parent=85 // loop_body
                %v335 = vld [vmem:[%s333] sm:$0xff]
                %336 = vst [vmem:[%s334] sm:$0xff] %v335
                %v337 = vld [vmem:[%s333 + $0x20] sm:$0xff]
                %338 = vst [vmem:[%s334 + $0x8] sm:$0xff] %v337
                %v339 = vld [vmem:[%s333 + $0x40] sm:$0xff]
                %340 = vst [vmem:[%s334 + $0x10] sm:$0xff] %v339
                %v341 = vld [vmem:[%s333 + $0x60] sm:$0xff]
                %342 = vst [vmem:[%s334 + $0x18] sm:$0xff] %v341
                %v343 = vld [vmem:[%s333 + $0x80] sm:$0xff]
                %344 = vst [vmem:[%s334 + $0x20] sm:$0xff] %v343
                %v345 = vld [vmem:[%s333 + $0xa0] sm:$0xff]
                %346 = vst [vmem:[%s334 + $0x28] sm:$0xff] %v345
                %v347 = vld [vmem:[%s333 + $0xc0] sm:$0xff]
                %348 = vst [vmem:[%s334 + $0x30] sm:$0xff] %v347
                %v349 = vld [vmem:[%s333 + $0xe0] sm:$0xff]
                %350 = vst [vmem:[%s334 + $0x38] sm:$0xff] %v349
                %v351 = vld [vmem:[%s333 + $0x100] sm:$0xff]
                %352 = vst [vmem:[%s334 + $0x40] sm:$0xff] %v351
                %v353 = vld [vmem:[%s333 + $0x120] sm:$0xff]
                %354 = vst [vmem:[%s334 + $0x48] sm:$0xff] %v353
                %v355 = vld [vmem:[%s333 + $0x140] sm:$0xff]
                %356 = vst [vmem:[%s334 + $0x50] sm:$0xff] %v355
                %v357 = vld [vmem:[%s333 + $0x160] sm:$0xff]
                %358 = vst [vmem:[%s334 + $0x58] sm:$0xff] %v357
                %v359 = vld [vmem:[%s333 + $0x180] sm:$0xff]
                %360 = vst [vmem:[%s334 + $0x60] sm:$0xff] %v359
                %v361 = vld [vmem:[%s333 + $0x1a0] sm:$0xff]
                %362 = vst [vmem:[%s334 + $0x68] sm:$0xff] %v361
                %v363 = vld [vmem:[%s333 + $0x1c0] sm:$0xff]
                %364 = vst [vmem:[%s334 + $0x70] sm:$0xff] %v363
                %v365 = vld [vmem:[%s333 + $0x1e0] sm:$0xff]
                %366 = vst [vmem:[%s334 + $0x78] sm:$0xff] %v365
              $region91: #{dea_gnn_jk_forward.19} parent=85 // loop_footer
                %s332 = sadd.s32 1, %s328
              $region92: #{dea_gnn_jk_forward.19} parent=85 // loop_footer_branch
                %327 = sbr.rel target = $region88
              $region93: #{dea_gnn_jk_forward.19} parent=85 // loop_exit
                _
            $region86: #{dea_gnn_jk_forward.19} parent=77 // pred_fallthru
              _
          $region78: #{dea_gnn_jk_forward.19} parent=73 // pred_fallthru
            _
          %411 = vnop
        $region74: #{dea_gnn_jk_forward.19} parent=31 // pred_fallthru
          _
      $region32: #{dea_gnn_jk_forward.19} parent=5 // pred_fallthru
        _
      %p412 = scmp.le.s32.totalorder 1, %s17
      %p413 = scmp.lt.s32.totalorder %s17, 5
      %p414 = pnand %p412, %p413
      %p415 = pneg %p414
      // Predicated region
      $region109: #{dea_gnn_jk_forward.19} parent=5 // pred_check
        _
      $region110: #{dea_gnn_jk_forward.19} parent=5 // pred_check_branch
        %417 = sbr.rel (%p414) target = $region112
      $region111: #{dea_gnn_jk_forward.19} parent=5 // pred_region
        %s418 = ssub.s32 %s17, 1
        %s419 = sand.u32 %s30, 1
        %s420 = sand.u32 %s30, 1
        %s421 = smul.addr %s420, 128
        %s422 = scalar_lea.vmem [#allocation3], %s421
        // Predicated region
        $region113: #{dea_gnn_jk_forward.19} parent=111 // pred_check
          %p423 = pneg %p43
        $region114: #{dea_gnn_jk_forward.19} parent=111 // pred_check_branch
          %425 = sbr.rel (%p423) target = $region116
        $region115: #{dea_gnn_jk_forward.19} parent=111 // pred_region
          _
        $region116: #{dea_gnn_jk_forward.19} parent=111 // pred_fallthru
          _
        %s426 = sand.u32 %s56, 1
        %s427 = sand.u32 %s56, 1
        %s428 = smul.addr %s427, 128
        %s429 = scalar_lea.vmem [#allocation4], %s428
        // Predicated region
        $region117: #{dea_gnn_jk_forward.19} parent=111 // pred_check
          %p430 = pneg %p69
        $region118: #{dea_gnn_jk_forward.19} parent=111 // pred_check_branch
          %432 = sbr.rel (%p430) target = $region120
        $region119: #{dea_gnn_jk_forward.19} parent=111 // pred_region
          _
        $region120: #{dea_gnn_jk_forward.19} parent=111 // pred_fallthru
          _
        %s433 = sand.u32 %s30, 1
        %s434 = sand.u32 %s30, 1
        %s435 = smul.addr %s434, 128
        %s436 = scalar_lea.vmem [#allocation3], %s435
        %p437 = pneg %p43
        %p438 = pneg %p40
        %s439 = sand.u32 %s56, 1
        %s440 = sand.u32 %s56, 1
        %s441 = smul.addr %s440, 128
        %s442 = scalar_lea.vmem [#allocation4], %s441
        %p443 = pneg %p69
        %p444 = pneg %p66
        %p445 = pneg %p90
        %p446 = pneg %p87
        %p447 = pneg %p111
        %p448 = pneg %p108
        %p449 = pneg %p132
        %p450 = pneg %p129
        %p451 = pneg %p153
        %p452 = pneg %p150
        %p453 = pneg %p179
        %p454 = pneg %p176
        %s455 = sand.u32 %s166, 1
        %s456 = scalar_lea.sflag [#allocation6], %s455
        %s457 = sand.u32 %s166, 1
        %s458 = scalar_lea.vmem [#allocation5], %s457
        %v459 = vld [vmem:[%s422] sm:$0xff]
        %v460 = vld [vmem:[%s422 + $0x8] sm:$0xff]
        %v461 = vld [vmem:[%s422 + $0x10] sm:$0xff]
        %v462 = vld [vmem:[%s422 + $0x18] sm:$0xff]
        %v463 = vld [vmem:[%s422 + $0x20] sm:$0xff]
        %v464 = vld [vmem:[%s422 + $0x28] sm:$0xff]
        %v465 = vld [vmem:[%s422 + $0x30] sm:$0xff]
        %v466 = vld [vmem:[%s422 + $0x38] sm:$0xff]
        %v467 = vld [vmem:[%s422 + $0x40] sm:$0xff]
        %v468 = vld [vmem:[%s422 + $0x48] sm:$0xff]
        %v469 = vld [vmem:[%s422 + $0x50] sm:$0xff]
        %v470 = vld [vmem:[%s422 + $0x58] sm:$0xff]
        %v471 = vld [vmem:[%s422 + $0x60] sm:$0xff]
        %v472 = vld [vmem:[%s422 + $0x68] sm:$0xff]
        %v473 = vld [vmem:[%s422 + $0x70] sm:$0xff]
        %v474 = vld [vmem:[%s422 + $0x78] sm:$0xff]
        %v475 = vld [vmem:[%s429] sm:$0xff]
        %v476 = vld [vmem:[%s429 + $0x8] sm:$0xff]
        %v477 = vld [vmem:[%s429 + $0x10] sm:$0xff]
        %v478 = vld [vmem:[%s429 + $0x18] sm:$0xff]
        %v479 = vld [vmem:[%s429 + $0x20] sm:$0xff]
        %v480 = vld [vmem:[%s429 + $0x28] sm:$0xff]
        %v481 = vld [vmem:[%s429 + $0x30] sm:$0xff]
        %v482 = vld [vmem:[%s429 + $0x38] sm:$0xff]
        %v483 = vld [vmem:[%s429 + $0x40] sm:$0xff]
        %v484 = vld [vmem:[%s429 + $0x48] sm:$0xff]
        %v485 = vld [vmem:[%s429 + $0x50] sm:$0xff]
        %v486 = vld [vmem:[%s429 + $0x58] sm:$0xff]
        %v487 = vld [vmem:[%s429 + $0x60] sm:$0xff]
        %v488 = vld [vmem:[%s429 + $0x68] sm:$0xff]
        %v489 = vld [vmem:[%s429 + $0x70] sm:$0xff]
        %v490 = vld [vmem:[%s429 + $0x78] sm:$0xff]
        %v491 = vmul.f32 %v459, %v475
        %v492 = vmul.f32 %v460, %v476
        %v493 = vmul.f32 %v461, %v477
        %v494 = vmul.f32 %v462, %v478
        %v495 = vmul.f32 %v463, %v479
        %v496 = vmul.f32 %v464, %v480
        %v497 = vmul.f32 %v465, %v481
        %v498 = vmul.f32 %v466, %v482
        %v499 = vmul.f32 %v467, %v483
        %v500 = vmul.f32 %v468, %v484
        %v501 = vmul.f32 %v469, %v485
        %v502 = vmul.f32 %v470, %v486
        %v503 = vmul.f32 %v471, %v487
        %v504 = vmul.f32 %v472, %v488
        %v505 = vmul.f32 %v473, %v489
        %v506 = vmul.f32 %v474, %v490
        %v507 = vld [vmem:[%s2] sm:$0xff]
        %v508 = vld [vmem:[%s2 + $0x8] sm:$0xff]
        %v509 = vld [vmem:[%s2 + $0x10] sm:$0xff]
        %v510 = vld [vmem:[%s2 + $0x18] sm:$0xff]
        %v511 = vld [vmem:[%s2 + $0x20] sm:$0xff]
        %v512 = vld [vmem:[%s2 + $0x28] sm:$0xff]
        %v513 = vld [vmem:[%s2 + $0x30] sm:$0xff]
        %v514 = vld [vmem:[%s2 + $0x38] sm:$0xff]
        %v515 = vld [vmem:[%s2 + $0x40] sm:$0xff]
        %v516 = vld [vmem:[%s2 + $0x48] sm:$0xff]
        %v517 = vld [vmem:[%s2 + $0x50] sm:$0xff]
        %v518 = vld [vmem:[%s2 + $0x58] sm:$0xff]
        %v519 = vld [vmem:[%s2 + $0x60] sm:$0xff]
        %v520 = vld [vmem:[%s2 + $0x68] sm:$0xff]
        %v521 = vld [vmem:[%s2 + $0x70] sm:$0xff]
        %v522 = vld [vmem:[%s2 + $0x78] sm:$0xff]
        %v523 = vld [vmem:[%s3] sm:$0xff]
        %v524 = vld [vmem:[%s3 + $0x8] sm:$0xff]
        %v525 = vld [vmem:[%s3 + $0x10] sm:$0xff]
        %v526 = vld [vmem:[%s3 + $0x18] sm:$0xff]
        %v527 = vld [vmem:[%s3 + $0x20] sm:$0xff]
        %v528 = vld [vmem:[%s3 + $0x28] sm:$0xff]
        %v529 = vld [vmem:[%s3 + $0x30] sm:$0xff]
        %v530 = vld [vmem:[%s3 + $0x38] sm:$0xff]
        %v531 = vld [vmem:[%s3 + $0x40] sm:$0xff]
        %v532 = vld [vmem:[%s3 + $0x48] sm:$0xff]
        %v533 = vld [vmem:[%s3 + $0x50] sm:$0xff]
        %v534 = vld [vmem:[%s3 + $0x58] sm:$0xff]
        %v535 = vld [vmem:[%s3 + $0x60] sm:$0xff]
        %v536 = vld [vmem:[%s3 + $0x68] sm:$0xff]
        %v537 = vld [vmem:[%s3 + $0x70] sm:$0xff]
        %v538 = vld [vmem:[%s3 + $0x78] sm:$0xff]
        %540 = vset.pattern.permute.xlu0 0
        %541 = vperm.xlu0 %540, %v523
        %v542 = vpop.permute.xlu0 %541
        %545 = vset.pattern.permute.xlu0 0
        %546 = vperm.xlu0 %545, %v524
        %v547 = vpop.permute.xlu0 %546
        %550 = vset.pattern.permute.xlu0 0
        %551 = vperm.xlu0 %550, %v525
        %v552 = vpop.permute.xlu0 %551
        %555 = vset.pattern.permute.xlu0 0
        %556 = vperm.xlu0 %555, %v526
        %v557 = vpop.permute.xlu0 %556
        %560 = vset.pattern.permute.xlu0 0
        %561 = vperm.xlu0 %560, %v527
        %v562 = vpop.permute.xlu0 %561
        %565 = vset.pattern.permute.xlu0 0
        %566 = vperm.xlu0 %565, %v528
        %v567 = vpop.permute.xlu0 %566
        %570 = vset.pattern.permute.xlu0 0
        %571 = vperm.xlu0 %570, %v529
        %v572 = vpop.permute.xlu0 %571
        %575 = vset.pattern.permute.xlu0 0
        %576 = vperm.xlu0 %575, %v530
        %v577 = vpop.permute.xlu0 %576
        %580 = vset.pattern.permute.xlu0 0
        %581 = vperm.xlu0 %580, %v531
        %v582 = vpop.permute.xlu0 %581
        %585 = vset.pattern.permute.xlu0 0
        %586 = vperm.xlu0 %585, %v532
        %v587 = vpop.permute.xlu0 %586
        %590 = vset.pattern.permute.xlu0 0
        %591 = vperm.xlu0 %590, %v533
        %v592 = vpop.permute.xlu0 %591
        %595 = vset.pattern.permute.xlu0 0
        %596 = vperm.xlu0 %595, %v534
        %v597 = vpop.permute.xlu0 %596
        %600 = vset.pattern.permute.xlu0 0
        %601 = vperm.xlu0 %600, %v535
        %v602 = vpop.permute.xlu0 %601
        %605 = vset.pattern.permute.xlu0 0
        %606 = vperm.xlu0 %605, %v536
        %v607 = vpop.permute.xlu0 %606
        %610 = vset.pattern.permute.xlu0 0
        %611 = vperm.xlu0 %610, %v537
        %v612 = vpop.permute.xlu0 %611
        %615 = vset.pattern.permute.xlu0 0
        %616 = vperm.xlu0 %615, %v538
        %v617 = vpop.permute.xlu0 %616
        %619 = vmatprep.subr.mxu0 0.0
        %620 = vmatpush1.msra.mxu0 %v491
        %621 = vmatprep.subr.mxu0 0.0
        %622 = vmatpush1.msra.mxu0 %v492
        %623 = vmatprep.subr.mxu0 0.0
        %624 = vmatpush1.msra.mxu0 %v493
        %625 = vmatprep.subr.mxu0 0.0
        %626 = vmatpush1.msra.mxu0 %v494
        %627 = vmatprep.subr.mxu0 0.0
        %628 = vmatpush1.msra.mxu0 %v495
        %629 = vmatprep.subr.mxu0 0.0
        %630 = vmatpush1.msra.mxu0 %v496
        %631 = vmatprep.subr.mxu0 0.0
        %632 = vmatpush1.msra.mxu0 %v497
        %633 = vmatprep.subr.mxu0 0.0
        %634 = vmatpush1.msra.mxu0 %v498
        %635 = vmatprep.subr.mxu0 0.0
        %636 = vmatpush1.msra.mxu0 %v499
        %637 = vmatprep.subr.mxu0 0.0
        %638 = vmatpush1.msra.mxu0 %v500
        %639 = vmatprep.subr.mxu0 0.0
        %640 = vmatpush1.msra.mxu0 %v501
        %641 = vmatprep.subr.mxu0 0.0
        %642 = vmatpush1.msra.mxu0 %v502
        %643 = vmatprep.subr.mxu0 0.0
        %644 = vmatpush1.msra.mxu0 %v503
        %645 = vmatprep.subr.mxu0 0.0
        %646 = vmatpush1.msra.mxu0 %v504
        %647 = vmatprep.subr.mxu0 0.0
        %648 = vmatpush1.msra.mxu0 %v505
        %649 = vmatprep.subr.mxu0 0.0
        %650 = vmatpush1.msra.mxu0 %v506
        %651 = vmatprep.subr.mxu0 0.0
        %652 = vmatpush1.msra.mxu0 0.0
        %653 = vmatprep.subr.mxu0 0.0
        %654 = vmatpush1.msra.mxu0 0.0
        %655 = vmatprep.subr.mxu0 0.0
        %656 = vmatpush1.msra.mxu0 0.0
        %657 = vmatprep.subr.mxu0 0.0
        %658 = vmatpush1.msra.mxu0 0.0
        %659 = vmatprep.subr.mxu0 0.0
        %660 = vmatpush1.msra.mxu0 0.0
        %661 = vmatprep.subr.mxu0 0.0
        %662 = vmatpush1.msra.mxu0 0.0
        %663 = vmatprep.subr.mxu0 0.0
        %664 = vmatpush1.msra.mxu0 0.0
        %665 = vmatprep.subr.mxu0 0.0
        %666 = vmatpush1.msra.mxu0 0.0
        %667 = vmatprep.subr.mxu0 0.0
        %668 = vmatpush1.msra.mxu0 0.0
        %669 = vmatprep.subr.mxu0 0.0
        %670 = vmatpush1.msra.mxu0 0.0
        %671 = vmatprep.subr.mxu0 0.0
        %672 = vmatpush1.msra.mxu0 0.0
        %673 = vmatprep.subr.mxu0 0.0
        %674 = vmatpush1.msra.mxu0 0.0
        %675 = vmatprep.subr.mxu0 0.0
        %676 = vmatpush1.msra.mxu0 0.0
        %677 = vmatprep.subr.mxu0 0.0
        %678 = vmatpush1.msra.mxu0 0.0
        %679 = vmatprep.subr.mxu0 0.0
        %680 = vmatpush1.msra.mxu0 0.0
        %681 = vmatprep.subr.mxu0 0.0
        %682 = vmatpush1.msra.mxu0 0.0
        %683 = vmatprep.mubr.f32.mxu0 0.0
        %684 = vmatmul.mubr.f32.gmra.mrb[0].mxu0 %v507
        %v685 = vpop.f32.mrb[0].mxu0
        %v686 = vadd.f32 %v542, %v685
        %v687 = vpop.f32.mrb[0].mxu0
        %688 = vmatprep.mubr.f32.mxu0 0.0
        %689 = vmatmul.mubr.f32.gmra.mrb[0].mxu0 %v508
        %v690 = vpop.f32.mrb[0].mxu0
        %v691 = vadd.f32 %v547, %v690
        %v692 = vpop.f32.mrb[0].mxu0
        %693 = vmatprep.mubr.f32.mxu0 0.0
        %694 = vmatmul.mubr.f32.gmra.mrb[0].mxu0 %v509
        %v695 = vpop.f32.mrb[0].mxu0
        %v696 = vadd.f32 %v552, %v695
        %v697 = vpop.f32.mrb[0].mxu0
        %698 = vmatprep.mubr.f32.mxu0 0.0
        %699 = vmatmul.mubr.f32.gmra.mrb[0].mxu0 %v510
        %v700 = vpop.f32.mrb[0].mxu0
        %v701 = vadd.f32 %v557, %v700
        %v702 = vpop.f32.mrb[0].mxu0
        %703 = vmatprep.mubr.f32.mxu0 0.0
        %704 = vmatmul.mubr.f32.gmra.mrb[0].mxu0 %v511
        %v705 = vpop.f32.mrb[0].mxu0
        %v706 = vadd.f32 %v562, %v705
        %v707 = vpop.f32.mrb[0].mxu0
        %708 = vmatprep.mubr.f32.mxu0 0.0
        %709 = vmatmul.mubr.f32.gmra.mrb[0].mxu0 %v512
        %v710 = vpop.f32.mrb[0].mxu0
        %v711 = vadd.f32 %v567, %v710
        %v712 = vpop.f32.mrb[0].mxu0
        %713 = vmatprep.mubr.f32.mxu0 0.0
        %714 = vmatmul.mubr.f32.gmra.mrb[0].mxu0 %v513
        %v715 = vpop.f32.mrb[0].mxu0
        %v716 = vadd.f32 %v572, %v715
        %v717 = vpop.f32.mrb[0].mxu0
        %718 = vmatprep.mubr.f32.mxu0 0.0
        %719 = vmatmul.mubr.f32.gmra.mrb[0].mxu0 %v514
        %v720 = vpop.f32.mrb[0].mxu0
        %v721 = vadd.f32 %v577, %v720
        %v722 = vpop.f32.mrb[0].mxu0
        %723 = vmatprep.mubr.f32.mxu0 0.0
        %724 = vmatmul.mubr.f32.gmra.mrb[0].mxu0 %v515
        %v725 = vpop.f32.mrb[0].mxu0
        %v726 = vadd.f32 %v582, %v725
        %v727 = vpop.f32.mrb[0].mxu0
        %728 = vmatprep.mubr.f32.mxu0 0.0
        %729 = vmatmul.mubr.f32.gmra.mrb[0].mxu0 %v516
        %v730 = vpop.f32.mrb[0].mxu0
        %v731 = vadd.f32 %v587, %v730
        %v732 = vpop.f32.mrb[0].mxu0
        %733 = vmatprep.mubr.f32.mxu0 0.0
        %734 = vmatmul.mubr.f32.gmra.mrb[0].mxu0 %v517
        %v735 = vpop.f32.mrb[0].mxu0
        %v736 = vadd.f32 %v592, %v735
        %v737 = vpop.f32.mrb[0].mxu0
        %738 = vmatprep.mubr.f32.mxu0 0.0
        %739 = vmatmul.mubr.f32.gmra.mrb[0].mxu0 %v518
        %v740 = vpop.f32.mrb[0].mxu0
        %v741 = vadd.f32 %v597, %v740
        %v742 = vpop.f32.mrb[0].mxu0
        %743 = vmatprep.mubr.f32.mxu0 0.0
        %744 = vmatmul.mubr.f32.gmra.mrb[0].mxu0 %v519
        %v745 = vpop.f32.mrb[0].mxu0
        %v746 = vadd.f32 %v602, %v745
        %v747 = vpop.f32.mrb[0].mxu0
        %748 = vmatprep.mubr.f32.mxu0 0.0
        %749 = vmatmul.mubr.f32.gmra.mrb[0].mxu0 %v520
        %v750 = vpop.f32.mrb[0].mxu0
        %v751 = vadd.f32 %v607, %v750
        %v752 = vpop.f32.mrb[0].mxu0
        %753 = vmatprep.mubr.f32.mxu0 0.0
        %754 = vmatmul.mubr.f32.gmra.mrb[0].mxu0 %v521
        %v755 = vpop.f32.mrb[0].mxu0
        %v756 = vadd.f32 %v612, %v755
        %v757 = vpop.f32.mrb[0].mxu0
        %758 = vmatprep.mubr.f32.mxu0 0.0
        %759 = vmatmul.mubr.f32.gmra.mrb[0].mxu0 %v522
        %v760 = vpop.f32.mrb[0].mxu0
        %v761 = vadd.f32 %v617, %v760
        %v762 = vpop.f32.mrb[0].mxu0
        %763 = vdwg.mxu0
        %v764 = vmax.f32 %v686, 0.0
        %v765 = vmax.f32 %v691, 0.0
        %v766 = vmax.f32 %v696, 0.0
        %v767 = vmax.f32 %v701, 0.0
        %v768 = vmax.f32 %v706, 0.0
        %v769 = vmax.f32 %v711, 0.0
        %v770 = vmax.f32 %v716, 0.0
        %v771 = vmax.f32 %v721, 0.0
        %v772 = vmax.f32 %v726, 0.0
        %v773 = vmax.f32 %v731, 0.0
        %v774 = vmax.f32 %v736, 0.0
        %v775 = vmax.f32 %v741, 0.0
        %v776 = vmax.f32 %v746, 0.0
        %v777 = vmax.f32 %v751, 0.0
        %v778 = vmax.f32 %v756, 0.0
        %v779 = vmax.f32 %v761, 0.0
        %v780 = vld [vmem:[%s4] sm:$0xff]
        %v781 = vld [vmem:[%s4 + $0x8] sm:$0xff]
        %v782 = vld [vmem:[%s4 + $0x10] sm:$0xff]
        %v783 = vld [vmem:[%s4 + $0x18] sm:$0xff]
        %v784 = vld [vmem:[%s4 + $0x20] sm:$0xff]
        %v785 = vld [vmem:[%s4 + $0x28] sm:$0xff]
        %v786 = vld [vmem:[%s4 + $0x30] sm:$0xff]
        %v787 = vld [vmem:[%s4 + $0x38] sm:$0xff]
        %v788 = vld [vmem:[%s4 + $0x40] sm:$0xff]
        %v789 = vld [vmem:[%s4 + $0x48] sm:$0xff]
        %v790 = vld [vmem:[%s4 + $0x50] sm:$0xff]
        %v791 = vld [vmem:[%s4 + $0x58] sm:$0xff]
        %v792 = vld [vmem:[%s4 + $0x60] sm:$0xff]
        %v793 = vld [vmem:[%s4 + $0x68] sm:$0xff]
        %v794 = vld [vmem:[%s4 + $0x70] sm:$0xff]
        %v795 = vld [vmem:[%s4 + $0x78] sm:$0xff]
        %797 = vset.pattern.permute.xlu0 0
        %798 = vperm.xlu0 %797, %v780
        %v799 = vpop.permute.xlu0 %798
        %802 = vset.pattern.permute.xlu0 0
        %803 = vperm.xlu0 %802, %v781
        %v804 = vpop.permute.xlu0 %803
        %807 = vset.pattern.permute.xlu0 0
        %808 = vperm.xlu0 %807, %v782
        %v809 = vpop.permute.xlu0 %808
        %812 = vset.pattern.permute.xlu0 0
        %813 = vperm.xlu0 %812, %v783
        %v814 = vpop.permute.xlu0 %813
        %817 = vset.pattern.permute.xlu0 0
        %818 = vperm.xlu0 %817, %v784
        %v819 = vpop.permute.xlu0 %818
        %822 = vset.pattern.permute.xlu0 0
        %823 = vperm.xlu0 %822, %v785
        %v824 = vpop.permute.xlu0 %823
        %827 = vset.pattern.permute.xlu0 0
        %828 = vperm.xlu0 %827, %v786
        %v829 = vpop.permute.xlu0 %828
        %832 = vset.pattern.permute.xlu0 0
        %833 = vperm.xlu0 %832, %v787
        %v834 = vpop.permute.xlu0 %833
        %837 = vset.pattern.permute.xlu0 0
        %838 = vperm.xlu0 %837, %v788
        %v839 = vpop.permute.xlu0 %838
        %842 = vset.pattern.permute.xlu0 0
        %843 = vperm.xlu0 %842, %v789
        %v844 = vpop.permute.xlu0 %843
        %847 = vset.pattern.permute.xlu0 0
        %848 = vperm.xlu0 %847, %v790
        %v849 = vpop.permute.xlu0 %848
        %852 = vset.pattern.permute.xlu0 0
        %853 = vperm.xlu0 %852, %v791
        %v854 = vpop.permute.xlu0 %853
        %857 = vset.pattern.permute.xlu0 0
        %858 = vperm.xlu0 %857, %v792
        %v859 = vpop.permute.xlu0 %858
        %862 = vset.pattern.permute.xlu0 0
        %863 = vperm.xlu0 %862, %v793
        %v864 = vpop.permute.xlu0 %863
        %867 = vset.pattern.permute.xlu0 0
        %868 = vperm.xlu0 %867, %v794
        %v869 = vpop.permute.xlu0 %868
        %872 = vset.pattern.permute.xlu0 0
        %873 = vperm.xlu0 %872, %v795
        %v874 = vpop.permute.xlu0 %873
        %v876 = vmul.f32 %v764, %v799
        %v877 = vmul.f32 %v765, %v804
        %v878 = vmul.f32 %v766, %v809
        %v879 = vmul.f32 %v767, %v814
        %v880 = vmul.f32 %v768, %v819
        %v881 = vmul.f32 %v769, %v824
        %v882 = vmul.f32 %v770, %v829
        %v883 = vmul.f32 %v771, %v834
        %v884 = vmul.f32 %v772, %v839
        %v885 = vmul.f32 %v773, %v844
        %v886 = vmul.f32 %v774, %v849
        %v887 = vmul.f32 %v775, %v854
        %v888 = vmul.f32 %v776, %v859
        %v889 = vmul.f32 %v777, %v864
        %v890 = vmul.f32 %v778, %v869
        %v891 = vmul.f32 %v779, %v874
        %v892 = vadd.f32 %v876, %v877
        %v893 = vadd.f32 %v892, %v878
        %v894 = vadd.f32 %v893, %v879
        %v895 = vadd.f32 %v894, %v880
        %v896 = vadd.f32 %v895, %v881
        %v897 = vadd.f32 %v896, %v882
        %v898 = vadd.f32 %v897, %v883
        %v899 = vadd.f32 %v898, %v884
        %v900 = vadd.f32 %v899, %v885
        %v901 = vadd.f32 %v900, %v886
        %v902 = vadd.f32 %v901, %v887
        %v903 = vadd.f32 %v902, %v888
        %v904 = vadd.f32 %v903, %v889
        %v905 = vadd.f32 %v904, %v890
        %v906 = vadd.f32 %v905, %v891
        %v907 = vrot.slane %v906, 4
        %v908 = vadd.f32 %v906, %v907
        %v909 = vrot.slane %v908, 2
        %v910 = vadd.f32 %v908, %v909
        %v911 = vrot.slane %v910, 1
        %v912 = vadd.f32 %v910, %v911
        %v913 = vld [vmem:[#allocation2] sm:$0x1]
        %915 = vset.pattern.permute.xlu0 0
        %916 = vperm.xlu0 %915, %v913
        %v917 = vpop.permute.xlu0 %916
        %v919 = vlaneseq
        %v920 = vshrl.u32 %v919, 7
        %v921 = vsub.s32 0, %v920
        %v922 = vrot.slane %v917, %v921
        %v923 = vadd.f32 %v912, %v922
        %924 = vst [vmem:[%s458] sm:$0x1] %v923
        %s925 = sand.u32 %s166, 1
        %s926 = scalar_lea.sflag [#allocation6], %s925
        %s927 = sand.u32 %s166, 1
        %s928 = scalar_lea.vmem [#allocation5], %s927
        // Predicated region
        $region121: #{dea_gnn_jk_forward.19} parent=111 // pred_check
          %p929 = pneg %p176
        $region122: #{dea_gnn_jk_forward.19} parent=111 // pred_check_branch
          %931 = sbr.rel (%p929) target = $region124
        $region123: #{dea_gnn_jk_forward.19} parent=111 // pred_region
          %s933 = ssub.s32 16, 16
          %934 = vsyncadd %s926, %s933
          %s935 = smul.addr %s22, 16
          %s936 = scalar_lea.hbm %s6, %s935
          %s938 = sshll.u32 %s928, 4
          %s939 = int_to_ptr.vmem [resolvable:$true] %s938
          %941 = dma.vmem_to_hbm [thread:$0]  %s939, 16, %s936, %s926
        $region124: #{dea_gnn_jk_forward.19} parent=111 // pred_fallthru
          _
      $region112: #{dea_gnn_jk_forward.19} parent=5 // pred_fallthru
        _
      %p942 = scmp.le.s32.totalorder 2, %s17
      // Predicated region
      $region125: #{dea_gnn_jk_forward.19} parent=5 // pred_check
        %p943 = pneg %p942
      $region126: #{dea_gnn_jk_forward.19} parent=5 // pred_check_branch
        %945 = sbr.rel (%p943) target = $region128
      $region127: #{dea_gnn_jk_forward.19} parent=5 // pred_region
        %s946 = ssub.s32 %s17, 2
        // Predicated region
        $region129: #{dea_gnn_jk_forward.19} parent=127 // pred_check
          %p947 = pneg %p182
        $region130: #{dea_gnn_jk_forward.19} parent=127 // pred_check_branch
          %949 = sbr.rel (%p947) target = $region132
        $region131: #{dea_gnn_jk_forward.19} parent=127 // pred_region
          %s950 = sand.u32 %s167, 1
          %s951 = scalar_lea.sflag [#allocation6], %s950
          %s952 = sand.u32 %s167, 1
          %s953 = scalar_lea.vmem [#allocation5], %s952
          %954 = dma.done %s951, 16
        $region132: #{dea_gnn_jk_forward.19} parent=127 // pred_fallthru
          _
      $region128: #{dea_gnn_jk_forward.19} parent=5 // pred_fallthru
        _
    $region6: #{dea_gnn_jk_forward.19} parent=1 // loop_footer
      %s21 = sadd.s32 1, %s17
    $region7: #{dea_gnn_jk_forward.19} parent=1 // loop_footer_branch
      %16 = sbr.rel target = $region3
    $region8: #{dea_gnn_jk_forward.19} parent=1 // loop_exit
      _
    %955 = vsyncpa [#allocation6], 1
    %s956 = scalar_lea.sflag [#allocation6], 1
    %957 = vsyncpa %s956, 1

</llo_original>
